<compile_context>
chip_gen: v7x
topology: tpu7x:2x2x1
jax: 0.10.0
libtpu: 0.0.40
codegen_flags: <defaults>
</compile_context>

<pallas_src>
import functools
import numpy as np

import jax
import jax.numpy as jnp
from jax import lax
from jax.experimental import pallas as pl
from jax.experimental.pallas import tpu as pltpu

ENC_CFG = [64, 64, 'M', 128, 128, 'M', 256, 256, 256, 'M',
           512, 512, 512, 'M', 512, 512, 512]
DEC_CFG = [512, 512, 512, 'U', 512, 512, 512, 'U', 256, 256, 256, 'U',
           128, 128, 'U', 64, 64]

_CK_MAX = 128          # Cin chunk for the K-reduction grid axis
_HEAD_TM = 512         # M tile for the 1x1+sigmoid head


def _round_up(x, m):
    return (x + m - 1) // m * m


# ----------------------------- Pallas kernels -----------------------------

def _conv3x3_kernel(x_ref, w_ref, b_ref, o_ref, acc_ref, *, nb, hh, ww, nk):
    """3x3 same-conv + bias + ReLU of one zero-padded window via 9 tap matmuls.

    x_ref:   (nb, hh+2, ww+2, CK) bf16     w_ref: (3, 3, CK, Cout) bf16
    b_ref:   (1, Cout) f32                 o_ref: (nb, hh, ww, Cout)
    acc_ref: (nb*hh*ww, Cout) f32 scratch (only used when nk > 1)
    """
    ck = x_ref.shape[-1]
    cout = w_ref.shape[-1]
    m = nb * hh * ww
    xw = x_ref[...]

    part = None
    for dy in range(3):
        for dx in range(3):
            tap = xw[:, dy:dy + hh, dx:dx + ww, :].reshape(m, ck)
            p = jnp.dot(tap, w_ref[dy, dx], preferred_element_type=jnp.float32)
            part = p if part is None else part + p

    def _finalize(acc):
        y = jnp.maximum(acc + b_ref[...], 0.0)
        o_ref[...] = y.reshape(nb, hh, ww, cout).astype(o_ref.dtype)

    if nk == 1:
        _finalize(part)
    else:
        k = pl.program_id(1)

        @pl.when(k == 0)
        def _():
            acc_ref[...] = jnp.zeros_like(acc_ref)

        acc_ref[...] += part

        @pl.when(k == nk - 1)
        def _():
            _finalize(acc_ref[...])


def _maxpool2x2_kernel(x_ref, o_ref):
    # x_ref: (1, H, W, C)   o_ref: (1, Ho, Wo, C); full 2x2 reduction in-kernel
    _, Ho, Wo, C = o_ref.shape
    x = x_ref[0].astype(jnp.float32).reshape(Ho, 2, 2 * Wo, C)
    r = jnp.maximum(x[:, 0], x[:, 1])                 # (Ho, W, C)
    r = jnp.max(r.reshape(Ho * Wo, 2, C), axis=1)     # pairwise max along W
    o_ref[0] = r.reshape(Ho, Wo, C).astype(o_ref.dtype)


def _bilerp_kernel(ah_ref, aw_ref, x_ref, o_ref):
    # Separable bilinear (align_corners=True) upsample of one batch element.
    # ah: (Ho, Hi) f32, aw: (Wo, Wi) f32, x: (1, Hi, Wi, C) f32, o: (1, Ho, Wo, C)
    _, hi, wi, c = x_ref.shape
    _, ho, wo, _ = o_ref.shape
    y = jnp.dot(ah_ref[...], x_ref[0].reshape(hi, wi * c),
                preferred_element_type=jnp.float32)          # (Ho, Wi*C) H-pass
    y = y.reshape(ho, wi, c)
    aw_b = jnp.broadcast_to(aw_ref[...][None, :, :], (ho, wo, wi))
    o_ref[0] = lax.dot_general(                              # batched W-pass
        aw_b, y, dimension_numbers=(((2,), (1,)), ((0,), (0,))),
        preferred_element_type=jnp.float32)                  # (Ho, Wo, C)


def _head_kernel(x_ref, w_ref, b_ref, o_ref):
    # x_ref: (TM, Cin) f32  w_ref: (1, Cin) f32  b_ref: (1, 1)  o_ref: (TM, 1)
    y = jnp.sum(x_ref[...] * w_ref[...], axis=-1, keepdims=True) + b_ref[...]
    o_ref[...] = jax.nn.sigmoid(y)


# ----------------------------- Pallas wrappers -----------------------------

@functools.partial(jax.jit, static_argnames=("out_dtype",))
def conv3x3_pallas(x, w, b, out_dtype=jnp.bfloat16):
    """3x3 same-padded conv + bias + ReLU; in-kernel taps, K-chunked weights."""
    N, H, W, Cin = x.shape
    Cout = w.shape[-1]
    if Cin <= _CK_MAX:
        # weight block resident; grid over batch for megacore / pipelining
        CK, nk, NB, gN = Cin, 1, 1, N
    else:
        # weight-streaming layers: whole batch in one block, K-reduction grid
        assert Cin % _CK_MAX == 0
        CK, nk, NB, gN = _CK_MAX, Cin // _CK_MAX, N, 1

    xp = jnp.pad(x.astype(jnp.bfloat16), ((0, 0), (1, 1), (1, 1), (0, 0)))
    kern = functools.partial(_conv3x3_kernel, nb=NB, hh=H, ww=W, nk=nk)
    return pl.pallas_call(
        kern,
        out_shape=jax.ShapeDtypeStruct((N, H, W, Cout), out_dtype),
        grid=(gN, nk),
        in_specs=[
            pl.BlockSpec((NB, H + 2, W + 2, CK), lambda n, k: (n, 0, 0, k)),
            pl.BlockSpec((3, 3, CK, Cout), lambda n, k: (0, 0, k, 0)),
            pl.BlockSpec((1, Cout), lambda n, k: (0, 0)),
        ],
        out_specs=pl.BlockSpec((NB, H, W, Cout), lambda n, k: (n, 0, 0, 0)),
        scratch_shapes=[pltpu.VMEM((NB * H * W, Cout), jnp.float32)],
        compiler_params=pltpu.CompilerParams(
            dimension_semantics=("parallel", "arbitrary")),
    )(xp, w, b)


@jax.jit
def maxpool2x2_pallas(x):
    N, H, W, C = x.shape
    Ho, Wo = H // 2, W // 2
    return pl.pallas_call(
        _maxpool2x2_kernel,
        out_shape=jax.ShapeDtypeStruct((N, Ho, Wo, C), x.dtype),
        grid=(N,),
        in_specs=[pl.BlockSpec((1, H, W, C), lambda n: (n, 0, 0, 0))],
        out_specs=pl.BlockSpec((1, Ho, Wo, C), lambda n: (n, 0, 0, 0)),
        compiler_params=pltpu.CompilerParams(dimension_semantics=("parallel",)),
    )(x)


def upsample2x_nearest(x):
    # nn.Upsample(scale_factor=2), default mode='nearest': pure replication,
    # no arithmetic -> kept as glue.  Cast to bf16 first so the 4x-size tensor
    # moves through HBM at half width (the next conv consumes bf16 anyway).
    x = x.astype(jnp.bfloat16)
    return jnp.repeat(jnp.repeat(x, 2, axis=1), 2, axis=2)


def _interp_coeffs(in_size, out_size):
    # UpsamplingBilinear2d == bilinear with align_corners=True
    if out_size == 1:
        src = np.zeros((1,), np.float64)
    else:
        src = np.arange(out_size, dtype=np.float64) * (in_size - 1) / (out_size - 1)
    i0 = np.clip(np.floor(src).astype(np.int32), 0, in_size - 1)
    i1 = np.minimum(i0 + 1, in_size - 1)
    frac = (src - i0).astype(np.float32)
    return i0, i1, frac


def _interp_matrix(in_size, out_size):
    i0, i1, frac = _interp_coeffs(in_size, out_size)
    A = np.zeros((out_size, in_size), np.float32)
    idx = np.arange(out_size)
    A[idx, i0] += (1.0 - frac)
    A[idx, i1] += frac
    return A


@functools.partial(jax.jit, static_argnums=(1, 2))
def bilinear_upsample_pallas(x, Ho, Wo):
    N, Hi, Wi, C = x.shape
    if (Hi, Wi) == (Ho, Wo):
        return x.astype(jnp.float32)   # identity under align_corners=True (f10)
    Ah = jnp.asarray(_interp_matrix(Hi, Ho))    # (Ho, Hi)
    Aw = jnp.asarray(_interp_matrix(Wi, Wo))    # (Wo, Wi)
    return pl.pallas_call(
        _bilerp_kernel,
        out_shape=jax.ShapeDtypeStruct((N, Ho, Wo, C), jnp.float32),
        grid=(N,),
        in_specs=[
            pl.BlockSpec((Ho, Hi), lambda n: (0, 0)),
            pl.BlockSpec((Wo, Wi), lambda n: (0, 0)),
            pl.BlockSpec((1, Hi, Wi, C), lambda n: (n, 0, 0, 0)),
        ],
        out_specs=pl.BlockSpec((1, Ho, Wo, C), lambda n: (n, 0, 0, 0)),
        compiler_params=pltpu.CompilerParams(dimension_semantics=("parallel",)),
    )(Ah, Aw, x.astype(jnp.float32))


@jax.jit
def conv1x1_sigmoid_pallas(x, w, b):
    # x: (N, H, W, 64) f32   w: (1, 64) f32   b: (1, 1) f32
    N, H, W, Cin = x.shape
    M = N * H * W
    TM = min(_HEAD_TM, _round_up(M, 8))
    Mp = _round_up(M, TM)
    x2 = x.reshape(M, Cin)                 # free: C already the minor dim
    if Mp != M:
        x2 = jnp.pad(x2, ((0, Mp - M), (0, 0)))
    out = pl.pallas_call(
        _head_kernel,
        out_shape=jax.ShapeDtypeStruct((Mp, 1), jnp.float32),
        grid=(Mp // TM,),
        in_specs=[
            pl.BlockSpec((TM, Cin), lambda i: (i, 0)),
            pl.BlockSpec((1, Cin), lambda i: (0, 0)),
            pl.BlockSpec((1, 1), lambda i: (0, 0)),
        ],
        out_specs=pl.BlockSpec((TM, 1), lambda i: (i, 0)),
        compiler_params=pltpu.CompilerParams(dimension_semantics=("parallel",)),
    )(x2, w, b)
    return out[:M].reshape(N, H, W, 1)


# ----------------------------- model structure -----------------------------

def _forward(x, params, conv, pool, up, head, bilerp, out_hw):
    ew, dw = params['enc'], params['dec']
    F32 = jnp.float32
    # ---- encoder (VGG-E without the 5th maxpool) ----
    x = conv(x, *ew[0]); x = conv(x, *ew[1]); x = pool(x)
    x = conv(x, *ew[2]); x = conv(x, *ew[3]); x = pool(x)
    x = conv(x, *ew[4]); x = conv(x, *ew[5]); x = conv(x, *ew[6]); x = pool(x)
    x = conv(x, *ew[7]); x = conv(x, *ew[8]); x = conv(x, *ew[9]); x = pool(x)
    x = conv(x, *ew[10]); x = conv(x, *ew[11]); x = conv(x, *ew[12])
    # ---- decoder ----
    x = conv(x, *dw[0]); x = conv(x, *dw[1]); f6 = conv(x, *dw[2], out_dtype=F32)
    x = up(f6)
    x = conv(x, *dw[3]); x = conv(x, *dw[4]); f7 = conv(x, *dw[5], out_dtype=F32)
    x = up(f7)
    x = conv(x, *dw[6]); x = conv(x, *dw[7]); f8 = conv(x, *dw[8], out_dtype=F32)
    x = up(f8)
    x = conv(x, *dw[9]); f9 = conv(x, *dw[10], out_dtype=F32)
    x = up(f9)
    x = conv(x, *dw[11]); f10 = conv(x, *dw[12], out_dtype=F32)
    xo = head(f10, *params['out'])
    Ht, Wt = out_hw
    return {'f6': bilerp(f6, Ht, Wt), 'f7': bilerp(f7, Ht, Wt),
            'f8': bilerp(f8, Ht, Wt), 'f9': bilerp(f9, Ht, Wt),
            'f10': bilerp(f10, Ht, Wt), 'x': xo}


def generator_forward_pallas(x, params, out_hw):
    return _forward(x, params, conv3x3_pallas, maxpool2x2_pallas,
                    upsample2x_nearest, conv1x1_sigmoid_pallas,
                    bilinear_upsample_pallas, out_hw)


# ----------------------------- pure-JAX references -----------------------------

@functools.partial(jax.jit, static_argnames=("out_dtype",))
def _conv3x3_ref(x, w, b, out_dtype=jnp.bfloat16):
    y = lax.conv_general_dilated(
        x.astype(jnp.bfloat16), w,
        window_strides=(1, 1), padding=((1, 1), (1, 1)),
        dimension_numbers=('NHWC', 'HWIO', 'NHWC'),
        preferred_element_type=jnp.float32)
    return jnp.maximum(y + b.reshape(1, 1, 1, -1), 0.0).astype(out_dtype)


@jax.jit
def _maxpool_ref(x):
    y = lax.reduce_window(x.astype(jnp.float32), -jnp.inf, lax.max,
                          (1, 2, 2, 1), (1, 2, 2, 1), 'VALID')
    return y.astype(x.dtype)


@jax.jit
def _head_ref(x, w, b):
    y = jnp.sum(x * w.reshape(1, 1, 1, -1), axis=-1, keepdims=True) + b[0, 0]
    return jax.nn.sigmoid(y)


@functools.partial(jax.jit, static_argnums=(1, 2))
def _bilerp_ref(x, Ho, Wo):
    N, Hi, Wi, C = x.shape
    x = x.astype(jnp.float32)
    h0, h1, fh = _interp_coeffs(Hi, Ho)
    w0, w1, fw = _interp_coeffs(Wi, Wo)
    xh0 = jnp.take(x, h0, axis=1)
    xh1 = jnp.take(x, h1, axis=1)
    x00 = jnp.take(xh0, w0, axis=2); x01 = jnp.take(xh0, w1, axis=2)
    x10 = jnp.take(xh1, w0, axis=2); x11 = jnp.take(xh1, w1, axis=2)
    fh_ = jnp.asarray(fh)[None, :, None, None]
    fw_ = jnp.asarray(fw)[None, None, :, None]
    top = x00 * (1.0 - fw_) + x01 * fw_
    bot = x10 * (1.0 - fw_) + x11 * fw_
    return top * (1.0 - fh_) + bot * fh_


# ----------------------------- per-kernel validation -----------------------------

def _np32(a):
    return np.asarray(jnp.asarray(a, jnp.float32))


def _checked(pallas_fn, ref_fn, name, tol):
    # Compare each Pallas kernel against a pure-JAX reference on the SAME
    # inputs (identical bf16 quantization), isolating kernel correctness.
    # Tolerance allows one bf16-ulp of output-rounding divergence.
    def fn(*args, **kwargs):
        out = pallas_fn(*args, **kwargs)
        ref = ref_fn(*args, **kwargs)
        np.testing.assert_allclose(_np32(out), _np32(ref),
                                   rtol=tol, atol=tol, err_msg=name)
        return out
    return fn


def generator_forward_checked(x, params, out_hw):
    conv = _checked(conv3x3_pallas, _conv3x3_ref, "conv3x3_relu", 1e-2)
    pool = _checked(maxpool2x2_pallas, _maxpool_ref, "maxpool2x2", 1e-2)
    head = _checked(conv1x1_sigmoid_pallas, _head_ref, "conv1x1_sigmoid", 1e-2)
    bil = _checked(bilinear_upsample_pallas, _bilerp_ref, "bilinear_upsample", 1e-2)
    return _forward(x, params, conv, pool, upsample2x_nearest, head, bil, out_hw)


# ----------------------------- parameters -----------------------------

def init_params(key):
    # TODO(synk): the PyTorch module loads pretrained .npy weights from disk
    # (load_pretrain_weight); replaced here with deterministic He-style init.
    # Conv weights are pre-packed once: bf16 HWIO; biases stay f32.
    params = {'enc': [], 'dec': []}
    cin = 3
    for v in ENC_CFG:
        if v == 'M':
            continue
        key, kw, kb = jax.random.split(key, 3)
        w = (jax.random.normal(kw, (3, 3, cin, v), jnp.float32)
             * np.sqrt(2.0 / (9 * cin))).astype(jnp.bfloat16)
        b = jax.random.normal(kb, (1, v), jnp.float32) * 0.01
        params['enc'].append((w, b))
        cin = v
    cin = 512
    for v in DEC_CFG:
        if v == 'U':
            continue
        key, kw, kb = jax.random.split(key, 3)
        w = (jax.random.normal(kw, (3, 3, cin, v), jnp.float32)
             * np.sqrt(2.0 / (9 * cin))).astype(jnp.bfloat16)
        b = jax.random.normal(kb, (1, v), jnp.float32) * 0.01
        params['dec'].append((w, b))
        cin = v
    key, kw, kb = jax.random.split(key, 3)
    params['out'] = (jax.random.normal(kw, (1, 64), jnp.float32) * np.sqrt(2.0 / 64),
                     jax.random.normal(kb, (1, 1), jnp.float32) * 0.01)
    return params


# ----------------------------- main -----------------------------

if __name__ == "__main__":
    IMAGE_H = IMAGE_W = 32           # must be divisible by 16 (4 maxpools)
    N = 2
    key = jax.random.PRNGKey(0)
    kx, kp = jax.random.split(key)
    x = jax.random.normal(kx, (N, IMAGE_H, IMAGE_W, 3), jnp.float32)
    params = init_params(kp)

    # 1) per-kernel validation against pure-JAX references on identical inputs.
    checked = generator_forward_checked(x, params, (IMAGE_H, IMAGE_W))

    # 2) end-to-end jitted run of the all-Pallas forward.
    pallas_fwd = jax.jit(
        lambda xx, pp: generator_forward_pallas(xx, pp, (IMAGE_H, IMAGE_W)))
    out = jax.block_until_ready(pallas_fwd(x, params))

    expected_shapes = {
        'f6': (N, IMAGE_H, IMAGE_W, 512), 'f7': (N, IMAGE_H, IMAGE_W, 512),
        'f8': (N, IMAGE_H, IMAGE_W, 256), 'f9': (N, IMAGE_H, IMAGE_W, 128),
        'f10': (N, IMAGE_H, IMAGE_W, 64), 'x': (N, IMAGE_H, IMAGE_W, 1),
    }
    for k in ('f6', 'f7', 'f8', 'f9', 'f10', 'x'):
        assert out[k].shape == expected_shapes[k], (k, out[k].shape)
        assert bool(jnp.all(jnp.isfinite(out[k]))), k
        np.testing.assert_allclose(_np32(out[k]), _np32(checked[k]),
                                   rtol=1e-3, atol=1e-3, err_msg=k)
    print("KERNEL_OK")
</pallas_src>

<mosaic_0001>
module attributes {stable_mosaic.version = 11 : i64} {
  func.func @_conv3x3_kernel(%arg0: i32, %arg1: i32, %arg2: memref<1x34x34x3xbf16, #tpu.memory_space<vmem>>, %arg3: memref<3x3x3x64xbf16, #tpu.memory_space<vmem>>, %arg4: memref<1x64xf32, #tpu.memory_space<vmem>>, %arg5: memref<1x32x32x64xbf16, #tpu.memory_space<vmem>>, %arg6: memref<1024x64xf32, #tpu.memory_space<vmem>>) attributes {dimension_semantics = [#tpu.dimension_semantics<parallel>, #tpu.dimension_semantics<arbitrary>], iteration_bounds = array<i64: 2, 1>, scalar_prefetch = 0 : i64, scratch_operands = 1 : i64, tpu.core_type = #tpu.core_type<tc>, window_params = [{transform_indices = @transform_0, window_bounds = array<i64: 1, 34, 34, 3>}, {transform_indices = @transform_1, window_bounds = array<i64: 3, 3, 3, 64>}, {pipeline_mode = #tpu.pipeline_mode<synchronous>, transform_indices = @transform_2, window_bounds = array<i64: 1, 64>}, {transform_indices = @transform_3, window_bounds = array<i64: 1, 32, 32, 64>}]} {
    %c0 = arith.constant 0 : index
    %c0_0 = arith.constant 0 : index
    %c0_1 = arith.constant 0 : index
    %c0_2 = arith.constant 0 : index
    %0 = vector.load %arg2[%c0, %c0_0, %c0_1, %c0_2] : memref<1x34x34x3xbf16, #tpu.memory_space<vmem>>, vector<1x34x34x3xbf16>
    %1 = vector.extract_strided_slice %0 {offsets = [0, 0, 0, 0], sizes = [1, 32, 32, 3], strides = [1, 1, 1, 1]} : vector<1x34x34x3xbf16> to vector<1x32x32x3xbf16>
    %2 = vector.shape_cast %1 : vector<1x32x32x3xbf16> to vector<1024x3xbf16>
    %c0_3 = arith.constant 0 : index
    %c0_4 = arith.constant 0 : index
    %c0_5 = arith.constant 0 : index
    %c0_6 = arith.constant 0 : index
    %3 = vector.load %arg3[%c0_3, %c0_4, %c0_5, %c0_6] : memref<3x3x3x64xbf16, #tpu.memory_space<vmem>>, vector<1x1x3x64xbf16>
    %4 = vector.shape_cast %3 : vector<1x1x3x64xbf16> to vector<3x64xbf16>
    %cst = arith.constant dense<0.000000e+00> : vector<1024x64xf32>
    %5 = tpu.matmul %2, %4, %cst {dimension_numbers = #tpu.dot_dimension_numbers<[1], [0], [0], [1], [0, 0, 1, 1], [], []>} : vector<1024x3xbf16>, vector<3x64xbf16>, vector<1024x64xf32> -> vector<1024x64xf32>
    %6 = vector.extract_strided_slice %0 {offsets = [0, 0, 1, 0], sizes = [1, 32, 32, 3], strides = [1, 1, 1, 1]} : vector<1x34x34x3xbf16> to vector<1x32x32x3xbf16>
    %7 = vector.shape_cast %6 : vector<1x32x32x3xbf16> to vector<1024x3xbf16>
    %c0_7 = arith.constant 0 : index
    %c1 = arith.constant 1 : index
    %c0_8 = arith.constant 0 : index
    %c0_9 = arith.constant 0 : index
    %8 = vector.load %arg3[%c0_7, %c1, %c0_8, %c0_9] : memref<3x3x3x64xbf16, #tpu.memory_space<vmem>>, vector<1x1x3x64xbf16>
    %9 = vector.shape_cast %8 : vector<1x1x3x64xbf16> to vector<3x64xbf16>
    %cst_10 = arith.constant dense<0.000000e+00> : vector<1024x64xf32>
    %10 = tpu.matmul %7, %9, %cst_10 {dimension_numbers = #tpu.dot_dimension_numbers<[1], [0], [0], [1], [0, 0, 1, 1], [], []>} : vector<1024x3xbf16>, vector<3x64xbf16>, vector<1024x64xf32> -> vector<1024x64xf32>
    %11 = arith.addf %5, %10 : vector<1024x64xf32>
    %12 = vector.extract_strided_slice %0 {offsets = [0, 0, 2, 0], sizes = [1, 32, 32, 3], strides = [1, 1, 1, 1]} : vector<1x34x34x3xbf16> to vector<1x32x32x3xbf16>
    %13 = vector.shape_cast %12 : vector<1x32x32x3xbf16> to vector<1024x3xbf16>
    %c0_11 = arith.constant 0 : index
    %c2 = arith.constant 2 : index
    %c0_12 = arith.constant 0 : index
    %c0_13 = arith.constant 0 : index
    %14 = vector.load %arg3[%c0_11, %c2, %c0_12, %c0_13] : memref<3x3x3x64xbf16, #tpu.memory_space<vmem>>, vector<1x1x3x64xbf16>
    %15 = vector.shape_cast %14 : vector<1x1x3x64xbf16> to vector<3x64xbf16>
    %cst_14 = arith.constant dense<0.000000e+00> : vector<1024x64xf32>
    %16 = tpu.matmul %13, %15, %cst_14 {dimension_numbers = #tpu.dot_dimension_numbers<[1], [0], [0], [1], [0, 0, 1, 1], [], []>} : vector<1024x3xbf16>, vector<3x64xbf16>, vector<1024x64xf32> -> vector<1024x64xf32>
    %17 = arith.addf %11, %16 : vector<1024x64xf32>
    %18 = vector.extract_strided_slice %0 {offsets = [0, 1, 0, 0], sizes = [1, 32, 32, 3], strides = [1, 1, 1, 1]} : vector<1x34x34x3xbf16> to vector<1x32x32x3xbf16>
    %19 = vector.shape_cast %18 : vector<1x32x32x3xbf16> to vector<1024x3xbf16>
    %c1_15 = arith.constant 1 : index
    %c0_16 = arith.constant 0 : index
    %c0_17 = arith.constant 0 : index
    %c0_18 = arith.constant 0 : index
    %20 = vector.load %arg3[%c1_15, %c0_16, %c0_17, %c0_18] : memref<3x3x3x64xbf16, #tpu.memory_space<vmem>>, vector<1x1x3x64xbf16>
    %21 = vector.shape_cast %20 : vector<1x1x3x64xbf16> to vector<3x64xbf16>
    %cst_19 = arith.constant dense<0.000000e+00> : vector<1024x64xf32>
    %22 = tpu.matmul %19, %21, %cst_19 {dimension_numbers = #tpu.dot_dimension_numbers<[1], [0], [0], [1], [0, 0, 1, 1], [], []>} : vector<1024x3xbf16>, vector<3x64xbf16>, vector<1024x64xf32> -> vector<1024x64xf32>
    %23 = arith.addf %17, %22 : vector<1024x64xf32>
    %24 = vector.extract_strided_slice %0 {offsets = [0, 1, 1, 0], sizes = [1, 32, 32, 3], strides = [1, 1, 1, 1]} : vector<1x34x34x3xbf16> to vector<1x32x32x3xbf16>
    %25 = vector.shape_cast %24 : vector<1x32x32x3xbf16> to vector<1024x3xbf16>
    %c1_20 = arith.constant 1 : index
    %c1_21 = arith.constant 1 : index
    %c0_22 = arith.constant 0 : index
    %c0_23 = arith.constant 0 : index
    %26 = vector.load %arg3[%c1_20, %c1_21, %c0_22, %c0_23] : memref<3x3x3x64xbf16, #tpu.memory_space<vmem>>, vector<1x1x3x64xbf16>
    %27 = vector.shape_cast %26 : vector<1x1x3x64xbf16> to vector<3x64xbf16>
    %cst_24 = arith.constant dense<0.000000e+00> : vector<1024x64xf32>
    %28 = tpu.matmul %25, %27, %cst_24 {dimension_numbers = #tpu.dot_dimension_numbers<[1], [0], [0], [1], [0, 0, 1, 1], [], []>} : vector<1024x3xbf16>, vector<3x64xbf16>, vector<1024x64xf32> -> vector<1024x64xf32>
    %29 = arith.addf %23, %28 : vector<1024x64xf32>
    %30 = vector.extract_strided_slice %0 {offsets = [0, 1, 2, 0], sizes = [1, 32, 32, 3], strides = [1, 1, 1, 1]} : vector<1x34x34x3xbf16> to vector<1x32x32x3xbf16>
    %31 = vector.shape_cast %30 : vector<1x32x32x3xbf16> to vector<1024x3xbf16>
    %c1_25 = arith.constant 1 : index
    %c2_26 = arith.constant 2 : index
    %c0_27 = arith.constant 0 : index
    %c0_28 = arith.constant 0 : index
    %32 = vector.load %arg3[%c1_25, %c2_26, %c0_27, %c0_28] : memref<3x3x3x64xbf16, #tpu.memory_space<vmem>>, vector<1x1x3x64xbf16>
    %33 = vector.shape_cast %32 : vector<1x1x3x64xbf16> to vector<3x64xbf16>
    %cst_29 = arith.constant dense<0.000000e+00> : vector<1024x64xf32>
    %34 = tpu.matmul %31, %33, %cst_29 {dimension_numbers = #tpu.dot_dimension_numbers<[1], [0], [0], [1], [0, 0, 1, 1], [], []>} : vector<1024x3xbf16>, vector<3x64xbf16>, vector<1024x64xf32> -> vector<1024x64xf32>
    %35 = arith.addf %29, %34 : vector<1024x64xf32>
    %36 = vector.extract_strided_slice %0 {offsets = [0, 2, 0, 0], sizes = [1, 32, 32, 3], strides = [1, 1, 1, 1]} : vector<1x34x34x3xbf16> to vector<1x32x32x3xbf16>
    %37 = vector.shape_cast %36 : vector<1x32x32x3xbf16> to vector<1024x3xbf16>
    %c2_30 = arith.constant 2 : index
    %c0_31 = arith.constant 0 : index
    %c0_32 = arith.constant 0 : index
    %c0_33 = arith.constant 0 : index
    %38 = vector.load %arg3[%c2_30, %c0_31, %c0_32, %c0_33] : memref<3x3x3x64xbf16, #tpu.memory_space<vmem>>, vector<1x1x3x64xbf16>
    %39 = vector.shape_cast %38 : vector<1x1x3x64xbf16> to vector<3x64xbf16>
    %cst_34 = arith.constant dense<0.000000e+00> : vector<1024x64xf32>
    %40 = tpu.matmul %37, %39, %cst_34 {dimension_numbers = #tpu.dot_dimension_numbers<[1], [0], [0], [1], [0, 0, 1, 1], [], []>} : vector<1024x3xbf16>, vector<3x64xbf16>, vector<1024x64xf32> -> vector<1024x64xf32>
    %41 = arith.addf %35, %40 : vector<1024x64xf32>
    %42 = vector.extract_strided_slice %0 {offsets = [0, 2, 1, 0], sizes = [1, 32, 32, 3], strides = [1, 1, 1, 1]} : vector<1x34x34x3xbf16> to vector<1x32x32x3xbf16>
    %43 = vector.shape_cast %42 : vector<1x32x32x3xbf16> to vector<1024x3xbf16>
    %c2_35 = arith.constant 2 : index
    %c1_36 = arith.constant 1 : index
    %c0_37 = arith.constant 0 : index
    %c0_38 = arith.constant 0 : index
    %44 = vector.load %arg3[%c2_35, %c1_36, %c0_37, %c0_38] : memref<3x3x3x64xbf16, #tpu.memory_space<vmem>>, vector<1x1x3x64xbf16>
    %45 = vector.shape_cast %44 : vector<1x1x3x64xbf16> to vector<3x64xbf16>
    %cst_39 = arith.constant dense<0.000000e+00> : vector<1024x64xf32>
    %46 = tpu.matmul %43, %45, %cst_39 {dimension_numbers = #tpu.dot_dimension_numbers<[1], [0], [0], [1], [0, 0, 1, 1], [], []>} : vector<1024x3xbf16>, vector<3x64xbf16>, vector<1024x64xf32> -> vector<1024x64xf32>
    %47 = arith.addf %41, %46 : vector<1024x64xf32>
    %48 = vector.extract_strided_slice %0 {offsets = [0, 2, 2, 0], sizes = [1, 32, 32, 3], strides = [1, 1, 1, 1]} : vector<1x34x34x3xbf16> to vector<1x32x32x3xbf16>
    %49 = vector.shape_cast %48 : vector<1x32x32x3xbf16> to vector<1024x3xbf16>
    %c2_40 = arith.constant 2 : index
    %c2_41 = arith.constant 2 : index
    %c0_42 = arith.constant 0 : index
    %c0_43 = arith.constant 0 : index
    %50 = vector.load %arg3[%c2_40, %c2_41, %c0_42, %c0_43] : memref<3x3x3x64xbf16, #tpu.memory_space<vmem>>, vector<1x1x3x64xbf16>
    %51 = vector.shape_cast %50 : vector<1x1x3x64xbf16> to vector<3x64xbf16>
    %cst_44 = arith.constant dense<0.000000e+00> : vector<1024x64xf32>
    %52 = tpu.matmul %49, %51, %cst_44 {dimension_numbers = #tpu.dot_dimension_numbers<[1], [0], [0], [1], [0, 0, 1, 1], [], []>} : vector<1024x3xbf16>, vector<3x64xbf16>, vector<1024x64xf32> -> vector<1024x64xf32>
    %53 = arith.addf %47, %52 : vector<1024x64xf32>
    %c0_45 = arith.constant 0 : index
    %c0_46 = arith.constant 0 : index
    %54 = vector.load %arg4[%c0_45, %c0_46] : memref<1x64xf32, #tpu.memory_space<vmem>>, vector<1x64xf32>
    %55 = vector.broadcast %54 : vector<1x64xf32> to vector<1024x64xf32>
    %56 = arith.addf %53, %55 : vector<1024x64xf32>
    %cst_47 = arith.constant 0.000000e+00 : f32
    %57 = vector.broadcast %cst_47 : f32 to vector<1024x64xf32>
    %58 = arith.maximumf %56, %57 : vector<1024x64xf32>
    %59 = vector.shape_cast %58 : vector<1024x64xf32> to vector<1x32x32x64xf32>
    %60 = arith.truncf %59 : vector<1x32x32x64xf32> to vector<1x32x32x64xbf16>
    %c0_48 = arith.constant 0 : index
    %c0_49 = arith.constant 0 : index
    %c0_50 = arith.constant 0 : index
    %c0_51 = arith.constant 0 : index
    %61 = vector.load %arg5[%c0_48, %c0_49, %c0_50, %c0_51] : memref<1x32x32x64xbf16, #tpu.memory_space<vmem>>, vector<1x32x32x64xbf16>
    tpu.vector_store %arg5[%c0_48, %c0_49, %c0_50, %c0_51], %60 {strides = array<i32>} : memref<1x32x32x64xbf16, #tpu.memory_space<vmem>>, vector<1x32x32x64xbf16>,
    return
  }
  func.func @transform_0(%arg0: i32, %arg1: i32) -> (i32, i32, i32, i32) {
    %c0_i32 = arith.constant 0 : i32
    %c0_i32_0 = arith.constant 0 : i32
    %c0_i32_1 = arith.constant 0 : i32
    return %arg0, %c0_i32, %c0_i32_0, %arg1 : i32, i32, i32, i32
  }
  func.func @transform_1(%arg0: i32, %arg1: i32) -> (i32, i32, i32, i32) {
    %c0_i32 = arith.constant 0 : i32
    %c0_i32_0 = arith.constant 0 : i32
    %c0_i32_1 = arith.constant 0 : i32
    %c0_i32_2 = arith.constant 0 : i32
    return %c0_i32, %c0_i32_0, %arg1, %c0_i32_1 : i32, i32, i32, i32
  }
  func.func @transform_2(%arg0: i32, %arg1: i32) -> (i32, i32) {
    %c0_i32 = arith.constant 0 : i32
    %c0_i32_0 = arith.constant 0 : i32
    %c0_i32_1 = arith.constant 0 : i32
    return %c0_i32, %c0_i32_0 : i32, i32
  }
  func.func @transform_3(%arg0: i32, %arg1: i32) -> (i32, i32, i32, i32) {
    %c0_i32 = arith.constant 0 : i32
    %c0_i32_0 = arith.constant 0 : i32
    %c0_i32_1 = arith.constant 0 : i32
    %c0_i32_2 = arith.constant 0 : i32
    return %arg0, %c0_i32, %c0_i32_0, %c0_i32_1 : i32, i32, i32, i32
  }
}

</mosaic_0001>

<llo_original>
// kernel: conv3x3_pallas.1
$region0: #{conv3x3_pallas.1}
  #allocation0 [shape = 'u32[]', space=smem, size = 0x4, offset = 0x4, fixed_abs, tag = 'smem constant byte address 0x4 - core index']
  #allocation1 [shape = 'u32[144,128]{1,0:T(1,128)}', space=vmem, size = 0x12000, scoped, tag = 'internal scratch']
  #allocation2 [shape = 'f32[1024,64]{1,0:T(8,128)}', space=vmem, size = 0x80000, scoped, tag = 'scratch operand']
  %s0 = inlined_call_operand.vmem [shape: bf16[2,34,34,3], index: 0, kind: input, shape index: {}]
  %s1 = inlined_call_operand.vmem [shape: bf16[3,3,3,64], index: 1, kind: input, shape index: {}]
  %s2 = inlined_call_operand.vmem [shape: f32[1,64], index: 2, kind: input, shape index: {}]
  %s3 = inlined_call_operand.hbm [shape: bf16[2,32,32,64], index: 3, kind: output, shape index: {}]
  %s4 = sld [smem:[#allocation0]]
  $region45: #{conv3x3_pallas.1} parent=0
    _
  %s6 = ssub.s32 1, %s4
  %s7 = scalar_select 0, %s6, %s4
  $region1: #{conv3x3_pallas.1} parent=0
    #allocation3 [shape = 'u8[524288]{0}', space=vmem, size = 0x80000, scoped, tag = 'output window, operand 0']
    #allocation4 [shape = 's32[2]{0}', space=sflag, size = 0x8, scoped, tag = 'scoped memory for conv3x3_pallas.1']
    %8 = vsyncpa [#allocation4], 0
    %s9 = scalar_lea.sflag [#allocation4], 1
    %10 = vsyncpa %s9, 0
    loop: start=0, step=1, limit=4
    $region2: #{conv3x3_pallas.1} parent=1 // loop_pre_header
      _
    $region3: #{conv3x3_pallas.1} parent=1 // loop_header
      %s12 = sphi 0, %s16
      %p13 = scmp.ge.s32.totalorder %s12, 4
      %s19 = sphi 0, %s31
      %s20 = sphi 0, %s27
      %s21 = sphi 0, %s19
      %s22 = sphi 0, %s20
      %s23 = sphi 0, %s21
      %s24 = sphi 0, %s22
      %s36 = sphi 0, %s38
      %s39 = sphi 0, %s36
      %s40 = sphi 0, %s39
      %s56 = sphi 0, %s40
      %s62 = sphi 0, %s64
      %s65 = sphi 0, %s62
      %s66 = sphi 0, %s65
      %s82 = sphi 0, %s66
      %s86 = sphi 0, %s86
      %s88 = sphi 0, %s86
      %s89 = sphi 0, %s88
      %s103 = sphi 0, %s89
      %s109 = sphi 0, %s111
      %s112 = sphi 0, %s109
      %s113 = sphi 0, %s112
      %s129 = sphi 0, %s113
    $region4: #{conv3x3_pallas.1} parent=1 // loop_header_branch
      %15 = sbr.rel (%p13) target = $region8
    $region5: #{conv3x3_pallas.1} parent=1 // loop_body
      %s17 = ssub.s32 %s12, 1
      %s18 = ssub.s32 %s12, 2
      %s25 = sadd.s32 1, %s20
      %p26 = scmp.ge.s32.totalorder %s25, 1
      %s27 = scalar_select %p26, 0, %s25
      %s28 = sadd.s32 1, %s19
      %s29 = scalar_select %p26, %s28, %s19
      %p30 = scmp.ge.s32.totalorder %s29, 2
      %s31 = scalar_select %p30, 0, %s29
      %s32 = ssub.s32 %s19, %s31
      %s33 = ssub.s32 %s20, %s27
      %s34 = sor.u32 %s32, %s33
      %p35 = scmp.eq.s32.totalorder %s34, 0
      %s37 = sadd.s32 %s36, 1
      %s38 = scalar_select %p35, %s36, %s37
      %p41 = pneg %p35
      %p42 = scmp.eq.s32.totalorder %s12, 1
      %p43 = por %p41, %p42
      %p44 = scmp.ne.s32.totalorder %s36, %s39
      %p45 = scmp.eq.s32.totalorder %s12, 0
      %p46 = por %p44, %p45
      %p47 = scmp.ne.s32.totalorder %s36, %s39
      %p48 = scmp.eq.s32.totalorder %s17, 1
      %p49 = por %p47, %p48
      %p50 = scmp.ne.s32.totalorder %s39, %s40
      %p51 = scmp.eq.s32.totalorder %s17, 0
      %p52 = por %p50, %p51
      %p53 = scmp.ne.s32.totalorder %s39, %s40
      %p54 = scmp.eq.s32.totalorder %s18, 1
      %p55 = por %p53, %p54
      %p57 = scmp.ne.s32.totalorder %s40, %s56
      %p58 = scmp.eq.s32.totalorder %s18, 0
      %p59 = por %p57, %p58
      %s60 = ssub.s32 %s20, %s27
      %p61 = scmp.eq.s32.totalorder %s60, 0
      %s63 = sadd.s32 %s62, 1
      %s64 = scalar_select %p61, %s62, %s63
      %p67 = pneg %p61
      %p68 = scmp.eq.s32.totalorder %s12, 1
      %p69 = por %p67, %p68
      %p70 = scmp.ne.s32.totalorder %s62, %s65
      %p71 = scmp.eq.s32.totalorder %s12, 0
      %p72 = por %p70, %p71
      %p73 = scmp.ne.s32.totalorder %s62, %s65
      %p74 = scmp.eq.s32.totalorder %s17, 1
      %p75 = por %p73, %p74
      %p76 = scmp.ne.s32.totalorder %s65, %s66
      %p77 = scmp.eq.s32.totalorder %s17, 0
      %p78 = por %p76, %p77
      %p79 = scmp.ne.s32.totalorder %s65, %s66
      %p80 = scmp.eq.s32.totalorder %s18, 1
      %p81 = por %p79, %p80
      %p83 = scmp.ne.s32.totalorder %s66, %s82
      %p84 = scmp.eq.s32.totalorder %s18, 0
      %p85 = por %p83, %p84
      %s87 = sadd.s32 %s86, 1
      %p90 = scmp.eq.s32.totalorder %s12, 1
      %p91 = scmp.ne.s32.totalorder %s86, %s88
      %p92 = scmp.eq.s32.totalorder %s12, 0
      %p93 = por %p91, %p92
      %p94 = scmp.ne.s32.totalorder %s86, %s88
      %p95 = scmp.eq.s32.totalorder %s17, 1
      %p96 = por %p94, %p95
      %p97 = scmp.ne.s32.totalorder %s88, %s89
      %p98 = scmp.eq.s32.totalorder %s17, 0
      %p99 = por %p97, %p98
      %p100 = scmp.ne.s32.totalorder %s88, %s89
      %p101 = scmp.eq.s32.totalorder %s18, 1
      %p102 = por %p100, %p101
      %p104 = scmp.ne.s32.totalorder %s89, %s103
      %p105 = scmp.eq.s32.totalorder %s18, 0
      %p106 = por %p104, %p105
      %s107 = ssub.s32 %s19, %s31
      %p108 = scmp.eq.s32.totalorder %s107, 0
      %s110 = sadd.s32 %s109, 1
      %s111 = scalar_select %p108, %s109, %s110
      %p114 = pneg %p108
      %p115 = scmp.eq.s32.totalorder %s12, 1
      %p116 = por %p114, %p115
      %p117 = scmp.ne.s32.totalorder %s109, %s112
      %p118 = scmp.eq.s32.totalorder %s12, 0
      %p119 = por %p117, %p118
      %p120 = scmp.ne.s32.totalorder %s109, %s112
      %p121 = scmp.eq.s32.totalorder %s17, 1
      %p122 = por %p120, %p121
      %p123 = scmp.ne.s32.totalorder %s112, %s113
      %p124 = scmp.eq.s32.totalorder %s17, 0
      %p125 = por %p123, %p124
      %p126 = scmp.ne.s32.totalorder %s112, %s113
      %p127 = scmp.eq.s32.totalorder %s18, 1
      %p128 = por %p126, %p127
      %p130 = scmp.ne.s32.totalorder %s113, %s129
      %p131 = scmp.eq.s32.totalorder %s18, 0
      %p132 = por %p130, %p131
      %p133 = scmp.le.s32.totalorder 1, %s12
      %p134 = scmp.lt.s32.totalorder %s12, 3
      %p135 = pnand %p133, %p134
      %p136 = pneg %p135
      // Predicated region
      $region9: #{conv3x3_pallas.1} parent=5 // pred_check
        _
      $region10: #{conv3x3_pallas.1} parent=5 // pred_check_branch
        %138 = sbr.rel (%p135) target = $region12
      $region11: #{conv3x3_pallas.1} parent=5 // pred_region
        %s139 = ssub.s32 %s12, 1
        // Predicated region
        $region13: #{conv3x3_pallas.1} parent=11 // pred_check
          %p140 = pneg %p78
        $region14: #{conv3x3_pallas.1} parent=11 // pred_check_branch
          %142 = sbr.rel (%p140) target = $region16
        $region15: #{conv3x3_pallas.1} parent=11 // pred_region
          %p143 = scmp.lt.s32.totalorder %s22, 0
          %s144 = scalar_select %p143, %s22, 0
          %s145 = smul.addr %s144, 2
          %s146 = scalar_lea.vmem %s1, %s145
        $region16: #{conv3x3_pallas.1} parent=11 // pred_fallthru
          _
        // Predicated region
        $region17: #{conv3x3_pallas.1} parent=11 // pred_check
          %p147 = pneg %p99
        $region18: #{conv3x3_pallas.1} parent=11 // pred_check_branch
          %149 = sbr.rel (%p147) target = $region20
        $region19: #{conv3x3_pallas.1} parent=11 // pred_region
          _
        $region20: #{conv3x3_pallas.1} parent=11 // pred_fallthru
          _
      $region12: #{conv3x3_pallas.1} parent=5 // pred_fallthru
        _
      %p150 = scmp.lt.s32.totalorder %s12, 2
      // Predicated region
      $region21: #{conv3x3_pallas.1} parent=5 // pred_check
        %p151 = pneg %p150
      $region22: #{conv3x3_pallas.1} parent=5 // pred_check_branch
        %153 = sbr.rel (%p151) target = $region24
      $region23: #{conv3x3_pallas.1} parent=5 // pred_region
        // Predicated region
        $region25: #{conv3x3_pallas.1} parent=23 // pred_check
          %p154 = pneg %p46
        $region26: #{conv3x3_pallas.1} parent=23 // pred_check_branch
          %156 = sbr.rel (%p154) target = $region28
        $region27: #{conv3x3_pallas.1} parent=23 // pred_region
          %p157 = scmp.lt.s32.totalorder %s19, 1
          %s158 = scalar_select %p157, %s19, 1
          %p159 = scmp.lt.s32.totalorder %s20, 0
          %s160 = scalar_select %p159, %s20, 0
          %s161 = smul.addr %s158, 170
          %s162 = sadd.s32 %s160, %s161
          %s163 = smul.addr %s162, 4
          %s164 = scalar_lea.vmem %s0, %s163
        $region28: #{conv3x3_pallas.1} parent=23 // pred_fallthru
          _
      $region24: #{conv3x3_pallas.1} parent=5 // pred_fallthru
        _
      %p165 = scmp.le.s32.totalorder 1, %s12
      %p166 = scmp.lt.s32.totalorder %s12, 3
      %p167 = pnand %p165, %p166
      %p168 = pneg %p167
      // Predicated region
      $region29: #{conv3x3_pallas.1} parent=5 // pred_check
        _
      $region30: #{conv3x3_pallas.1} parent=5 // pred_check_branch
        %170 = sbr.rel (%p167) target = $region32
      $region31: #{conv3x3_pallas.1} parent=5 // pred_region
        %s171 = ssub.s32 %s12, 1
        %p172 = scmp.lt.s32.totalorder %s21, 1
        %s173 = scalar_select %p172, %s21, 1
        %p174 = scmp.lt.s32.totalorder %s22, 0
        %s175 = scalar_select %p174, %s22, 0
        %s176 = smul.addr %s173, 170
        %s177 = sadd.s32 %s175, %s176
        %s178 = smul.addr %s177, 4
        %s179 = scalar_lea.vmem %s0, %s178
        %p180 = pneg %p52
        %p181 = pneg %p49
        %p182 = scmp.lt.s32.totalorder %s22, 0
        %s183 = scalar_select %p182, %s22, 0
        %s184 = smul.addr %s183, 2
        %s185 = scalar_lea.vmem %s1, %s184
        %p186 = pneg %p78
        %p187 = pneg %p75
        %p188 = pneg %p99
        %p189 = pneg %p96
        %p190 = pneg %p125
        %p191 = pneg %p122
        %s192 = sand.u32 %s112, 1
        %s193 = scalar_lea.sflag [#allocation4], %s192
        %s194 = sand.u32 %s112, 1
        %s195 = smul.addr %s194, 512
        %s196 = scalar_lea.vmem [#allocation3], %s195
        %p197 = scmp.lt.s32.totalorder %s21, 1
        %s198 = scalar_select %p197, %s21, 1
        %p199 = scmp.lt.s32.totalorder %s22, 0
        %s200 = scalar_select %p199, %s22, 0
        %s201 = smul.addr %s198, 170
        %s202 = sadd.s32 %s200, %s201
        %s203 = smul.addr %s202, 4
        %s204 = scalar_lea.vmem %s0, %s203
        %p205 = scmp.lt.s32.totalorder %s22, 0
        %s206 = scalar_select %p205, %s22, 0
        %s207 = smul.addr %s206, 2
        %s208 = scalar_lea.vmem %s1, %s207
        %v210 = vld [vmem:[%s204] sm:$0xf]
        %v211 = vld [vmem:[%s204 + $0x4] sm:$0xf]
        %v212 = vld [vmem:[%s204 + $0x8] sm:$0xf]
        %v213 = vld [vmem:[%s204 + $0xc] sm:$0xf]
        %v214 = vld [vmem:[%s204 + $0x10] sm:$0x1]
        %v215 = vld [vmem:[%s204 + $0x14] sm:$0xf]
        %v216 = vld [vmem:[%s204 + $0x18] sm:$0xf]
        %v217 = vld [vmem:[%s204 + $0x1c] sm:$0xf]
        %v218 = vld [vmem:[%s204 + $0x20] sm:$0xf]
        %v219 = vld [vmem:[%s204 + $0x24] sm:$0x1]
        %v220 = vld [vmem:[%s204 + $0x28] sm:$0xf]
        %v221 = vld [vmem:[%s204 + $0x2c] sm:$0xf]
        %v222 = vld [vmem:[%s204 + $0x30] sm:$0xf]
        %v223 = vld [vmem:[%s204 + $0x34] sm:$0xf]
        %v224 = vld [vmem:[%s204 + $0x38] sm:$0x1]
        %v225 = vld [vmem:[%s204 + $0x3c] sm:$0xf]
        %v226 = vld [vmem:[%s204 + $0x40] sm:$0xf]
        %v227 = vld [vmem:[%s204 + $0x44] sm:$0xf]
        %v228 = vld [vmem:[%s204 + $0x48] sm:$0xf]
        %v229 = vld [vmem:[%s204 + $0x4c] sm:$0x1]
        %v230 = vld [vmem:[%s204 + $0x50] sm:$0xf]
        %v231 = vld [vmem:[%s204 + $0x54] sm:$0xf]
        %v232 = vld [vmem:[%s204 + $0x58] sm:$0xf]
        %v233 = vld [vmem:[%s204 + $0x5c] sm:$0xf]
        %v234 = vld [vmem:[%s204 + $0x60] sm:$0x1]
        %v235 = vld [vmem:[%s204 + $0x64] sm:$0xf]
        %v236 = vld [vmem:[%s204 + $0x68] sm:$0xf]
        %v237 = vld [vmem:[%s204 + $0x6c] sm:$0xf]
        %v238 = vld [vmem:[%s204 + $0x70] sm:$0xf]
        %v239 = vld [vmem:[%s204 + $0x74] sm:$0x1]
        %v240 = vld [vmem:[%s204 + $0x78] sm:$0xf]
        %v241 = vld [vmem:[%s204 + $0x7c] sm:$0xf]
        %v242 = vld [vmem:[%s204 + $0x80] sm:$0xf]
        %v243 = vld [vmem:[%s204 + $0x84] sm:$0xf]
        %v244 = vld [vmem:[%s204 + $0x88] sm:$0x1]
        %v245 = vld [vmem:[%s204 + $0x8c] sm:$0xf]
        %v246 = vld [vmem:[%s204 + $0x90] sm:$0xf]
        %v247 = vld [vmem:[%s204 + $0x94] sm:$0xf]
        %v248 = vld [vmem:[%s204 + $0x98] sm:$0xf]
        %v249 = vld [vmem:[%s204 + $0x9c] sm:$0x1]
        %v250 = vld [vmem:[%s204 + $0xa0] sm:$0xf]
        %v251 = vld [vmem:[%s204 + $0xa4] sm:$0xf]
        %v252 = vld [vmem:[%s204 + $0xa8] sm:$0xf]
        %v253 = vld [vmem:[%s204 + $0xac] sm:$0xf]
        %v254 = vld [vmem:[%s204 + $0xb0] sm:$0x1]
        %v255 = vld [vmem:[%s204 + $0xb4] sm:$0xf]
        %v256 = vld [vmem:[%s204 + $0xb8] sm:$0xf]
        %v257 = vld [vmem:[%s204 + $0xbc] sm:$0xf]
        %v258 = vld [vmem:[%s204 + $0xc0] sm:$0xf]
        %v259 = vld [vmem:[%s204 + $0xc4] sm:$0x1]
        %v260 = vld [vmem:[%s204 + $0xc8] sm:$0xf]
        %v261 = vld [vmem:[%s204 + $0xcc] sm:$0xf]
        %v262 = vld [vmem:[%s204 + $0xd0] sm:$0xf]
        %v263 = vld [vmem:[%s204 + $0xd4] sm:$0xf]
        %v264 = vld [vmem:[%s204 + $0xd8] sm:$0x1]
        %v265 = vld [vmem:[%s204 + $0xdc] sm:$0xf]
        %v266 = vld [vmem:[%s204 + $0xe0] sm:$0xf]
        %v267 = vld [vmem:[%s204 + $0xe4] sm:$0xf]
        %v268 = vld [vmem:[%s204 + $0xe8] sm:$0xf]
        %v269 = vld [vmem:[%s204 + $0xec] sm:$0x1]
        %v270 = vld [vmem:[%s204 + $0xf0] sm:$0xf]
        %v271 = vld [vmem:[%s204 + $0xf4] sm:$0xf]
        %v272 = vld [vmem:[%s204 + $0xf8] sm:$0xf]
        %v273 = vld [vmem:[%s204 + $0xfc] sm:$0xf]
        %v274 = vld [vmem:[%s204 + $0x100] sm:$0x1]
        %v275 = vld [vmem:[%s204 + $0x104] sm:$0xf]
        %v276 = vld [vmem:[%s204 + $0x108] sm:$0xf]
        %v277 = vld [vmem:[%s204 + $0x10c] sm:$0xf]
        %v278 = vld [vmem:[%s204 + $0x110] sm:$0xf]
        %v279 = vld [vmem:[%s204 + $0x114] sm:$0x1]
        %v280 = vld [vmem:[%s204 + $0x118] sm:$0xf]
        %v281 = vld [vmem:[%s204 + $0x11c] sm:$0xf]
        %v282 = vld [vmem:[%s204 + $0x120] sm:$0xf]
        %v283 = vld [vmem:[%s204 + $0x124] sm:$0xf]
        %v284 = vld [vmem:[%s204 + $0x128] sm:$0x1]
        %v285 = vld [vmem:[%s204 + $0x12c] sm:$0xf]
        %v286 = vld [vmem:[%s204 + $0x130] sm:$0xf]
        %v287 = vld [vmem:[%s204 + $0x134] sm:$0xf]
        %v288 = vld [vmem:[%s204 + $0x138] sm:$0xf]
        %v289 = vld [vmem:[%s204 + $0x13c] sm:$0x1]
        %v290 = vld [vmem:[%s204 + $0x140] sm:$0xf]
        %v291 = vld [vmem:[%s204 + $0x144] sm:$0xf]
        %v292 = vld [vmem:[%s204 + $0x148] sm:$0xf]
        %v293 = vld [vmem:[%s204 + $0x14c] sm:$0xf]
        %v294 = vld [vmem:[%s204 + $0x150] sm:$0x1]
        %v295 = vld [vmem:[%s204 + $0x154] sm:$0xf]
        %v296 = vld [vmem:[%s204 + $0x158] sm:$0xf]
        %v297 = vld [vmem:[%s204 + $0x15c] sm:$0xf]
        %v298 = vld [vmem:[%s204 + $0x160] sm:$0xf]
        %v299 = vld [vmem:[%s204 + $0x164] sm:$0x1]
        %v300 = vld [vmem:[%s204 + $0x168] sm:$0xf]
        %v301 = vld [vmem:[%s204 + $0x16c] sm:$0xf]
        %v302 = vld [vmem:[%s204 + $0x170] sm:$0xf]
        %v303 = vld [vmem:[%s204 + $0x174] sm:$0xf]
        %v304 = vld [vmem:[%s204 + $0x178] sm:$0x1]
        %v305 = vld [vmem:[%s204 + $0x17c] sm:$0xf]
        %v306 = vld [vmem:[%s204 + $0x180] sm:$0xf]
        %v307 = vld [vmem:[%s204 + $0x184] sm:$0xf]
        %v308 = vld [vmem:[%s204 + $0x188] sm:$0xf]
        %v309 = vld [vmem:[%s204 + $0x18c] sm:$0x1]
        %v310 = vld [vmem:[%s204 + $0x190] sm:$0xf]
        %v311 = vld [vmem:[%s204 + $0x194] sm:$0xf]
        %v312 = vld [vmem:[%s204 + $0x198] sm:$0xf]
        %v313 = vld [vmem:[%s204 + $0x19c] sm:$0xf]
        %v314 = vld [vmem:[%s204 + $0x1a0] sm:$0x1]
        %v315 = vld [vmem:[%s204 + $0x1a4] sm:$0xf]
        %v316 = vld [vmem:[%s204 + $0x1a8] sm:$0xf]
        %v317 = vld [vmem:[%s204 + $0x1ac] sm:$0xf]
        %v318 = vld [vmem:[%s204 + $0x1b0] sm:$0xf]
        %v319 = vld [vmem:[%s204 + $0x1b4] sm:$0x1]
        %v320 = vld [vmem:[%s204 + $0x1b8] sm:$0xf]
        %v321 = vld [vmem:[%s204 + $0x1bc] sm:$0xf]
        %v322 = vld [vmem:[%s204 + $0x1c0] sm:$0xf]
        %v323 = vld [vmem:[%s204 + $0x1c4] sm:$0xf]
        %v324 = vld [vmem:[%s204 + $0x1c8] sm:$0x1]
        %v325 = vld [vmem:[%s204 + $0x1cc] sm:$0xf]
        %v326 = vld [vmem:[%s204 + $0x1d0] sm:$0xf]
        %v327 = vld [vmem:[%s204 + $0x1d4] sm:$0xf]
        %v328 = vld [vmem:[%s204 + $0x1d8] sm:$0xf]
        %v329 = vld [vmem:[%s204 + $0x1dc] sm:$0x1]
        %v330 = vld [vmem:[%s204 + $0x1e0] sm:$0xf]
        %v331 = vld [vmem:[%s204 + $0x1e4] sm:$0xf]
        %v332 = vld [vmem:[%s204 + $0x1e8] sm:$0xf]
        %v333 = vld [vmem:[%s204 + $0x1ec] sm:$0xf]
        %v334 = vld [vmem:[%s204 + $0x1f0] sm:$0x1]
        %v335 = vld [vmem:[%s204 + $0x1f4] sm:$0xf]
        %v336 = vld [vmem:[%s204 + $0x1f8] sm:$0xf]
        %v337 = vld [vmem:[%s204 + $0x1fc] sm:$0xf]
        %v338 = vld [vmem:[%s204 + $0x200] sm:$0xf]
        %v339 = vld [vmem:[%s204 + $0x204] sm:$0x1]
        %v340 = vld [vmem:[%s204 + $0x208] sm:$0xf]
        %v341 = vld [vmem:[%s204 + $0x20c] sm:$0xf]
        %v342 = vld [vmem:[%s204 + $0x210] sm:$0xf]
        %v343 = vld [vmem:[%s204 + $0x214] sm:$0xf]
        %v344 = vld [vmem:[%s204 + $0x218] sm:$0x1]
        %v345 = vld [vmem:[%s204 + $0x21c] sm:$0xf]
        %v346 = vld [vmem:[%s204 + $0x220] sm:$0xf]
        %v347 = vld [vmem:[%s204 + $0x224] sm:$0xf]
        %v348 = vld [vmem:[%s204 + $0x228] sm:$0xf]
        %v349 = vld [vmem:[%s204 + $0x22c] sm:$0x1]
        %v350 = vld [vmem:[%s204 + $0x230] sm:$0xf]
        %v351 = vld [vmem:[%s204 + $0x234] sm:$0xf]
        %v352 = vld [vmem:[%s204 + $0x238] sm:$0xf]
        %v353 = vld [vmem:[%s204 + $0x23c] sm:$0xf]
        %v354 = vld [vmem:[%s204 + $0x240] sm:$0x1]
        %v355 = vld [vmem:[%s204 + $0x244] sm:$0xf]
        %v356 = vld [vmem:[%s204 + $0x248] sm:$0xf]
        %v357 = vld [vmem:[%s204 + $0x24c] sm:$0xf]
        %v358 = vld [vmem:[%s204 + $0x250] sm:$0xf]
        %v359 = vld [vmem:[%s204 + $0x254] sm:$0x1]
        %v360 = vld [vmem:[%s204 + $0x258] sm:$0xf]
        %v361 = vld [vmem:[%s204 + $0x25c] sm:$0xf]
        %v362 = vld [vmem:[%s204 + $0x260] sm:$0xf]
        %v363 = vld [vmem:[%s204 + $0x264] sm:$0xf]
        %v364 = vld [vmem:[%s204 + $0x268] sm:$0x1]
        %v365 = vld [vmem:[%s204 + $0x26c] sm:$0xf]
        %v366 = vld [vmem:[%s204 + $0x270] sm:$0xf]
        %v367 = vld [vmem:[%s204 + $0x274] sm:$0xf]
        %v368 = vld [vmem:[%s204 + $0x278] sm:$0xf]
        %v369 = vld [vmem:[%s204 + $0x27c] sm:$0x1]
        %v370 = vld [vmem:[%s204 + $0x280] sm:$0xf]
        %v371 = vld [vmem:[%s204 + $0x284] sm:$0xf]
        %v372 = vld [vmem:[%s204 + $0x288] sm:$0xf]
        %v373 = vld [vmem:[%s204 + $0x28c] sm:$0xf]
        %v374 = vld [vmem:[%s204 + $0x290] sm:$0x1]
        %v375 = vld [vmem:[%s204 + $0x294] sm:$0xf]
        %v376 = vld [vmem:[%s204 + $0x298] sm:$0xf]
        %v377 = vld [vmem:[%s204 + $0x29c] sm:$0xf]
        %v378 = vld [vmem:[%s204 + $0x2a0] sm:$0xf]
        %v379 = vld [vmem:[%s204 + $0x2a4] sm:$0x1]
        %v380 = vld [vmem:[%s208] sm:$0x3]
        %vm381 = vsmask.f32 3328
        %vm382 = vsmask.f32 7440
        %vm383 = vmor %vm381, %vm382
        %v385 = vshrl.u32 %v210, 16
        %v387 = vrot.slane %v385, 4
        %v388 = vshll.u32 %v210, 16
        %v390 = vrot.slane %v388, 5
        %v391 = vor.u32 %v387, %v390
        %v392 = vrot.slane %v391, 4
        %v394 = vshll.u32 %v211, 16
        %v396 = vrot.slane %v394, 5
        %v397 = vsel %vm383, %v392, %v396
        %v398 = vshrl.u32 %v211, 16
        %v400 = vrot.slane %v398, 4
        %v401 = vor.u32 %v400, %v396
        %v402 = vrot.slane %v401, 4
        %v404 = vshll.u32 %v212, 16
        %v406 = vrot.slane %v404, 5
        %v407 = vsel %vm383, %v402, %v406
        %v408 = vshrl.u32 %v212, 16
        %v410 = vrot.slane %v408, 4
        %v411 = vor.u32 %v410, %v406
        %v412 = vrot.slane %v411, 4
        %v414 = vshll.u32 %v213, 16
        %v416 = vrot.slane %v414, 5
        %v417 = vsel %vm383, %v412, %v416
        %v418 = vshrl.u32 %v213, 16
        %v420 = vrot.slane %v418, 4
        %v421 = vor.u32 %v420, %v416
        %v422 = vrot.slane %v421, 4
        %v424 = vshll.u32 %v214, 16
        %v426 = vrot.slane %v424, 5
        %v427 = vsel %vm383, %v422, %v426
        %v429 = vshrl.u32 %v215, 16
        %v431 = vrot.slane %v429, 4
        %v432 = vshll.u32 %v215, 16
        %v434 = vrot.slane %v432, 5
        %v435 = vor.u32 %v431, %v434
        %v436 = vrot.slane %v435, 4
        %v438 = vshll.u32 %v216, 16
        %v440 = vrot.slane %v438, 5
        %v441 = vsel %vm383, %v436, %v440
        %v442 = vshrl.u32 %v216, 16
        %v444 = vrot.slane %v442, 4
        %v445 = vor.u32 %v444, %v440
        %v446 = vrot.slane %v445, 4
        %v448 = vshll.u32 %v217, 16
        %v450 = vrot.slane %v448, 5
        %v451 = vsel %vm383, %v446, %v450
        %v452 = vshrl.u32 %v217, 16
        %v454 = vrot.slane %v452, 4
        %v455 = vor.u32 %v454, %v450
        %v456 = vrot.slane %v455, 4
        %v458 = vshll.u32 %v218, 16
        %v460 = vrot.slane %v458, 5
        %v461 = vsel %vm383, %v456, %v460
        %v462 = vshrl.u32 %v218, 16
        %v464 = vrot.slane %v462, 4
        %v465 = vor.u32 %v464, %v460
        %v466 = vrot.slane %v465, 4
        %v468 = vshll.u32 %v219, 16
        %v470 = vrot.slane %v468, 5
        %v471 = vsel %vm383, %v466, %v470
        %v473 = vshrl.u32 %v220, 16
        %v475 = vrot.slane %v473, 4
        %v476 = vshll.u32 %v220, 16
        %v478 = vrot.slane %v476, 5
        %v479 = vor.u32 %v475, %v478
        %v480 = vrot.slane %v479, 4
        %v482 = vshll.u32 %v221, 16
        %v484 = vrot.slane %v482, 5
        %v485 = vsel %vm383, %v480, %v484
        %v486 = vshrl.u32 %v221, 16
        %v488 = vrot.slane %v486, 4
        %v489 = vor.u32 %v488, %v484
        %v490 = vrot.slane %v489, 4
        %v492 = vshll.u32 %v222, 16
        %v494 = vrot.slane %v492, 5
        %v495 = vsel %vm383, %v490, %v494
        %v496 = vshrl.u32 %v222, 16
        %v498 = vrot.slane %v496, 4
        %v499 = vor.u32 %v498, %v494
        %v500 = vrot.slane %v499, 4
        %v502 = vshll.u32 %v223, 16
        %v504 = vrot.slane %v502, 5
        %v505 = vsel %vm383, %v500, %v504
        %v506 = vshrl.u32 %v223, 16
        %v508 = vrot.slane %v506, 4
        %v509 = vor.u32 %v508, %v504
        %v510 = vrot.slane %v509, 4
        %v512 = vshll.u32 %v224, 16
        %v514 = vrot.slane %v512, 5
        %v515 = vsel %vm383, %v510, %v514
        %v517 = vshrl.u32 %v225, 16
        %v519 = vrot.slane %v517, 4
        %v520 = vshll.u32 %v225, 16
        %v522 = vrot.slane %v520, 5
        %v523 = vor.u32 %v519, %v522
        %v524 = vrot.slane %v523, 4
        %v526 = vshll.u32 %v226, 16
        %v528 = vrot.slane %v526, 5
        %v529 = vsel %vm383, %v524, %v528
        %v530 = vshrl.u32 %v226, 16
        %v532 = vrot.slane %v530, 4
        %v533 = vor.u32 %v532, %v528
        %v534 = vrot.slane %v533, 4
        %v536 = vshll.u32 %v227, 16
        %v538 = vrot.slane %v536, 5
        %v539 = vsel %vm383, %v534, %v538
        %v540 = vshrl.u32 %v227, 16
        %v542 = vrot.slane %v540, 4
        %v543 = vor.u32 %v542, %v538
        %v544 = vrot.slane %v543, 4
        %v546 = vshll.u32 %v228, 16
        %v548 = vrot.slane %v546, 5
        %v549 = vsel %vm383, %v544, %v548
        %v550 = vshrl.u32 %v228, 16
        %v552 = vrot.slane %v550, 4
        %v553 = vor.u32 %v552, %v548
        %v554 = vrot.slane %v553, 4
        %v556 = vshll.u32 %v229, 16
        %v558 = vrot.slane %v556, 5
        %v559 = vsel %vm383, %v554, %v558
        %v561 = vshrl.u32 %v230, 16
        %v563 = vrot.slane %v561, 4
        %v564 = vshll.u32 %v230, 16
        %v566 = vrot.slane %v564, 5
        %v567 = vor.u32 %v563, %v566
        %v568 = vrot.slane %v567, 4
        %v570 = vshll.u32 %v231, 16
        %v572 = vrot.slane %v570, 5
        %v573 = vsel %vm383, %v568, %v572
        %v574 = vshrl.u32 %v231, 16
        %v576 = vrot.slane %v574, 4
        %v577 = vor.u32 %v576, %v572
        %v578 = vrot.slane %v577, 4
        %v580 = vshll.u32 %v232, 16
        %v582 = vrot.slane %v580, 5
        %v583 = vsel %vm383, %v578, %v582
        %v584 = vshrl.u32 %v232, 16
        %v586 = vrot.slane %v584, 4
        %v587 = vor.u32 %v586, %v582
        %v588 = vrot.slane %v587, 4
        %v590 = vshll.u32 %v233, 16
        %v592 = vrot.slane %v590, 5
        %v593 = vsel %vm383, %v588, %v592
        %v594 = vshrl.u32 %v233, 16
        %v596 = vrot.slane %v594, 4
        %v597 = vor.u32 %v596, %v592
        %v598 = vrot.slane %v597, 4
        %v600 = vshll.u32 %v234, 16
        %v602 = vrot.slane %v600, 5
        %v603 = vsel %vm383, %v598, %v602
        %v605 = vshrl.u32 %v235, 16
        %v607 = vrot.slane %v605, 4
        %v608 = vshll.u32 %v235, 16
        %v610 = vrot.slane %v608, 5
        %v611 = vor.u32 %v607, %v610
        %v612 = vrot.slane %v611, 4
        %v614 = vshll.u32 %v236, 16
        %v616 = vrot.slane %v614, 5
        %v617 = vsel %vm383, %v612, %v616
        %v618 = vshrl.u32 %v236, 16
        %v620 = vrot.slane %v618, 4
        %v621 = vor.u32 %v620, %v616
        %v622 = vrot.slane %v621, 4
        %v624 = vshll.u32 %v237, 16
        %v626 = vrot.slane %v624, 5
        %v627 = vsel %vm383, %v622, %v626
        %v628 = vshrl.u32 %v237, 16
        %v630 = vrot.slane %v628, 4
        %v631 = vor.u32 %v630, %v626
        %v632 = vrot.slane %v631, 4
        %v634 = vshll.u32 %v238, 16
        %v636 = vrot.slane %v634, 5
        %v637 = vsel %vm383, %v632, %v636
        %v638 = vshrl.u32 %v238, 16
        %v640 = vrot.slane %v638, 4
        %v641 = vor.u32 %v640, %v636
        %v642 = vrot.slane %v641, 4
        %v644 = vshll.u32 %v239, 16
        %v646 = vrot.slane %v644, 5
        %v647 = vsel %vm383, %v642, %v646
        %v649 = vshrl.u32 %v240, 16
        %v651 = vrot.slane %v649, 4
        %v652 = vshll.u32 %v240, 16
        %v654 = vrot.slane %v652, 5
        %v655 = vor.u32 %v651, %v654
        %v656 = vrot.slane %v655, 4
        %v658 = vshll.u32 %v241, 16
        %v660 = vrot.slane %v658, 5
        %v661 = vsel %vm383, %v656, %v660
        %v662 = vshrl.u32 %v241, 16
        %v664 = vrot.slane %v662, 4
        %v665 = vor.u32 %v664, %v660
        %v666 = vrot.slane %v665, 4
        %v668 = vshll.u32 %v242, 16
        %v670 = vrot.slane %v668, 5
        %v671 = vsel %vm383, %v666, %v670
        %v672 = vshrl.u32 %v242, 16
        %v674 = vrot.slane %v672, 4
        %v675 = vor.u32 %v674, %v670
        %v676 = vrot.slane %v675, 4
        %v678 = vshll.u32 %v243, 16
        %v680 = vrot.slane %v678, 5
        %v681 = vsel %vm383, %v676, %v680
        %v682 = vshrl.u32 %v243, 16
        %v684 = vrot.slane %v682, 4
        %v685 = vor.u32 %v684, %v680
        %v686 = vrot.slane %v685, 4
        %v688 = vshll.u32 %v244, 16
        %v690 = vrot.slane %v688, 5
        %v691 = vsel %vm383, %v686, %v690
        %v693 = vshrl.u32 %v245, 16
        %v695 = vrot.slane %v693, 4
        %v696 = vshll.u32 %v245, 16
        %v698 = vrot.slane %v696, 5
        %v699 = vor.u32 %v695, %v698
        %v700 = vrot.slane %v699, 4
        %v702 = vshll.u32 %v246, 16
        %v704 = vrot.slane %v702, 5
        %v705 = vsel %vm383, %v700, %v704
        %v706 = vshrl.u32 %v246, 16
        %v708 = vrot.slane %v706, 4
        %v709 = vor.u32 %v708, %v704
        %v710 = vrot.slane %v709, 4
        %v712 = vshll.u32 %v247, 16
        %v714 = vrot.slane %v712, 5
        %v715 = vsel %vm383, %v710, %v714
        %v716 = vshrl.u32 %v247, 16
        %v718 = vrot.slane %v716, 4
        %v719 = vor.u32 %v718, %v714
        %v720 = vrot.slane %v719, 4
        %v722 = vshll.u32 %v248, 16
        %v724 = vrot.slane %v722, 5
        %v725 = vsel %vm383, %v720, %v724
        %v726 = vshrl.u32 %v248, 16
        %v728 = vrot.slane %v726, 4
        %v729 = vor.u32 %v728, %v724
        %v730 = vrot.slane %v729, 4
        %v732 = vshll.u32 %v249, 16
        %v734 = vrot.slane %v732, 5
        %v735 = vsel %vm383, %v730, %v734
        %v737 = vshrl.u32 %v250, 16
        %v739 = vrot.slane %v737, 4
        %v740 = vshll.u32 %v250, 16
        %v742 = vrot.slane %v740, 5
        %v743 = vor.u32 %v739, %v742
        %v744 = vrot.slane %v743, 4
        %v746 = vshll.u32 %v251, 16
        %v748 = vrot.slane %v746, 5
        %v749 = vsel %vm383, %v744, %v748
        %v750 = vshrl.u32 %v251, 16
        %v752 = vrot.slane %v750, 4
        %v753 = vor.u32 %v752, %v748
        %v754 = vrot.slane %v753, 4
        %v756 = vshll.u32 %v252, 16
        %v758 = vrot.slane %v756, 5
        %v759 = vsel %vm383, %v754, %v758
        %v760 = vshrl.u32 %v252, 16
        %v762 = vrot.slane %v760, 4
        %v763 = vor.u32 %v762, %v758
        %v764 = vrot.slane %v763, 4
        %v766 = vshll.u32 %v253, 16
        %v768 = vrot.slane %v766, 5
        %v769 = vsel %vm383, %v764, %v768
        %v770 = vshrl.u32 %v253, 16
        %v772 = vrot.slane %v770, 4
        %v773 = vor.u32 %v772, %v768
        %v774 = vrot.slane %v773, 4
        %v776 = vshll.u32 %v254, 16
        %v778 = vrot.slane %v776, 5
        %v779 = vsel %vm383, %v774, %v778
        %v781 = vshrl.u32 %v255, 16
        %v783 = vrot.slane %v781, 4
        %v784 = vshll.u32 %v255, 16
        %v786 = vrot.slane %v784, 5
        %v787 = vor.u32 %v783, %v786
        %v788 = vrot.slane %v787, 4
        %v790 = vshll.u32 %v256, 16
        %v792 = vrot.slane %v790, 5
        %v793 = vsel %vm383, %v788, %v792
        %v794 = vshrl.u32 %v256, 16
        %v796 = vrot.slane %v794, 4
        %v797 = vor.u32 %v796, %v792
        %v798 = vrot.slane %v797, 4
        %v800 = vshll.u32 %v257, 16
        %v802 = vrot.slane %v800, 5
        %v803 = vsel %vm383, %v798, %v802
        %v804 = vshrl.u32 %v257, 16
        %v806 = vrot.slane %v804, 4
        %v807 = vor.u32 %v806, %v802
        %v808 = vrot.slane %v807, 4
        %v810 = vshll.u32 %v258, 16
        %v812 = vrot.slane %v810, 5
        %v813 = vsel %vm383, %v808, %v812
        %v814 = vshrl.u32 %v258, 16
        %v816 = vrot.slane %v814, 4
        %v817 = vor.u32 %v816, %v812
        %v818 = vrot.slane %v817, 4
        %v820 = vshll.u32 %v259, 16
        %v822 = vrot.slane %v820, 5
        %v823 = vsel %vm383, %v818, %v822
        %v825 = vshrl.u32 %v260, 16
        %v827 = vrot.slane %v825, 4
        %v828 = vshll.u32 %v260, 16
        %v830 = vrot.slane %v828, 5
        %v831 = vor.u32 %v827, %v830
        %v832 = vrot.slane %v831, 4
        %v834 = vshll.u32 %v261, 16
        %v836 = vrot.slane %v834, 5
        %v837 = vsel %vm383, %v832, %v836
        %v838 = vshrl.u32 %v261, 16
        %v840 = vrot.slane %v838, 4
        %v841 = vor.u32 %v840, %v836
        %v842 = vrot.slane %v841, 4
        %v844 = vshll.u32 %v262, 16
        %v846 = vrot.slane %v844, 5
        %v847 = vsel %vm383, %v842, %v846
        %v848 = vshrl.u32 %v262, 16
        %v850 = vrot.slane %v848, 4
        %v851 = vor.u32 %v850, %v846
        %v852 = vrot.slane %v851, 4
        %v854 = vshll.u32 %v263, 16
        %v856 = vrot.slane %v854, 5
        %v857 = vsel %vm383, %v852, %v856
        %v858 = vshrl.u32 %v263, 16
        %v860 = vrot.slane %v858, 4
        %v861 = vor.u32 %v860, %v856
        %v862 = vrot.slane %v861, 4
        %v864 = vshll.u32 %v264, 16
        %v866 = vrot.slane %v864, 5
        %v867 = vsel %vm383, %v862, %v866
        %v869 = vshrl.u32 %v265, 16
        %v871 = vrot.slane %v869, 4
        %v872 = vshll.u32 %v265, 16
        %v874 = vrot.slane %v872, 5
        %v875 = vor.u32 %v871, %v874
        %v876 = vrot.slane %v875, 4
        %v878 = vshll.u32 %v266, 16
        %v880 = vrot.slane %v878, 5
        %v881 = vsel %vm383, %v876, %v880
        %v882 = vshrl.u32 %v266, 16
        %v884 = vrot.slane %v882, 4
        %v885 = vor.u32 %v884, %v880
        %v886 = vrot.slane %v885, 4
        %v888 = vshll.u32 %v267, 16
        %v890 = vrot.slane %v888, 5
        %v891 = vsel %vm383, %v886, %v890
        %v892 = vshrl.u32 %v267, 16
        %v894 = vrot.slane %v892, 4
        %v895 = vor.u32 %v894, %v890
        %v896 = vrot.slane %v895, 4
        %v898 = vshll.u32 %v268, 16
        %v900 = vrot.slane %v898, 5
        %v901 = vsel %vm383, %v896, %v900
        %v902 = vshrl.u32 %v268, 16
        %v904 = vrot.slane %v902, 4
        %v905 = vor.u32 %v904, %v900
        %v906 = vrot.slane %v905, 4
        %v908 = vshll.u32 %v269, 16
        %v910 = vrot.slane %v908, 5
        %v911 = vsel %vm383, %v906, %v910
        %v913 = vshrl.u32 %v270, 16
        %v915 = vrot.slane %v913, 4
        %v916 = vshll.u32 %v270, 16
        %v918 = vrot.slane %v916, 5
        %v919 = vor.u32 %v915, %v918
        %v920 = vrot.slane %v919, 4
        %v922 = vshll.u32 %v271, 16
        %v924 = vrot.slane %v922, 5
        %v925 = vsel %vm383, %v920, %v924
        %v926 = vshrl.u32 %v271, 16
        %v928 = vrot.slane %v926, 4
        %v929 = vor.u32 %v928, %v924
        %v930 = vrot.slane %v929, 4
        %v932 = vshll.u32 %v272, 16
        %v934 = vrot.slane %v932, 5
        %v935 = vsel %vm383, %v930, %v934
        %v936 = vshrl.u32 %v272, 16
        %v938 = vrot.slane %v936, 4
        %v939 = vor.u32 %v938, %v934
        %v940 = vrot.slane %v939, 4
        %v942 = vshll.u32 %v273, 16
        %v944 = vrot.slane %v942, 5
        %v945 = vsel %vm383, %v940, %v944
        %v946 = vshrl.u32 %v273, 16
        %v948 = vrot.slane %v946, 4
        %v949 = vor.u32 %v948, %v944
        %v950 = vrot.slane %v949, 4
        %v952 = vshll.u32 %v274, 16
        %v954 = vrot.slane %v952, 5
        %v955 = vsel %vm383, %v950, %v954
        %v957 = vshrl.u32 %v275, 16
        %v959 = vrot.slane %v957, 4
        %v960 = vshll.u32 %v275, 16
        %v962 = vrot.slane %v960, 5
        %v963 = vor.u32 %v959, %v962
        %v964 = vrot.slane %v963, 4
        %v966 = vshll.u32 %v276, 16
        %v968 = vrot.slane %v966, 5
        %v969 = vsel %vm383, %v964, %v968
        %v970 = vshrl.u32 %v276, 16
        %v972 = vrot.slane %v970, 4
        %v973 = vor.u32 %v972, %v968
        %v974 = vrot.slane %v973, 4
        %v976 = vshll.u32 %v277, 16
        %v978 = vrot.slane %v976, 5
        %v979 = vsel %vm383, %v974, %v978
        %v980 = vshrl.u32 %v277, 16
        %v982 = vrot.slane %v980, 4
        %v983 = vor.u32 %v982, %v978
        %v984 = vrot.slane %v983, 4
        %v986 = vshll.u32 %v278, 16
        %v988 = vrot.slane %v986, 5
        %v989 = vsel %vm383, %v984, %v988
        %v990 = vshrl.u32 %v278, 16
        %v992 = vrot.slane %v990, 4
        %v993 = vor.u32 %v992, %v988
        %v994 = vrot.slane %v993, 4
        %v996 = vshll.u32 %v279, 16
        %v998 = vrot.slane %v996, 5
        %v999 = vsel %vm383, %v994, %v998
        %v1001 = vshrl.u32 %v280, 16
        %v1003 = vrot.slane %v1001, 4
        %v1004 = vshll.u32 %v280, 16
        %v1006 = vrot.slane %v1004, 5
        %v1007 = vor.u32 %v1003, %v1006
        %v1008 = vrot.slane %v1007, 4
        %v1010 = vshll.u32 %v281, 16
        %v1012 = vrot.slane %v1010, 5
        %v1013 = vsel %vm383, %v1008, %v1012
        %v1014 = vshrl.u32 %v281, 16
        %v1016 = vrot.slane %v1014, 4
        %v1017 = vor.u32 %v1016, %v1012
        %v1018 = vrot.slane %v1017, 4
        %v1020 = vshll.u32 %v282, 16
        %v1022 = vrot.slane %v1020, 5
        %v1023 = vsel %vm383, %v1018, %v1022
        %v1024 = vshrl.u32 %v282, 16
        %v1026 = vrot.slane %v1024, 4
        %v1027 = vor.u32 %v1026, %v1022
        %v1028 = vrot.slane %v1027, 4
        %v1030 = vshll.u32 %v283, 16
        %v1032 = vrot.slane %v1030, 5
        %v1033 = vsel %vm383, %v1028, %v1032
        %v1034 = vshrl.u32 %v283, 16
        %v1036 = vrot.slane %v1034, 4
        %v1037 = vor.u32 %v1036, %v1032
        %v1038 = vrot.slane %v1037, 4
        %v1040 = vshll.u32 %v284, 16
        %v1042 = vrot.slane %v1040, 5
        %v1043 = vsel %vm383, %v1038, %v1042
        %v1045 = vshrl.u32 %v285, 16
        %v1047 = vrot.slane %v1045, 4
        %v1048 = vshll.u32 %v285, 16
        %v1050 = vrot.slane %v1048, 5
        %v1051 = vor.u32 %v1047, %v1050
        %v1052 = vrot.slane %v1051, 4
        %v1054 = vshll.u32 %v286, 16
        %v1056 = vrot.slane %v1054, 5
        %v1057 = vsel %vm383, %v1052, %v1056
        %v1058 = vshrl.u32 %v286, 16
        %v1060 = vrot.slane %v1058, 4
        %v1061 = vor.u32 %v1060, %v1056
        %v1062 = vrot.slane %v1061, 4
        %v1064 = vshll.u32 %v287, 16
        %v1066 = vrot.slane %v1064, 5
        %v1067 = vsel %vm383, %v1062, %v1066
        %v1068 = vshrl.u32 %v287, 16
        %v1070 = vrot.slane %v1068, 4
        %v1071 = vor.u32 %v1070, %v1066
        %v1072 = vrot.slane %v1071, 4
        %v1074 = vshll.u32 %v288, 16
        %v1076 = vrot.slane %v1074, 5
        %v1077 = vsel %vm383, %v1072, %v1076
        %v1078 = vshrl.u32 %v288, 16
        %v1080 = vrot.slane %v1078, 4
        %v1081 = vor.u32 %v1080, %v1076
        %v1082 = vrot.slane %v1081, 4
        %v1084 = vshll.u32 %v289, 16
        %v1086 = vrot.slane %v1084, 5
        %v1087 = vsel %vm383, %v1082, %v1086
        %v1089 = vshrl.u32 %v290, 16
        %v1091 = vrot.slane %v1089, 4
        %v1092 = vshll.u32 %v290, 16
        %v1094 = vrot.slane %v1092, 5
        %v1095 = vor.u32 %v1091, %v1094
        %v1096 = vrot.slane %v1095, 4
        %v1098 = vshll.u32 %v291, 16
        %v1100 = vrot.slane %v1098, 5
        %v1101 = vsel %vm383, %v1096, %v1100
        %v1102 = vshrl.u32 %v291, 16
        %v1104 = vrot.slane %v1102, 4
        %v1105 = vor.u32 %v1104, %v1100
        %v1106 = vrot.slane %v1105, 4
        %v1108 = vshll.u32 %v292, 16
        %v1110 = vrot.slane %v1108, 5
        %v1111 = vsel %vm383, %v1106, %v1110
        %v1112 = vshrl.u32 %v292, 16
        %v1114 = vrot.slane %v1112, 4
        %v1115 = vor.u32 %v1114, %v1110
        %v1116 = vrot.slane %v1115, 4
        %v1118 = vshll.u32 %v293, 16
        %v1120 = vrot.slane %v1118, 5
        %v1121 = vsel %vm383, %v1116, %v1120
        %v1122 = vshrl.u32 %v293, 16
        %v1124 = vrot.slane %v1122, 4
        %v1125 = vor.u32 %v1124, %v1120
        %v1126 = vrot.slane %v1125, 4
        %v1128 = vshll.u32 %v294, 16
        %v1130 = vrot.slane %v1128, 5
        %v1131 = vsel %vm383, %v1126, %v1130
        %v1133 = vshrl.u32 %v295, 16
        %v1135 = vrot.slane %v1133, 4
        %v1136 = vshll.u32 %v295, 16
        %v1138 = vrot.slane %v1136, 5
        %v1139 = vor.u32 %v1135, %v1138
        %v1140 = vrot.slane %v1139, 4
        %v1142 = vshll.u32 %v296, 16
        %v1144 = vrot.slane %v1142, 5
        %v1145 = vsel %vm383, %v1140, %v1144
        %v1146 = vshrl.u32 %v296, 16
        %v1148 = vrot.slane %v1146, 4
        %v1149 = vor.u32 %v1148, %v1144
        %v1150 = vrot.slane %v1149, 4
        %v1152 = vshll.u32 %v297, 16
        %v1154 = vrot.slane %v1152, 5
        %v1155 = vsel %vm383, %v1150, %v1154
        %v1156 = vshrl.u32 %v297, 16
        %v1158 = vrot.slane %v1156, 4
        %v1159 = vor.u32 %v1158, %v1154
        %v1160 = vrot.slane %v1159, 4
        %v1162 = vshll.u32 %v298, 16
        %v1164 = vrot.slane %v1162, 5
        %v1165 = vsel %vm383, %v1160, %v1164
        %v1166 = vshrl.u32 %v298, 16
        %v1168 = vrot.slane %v1166, 4
        %v1169 = vor.u32 %v1168, %v1164
        %v1170 = vrot.slane %v1169, 4
        %v1172 = vshll.u32 %v299, 16
        %v1174 = vrot.slane %v1172, 5
        %v1175 = vsel %vm383, %v1170, %v1174
        %v1177 = vshrl.u32 %v300, 16
        %v1179 = vrot.slane %v1177, 4
        %v1180 = vshll.u32 %v300, 16
        %v1182 = vrot.slane %v1180, 5
        %v1183 = vor.u32 %v1179, %v1182
        %v1184 = vrot.slane %v1183, 4
        %v1186 = vshll.u32 %v301, 16
        %v1188 = vrot.slane %v1186, 5
        %v1189 = vsel %vm383, %v1184, %v1188
        %v1190 = vshrl.u32 %v301, 16
        %v1192 = vrot.slane %v1190, 4
        %v1193 = vor.u32 %v1192, %v1188
        %v1194 = vrot.slane %v1193, 4
        %v1196 = vshll.u32 %v302, 16
        %v1198 = vrot.slane %v1196, 5
        %v1199 = vsel %vm383, %v1194, %v1198
        %v1200 = vshrl.u32 %v302, 16
        %v1202 = vrot.slane %v1200, 4
        %v1203 = vor.u32 %v1202, %v1198
        %v1204 = vrot.slane %v1203, 4
        %v1206 = vshll.u32 %v303, 16
        %v1208 = vrot.slane %v1206, 5
        %v1209 = vsel %vm383, %v1204, %v1208
        %v1210 = vshrl.u32 %v303, 16
        %v1212 = vrot.slane %v1210, 4
        %v1213 = vor.u32 %v1212, %v1208
        %v1214 = vrot.slane %v1213, 4
        %v1216 = vshll.u32 %v304, 16
        %v1218 = vrot.slane %v1216, 5
        %v1219 = vsel %vm383, %v1214, %v1218
        %v1221 = vshrl.u32 %v305, 16
        %v1223 = vrot.slane %v1221, 4
        %v1224 = vshll.u32 %v305, 16
        %v1226 = vrot.slane %v1224, 5
        %v1227 = vor.u32 %v1223, %v1226
        %v1228 = vrot.slane %v1227, 4
        %v1230 = vshll.u32 %v306, 16
        %v1232 = vrot.slane %v1230, 5
        %v1233 = vsel %vm383, %v1228, %v1232
        %v1234 = vshrl.u32 %v306, 16
        %v1236 = vrot.slane %v1234, 4
        %v1237 = vor.u32 %v1236, %v1232
        %v1238 = vrot.slane %v1237, 4
        %v1240 = vshll.u32 %v307, 16
        %v1242 = vrot.slane %v1240, 5
        %v1243 = vsel %vm383, %v1238, %v1242
        %v1244 = vshrl.u32 %v307, 16
        %v1246 = vrot.slane %v1244, 4
        %v1247 = vor.u32 %v1246, %v1242
        %v1248 = vrot.slane %v1247, 4
        %v1250 = vshll.u32 %v308, 16
        %v1252 = vrot.slane %v1250, 5
        %v1253 = vsel %vm383, %v1248, %v1252
        %v1254 = vshrl.u32 %v308, 16
        %v1256 = vrot.slane %v1254, 4
        %v1257 = vor.u32 %v1256, %v1252
        %v1258 = vrot.slane %v1257, 4
        %v1260 = vshll.u32 %v309, 16
        %v1262 = vrot.slane %v1260, 5
        %v1263 = vsel %vm383, %v1258, %v1262
        %v1265 = vshrl.u32 %v310, 16
        %v1267 = vrot.slane %v1265, 4
        %v1268 = vshll.u32 %v310, 16
        %v1270 = vrot.slane %v1268, 5
        %v1271 = vor.u32 %v1267, %v1270
        %v1272 = vrot.slane %v1271, 4
        %v1274 = vshll.u32 %v311, 16
        %v1276 = vrot.slane %v1274, 5
        %v1277 = vsel %vm383, %v1272, %v1276
        %v1278 = vshrl.u32 %v311, 16
        %v1280 = vrot.slane %v1278, 4
        %v1281 = vor.u32 %v1280, %v1276
        %v1282 = vrot.slane %v1281, 4
        %v1284 = vshll.u32 %v312, 16
        %v1286 = vrot.slane %v1284, 5
        %v1287 = vsel %vm383, %v1282, %v1286
        %v1288 = vshrl.u32 %v312, 16
        %v1290 = vrot.slane %v1288, 4
        %v1291 = vor.u32 %v1290, %v1286
        %v1292 = vrot.slane %v1291, 4
        %v1294 = vshll.u32 %v313, 16
        %v1296 = vrot.slane %v1294, 5
        %v1297 = vsel %vm383, %v1292, %v1296
        %v1298 = vshrl.u32 %v313, 16
        %v1300 = vrot.slane %v1298, 4
        %v1301 = vor.u32 %v1300, %v1296
        %v1302 = vrot.slane %v1301, 4
        %v1304 = vshll.u32 %v314, 16
        %v1306 = vrot.slane %v1304, 5
        %v1307 = vsel %vm383, %v1302, %v1306
        %v1309 = vshrl.u32 %v315, 16
        %v1311 = vrot.slane %v1309, 4
        %v1312 = vshll.u32 %v315, 16
        %v1314 = vrot.slane %v1312, 5
        %v1315 = vor.u32 %v1311, %v1314
        %v1316 = vrot.slane %v1315, 4
        %v1318 = vshll.u32 %v316, 16
        %v1320 = vrot.slane %v1318, 5
        %v1321 = vsel %vm383, %v1316, %v1320
        %v1322 = vshrl.u32 %v316, 16
        %v1324 = vrot.slane %v1322, 4
        %v1325 = vor.u32 %v1324, %v1320
        %v1326 = vrot.slane %v1325, 4
        %v1328 = vshll.u32 %v317, 16
        %v1330 = vrot.slane %v1328, 5
        %v1331 = vsel %vm383, %v1326, %v1330
        %v1332 = vshrl.u32 %v317, 16
        %v1334 = vrot.slane %v1332, 4
        %v1335 = vor.u32 %v1334, %v1330
        %v1336 = vrot.slane %v1335, 4
        %v1338 = vshll.u32 %v318, 16
        %v1340 = vrot.slane %v1338, 5
        %v1341 = vsel %vm383, %v1336, %v1340
        %v1342 = vshrl.u32 %v318, 16
        %v1344 = vrot.slane %v1342, 4
        %v1345 = vor.u32 %v1344, %v1340
        %v1346 = vrot.slane %v1345, 4
        %v1348 = vshll.u32 %v319, 16
        %v1350 = vrot.slane %v1348, 5
        %v1351 = vsel %vm383, %v1346, %v1350
        %v1353 = vshrl.u32 %v320, 16
        %v1355 = vrot.slane %v1353, 4
        %v1356 = vshll.u32 %v320, 16
        %v1358 = vrot.slane %v1356, 5
        %v1359 = vor.u32 %v1355, %v1358
        %v1360 = vrot.slane %v1359, 4
        %v1362 = vshll.u32 %v321, 16
        %v1364 = vrot.slane %v1362, 5
        %v1365 = vsel %vm383, %v1360, %v1364
        %v1366 = vshrl.u32 %v321, 16
        %v1368 = vrot.slane %v1366, 4
        %v1369 = vor.u32 %v1368, %v1364
        %v1370 = vrot.slane %v1369, 4
        %v1372 = vshll.u32 %v322, 16
        %v1374 = vrot.slane %v1372, 5
        %v1375 = vsel %vm383, %v1370, %v1374
        %v1376 = vshrl.u32 %v322, 16
        %v1378 = vrot.slane %v1376, 4
        %v1379 = vor.u32 %v1378, %v1374
        %v1380 = vrot.slane %v1379, 4
        %v1382 = vshll.u32 %v323, 16
        %v1384 = vrot.slane %v1382, 5
        %v1385 = vsel %vm383, %v1380, %v1384
        %v1386 = vshrl.u32 %v323, 16
        %v1388 = vrot.slane %v1386, 4
        %v1389 = vor.u32 %v1388, %v1384
        %v1390 = vrot.slane %v1389, 4
        %v1392 = vshll.u32 %v324, 16
        %v1394 = vrot.slane %v1392, 5
        %v1395 = vsel %vm383, %v1390, %v1394
        %v1397 = vshrl.u32 %v325, 16
        %v1399 = vrot.slane %v1397, 4
        %v1400 = vshll.u32 %v325, 16
        %v1402 = vrot.slane %v1400, 5
        %v1403 = vor.u32 %v1399, %v1402
        %v1404 = vrot.slane %v1403, 4
        %v1406 = vshll.u32 %v326, 16
        %v1408 = vrot.slane %v1406, 5
        %v1409 = vsel %vm383, %v1404, %v1408
        %v1410 = vshrl.u32 %v326, 16
        %v1412 = vrot.slane %v1410, 4
        %v1413 = vor.u32 %v1412, %v1408
        %v1414 = vrot.slane %v1413, 4
        %v1416 = vshll.u32 %v327, 16
        %v1418 = vrot.slane %v1416, 5
        %v1419 = vsel %vm383, %v1414, %v1418
        %v1420 = vshrl.u32 %v327, 16
        %v1422 = vrot.slane %v1420, 4
        %v1423 = vor.u32 %v1422, %v1418
        %v1424 = vrot.slane %v1423, 4
        %v1426 = vshll.u32 %v328, 16
        %v1428 = vrot.slane %v1426, 5
        %v1429 = vsel %vm383, %v1424, %v1428
        %v1430 = vshrl.u32 %v328, 16
        %v1432 = vrot.slane %v1430, 4
        %v1433 = vor.u32 %v1432, %v1428
        %v1434 = vrot.slane %v1433, 4
        %v1436 = vshll.u32 %v329, 16
        %v1438 = vrot.slane %v1436, 5
        %v1439 = vsel %vm383, %v1434, %v1438
        %v1441 = vshrl.u32 %v330, 16
        %v1443 = vrot.slane %v1441, 4
        %v1444 = vshll.u32 %v330, 16
        %v1446 = vrot.slane %v1444, 5
        %v1447 = vor.u32 %v1443, %v1446
        %v1448 = vrot.slane %v1447, 4
        %v1450 = vshll.u32 %v331, 16
        %v1452 = vrot.slane %v1450, 5
        %v1453 = vsel %vm383, %v1448, %v1452
        %v1454 = vshrl.u32 %v331, 16
        %v1456 = vrot.slane %v1454, 4
        %v1457 = vor.u32 %v1456, %v1452
        %v1458 = vrot.slane %v1457, 4
        %v1460 = vshll.u32 %v332, 16
        %v1462 = vrot.slane %v1460, 5
        %v1463 = vsel %vm383, %v1458, %v1462
        %v1464 = vshrl.u32 %v332, 16
        %v1466 = vrot.slane %v1464, 4
        %v1467 = vor.u32 %v1466, %v1462
        %v1468 = vrot.slane %v1467, 4
        %v1470 = vshll.u32 %v333, 16
        %v1472 = vrot.slane %v1470, 5
        %v1473 = vsel %vm383, %v1468, %v1472
        %v1474 = vshrl.u32 %v333, 16
        %v1476 = vrot.slane %v1474, 4
        %v1477 = vor.u32 %v1476, %v1472
        %v1478 = vrot.slane %v1477, 4
        %v1480 = vshll.u32 %v334, 16
        %v1482 = vrot.slane %v1480, 5
        %v1483 = vsel %vm383, %v1478, %v1482
        %v1485 = vshrl.u32 %v335, 16
        %v1487 = vrot.slane %v1485, 4
        %v1488 = vshll.u32 %v335, 16
        %v1490 = vrot.slane %v1488, 5
        %v1491 = vor.u32 %v1487, %v1490
        %v1492 = vrot.slane %v1491, 4
        %v1494 = vshll.u32 %v336, 16
        %v1496 = vrot.slane %v1494, 5
        %v1497 = vsel %vm383, %v1492, %v1496
        %v1498 = vshrl.u32 %v336, 16
        %v1500 = vrot.slane %v1498, 4
        %v1501 = vor.u32 %v1500, %v1496
        %v1502 = vrot.slane %v1501, 4
        %v1504 = vshll.u32 %v337, 16
        %v1506 = vrot.slane %v1504, 5
        %v1507 = vsel %vm383, %v1502, %v1506
        %v1508 = vshrl.u32 %v337, 16
        %v1510 = vrot.slane %v1508, 4
        %v1511 = vor.u32 %v1510, %v1506
        %v1512 = vrot.slane %v1511, 4
        %v1514 = vshll.u32 %v338, 16
        %v1516 = vrot.slane %v1514, 5
        %v1517 = vsel %vm383, %v1512, %v1516
        %v1518 = vshrl.u32 %v338, 16
        %v1520 = vrot.slane %v1518, 4
        %v1521 = vor.u32 %v1520, %v1516
        %v1522 = vrot.slane %v1521, 4
        %v1524 = vshll.u32 %v339, 16
        %v1526 = vrot.slane %v1524, 5
        %v1527 = vsel %vm383, %v1522, %v1526
        %v1529 = vshrl.u32 %v340, 16
        %v1531 = vrot.slane %v1529, 4
        %v1532 = vshll.u32 %v340, 16
        %v1534 = vrot.slane %v1532, 5
        %v1535 = vor.u32 %v1531, %v1534
        %v1536 = vrot.slane %v1535, 4
        %v1538 = vshll.u32 %v341, 16
        %v1540 = vrot.slane %v1538, 5
        %v1541 = vsel %vm383, %v1536, %v1540
        %v1542 = vshrl.u32 %v341, 16
        %v1544 = vrot.slane %v1542, 4
        %v1545 = vor.u32 %v1544, %v1540
        %v1546 = vrot.slane %v1545, 4
        %v1548 = vshll.u32 %v342, 16
        %v1550 = vrot.slane %v1548, 5
        %v1551 = vsel %vm383, %v1546, %v1550
        %v1552 = vshrl.u32 %v342, 16
        %v1554 = vrot.slane %v1552, 4
        %v1555 = vor.u32 %v1554, %v1550
        %v1556 = vrot.slane %v1555, 4
        %v1558 = vshll.u32 %v343, 16
        %v1560 = vrot.slane %v1558, 5
        %v1561 = vsel %vm383, %v1556, %v1560
        %v1562 = vshrl.u32 %v343, 16
        %v1564 = vrot.slane %v1562, 4
        %v1565 = vor.u32 %v1564, %v1560
        %v1566 = vrot.slane %v1565, 4
        %v1568 = vshll.u32 %v344, 16
        %v1570 = vrot.slane %v1568, 5
        %v1571 = vsel %vm383, %v1566, %v1570
        %v1573 = vshrl.u32 %v345, 16
        %v1575 = vrot.slane %v1573, 4
        %v1576 = vshll.u32 %v345, 16
        %v1578 = vrot.slane %v1576, 5
        %v1579 = vor.u32 %v1575, %v1578
        %v1580 = vrot.slane %v1579, 4
        %v1582 = vshll.u32 %v346, 16
        %v1584 = vrot.slane %v1582, 5
        %v1585 = vsel %vm383, %v1580, %v1584
        %v1586 = vshrl.u32 %v346, 16
        %v1588 = vrot.slane %v1586, 4
        %v1589 = vor.u32 %v1588, %v1584
        %v1590 = vrot.slane %v1589, 4
        %v1592 = vshll.u32 %v347, 16
        %v1594 = vrot.slane %v1592, 5
        %v1595 = vsel %vm383, %v1590, %v1594
        %v1596 = vshrl.u32 %v347, 16
        %v1598 = vrot.slane %v1596, 4
        %v1599 = vor.u32 %v1598, %v1594
        %v1600 = vrot.slane %v1599, 4
        %v1602 = vshll.u32 %v348, 16
        %v1604 = vrot.slane %v1602, 5
        %v1605 = vsel %vm383, %v1600, %v1604
        %v1606 = vshrl.u32 %v348, 16
        %v1608 = vrot.slane %v1606, 4
        %v1609 = vor.u32 %v1608, %v1604
        %v1610 = vrot.slane %v1609, 4
        %v1612 = vshll.u32 %v349, 16
        %v1614 = vrot.slane %v1612, 5
        %v1615 = vsel %vm383, %v1610, %v1614
        %v1617 = vshrl.u32 %v350, 16
        %v1619 = vrot.slane %v1617, 4
        %v1620 = vshll.u32 %v350, 16
        %v1622 = vrot.slane %v1620, 5
        %v1623 = vor.u32 %v1619, %v1622
        %v1624 = vrot.slane %v1623, 4
        %v1626 = vshll.u32 %v351, 16
        %v1628 = vrot.slane %v1626, 5
        %v1629 = vsel %vm383, %v1624, %v1628
        %v1630 = vshrl.u32 %v351, 16
        %v1632 = vrot.slane %v1630, 4
        %v1633 = vor.u32 %v1632, %v1628
        %v1634 = vrot.slane %v1633, 4
        %v1636 = vshll.u32 %v352, 16
        %v1638 = vrot.slane %v1636, 5
        %v1639 = vsel %vm383, %v1634, %v1638
        %v1640 = vshrl.u32 %v352, 16
        %v1642 = vrot.slane %v1640, 4
        %v1643 = vor.u32 %v1642, %v1638
        %v1644 = vrot.slane %v1643, 4
        %v1646 = vshll.u32 %v353, 16
        %v1648 = vrot.slane %v1646, 5
        %v1649 = vsel %vm383, %v1644, %v1648
        %v1650 = vshrl.u32 %v353, 16
        %v1652 = vrot.slane %v1650, 4
        %v1653 = vor.u32 %v1652, %v1648
        %v1654 = vrot.slane %v1653, 4
        %v1656 = vshll.u32 %v354, 16
        %v1658 = vrot.slane %v1656, 5
        %v1659 = vsel %vm383, %v1654, %v1658
        %v1661 = vshrl.u32 %v355, 16
        %v1663 = vrot.slane %v1661, 4
        %v1664 = vshll.u32 %v355, 16
        %v1666 = vrot.slane %v1664, 5
        %v1667 = vor.u32 %v1663, %v1666
        %v1668 = vrot.slane %v1667, 4
        %v1670 = vshll.u32 %v356, 16
        %v1672 = vrot.slane %v1670, 5
        %v1673 = vsel %vm383, %v1668, %v1672
        %v1674 = vshrl.u32 %v356, 16
        %v1676 = vrot.slane %v1674, 4
        %v1677 = vor.u32 %v1676, %v1672
        %v1678 = vrot.slane %v1677, 4
        %v1680 = vshll.u32 %v357, 16
        %v1682 = vrot.slane %v1680, 5
        %v1683 = vsel %vm383, %v1678, %v1682
        %v1684 = vshrl.u32 %v357, 16
        %v1686 = vrot.slane %v1684, 4
        %v1687 = vor.u32 %v1686, %v1682
        %v1688 = vrot.slane %v1687, 4
        %v1690 = vshll.u32 %v358, 16
        %v1692 = vrot.slane %v1690, 5
        %v1693 = vsel %vm383, %v1688, %v1692
        %v1694 = vshrl.u32 %v358, 16
        %v1696 = vrot.slane %v1694, 4
        %v1697 = vor.u32 %v1696, %v1692
        %v1698 = vrot.slane %v1697, 4
        %v1700 = vshll.u32 %v359, 16
        %v1702 = vrot.slane %v1700, 5
        %v1703 = vsel %vm383, %v1698, %v1702
        %v1705 = vshrl.u32 %v360, 16
        %v1707 = vrot.slane %v1705, 4
        %v1708 = vshll.u32 %v360, 16
        %v1710 = vrot.slane %v1708, 5
        %v1711 = vor.u32 %v1707, %v1710
        %v1712 = vrot.slane %v1711, 4
        %v1714 = vshll.u32 %v361, 16
        %v1716 = vrot.slane %v1714, 5
        %v1717 = vsel %vm383, %v1712, %v1716
        %v1718 = vshrl.u32 %v361, 16
        %v1720 = vrot.slane %v1718, 4
        %v1721 = vor.u32 %v1720, %v1716
        %v1722 = vrot.slane %v1721, 4
        %v1724 = vshll.u32 %v362, 16
        %v1726 = vrot.slane %v1724, 5
        %v1727 = vsel %vm383, %v1722, %v1726
        %v1728 = vshrl.u32 %v362, 16
        %v1730 = vrot.slane %v1728, 4
        %v1731 = vor.u32 %v1730, %v1726
        %v1732 = vrot.slane %v1731, 4
        %v1734 = vshll.u32 %v363, 16
        %v1736 = vrot.slane %v1734, 5
        %v1737 = vsel %vm383, %v1732, %v1736
        %v1738 = vshrl.u32 %v363, 16
        %v1740 = vrot.slane %v1738, 4
        %v1741 = vor.u32 %v1740, %v1736
        %v1742 = vrot.slane %v1741, 4
        %v1744 = vshll.u32 %v364, 16
        %v1746 = vrot.slane %v1744, 5
        %v1747 = vsel %vm383, %v1742, %v1746
        %v1749 = vshrl.u32 %v365, 16
        %v1751 = vrot.slane %v1749, 4
        %v1752 = vshll.u32 %v365, 16
        %v1754 = vrot.slane %v1752, 5
        %v1755 = vor.u32 %v1751, %v1754
        %v1756 = vrot.slane %v1755, 4
        %v1758 = vshll.u32 %v366, 16
        %v1760 = vrot.slane %v1758, 5
        %v1761 = vsel %vm383, %v1756, %v1760
        %v1762 = vshrl.u32 %v366, 16
        %v1764 = vrot.slane %v1762, 4
        %v1765 = vor.u32 %v1764, %v1760
        %v1766 = vrot.slane %v1765, 4
        %v1768 = vshll.u32 %v367, 16
        %v1770 = vrot.slane %v1768, 5
        %v1771 = vsel %vm383, %v1766, %v1770
        %v1772 = vshrl.u32 %v367, 16
        %v1774 = vrot.slane %v1772, 4
        %v1775 = vor.u32 %v1774, %v1770
        %v1776 = vrot.slane %v1775, 4
        %v1778 = vshll.u32 %v368, 16
        %v1780 = vrot.slane %v1778, 5
        %v1781 = vsel %vm383, %v1776, %v1780
        %v1782 = vshrl.u32 %v368, 16
        %v1784 = vrot.slane %v1782, 4
        %v1785 = vor.u32 %v1784, %v1780
        %v1786 = vrot.slane %v1785, 4
        %v1788 = vshll.u32 %v369, 16
        %v1790 = vrot.slane %v1788, 5
        %v1791 = vsel %vm383, %v1786, %v1790
        %s1792 = scalar_lea.vmem %s208, 2
        %v1793 = vld [vmem:[%s1792] sm:$0x3]
        %v1794 = vunpack.c.l.b16 %v397
        %v1795 = vunpack.c.l.b16 %v407
        %v1796 = vunpack.c.l.b16 %v417
        %v1797 = vunpack.c.l.b16 %v427
        %v1798 = vunpack.c.l.b16 %v441
        %v1799 = vunpack.c.l.b16 %v451
        %v1800 = vunpack.c.l.b16 %v461
        %v1801 = vunpack.c.l.b16 %v471
        %v1802 = vunpack.c.l.b16 %v485
        %v1803 = vunpack.c.l.b16 %v495
        %v1804 = vunpack.c.l.b16 %v505
        %v1805 = vunpack.c.l.b16 %v515
        %v1806 = vunpack.c.l.b16 %v529
        %v1807 = vunpack.c.l.b16 %v539
        %v1808 = vunpack.c.l.b16 %v549
        %v1809 = vunpack.c.l.b16 %v559
        %v1810 = vunpack.c.l.b16 %v573
        %v1811 = vunpack.c.l.b16 %v583
        %v1812 = vunpack.c.l.b16 %v593
        %v1813 = vunpack.c.l.b16 %v603
        %v1814 = vunpack.c.l.b16 %v617
        %v1815 = vunpack.c.l.b16 %v627
        %v1816 = vunpack.c.l.b16 %v637
        %v1817 = vunpack.c.l.b16 %v647
        %v1818 = vunpack.c.l.b16 %v661
        %v1819 = vunpack.c.l.b16 %v671
        %v1820 = vunpack.c.l.b16 %v681
        %v1821 = vunpack.c.l.b16 %v691
        %v1822 = vunpack.c.l.b16 %v705
        %v1823 = vunpack.c.l.b16 %v715
        %v1824 = vunpack.c.l.b16 %v725
        %v1825 = vunpack.c.l.b16 %v735
        %v1826 = vunpack.c.l.b16 %v749
        %v1827 = vunpack.c.l.b16 %v759
        %v1828 = vunpack.c.l.b16 %v769
        %v1829 = vunpack.c.l.b16 %v779
        %v1830 = vunpack.c.l.b16 %v793
        %v1831 = vunpack.c.l.b16 %v803
        %v1832 = vunpack.c.l.b16 %v813
        %v1833 = vunpack.c.l.b16 %v823
        %v1834 = vunpack.c.l.b16 %v837
        %v1835 = vunpack.c.l.b16 %v847
        %v1836 = vunpack.c.l.b16 %v857
        %v1837 = vunpack.c.l.b16 %v867
        %v1838 = vunpack.c.l.b16 %v881
        %v1839 = vunpack.c.l.b16 %v891
        %v1840 = vunpack.c.l.b16 %v901
        %v1841 = vunpack.c.l.b16 %v911
        %v1842 = vunpack.c.l.b16 %v925
        %v1843 = vunpack.c.l.b16 %v935
        %v1844 = vunpack.c.l.b16 %v945
        %v1845 = vunpack.c.l.b16 %v955
        %v1846 = vunpack.c.l.b16 %v969
        %v1847 = vunpack.c.l.b16 %v979
        %v1848 = vunpack.c.l.b16 %v989
        %v1849 = vunpack.c.l.b16 %v999
        %v1850 = vunpack.c.l.b16 %v1013
        %v1851 = vunpack.c.l.b16 %v1023
        %v1852 = vunpack.c.l.b16 %v1033
        %v1853 = vunpack.c.l.b16 %v1043
        %v1854 = vunpack.c.l.b16 %v1057
        %v1855 = vunpack.c.l.b16 %v1067
        %v1856 = vunpack.c.l.b16 %v1077
        %v1857 = vunpack.c.l.b16 %v1087
        %v1858 = vunpack.c.l.b16 %v1101
        %v1859 = vunpack.c.l.b16 %v1111
        %v1860 = vunpack.c.l.b16 %v1121
        %v1861 = vunpack.c.l.b16 %v1131
        %v1862 = vunpack.c.l.b16 %v1145
        %v1863 = vunpack.c.l.b16 %v1155
        %v1864 = vunpack.c.l.b16 %v1165
        %v1865 = vunpack.c.l.b16 %v1175
        %v1866 = vunpack.c.l.b16 %v1189
        %v1867 = vunpack.c.l.b16 %v1199
        %v1868 = vunpack.c.l.b16 %v1209
        %v1869 = vunpack.c.l.b16 %v1219
        %v1870 = vunpack.c.l.b16 %v1233
        %v1871 = vunpack.c.l.b16 %v1243
        %v1872 = vunpack.c.l.b16 %v1253
        %v1873 = vunpack.c.l.b16 %v1263
        %v1874 = vunpack.c.l.b16 %v1277
        %v1875 = vunpack.c.l.b16 %v1287
        %v1876 = vunpack.c.l.b16 %v1297
        %v1877 = vunpack.c.l.b16 %v1307
        %v1878 = vunpack.c.l.b16 %v1321
        %v1879 = vunpack.c.l.b16 %v1331
        %v1880 = vunpack.c.l.b16 %v1341
        %v1881 = vunpack.c.l.b16 %v1351
        %v1882 = vunpack.c.l.b16 %v1365
        %v1883 = vunpack.c.l.b16 %v1375
        %v1884 = vunpack.c.l.b16 %v1385
        %v1885 = vunpack.c.l.b16 %v1395
        %v1886 = vunpack.c.l.b16 %v1409
        %v1887 = vunpack.c.l.b16 %v1419
        %v1888 = vunpack.c.l.b16 %v1429
        %v1889 = vunpack.c.l.b16 %v1439
        %v1890 = vunpack.c.l.b16 %v1453
        %v1891 = vunpack.c.l.b16 %v1463
        %v1892 = vunpack.c.l.b16 %v1473
        %v1893 = vunpack.c.l.b16 %v1483
        %v1894 = vunpack.c.l.b16 %v1497
        %v1895 = vunpack.c.l.b16 %v1507
        %v1896 = vunpack.c.l.b16 %v1517
        %v1897 = vunpack.c.l.b16 %v1527
        %v1898 = vunpack.c.l.b16 %v1541
        %v1899 = vunpack.c.l.b16 %v1551
        %v1900 = vunpack.c.l.b16 %v1561
        %v1901 = vunpack.c.l.b16 %v1571
        %v1902 = vunpack.c.l.b16 %v1585
        %v1903 = vunpack.c.l.b16 %v1595
        %v1904 = vunpack.c.l.b16 %v1605
        %v1905 = vunpack.c.l.b16 %v1615
        %v1906 = vunpack.c.l.b16 %v1629
        %v1907 = vunpack.c.l.b16 %v1639
        %v1908 = vunpack.c.l.b16 %v1649
        %v1909 = vunpack.c.l.b16 %v1659
        %v1910 = vunpack.c.l.b16 %v1673
        %v1911 = vunpack.c.l.b16 %v1683
        %v1912 = vunpack.c.l.b16 %v1693
        %v1913 = vunpack.c.l.b16 %v1703
        %v1914 = vunpack.c.l.b16 %v1717
        %v1915 = vunpack.c.l.b16 %v1727
        %v1916 = vunpack.c.l.b16 %v1737
        %v1917 = vunpack.c.l.b16 %v1747
        %v1918 = vunpack.c.l.b16 %v1761
        %v1919 = vunpack.c.l.b16 %v1771
        %v1920 = vunpack.c.l.b16 %v1781
        %v1921 = vunpack.c.l.b16 %v1791
        %v1922 = vpack.c.b16 %v1795, %v1794
        %v1923 = vpack.c.b16 %v1797, %v1796
        %v1924 = vpack.c.b16 %v1799, %v1798
        %v1925 = vpack.c.b16 %v1801, %v1800
        %v1926 = vpack.c.b16 %v1803, %v1802
        %v1927 = vpack.c.b16 %v1805, %v1804
        %v1928 = vpack.c.b16 %v1807, %v1806
        %v1929 = vpack.c.b16 %v1809, %v1808
        %v1930 = vpack.c.b16 %v1811, %v1810
        %v1931 = vpack.c.b16 %v1813, %v1812
        %v1932 = vpack.c.b16 %v1815, %v1814
        %v1933 = vpack.c.b16 %v1817, %v1816
        %v1934 = vpack.c.b16 %v1819, %v1818
        %v1935 = vpack.c.b16 %v1821, %v1820
        %v1936 = vpack.c.b16 %v1823, %v1822
        %v1937 = vpack.c.b16 %v1825, %v1824
        %v1938 = vpack.c.b16 %v1827, %v1826
        %v1939 = vpack.c.b16 %v1829, %v1828
        %v1940 = vpack.c.b16 %v1831, %v1830
        %v1941 = vpack.c.b16 %v1833, %v1832
        %v1942 = vpack.c.b16 %v1835, %v1834
        %v1943 = vpack.c.b16 %v1837, %v1836
        %v1944 = vpack.c.b16 %v1839, %v1838
        %v1945 = vpack.c.b16 %v1841, %v1840
        %v1946 = vpack.c.b16 %v1843, %v1842
        %v1947 = vpack.c.b16 %v1845, %v1844
        %v1948 = vpack.c.b16 %v1847, %v1846
        %v1949 = vpack.c.b16 %v1849, %v1848
        %v1950 = vpack.c.b16 %v1851, %v1850
        %v1951 = vpack.c.b16 %v1853, %v1852
        %v1952 = vpack.c.b16 %v1855, %v1854
        %v1953 = vpack.c.b16 %v1857, %v1856
        %v1954 = vpack.c.b16 %v1859, %v1858
        %v1955 = vpack.c.b16 %v1861, %v1860
        %v1956 = vpack.c.b16 %v1863, %v1862
        %v1957 = vpack.c.b16 %v1865, %v1864
        %v1958 = vpack.c.b16 %v1867, %v1866
        %v1959 = vpack.c.b16 %v1869, %v1868
        %v1960 = vpack.c.b16 %v1871, %v1870
        %v1961 = vpack.c.b16 %v1873, %v1872
        %v1962 = vpack.c.b16 %v1875, %v1874
        %v1963 = vpack.c.b16 %v1877, %v1876
        %v1964 = vpack.c.b16 %v1879, %v1878
        %v1965 = vpack.c.b16 %v1881, %v1880
        %v1966 = vpack.c.b16 %v1883, %v1882
        %v1967 = vpack.c.b16 %v1885, %v1884
        %v1968 = vpack.c.b16 %v1887, %v1886
        %v1969 = vpack.c.b16 %v1889, %v1888
        %v1970 = vpack.c.b16 %v1891, %v1890
        %v1971 = vpack.c.b16 %v1893, %v1892
        %v1972 = vpack.c.b16 %v1895, %v1894
        %v1973 = vpack.c.b16 %v1897, %v1896
        %v1974 = vpack.c.b16 %v1899, %v1898
        %v1975 = vpack.c.b16 %v1901, %v1900
        %v1976 = vpack.c.b16 %v1903, %v1902
        %v1977 = vpack.c.b16 %v1905, %v1904
        %v1978 = vpack.c.b16 %v1907, %v1906
        %v1979 = vpack.c.b16 %v1909, %v1908
        %v1980 = vpack.c.b16 %v1911, %v1910
        %v1981 = vpack.c.b16 %v1913, %v1912
        %v1982 = vpack.c.b16 %v1915, %v1914
        %v1983 = vpack.c.b16 %v1917, %v1916
        %v1984 = vpack.c.b16 %v1919, %v1918
        %v1985 = vpack.c.b16 %v1921, %v1920
        %vm1986 = vcmask 23552
        %v1988 = vsel %vm1986, %v1922, 0
        %v1991 = vsel %vm1986, %v1923, 0
        %v1994 = vsel %vm1986, %v1924, 0
        %v1997 = vsel %vm1986, %v1925, 0
        %v2000 = vsel %vm1986, %v1926, 0
        %v2003 = vsel %vm1986, %v1927, 0
        %v2006 = vsel %vm1986, %v1928, 0
        %v2009 = vsel %vm1986, %v1929, 0
        %v2012 = vsel %vm1986, %v1930, 0
        %v2015 = vsel %vm1986, %v1931, 0
        %v2018 = vsel %vm1986, %v1932, 0
        %v2021 = vsel %vm1986, %v1933, 0
        %v2024 = vsel %vm1986, %v1934, 0
        %v2027 = vsel %vm1986, %v1935, 0
        %v2030 = vsel %vm1986, %v1936, 0
        %v2033 = vsel %vm1986, %v1937, 0
        %v2036 = vsel %vm1986, %v1938, 0
        %v2039 = vsel %vm1986, %v1939, 0
        %v2042 = vsel %vm1986, %v1940, 0
        %v2045 = vsel %vm1986, %v1941, 0
        %v2048 = vsel %vm1986, %v1942, 0
        %v2051 = vsel %vm1986, %v1943, 0
        %v2054 = vsel %vm1986, %v1944, 0
        %v2057 = vsel %vm1986, %v1945, 0
        %v2060 = vsel %vm1986, %v1946, 0
        %v2063 = vsel %vm1986, %v1947, 0
        %v2066 = vsel %vm1986, %v1948, 0
        %v2069 = vsel %vm1986, %v1949, 0
        %v2072 = vsel %vm1986, %v1950, 0
        %v2075 = vsel %vm1986, %v1951, 0
        %v2078 = vsel %vm1986, %v1952, 0
        %v2081 = vsel %vm1986, %v1953, 0
        %v2084 = vsel %vm1986, %v1954, 0
        %v2087 = vsel %vm1986, %v1955, 0
        %v2090 = vsel %vm1986, %v1956, 0
        %v2093 = vsel %vm1986, %v1957, 0
        %v2096 = vsel %vm1986, %v1958, 0
        %v2099 = vsel %vm1986, %v1959, 0
        %v2102 = vsel %vm1986, %v1960, 0
        %v2105 = vsel %vm1986, %v1961, 0
        %v2108 = vsel %vm1986, %v1962, 0
        %v2111 = vsel %vm1986, %v1963, 0
        %v2114 = vsel %vm1986, %v1964, 0
        %v2117 = vsel %vm1986, %v1965, 0
        %v2120 = vsel %vm1986, %v1966, 0
        %v2123 = vsel %vm1986, %v1967, 0
        %v2126 = vsel %vm1986, %v1968, 0
        %v2129 = vsel %vm1986, %v1969, 0
        %v2132 = vsel %vm1986, %v1970, 0
        %v2135 = vsel %vm1986, %v1971, 0
        %v2138 = vsel %vm1986, %v1972, 0
        %v2141 = vsel %vm1986, %v1973, 0
        %v2144 = vsel %vm1986, %v1974, 0
        %v2147 = vsel %vm1986, %v1975, 0
        %v2150 = vsel %vm1986, %v1976, 0
        %v2153 = vsel %vm1986, %v1977, 0
        %v2156 = vsel %vm1986, %v1978, 0
        %v2159 = vsel %vm1986, %v1979, 0
        %v2162 = vsel %vm1986, %v1980, 0
        %v2165 = vsel %vm1986, %v1981, 0
        %v2168 = vsel %vm1986, %v1982, 0
        %v2171 = vsel %vm1986, %v1983, 0
        %v2174 = vsel %vm1986, %v1984, 0
        %v2177 = vsel %vm1986, %v1985, 0
        %vm2179 = vcmask 1040384
        %vm2180 = vcmask 1041408
        %v2181 = vsel %vm2179, 4294967295, 65535
        %v2182 = vsel %vm2180, %v2181, 0
        %v2184 = vand.u32 %v1793, %v2182
        %2186 = vmatprep.subr.bf16.mxu0 0
        %2187 = vmatpush1.bf16.msra.mxu0 %v2184
        %2188 = vmatprep.subr.bf16.mxu0 0
        %2189 = vmatpush1.bf16.msra.mxu0 0
        %2190 = vmatprep.subr.bf16.mxu0 0
        %2191 = vmatpush1.bf16.msra.mxu0 0
        %2192 = vmatprep.subr.bf16.mxu0 0
        %2193 = vmatpush1.bf16.msra.mxu0 0
        %2194 = vmatprep.subr.bf16.mxu0 0
        %2195 = vmatpush1.bf16.msra.mxu0 0
        %2196 = vmatprep.subr.bf16.mxu0 0
        %2197 = vmatpush1.bf16.msra.mxu0 0
        %2198 = vmatprep.subr.bf16.mxu0 0
        %2199 = vmatpush1.bf16.msra.mxu0 0
        %2200 = vmatprep.subr.bf16.mxu0 0
        %2201 = vmatpush1.bf16.msra.mxu0 0
        %2202 = vmatprep.subr.bf16.mxu0 0
        %2203 = vmatpush1.bf16.msra.mxu0 0
        %2204 = vmatprep.subr.bf16.mxu0 0
        %2205 = vmatpush1.bf16.msra.mxu0 0
        %2206 = vmatprep.subr.bf16.mxu0 0
        %2207 = vmatpush1.bf16.msra.mxu0 0
        %2208 = vmatprep.subr.bf16.mxu0 0
        %2209 = vmatpush1.bf16.msra.mxu0 0
        %2210 = vmatprep.subr.bf16.mxu0 0
        %2211 = vmatpush1.bf16.msra.mxu0 0
        %2212 = vmatprep.subr.bf16.mxu0 0
        %2213 = vmatpush1.bf16.msra.mxu0 0
        %2214 = vmatprep.subr.bf16.mxu0 0
        %2215 = vmatpush1.bf16.msra.mxu0 0
        %2216 = vmatprep.subr.bf16.mxu0 0
        %2217 = vmatpush1.bf16.msra.mxu0 0
        %2218 = vmatprep.mubr.bf16.mxu0 0
        %2219 = vmatmul.mubr.bf16.gmra.mrb[0].mxu0 %v1988
        %v2220 = vpop.f32.mrb[0].mxu0
        %v2221 = vadd.f32 0.0, %v2220
        %v2222 = vpop.f32.mrb[0].mxu0
        %v2223 = vpop.f32.mrb[0].mxu0
        %v2224 = vadd.f32 0.0, %v2223
        %v2225 = vpop.f32.mrb[0].mxu0
        %2226 = vmatprep.mubr.bf16.mxu0 0
        %2227 = vmatmul.mubr.bf16.gmra.mrb[0].mxu0 %v1991
        %v2228 = vpop.f32.mrb[0].mxu0
        %v2229 = vadd.f32 0.0, %v2228
        %v2230 = vpop.f32.mrb[0].mxu0
        %v2231 = vpop.f32.mrb[0].mxu0
        %v2232 = vadd.f32 0.0, %v2231
        %v2233 = vpop.f32.mrb[0].mxu0
        %2234 = vmatprep.mubr.bf16.mxu0 0
        %2235 = vmatmul.mubr.bf16.gmra.mrb[0].mxu0 %v1994
        %v2236 = vpop.f32.mrb[0].mxu0
        %v2237 = vadd.f32 0.0, %v2236
        %v2238 = vpop.f32.mrb[0].mxu0
        %v2239 = vpop.f32.mrb[0].mxu0
        %v2240 = vadd.f32 0.0, %v2239
        %v2241 = vpop.f32.mrb[0].mxu0
        %2242 = vmatprep.mubr.bf16.mxu0 0
        %2243 = vmatmul.mubr.bf16.gmra.mrb[0].mxu0 %v1997
        %v2244 = vpop.f32.mrb[0].mxu0
        %v2245 = vadd.f32 0.0, %v2244
        %v2246 = vpop.f32.mrb[0].mxu0
        %v2247 = vpop.f32.mrb[0].mxu0
        %v2248 = vadd.f32 0.0, %v2247
        %v2249 = vpop.f32.mrb[0].mxu0
        %2250 = vmatprep.mubr.bf16.mxu0 0
        %2251 = vmatmul.mubr.bf16.gmra.mrb[0].mxu0 %v2000
        %v2252 = vpop.f32.mrb[0].mxu0
        %v2253 = vadd.f32 0.0, %v2252
        %v2254 = vpop.f32.mrb[0].mxu0
        %v2255 = vpop.f32.mrb[0].mxu0
        %v2256 = vadd.f32 0.0, %v2255
        %v2257 = vpop.f32.mrb[0].mxu0
        %2258 = vmatprep.mubr.bf16.mxu0 0
        %2259 = vmatmul.mubr.bf16.gmra.mrb[0].mxu0 %v2003
        %v2260 = vpop.f32.mrb[0].mxu0
        %v2261 = vadd.f32 0.0, %v2260
        %v2262 = vpop.f32.mrb[0].mxu0
        %v2263 = vpop.f32.mrb[0].mxu0
        %v2264 = vadd.f32 0.0, %v2263
        %v2265 = vpop.f32.mrb[0].mxu0
        %2266 = vmatprep.mubr.bf16.mxu0 0
        %2267 = vmatmul.mubr.bf16.gmra.mrb[0].mxu0 %v2006
        %v2268 = vpop.f32.mrb[0].mxu0
        %v2269 = vadd.f32 0.0, %v2268
        %v2270 = vpop.f32.mrb[0].mxu0
        %v2271 = vpop.f32.mrb[0].mxu0
        %v2272 = vadd.f32 0.0, %v2271
        %v2273 = vpop.f32.mrb[0].mxu0
        %2274 = vmatprep.mubr.bf16.mxu0 0
        %2275 = vmatmul.mubr.bf16.gmra.mrb[0].mxu0 %v2009
        %v2276 = vpop.f32.mrb[0].mxu0
        %v2277 = vadd.f32 0.0, %v2276
        %v2278 = vpop.f32.mrb[0].mxu0
        %v2279 = vpop.f32.mrb[0].mxu0
        %v2280 = vadd.f32 0.0, %v2279
        %v2281 = vpop.f32.mrb[0].mxu0
        %2282 = vmatprep.mubr.bf16.mxu0 0
        %2283 = vmatmul.mubr.bf16.gmra.mrb[0].mxu0 %v2012
        %v2284 = vpop.f32.mrb[0].mxu0
        %v2285 = vadd.f32 0.0, %v2284
        %v2286 = vpop.f32.mrb[0].mxu0
        %v2287 = vpop.f32.mrb[0].mxu0
        %v2288 = vadd.f32 0.0, %v2287
        %v2289 = vpop.f32.mrb[0].mxu0
        %2290 = vmatprep.mubr.bf16.mxu0 0
        %2291 = vmatmul.mubr.bf16.gmra.mrb[0].mxu0 %v2015
        %v2292 = vpop.f32.mrb[0].mxu0
        %v2293 = vadd.f32 0.0, %v2292
        %v2294 = vpop.f32.mrb[0].mxu0
        %v2295 = vpop.f32.mrb[0].mxu0
        %v2296 = vadd.f32 0.0, %v2295
        %v2297 = vpop.f32.mrb[0].mxu0
        %2298 = vmatprep.mubr.bf16.mxu0 0
        %2299 = vmatmul.mubr.bf16.gmra.mrb[0].mxu0 %v2018
        %v2300 = vpop.f32.mrb[0].mxu0
        %v2301 = vadd.f32 0.0, %v2300
        %v2302 = vpop.f32.mrb[0].mxu0
        %v2303 = vpop.f32.mrb[0].mxu0
        %v2304 = vadd.f32 0.0, %v2303
        %v2305 = vpop.f32.mrb[0].mxu0
        %2306 = vmatprep.mubr.bf16.mxu0 0
        %2307 = vmatmul.mubr.bf16.gmra.mrb[0].mxu0 %v2021
        %v2308 = vpop.f32.mrb[0].mxu0
        %v2309 = vadd.f32 0.0, %v2308
        %v2310 = vpop.f32.mrb[0].mxu0
        %v2311 = vpop.f32.mrb[0].mxu0
        %v2312 = vadd.f32 0.0, %v2311
        %v2313 = vpop.f32.mrb[0].mxu0
        %2314 = vmatprep.mubr.bf16.mxu0 0
        %2315 = vmatmul.mubr.bf16.gmra.mrb[0].mxu0 %v2024
        %v2316 = vpop.f32.mrb[0].mxu0
        %v2317 = vadd.f32 0.0, %v2316
        %v2318 = vpop.f32.mrb[0].mxu0
        %v2319 = vpop.f32.mrb[0].mxu0
        %v2320 = vadd.f32 0.0, %v2319
        %v2321 = vpop.f32.mrb[0].mxu0
        %2322 = vmatprep.mubr.bf16.mxu0 0
        %2323 = vmatmul.mubr.bf16.gmra.mrb[0].mxu0 %v2027
        %v2324 = vpop.f32.mrb[0].mxu0
        %v2325 = vadd.f32 0.0, %v2324
        %v2326 = vpop.f32.mrb[0].mxu0
        %v2327 = vpop.f32.mrb[0].mxu0
        %v2328 = vadd.f32 0.0, %v2327
        %v2329 = vpop.f32.mrb[0].mxu0
        %2330 = vmatprep.mubr.bf16.mxu0 0
        %2331 = vmatmul.mubr.bf16.gmra.mrb[0].mxu0 %v2030
        %v2332 = vpop.f32.mrb[0].mxu0
        %v2333 = vadd.f32 0.0, %v2332
        %v2334 = vpop.f32.mrb[0].mxu0
        %v2335 = vpop.f32.mrb[0].mxu0
        %v2336 = vadd.f32 0.0, %v2335
        %v2337 = vpop.f32.mrb[0].mxu0
        %2338 = vmatprep.mubr.bf16.mxu0 0
        %2339 = vmatmul.mubr.bf16.gmra.mrb[0].mxu0 %v2033
        %v2340 = vpop.f32.mrb[0].mxu0
        %v2341 = vadd.f32 0.0, %v2340
        %v2342 = vpop.f32.mrb[0].mxu0
        %v2343 = vpop.f32.mrb[0].mxu0
        %v2344 = vadd.f32 0.0, %v2343
        %v2345 = vpop.f32.mrb[0].mxu0
        %2346 = vmatprep.mubr.bf16.mxu0 0
        %2347 = vmatmul.mubr.bf16.gmra.mrb[0].mxu0 %v2036
        %v2348 = vpop.f32.mrb[0].mxu0
        %v2349 = vadd.f32 0.0, %v2348
        %v2350 = vpop.f32.mrb[0].mxu0
        %v2351 = vpop.f32.mrb[0].mxu0
        %v2352 = vadd.f32 0.0, %v2351
        %v2353 = vpop.f32.mrb[0].mxu0
        %2354 = vmatprep.mubr.bf16.mxu0 0
        %2355 = vmatmul.mubr.bf16.gmra.mrb[0].mxu0 %v2039
        %v2356 = vpop.f32.mrb[0].mxu0
        %v2357 = vadd.f32 0.0, %v2356
        %v2358 = vpop.f32.mrb[0].mxu0
        %v2359 = vpop.f32.mrb[0].mxu0
        %v2360 = vadd.f32 0.0, %v2359
        %v2361 = vpop.f32.mrb[0].mxu0
        %2362 = vmatprep.mubr.bf16.mxu0 0
        %2363 = vmatmul.mubr.bf16.gmra.mrb[0].mxu0 %v2042
        %v2364 = vpop.f32.mrb[0].mxu0
        %v2365 = vadd.f32 0.0, %v2364
        %v2366 = vpop.f32.mrb[0].mxu0
        %v2367 = vpop.f32.mrb[0].mxu0
        %v2368 = vadd.f32 0.0, %v2367
        %v2369 = vpop.f32.mrb[0].mxu0
        %2370 = vmatprep.mubr.bf16.mxu0 0
        %2371 = vmatmul.mubr.bf16.gmra.mrb[0].mxu0 %v2045
        %v2372 = vpop.f32.mrb[0].mxu0
        %v2373 = vadd.f32 0.0, %v2372
        %v2374 = vpop.f32.mrb[0].mxu0
        %v2375 = vpop.f32.mrb[0].mxu0
        %v2376 = vadd.f32 0.0, %v2375
        %v2377 = vpop.f32.mrb[0].mxu0
        %2378 = vmatprep.mubr.bf16.mxu0 0
        %2379 = vmatmul.mubr.bf16.gmra.mrb[0].mxu0 %v2048
        %v2380 = vpop.f32.mrb[0].mxu0
        %v2381 = vadd.f32 0.0, %v2380
        %v2382 = vpop.f32.mrb[0].mxu0
        %v2383 = vpop.f32.mrb[0].mxu0
        %v2384 = vadd.f32 0.0, %v2383
        %v2385 = vpop.f32.mrb[0].mxu0
        %2386 = vmatprep.mubr.bf16.mxu0 0
        %2387 = vmatmul.mubr.bf16.gmra.mrb[0].mxu0 %v2051
        %v2388 = vpop.f32.mrb[0].mxu0
        %v2389 = vadd.f32 0.0, %v2388
        %v2390 = vpop.f32.mrb[0].mxu0
        %v2391 = vpop.f32.mrb[0].mxu0
        %v2392 = vadd.f32 0.0, %v2391
        %v2393 = vpop.f32.mrb[0].mxu0
        %2394 = vmatprep.mubr.bf16.mxu0 0
        %2395 = vmatmul.mubr.bf16.gmra.mrb[0].mxu0 %v2054
        %v2396 = vpop.f32.mrb[0].mxu0
        %v2397 = vadd.f32 0.0, %v2396
        %v2398 = vpop.f32.mrb[0].mxu0
        %v2399 = vpop.f32.mrb[0].mxu0
        %v2400 = vadd.f32 0.0, %v2399
        %v2401 = vpop.f32.mrb[0].mxu0
        %2402 = vmatprep.mubr.bf16.mxu0 0
        %2403 = vmatmul.mubr.bf16.gmra.mrb[0].mxu0 %v2057
        %v2404 = vpop.f32.mrb[0].mxu0
        %v2405 = vadd.f32 0.0, %v2404
        %v2406 = vpop.f32.mrb[0].mxu0
        %v2407 = vpop.f32.mrb[0].mxu0
        %v2408 = vadd.f32 0.0, %v2407
        %v2409 = vpop.f32.mrb[0].mxu0
        %2410 = vmatprep.mubr.bf16.mxu0 0
        %2411 = vmatmul.mubr.bf16.gmra.mrb[0].mxu0 %v2060
        %v2412 = vpop.f32.mrb[0].mxu0
        %v2413 = vadd.f32 0.0, %v2412
        %v2414 = vpop.f32.mrb[0].mxu0
        %v2415 = vpop.f32.mrb[0].mxu0
        %v2416 = vadd.f32 0.0, %v2415
        %v2417 = vpop.f32.mrb[0].mxu0
        %2418 = vmatprep.mubr.bf16.mxu0 0
        %2419 = vmatmul.mubr.bf16.gmra.mrb[0].mxu0 %v2063
        %v2420 = vpop.f32.mrb[0].mxu0
        %v2421 = vadd.f32 0.0, %v2420
        %v2422 = vpop.f32.mrb[0].mxu0
        %v2423 = vpop.f32.mrb[0].mxu0
        %v2424 = vadd.f32 0.0, %v2423
        %v2425 = vpop.f32.mrb[0].mxu0
        %2426 = vmatprep.mubr.bf16.mxu0 0
        %2427 = vmatmul.mubr.bf16.gmra.mrb[0].mxu0 %v2066
        %v2428 = vpop.f32.mrb[0].mxu0
        %v2429 = vadd.f32 0.0, %v2428
        %v2430 = vpop.f32.mrb[0].mxu0
        %v2431 = vpop.f32.mrb[0].mxu0
        %v2432 = vadd.f32 0.0, %v2431
        %v2433 = vpop.f32.mrb[0].mxu0
        %2434 = vmatprep.mubr.bf16.mxu0 0
        %2435 = vmatmul.mubr.bf16.gmra.mrb[0].mxu0 %v2069
        %v2436 = vpop.f32.mrb[0].mxu0
        %v2437 = vadd.f32 0.0, %v2436
        %v2438 = vpop.f32.mrb[0].mxu0
        %v2439 = vpop.f32.mrb[0].mxu0
        %v2440 = vadd.f32 0.0, %v2439
        %v2441 = vpop.f32.mrb[0].mxu0
        %2442 = vmatprep.mubr.bf16.mxu0 0
        %2443 = vmatmul.mubr.bf16.gmra.mrb[0].mxu0 %v2072
        %v2444 = vpop.f32.mrb[0].mxu0
        %v2445 = vadd.f32 0.0, %v2444
        %v2446 = vpop.f32.mrb[0].mxu0
        %v2447 = vpop.f32.mrb[0].mxu0
        %v2448 = vadd.f32 0.0, %v2447
        %v2449 = vpop.f32.mrb[0].mxu0
        %2450 = vmatprep.mubr.bf16.mxu0 0
        %2451 = vmatmul.mubr.bf16.gmra.mrb[0].mxu0 %v2075
        %v2452 = vpop.f32.mrb[0].mxu0
        %v2453 = vadd.f32 0.0, %v2452
        %v2454 = vpop.f32.mrb[0].mxu0
        %v2455 = vpop.f32.mrb[0].mxu0
        %v2456 = vadd.f32 0.0, %v2455
        %v2457 = vpop.f32.mrb[0].mxu0
        %2458 = vmatprep.mubr.bf16.mxu0 0
        %2459 = vmatmul.mubr.bf16.gmra.mrb[0].mxu0 %v2078
        %v2460 = vpop.f32.mrb[0].mxu0
        %v2461 = vadd.f32 0.0, %v2460
        %v2462 = vpop.f32.mrb[0].mxu0
        %v2463 = vpop.f32.mrb[0].mxu0
        %v2464 = vadd.f32 0.0, %v2463
        %v2465 = vpop.f32.mrb[0].mxu0
        %2466 = vmatprep.mubr.bf16.mxu0 0
        %2467 = vmatmul.mubr.bf16.gmra.mrb[0].mxu0 %v2081
        %v2468 = vpop.f32.mrb[0].mxu0
        %v2469 = vadd.f32 0.0, %v2468
        %v2470 = vpop.f32.mrb[0].mxu0
        %v2471 = vpop.f32.mrb[0].mxu0
        %v2472 = vadd.f32 0.0, %v2471
        %v2473 = vpop.f32.mrb[0].mxu0
        %2474 = vmatprep.mubr.bf16.mxu0 0
        %2475 = vmatmul.mubr.bf16.gmra.mrb[0].mxu0 %v2084
        %v2476 = vpop.f32.mrb[0].mxu0
        %v2477 = vadd.f32 0.0, %v2476
        %v2478 = vpop.f32.mrb[0].mxu0
        %v2479 = vpop.f32.mrb[0].mxu0
        %v2480 = vadd.f32 0.0, %v2479
        %v2481 = vpop.f32.mrb[0].mxu0
        %2482 = vmatprep.mubr.bf16.mxu0 0
        %2483 = vmatmul.mubr.bf16.gmra.mrb[0].mxu0 %v2087
        %v2484 = vpop.f32.mrb[0].mxu0
        %v2485 = vadd.f32 0.0, %v2484
        %v2486 = vpop.f32.mrb[0].mxu0
        %v2487 = vpop.f32.mrb[0].mxu0
        %v2488 = vadd.f32 0.0, %v2487
        %v2489 = vpop.f32.mrb[0].mxu0
        %2490 = vmatprep.mubr.bf16.mxu0 0
        %2491 = vmatmul.mubr.bf16.gmra.mrb[0].mxu0 %v2090
        %v2492 = vpop.f32.mrb[0].mxu0
        %v2493 = vadd.f32 0.0, %v2492
        %v2494 = vpop.f32.mrb[0].mxu0
        %v2495 = vpop.f32.mrb[0].mxu0
        %v2496 = vadd.f32 0.0, %v2495
        %v2497 = vpop.f32.mrb[0].mxu0
        %2498 = vmatprep.mubr.bf16.mxu0 0
        %2499 = vmatmul.mubr.bf16.gmra.mrb[0].mxu0 %v2093
        %v2500 = vpop.f32.mrb[0].mxu0
        %v2501 = vadd.f32 0.0, %v2500
        %v2502 = vpop.f32.mrb[0].mxu0
        %v2503 = vpop.f32.mrb[0].mxu0
        %v2504 = vadd.f32 0.0, %v2503
        %v2505 = vpop.f32.mrb[0].mxu0
        %2506 = vmatprep.mubr.bf16.mxu0 0
        %2507 = vmatmul.mubr.bf16.gmra.mrb[0].mxu0 %v2096
        %v2508 = vpop.f32.mrb[0].mxu0
        %v2509 = vadd.f32 0.0, %v2508
        %v2510 = vpop.f32.mrb[0].mxu0
        %v2511 = vpop.f32.mrb[0].mxu0
        %v2512 = vadd.f32 0.0, %v2511
        %v2513 = vpop.f32.mrb[0].mxu0
        %2514 = vmatprep.mubr.bf16.mxu0 0
        %2515 = vmatmul.mubr.bf16.gmra.mrb[0].mxu0 %v2099
        %v2516 = vpop.f32.mrb[0].mxu0
        %v2517 = vadd.f32 0.0, %v2516
        %v2518 = vpop.f32.mrb[0].mxu0
        %v2519 = vpop.f32.mrb[0].mxu0
        %v2520 = vadd.f32 0.0, %v2519
        %v2521 = vpop.f32.mrb[0].mxu0
        %2522 = vmatprep.mubr.bf16.mxu0 0
        %2523 = vmatmul.mubr.bf16.gmra.mrb[0].mxu0 %v2102
        %v2524 = vpop.f32.mrb[0].mxu0
        %v2525 = vadd.f32 0.0, %v2524
        %v2526 = vpop.f32.mrb[0].mxu0
        %v2527 = vpop.f32.mrb[0].mxu0
        %v2528 = vadd.f32 0.0, %v2527
        %v2529 = vpop.f32.mrb[0].mxu0
        %2530 = vmatprep.mubr.bf16.mxu0 0
        %2531 = vmatmul.mubr.bf16.gmra.mrb[0].mxu0 %v2105
        %v2532 = vpop.f32.mrb[0].mxu0
        %v2533 = vadd.f32 0.0, %v2532
        %v2534 = vpop.f32.mrb[0].mxu0
        %v2535 = vpop.f32.mrb[0].mxu0
        %v2536 = vadd.f32 0.0, %v2535
        %v2537 = vpop.f32.mrb[0].mxu0
        %2538 = vmatprep.mubr.bf16.mxu0 0
        %2539 = vmatmul.mubr.bf16.gmra.mrb[0].mxu0 %v2108
        %v2540 = vpop.f32.mrb[0].mxu0
        %v2541 = vadd.f32 0.0, %v2540
        %v2542 = vpop.f32.mrb[0].mxu0
        %v2543 = vpop.f32.mrb[0].mxu0
        %v2544 = vadd.f32 0.0, %v2543
        %v2545 = vpop.f32.mrb[0].mxu0
        %2546 = vmatprep.mubr.bf16.mxu0 0
        %2547 = vmatmul.mubr.bf16.gmra.mrb[0].mxu0 %v2111
        %v2548 = vpop.f32.mrb[0].mxu0
        %v2549 = vadd.f32 0.0, %v2548
        %v2550 = vpop.f32.mrb[0].mxu0
        %v2551 = vpop.f32.mrb[0].mxu0
        %v2552 = vadd.f32 0.0, %v2551
        %v2553 = vpop.f32.mrb[0].mxu0
        %2554 = vmatprep.mubr.bf16.mxu0 0
        %2555 = vmatmul.mubr.bf16.gmra.mrb[0].mxu0 %v2114
        %v2556 = vpop.f32.mrb[0].mxu0
        %v2557 = vadd.f32 0.0, %v2556
        %v2558 = vpop.f32.mrb[0].mxu0
        %v2559 = vpop.f32.mrb[0].mxu0
        %v2560 = vadd.f32 0.0, %v2559
        %v2561 = vpop.f32.mrb[0].mxu0
        %2562 = vmatprep.mubr.bf16.mxu0 0
        %2563 = vmatmul.mubr.bf16.gmra.mrb[0].mxu0 %v2117
        %v2564 = vpop.f32.mrb[0].mxu0
        %v2565 = vadd.f32 0.0, %v2564
        %v2566 = vpop.f32.mrb[0].mxu0
        %v2567 = vpop.f32.mrb[0].mxu0
        %v2568 = vadd.f32 0.0, %v2567
        %v2569 = vpop.f32.mrb[0].mxu0
        %2570 = vmatprep.mubr.bf16.mxu0 0
        %2571 = vmatmul.mubr.bf16.gmra.mrb[0].mxu0 %v2120
        %v2572 = vpop.f32.mrb[0].mxu0
        %v2573 = vadd.f32 0.0, %v2572
        %v2574 = vpop.f32.mrb[0].mxu0
        %v2575 = vpop.f32.mrb[0].mxu0
        %v2576 = vadd.f32 0.0, %v2575
        %v2577 = vpop.f32.mrb[0].mxu0
        %2578 = vmatprep.mubr.bf16.mxu0 0
        %2579 = vmatmul.mubr.bf16.gmra.mrb[0].mxu0 %v2123
        %v2580 = vpop.f32.mrb[0].mxu0
        %v2581 = vadd.f32 0.0, %v2580
        %v2582 = vpop.f32.mrb[0].mxu0
        %v2583 = vpop.f32.mrb[0].mxu0
        %v2584 = vadd.f32 0.0, %v2583
        %v2585 = vpop.f32.mrb[0].mxu0
        %2586 = vmatprep.mubr.bf16.mxu0 0
        %2587 = vmatmul.mubr.bf16.gmra.mrb[0].mxu0 %v2126
        %v2588 = vpop.f32.mrb[0].mxu0
        %v2589 = vadd.f32 0.0, %v2588
        %v2590 = vpop.f32.mrb[0].mxu0
        %v2591 = vpop.f32.mrb[0].mxu0
        %v2592 = vadd.f32 0.0, %v2591
        %v2593 = vpop.f32.mrb[0].mxu0
        %2594 = vmatprep.mubr.bf16.mxu0 0
        %2595 = vmatmul.mubr.bf16.gmra.mrb[0].mxu0 %v2129
        %v2596 = vpop.f32.mrb[0].mxu0
        %v2597 = vadd.f32 0.0, %v2596
        %v2598 = vpop.f32.mrb[0].mxu0
        %v2599 = vpop.f32.mrb[0].mxu0
        %v2600 = vadd.f32 0.0, %v2599
        %v2601 = vpop.f32.mrb[0].mxu0
        %2602 = vmatprep.mubr.bf16.mxu0 0
        %2603 = vmatmul.mubr.bf16.gmra.mrb[0].mxu0 %v2132
        %v2604 = vpop.f32.mrb[0].mxu0
        %v2605 = vadd.f32 0.0, %v2604
        %v2606 = vpop.f32.mrb[0].mxu0
        %v2607 = vpop.f32.mrb[0].mxu0
        %v2608 = vadd.f32 0.0, %v2607
        %v2609 = vpop.f32.mrb[0].mxu0
        %2610 = vmatprep.mubr.bf16.mxu0 0
        %2611 = vmatmul.mubr.bf16.gmra.mrb[0].mxu0 %v2135
        %v2612 = vpop.f32.mrb[0].mxu0
        %v2613 = vadd.f32 0.0, %v2612
        %v2614 = vpop.f32.mrb[0].mxu0
        %v2615 = vpop.f32.mrb[0].mxu0
        %v2616 = vadd.f32 0.0, %v2615
        %v2617 = vpop.f32.mrb[0].mxu0
        %2618 = vmatprep.mubr.bf16.mxu0 0
        %2619 = vmatmul.mubr.bf16.gmra.mrb[0].mxu0 %v2138
        %v2620 = vpop.f32.mrb[0].mxu0
        %v2621 = vadd.f32 0.0, %v2620
        %v2622 = vpop.f32.mrb[0].mxu0
        %v2623 = vpop.f32.mrb[0].mxu0
        %v2624 = vadd.f32 0.0, %v2623
        %v2625 = vpop.f32.mrb[0].mxu0
        %2626 = vmatprep.mubr.bf16.mxu0 0
        %2627 = vmatmul.mubr.bf16.gmra.mrb[0].mxu0 %v2141
        %v2628 = vpop.f32.mrb[0].mxu0
        %v2629 = vadd.f32 0.0, %v2628
        %v2630 = vpop.f32.mrb[0].mxu0
        %v2631 = vpop.f32.mrb[0].mxu0
        %v2632 = vadd.f32 0.0, %v2631
        %v2633 = vpop.f32.mrb[0].mxu0
        %2634 = vmatprep.mubr.bf16.mxu0 0
        %2635 = vmatmul.mubr.bf16.gmra.mrb[0].mxu0 %v2144
        %v2636 = vpop.f32.mrb[0].mxu0
        %v2637 = vadd.f32 0.0, %v2636
        %v2638 = vpop.f32.mrb[0].mxu0
        %v2639 = vpop.f32.mrb[0].mxu0
        %v2640 = vadd.f32 0.0, %v2639
        %v2641 = vpop.f32.mrb[0].mxu0
        %2642 = vmatprep.mubr.bf16.mxu0 0
        %2643 = vmatmul.mubr.bf16.gmra.mrb[0].mxu0 %v2147
        %v2644 = vpop.f32.mrb[0].mxu0
        %v2645 = vadd.f32 0.0, %v2644
        %v2646 = vpop.f32.mrb[0].mxu0
        %v2647 = vpop.f32.mrb[0].mxu0
        %v2648 = vadd.f32 0.0, %v2647
        %v2649 = vpop.f32.mrb[0].mxu0
        %2650 = vmatprep.mubr.bf16.mxu0 0
        %2651 = vmatmul.mubr.bf16.gmra.mrb[0].mxu0 %v2150
        %v2652 = vpop.f32.mrb[0].mxu0
        %v2653 = vadd.f32 0.0, %v2652
        %v2654 = vpop.f32.mrb[0].mxu0
        %v2655 = vpop.f32.mrb[0].mxu0
        %v2656 = vadd.f32 0.0, %v2655
        %v2657 = vpop.f32.mrb[0].mxu0
        %2658 = vmatprep.mubr.bf16.mxu0 0
        %2659 = vmatmul.mubr.bf16.gmra.mrb[0].mxu0 %v2153
        %v2660 = vpop.f32.mrb[0].mxu0
        %v2661 = vadd.f32 0.0, %v2660
        %v2662 = vpop.f32.mrb[0].mxu0
        %v2663 = vpop.f32.mrb[0].mxu0
        %v2664 = vadd.f32 0.0, %v2663
        %v2665 = vpop.f32.mrb[0].mxu0
        %2666 = vmatprep.mubr.bf16.mxu0 0
        %2667 = vmatmul.mubr.bf16.gmra.mrb[0].mxu0 %v2156
        %v2668 = vpop.f32.mrb[0].mxu0
        %v2669 = vadd.f32 0.0, %v2668
        %v2670 = vpop.f32.mrb[0].mxu0
        %v2671 = vpop.f32.mrb[0].mxu0
        %v2672 = vadd.f32 0.0, %v2671
        %v2673 = vpop.f32.mrb[0].mxu0
        %2674 = vmatprep.mubr.bf16.mxu0 0
        %2675 = vmatmul.mubr.bf16.gmra.mrb[0].mxu0 %v2159
        %v2676 = vpop.f32.mrb[0].mxu0
        %v2677 = vadd.f32 0.0, %v2676
        %v2678 = vpop.f32.mrb[0].mxu0
        %v2679 = vpop.f32.mrb[0].mxu0
        %v2680 = vadd.f32 0.0, %v2679
        %v2681 = vpop.f32.mrb[0].mxu0
        %2682 = vmatprep.mubr.bf16.mxu0 0
        %2683 = vmatmul.mubr.bf16.gmra.mrb[0].mxu0 %v2162
        %v2684 = vpop.f32.mrb[0].mxu0
        %v2685 = vadd.f32 0.0, %v2684
        %v2686 = vpop.f32.mrb[0].mxu0
        %v2687 = vpop.f32.mrb[0].mxu0
        %v2688 = vadd.f32 0.0, %v2687
        %v2689 = vpop.f32.mrb[0].mxu0
        %2690 = vmatprep.mubr.bf16.mxu0 0
        %2691 = vmatmul.mubr.bf16.gmra.mrb[0].mxu0 %v2165
        %v2692 = vpop.f32.mrb[0].mxu0
        %v2693 = vadd.f32 0.0, %v2692
        %v2694 = vpop.f32.mrb[0].mxu0
        %v2695 = vpop.f32.mrb[0].mxu0
        %v2696 = vadd.f32 0.0, %v2695
        %v2697 = vpop.f32.mrb[0].mxu0
        %2698 = vmatprep.mubr.bf16.mxu0 0
        %2699 = vmatmul.mubr.bf16.gmra.mrb[0].mxu0 %v2168
        %v2700 = vpop.f32.mrb[0].mxu0
        %v2701 = vadd.f32 0.0, %v2700
        %v2702 = vpop.f32.mrb[0].mxu0
        %v2703 = vpop.f32.mrb[0].mxu0
        %v2704 = vadd.f32 0.0, %v2703
        %v2705 = vpop.f32.mrb[0].mxu0
        %2706 = vmatprep.mubr.bf16.mxu0 0
        %2707 = vmatmul.mubr.bf16.gmra.mrb[0].mxu0 %v2171
        %v2708 = vpop.f32.mrb[0].mxu0
        %v2709 = vadd.f32 0.0, %v2708
        %v2710 = vpop.f32.mrb[0].mxu0
        %v2711 = vpop.f32.mrb[0].mxu0
        %v2712 = vadd.f32 0.0, %v2711
        %v2713 = vpop.f32.mrb[0].mxu0
        %2714 = vmatprep.mubr.bf16.mxu0 0
        %2715 = vmatmul.mubr.bf16.gmra.mrb[0].mxu0 %v2174
        %v2716 = vpop.f32.mrb[0].mxu0
        %v2717 = vadd.f32 0.0, %v2716
        %v2718 = vpop.f32.mrb[0].mxu0
        %v2719 = vpop.f32.mrb[0].mxu0
        %v2720 = vadd.f32 0.0, %v2719
        %v2721 = vpop.f32.mrb[0].mxu0
        %2722 = vmatprep.mubr.bf16.mxu0 0
        %2723 = vmatmul.mubr.bf16.gmra.mrb[0].mxu0 %v2177
        %v2724 = vpop.f32.mrb[0].mxu0
        %v2725 = vadd.f32 0.0, %v2724
        %v2726 = vpop.f32.mrb[0].mxu0
        %v2727 = vpop.f32.mrb[0].mxu0
        %v2728 = vadd.f32 0.0, %v2727
        %v2729 = vpop.f32.mrb[0].mxu0
        %2730 = vdwg.mxu0
        %v2859 = vunpack.c.l.b16 %v210
        %v2860 = vunpack.c.l.b16 %v211
        %v2861 = vunpack.c.l.b16 %v212
        %v2862 = vunpack.c.l.b16 %v213
        %v2863 = vunpack.c.l.b16 %v215
        %v2864 = vunpack.c.l.b16 %v216
        %v2865 = vunpack.c.l.b16 %v217
        %v2866 = vunpack.c.l.b16 %v218
        %v2867 = vunpack.c.l.b16 %v220
        %v2868 = vunpack.c.l.b16 %v221
        %v2869 = vunpack.c.l.b16 %v222
        %v2870 = vunpack.c.l.b16 %v223
        %v2871 = vunpack.c.l.b16 %v225
        %v2872 = vunpack.c.l.b16 %v226
        %v2873 = vunpack.c.l.b16 %v227
        %v2874 = vunpack.c.l.b16 %v228
        %v2875 = vunpack.c.l.b16 %v230
        %v2876 = vunpack.c.l.b16 %v231
        %v2877 = vunpack.c.l.b16 %v232
        %v2878 = vunpack.c.l.b16 %v233
        %v2879 = vunpack.c.l.b16 %v235
        %v2880 = vunpack.c.l.b16 %v236
        %v2881 = vunpack.c.l.b16 %v237
        %v2882 = vunpack.c.l.b16 %v238
        %v2883 = vunpack.c.l.b16 %v240
        %v2884 = vunpack.c.l.b16 %v241
        %v2885 = vunpack.c.l.b16 %v242
        %v2886 = vunpack.c.l.b16 %v243
        %v2887 = vunpack.c.l.b16 %v245
        %v2888 = vunpack.c.l.b16 %v246
        %v2889 = vunpack.c.l.b16 %v247
        %v2890 = vunpack.c.l.b16 %v248
        %v2891 = vunpack.c.l.b16 %v250
        %v2892 = vunpack.c.l.b16 %v251
        %v2893 = vunpack.c.l.b16 %v252
        %v2894 = vunpack.c.l.b16 %v253
        %v2895 = vunpack.c.l.b16 %v255
        %v2896 = vunpack.c.l.b16 %v256
        %v2897 = vunpack.c.l.b16 %v257
        %v2898 = vunpack.c.l.b16 %v258
        %v2899 = vunpack.c.l.b16 %v260
        %v2900 = vunpack.c.l.b16 %v261
        %v2901 = vunpack.c.l.b16 %v262
        %v2902 = vunpack.c.l.b16 %v263
        %v2903 = vunpack.c.l.b16 %v265
        %v2904 = vunpack.c.l.b16 %v266
        %v2905 = vunpack.c.l.b16 %v267
        %v2906 = vunpack.c.l.b16 %v268
        %v2907 = vunpack.c.l.b16 %v270
        %v2908 = vunpack.c.l.b16 %v271
        %v2909 = vunpack.c.l.b16 %v272
        %v2910 = vunpack.c.l.b16 %v273
        %v2911 = vunpack.c.l.b16 %v275
        %v2912 = vunpack.c.l.b16 %v276
        %v2913 = vunpack.c.l.b16 %v277
        %v2914 = vunpack.c.l.b16 %v278
        %v2915 = vunpack.c.l.b16 %v280
        %v2916 = vunpack.c.l.b16 %v281
        %v2917 = vunpack.c.l.b16 %v282
        %v2918 = vunpack.c.l.b16 %v283
        %v2919 = vunpack.c.l.b16 %v285
        %v2920 = vunpack.c.l.b16 %v286
        %v2921 = vunpack.c.l.b16 %v287
        %v2922 = vunpack.c.l.b16 %v288
        %v2923 = vunpack.c.l.b16 %v290
        %v2924 = vunpack.c.l.b16 %v291
        %v2925 = vunpack.c.l.b16 %v292
        %v2926 = vunpack.c.l.b16 %v293
        %v2927 = vunpack.c.l.b16 %v295
        %v2928 = vunpack.c.l.b16 %v296
        %v2929 = vunpack.c.l.b16 %v297
        %v2930 = vunpack.c.l.b16 %v298
        %v2931 = vunpack.c.l.b16 %v300
        %v2932 = vunpack.c.l.b16 %v301
        %v2933 = vunpack.c.l.b16 %v302
        %v2934 = vunpack.c.l.b16 %v303
        %v2935 = vunpack.c.l.b16 %v305
        %v2936 = vunpack.c.l.b16 %v306
        %v2937 = vunpack.c.l.b16 %v307
        %v2938 = vunpack.c.l.b16 %v308
        %v2939 = vunpack.c.l.b16 %v310
        %v2940 = vunpack.c.l.b16 %v311
        %v2941 = vunpack.c.l.b16 %v312
        %v2942 = vunpack.c.l.b16 %v313
        %v2943 = vunpack.c.l.b16 %v315
        %v2944 = vunpack.c.l.b16 %v316
        %v2945 = vunpack.c.l.b16 %v317
        %v2946 = vunpack.c.l.b16 %v318
        %v2947 = vunpack.c.l.b16 %v320
        %v2948 = vunpack.c.l.b16 %v321
        %v2949 = vunpack.c.l.b16 %v322
        %v2950 = vunpack.c.l.b16 %v323
        %v2951 = vunpack.c.l.b16 %v325
        %v2952 = vunpack.c.l.b16 %v326
        %v2953 = vunpack.c.l.b16 %v327
        %v2954 = vunpack.c.l.b16 %v328
        %v2955 = vunpack.c.l.b16 %v330
        %v2956 = vunpack.c.l.b16 %v331
        %v2957 = vunpack.c.l.b16 %v332
        %v2958 = vunpack.c.l.b16 %v333
        %v2959 = vunpack.c.l.b16 %v335
        %v2960 = vunpack.c.l.b16 %v336
        %v2961 = vunpack.c.l.b16 %v337
        %v2962 = vunpack.c.l.b16 %v338
        %v2963 = vunpack.c.l.b16 %v340
        %v2964 = vunpack.c.l.b16 %v341
        %v2965 = vunpack.c.l.b16 %v342
        %v2966 = vunpack.c.l.b16 %v343
        %v2967 = vunpack.c.l.b16 %v345
        %v2968 = vunpack.c.l.b16 %v346
        %v2969 = vunpack.c.l.b16 %v347
        %v2970 = vunpack.c.l.b16 %v348
        %v2971 = vunpack.c.l.b16 %v350
        %v2972 = vunpack.c.l.b16 %v351
        %v2973 = vunpack.c.l.b16 %v352
        %v2974 = vunpack.c.l.b16 %v353
        %v2975 = vunpack.c.l.b16 %v355
        %v2976 = vunpack.c.l.b16 %v356
        %v2977 = vunpack.c.l.b16 %v357
        %v2978 = vunpack.c.l.b16 %v358
        %v2979 = vunpack.c.l.b16 %v360
        %v2980 = vunpack.c.l.b16 %v361
        %v2981 = vunpack.c.l.b16 %v362
        %v2982 = vunpack.c.l.b16 %v363
        %v2983 = vunpack.c.l.b16 %v365
        %v2984 = vunpack.c.l.b16 %v366
        %v2985 = vunpack.c.l.b16 %v367
        %v2986 = vunpack.c.l.b16 %v368
        %v2987 = vpack.c.b16 %v2860, %v2859
        %v2988 = vpack.c.b16 %v2862, %v2861
        %v2989 = vpack.c.b16 %v2864, %v2863
        %v2990 = vpack.c.b16 %v2866, %v2865
        %v2991 = vpack.c.b16 %v2868, %v2867
        %v2992 = vpack.c.b16 %v2870, %v2869
        %v2993 = vpack.c.b16 %v2872, %v2871
        %v2994 = vpack.c.b16 %v2874, %v2873
        %v2995 = vpack.c.b16 %v2876, %v2875
        %v2996 = vpack.c.b16 %v2878, %v2877
        %v2997 = vpack.c.b16 %v2880, %v2879
        %v2998 = vpack.c.b16 %v2882, %v2881
        %v2999 = vpack.c.b16 %v2884, %v2883
        %v3000 = vpack.c.b16 %v2886, %v2885
        %v3001 = vpack.c.b16 %v2888, %v2887
        %v3002 = vpack.c.b16 %v2890, %v2889
        %v3003 = vpack.c.b16 %v2892, %v2891
        %v3004 = vpack.c.b16 %v2894, %v2893
        %v3005 = vpack.c.b16 %v2896, %v2895
        %v3006 = vpack.c.b16 %v2898, %v2897
        %v3007 = vpack.c.b16 %v2900, %v2899
        %v3008 = vpack.c.b16 %v2902, %v2901
        %v3009 = vpack.c.b16 %v2904, %v2903
        %v3010 = vpack.c.b16 %v2906, %v2905
        %v3011 = vpack.c.b16 %v2908, %v2907
        %v3012 = vpack.c.b16 %v2910, %v2909
        %v3013 = vpack.c.b16 %v2912, %v2911
        %v3014 = vpack.c.b16 %v2914, %v2913
        %v3015 = vpack.c.b16 %v2916, %v2915
        %v3016 = vpack.c.b16 %v2918, %v2917
        %v3017 = vpack.c.b16 %v2920, %v2919
        %v3018 = vpack.c.b16 %v2922, %v2921
        %v3019 = vpack.c.b16 %v2924, %v2923
        %v3020 = vpack.c.b16 %v2926, %v2925
        %v3021 = vpack.c.b16 %v2928, %v2927
        %v3022 = vpack.c.b16 %v2930, %v2929
        %v3023 = vpack.c.b16 %v2932, %v2931
        %v3024 = vpack.c.b16 %v2934, %v2933
        %v3025 = vpack.c.b16 %v2936, %v2935
        %v3026 = vpack.c.b16 %v2938, %v2937
        %v3027 = vpack.c.b16 %v2940, %v2939
        %v3028 = vpack.c.b16 %v2942, %v2941
        %v3029 = vpack.c.b16 %v2944, %v2943
        %v3030 = vpack.c.b16 %v2946, %v2945
        %v3031 = vpack.c.b16 %v2948, %v2947
        %v3032 = vpack.c.b16 %v2950, %v2949
        %v3033 = vpack.c.b16 %v2952, %v2951
        %v3034 = vpack.c.b16 %v2954, %v2953
        %v3035 = vpack.c.b16 %v2956, %v2955
        %v3036 = vpack.c.b16 %v2958, %v2957
        %v3037 = vpack.c.b16 %v2960, %v2959
        %v3038 = vpack.c.b16 %v2962, %v2961
        %v3039 = vpack.c.b16 %v2964, %v2963
        %v3040 = vpack.c.b16 %v2966, %v2965
        %v3041 = vpack.c.b16 %v2968, %v2967
        %v3042 = vpack.c.b16 %v2970, %v2969
        %v3043 = vpack.c.b16 %v2972, %v2971
        %v3044 = vpack.c.b16 %v2974, %v2973
        %v3045 = vpack.c.b16 %v2976, %v2975
        %v3046 = vpack.c.b16 %v2978, %v2977
        %v3047 = vpack.c.b16 %v2980, %v2979
        %v3048 = vpack.c.b16 %v2982, %v2981
        %v3049 = vpack.c.b16 %v2984, %v2983
        %v3050 = vpack.c.b16 %v2986, %v2985
        %v3052 = vsel %vm1986, %v2987, 0
        %v3055 = vsel %vm1986, %v2988, 0
        %v3058 = vsel %vm1986, %v2989, 0
        %v3061 = vsel %vm1986, %v2990, 0
        %v3064 = vsel %vm1986, %v2991, 0
        %v3067 = vsel %vm1986, %v2992, 0
        %v3070 = vsel %vm1986, %v2993, 0
        %v3073 = vsel %vm1986, %v2994, 0
        %v3076 = vsel %vm1986, %v2995, 0
        %v3079 = vsel %vm1986, %v2996, 0
        %v3082 = vsel %vm1986, %v2997, 0
        %v3085 = vsel %vm1986, %v2998, 0
        %v3088 = vsel %vm1986, %v2999, 0
        %v3091 = vsel %vm1986, %v3000, 0
        %v3094 = vsel %vm1986, %v3001, 0
        %v3097 = vsel %vm1986, %v3002, 0
        %v3100 = vsel %vm1986, %v3003, 0
        %v3103 = vsel %vm1986, %v3004, 0
        %v3106 = vsel %vm1986, %v3005, 0
        %v3109 = vsel %vm1986, %v3006, 0
        %v3112 = vsel %vm1986, %v3007, 0
        %v3115 = vsel %vm1986, %v3008, 0
        %v3118 = vsel %vm1986, %v3009, 0
        %v3121 = vsel %vm1986, %v3010, 0
        %v3124 = vsel %vm1986, %v3011, 0
        %v3127 = vsel %vm1986, %v3012, 0
        %v3130 = vsel %vm1986, %v3013, 0
        %v3133 = vsel %vm1986, %v3014, 0
        %v3136 = vsel %vm1986, %v3015, 0
        %v3139 = vsel %vm1986, %v3016, 0
        %v3142 = vsel %vm1986, %v3017, 0
        %v3145 = vsel %vm1986, %v3018, 0
        %v3148 = vsel %vm1986, %v3019, 0
        %v3151 = vsel %vm1986, %v3020, 0
        %v3154 = vsel %vm1986, %v3021, 0
        %v3157 = vsel %vm1986, %v3022, 0
        %v3160 = vsel %vm1986, %v3023, 0
        %v3163 = vsel %vm1986, %v3024, 0
        %v3166 = vsel %vm1986, %v3025, 0
        %v3169 = vsel %vm1986, %v3026, 0
        %v3172 = vsel %vm1986, %v3027, 0
        %v3175 = vsel %vm1986, %v3028, 0
        %v3178 = vsel %vm1986, %v3029, 0
        %v3181 = vsel %vm1986, %v3030, 0
        %v3184 = vsel %vm1986, %v3031, 0
        %v3187 = vsel %vm1986, %v3032, 0
        %v3190 = vsel %vm1986, %v3033, 0
        %v3193 = vsel %vm1986, %v3034, 0
        %v3196 = vsel %vm1986, %v3035, 0
        %v3199 = vsel %vm1986, %v3036, 0
        %v3202 = vsel %vm1986, %v3037, 0
        %v3205 = vsel %vm1986, %v3038, 0
        %v3208 = vsel %vm1986, %v3039, 0
        %v3211 = vsel %vm1986, %v3040, 0
        %v3214 = vsel %vm1986, %v3041, 0
        %v3217 = vsel %vm1986, %v3042, 0
        %v3220 = vsel %vm1986, %v3043, 0
        %v3223 = vsel %vm1986, %v3044, 0
        %v3226 = vsel %vm1986, %v3045, 0
        %v3229 = vsel %vm1986, %v3046, 0
        %v3232 = vsel %vm1986, %v3047, 0
        %v3235 = vsel %vm1986, %v3048, 0
        %v3238 = vsel %vm1986, %v3049, 0
        %v3241 = vsel %vm1986, %v3050, 0
        %v3244 = vand.u32 %v380, %v2182
        %3246 = vmatprep.subr.bf16.mxu0 0
        %3247 = vmatpush1.bf16.msra.mxu0 %v3244
        %3248 = vmatprep.subr.bf16.mxu0 0
        %3249 = vmatpush1.bf16.msra.mxu0 0
        %3250 = vmatprep.subr.bf16.mxu0 0
        %3251 = vmatpush1.bf16.msra.mxu0 0
        %3252 = vmatprep.subr.bf16.mxu0 0
        %3253 = vmatpush1.bf16.msra.mxu0 0
        %3254 = vmatprep.subr.bf16.mxu0 0
        %3255 = vmatpush1.bf16.msra.mxu0 0
        %3256 = vmatprep.subr.bf16.mxu0 0
        %3257 = vmatpush1.bf16.msra.mxu0 0
        %3258 = vmatprep.subr.bf16.mxu0 0
        %3259 = vmatpush1.bf16.msra.mxu0 0
        %3260 = vmatprep.subr.bf16.mxu0 0
        %3261 = vmatpush1.bf16.msra.mxu0 0
        %3262 = vmatprep.subr.bf16.mxu0 0
        %3263 = vmatpush1.bf16.msra.mxu0 0
        %3264 = vmatprep.subr.bf16.mxu0 0
        %3265 = vmatpush1.bf16.msra.mxu0 0
        %3266 = vmatprep.subr.bf16.mxu0 0
        %3267 = vmatpush1.bf16.msra.mxu0 0
        %3268 = vmatprep.subr.bf16.mxu0 0
        %3269 = vmatpush1.bf16.msra.mxu0 0
        %3270 = vmatprep.subr.bf16.mxu0 0
        %3271 = vmatpush1.bf16.msra.mxu0 0
        %3272 = vmatprep.subr.bf16.mxu0 0
        %3273 = vmatpush1.bf16.msra.mxu0 0
        %3274 = vmatprep.subr.bf16.mxu0 0
        %3275 = vmatpush1.bf16.msra.mxu0 0
        %3276 = vmatprep.subr.bf16.mxu0 0
        %3277 = vmatpush1.bf16.msra.mxu0 0
        %3278 = vmatprep.mubr.bf16.mxu0 0
        %3279 = vmatmul.mubr.bf16.gmra.mrb[0].mxu0 %v3052
        %v3280 = vpop.f32.mrb[0].mxu0
        %v3281 = vadd.f32 %v2221, %v3280
        %v3282 = vpop.f32.mrb[0].mxu0
        %v3283 = vpop.f32.mrb[0].mxu0
        %v3284 = vadd.f32 %v2224, %v3283
        %v3285 = vpop.f32.mrb[0].mxu0
        %3286 = vmatprep.mubr.bf16.mxu0 0
        %3287 = vmatmul.mubr.bf16.gmra.mrb[0].mxu0 %v3055
        %v3288 = vpop.f32.mrb[0].mxu0
        %v3289 = vadd.f32 %v2229, %v3288
        %v3290 = vpop.f32.mrb[0].mxu0
        %v3291 = vpop.f32.mrb[0].mxu0
        %v3292 = vadd.f32 %v2232, %v3291
        %v3293 = vpop.f32.mrb[0].mxu0
        %3294 = vmatprep.mubr.bf16.mxu0 0
        %3295 = vmatmul.mubr.bf16.gmra.mrb[0].mxu0 %v3058
        %v3296 = vpop.f32.mrb[0].mxu0
        %v3297 = vadd.f32 %v2237, %v3296
        %v3298 = vpop.f32.mrb[0].mxu0
        %v3299 = vpop.f32.mrb[0].mxu0
        %v3300 = vadd.f32 %v2240, %v3299
        %v3301 = vpop.f32.mrb[0].mxu0
        %3302 = vmatprep.mubr.bf16.mxu0 0
        %3303 = vmatmul.mubr.bf16.gmra.mrb[0].mxu0 %v3061
        %v3304 = vpop.f32.mrb[0].mxu0
        %v3305 = vadd.f32 %v2245, %v3304
        %v3306 = vpop.f32.mrb[0].mxu0
        %v3307 = vpop.f32.mrb[0].mxu0
        %v3308 = vadd.f32 %v2248, %v3307
        %v3309 = vpop.f32.mrb[0].mxu0
        %3310 = vmatprep.mubr.bf16.mxu0 0
        %3311 = vmatmul.mubr.bf16.gmra.mrb[0].mxu0 %v3064
        %v3312 = vpop.f32.mrb[0].mxu0
        %v3313 = vadd.f32 %v2253, %v3312
        %v3314 = vpop.f32.mrb[0].mxu0
        %v3315 = vpop.f32.mrb[0].mxu0
        %v3316 = vadd.f32 %v2256, %v3315
        %v3317 = vpop.f32.mrb[0].mxu0
        %3318 = vmatprep.mubr.bf16.mxu0 0
        %3319 = vmatmul.mubr.bf16.gmra.mrb[0].mxu0 %v3067
        %v3320 = vpop.f32.mrb[0].mxu0
        %v3321 = vadd.f32 %v2261, %v3320
        %v3322 = vpop.f32.mrb[0].mxu0
        %v3323 = vpop.f32.mrb[0].mxu0
        %v3324 = vadd.f32 %v2264, %v3323
        %v3325 = vpop.f32.mrb[0].mxu0
        %3326 = vmatprep.mubr.bf16.mxu0 0
        %3327 = vmatmul.mubr.bf16.gmra.mrb[0].mxu0 %v3070
        %v3328 = vpop.f32.mrb[0].mxu0
        %v3329 = vadd.f32 %v2269, %v3328
        %v3330 = vpop.f32.mrb[0].mxu0
        %v3331 = vpop.f32.mrb[0].mxu0
        %v3332 = vadd.f32 %v2272, %v3331
        %v3333 = vpop.f32.mrb[0].mxu0
        %3334 = vmatprep.mubr.bf16.mxu0 0
        %3335 = vmatmul.mubr.bf16.gmra.mrb[0].mxu0 %v3073
        %v3336 = vpop.f32.mrb[0].mxu0
        %v3337 = vadd.f32 %v2277, %v3336
        %v3338 = vpop.f32.mrb[0].mxu0
        %v3339 = vpop.f32.mrb[0].mxu0
        %v3340 = vadd.f32 %v2280, %v3339
        %v3341 = vpop.f32.mrb[0].mxu0
        %3342 = vmatprep.mubr.bf16.mxu0 0
        %3343 = vmatmul.mubr.bf16.gmra.mrb[0].mxu0 %v3076
        %v3344 = vpop.f32.mrb[0].mxu0
        %v3345 = vadd.f32 %v2285, %v3344
        %v3346 = vpop.f32.mrb[0].mxu0
        %v3347 = vpop.f32.mrb[0].mxu0
        %v3348 = vadd.f32 %v2288, %v3347
        %v3349 = vpop.f32.mrb[0].mxu0
        %3350 = vmatprep.mubr.bf16.mxu0 0
        %3351 = vmatmul.mubr.bf16.gmra.mrb[0].mxu0 %v3079
        %v3352 = vpop.f32.mrb[0].mxu0
        %v3353 = vadd.f32 %v2293, %v3352
        %v3354 = vpop.f32.mrb[0].mxu0
        %v3355 = vpop.f32.mrb[0].mxu0
        %v3356 = vadd.f32 %v2296, %v3355
        %v3357 = vpop.f32.mrb[0].mxu0
        %3358 = vmatprep.mubr.bf16.mxu0 0
        %3359 = vmatmul.mubr.bf16.gmra.mrb[0].mxu0 %v3082
        %v3360 = vpop.f32.mrb[0].mxu0
        %v3361 = vadd.f32 %v2301, %v3360
        %v3362 = vpop.f32.mrb[0].mxu0
        %v3363 = vpop.f32.mrb[0].mxu0
        %v3364 = vadd.f32 %v2304, %v3363
        %v3365 = vpop.f32.mrb[0].mxu0
        %3366 = vmatprep.mubr.bf16.mxu0 0
        %3367 = vmatmul.mubr.bf16.gmra.mrb[0].mxu0 %v3085
        %v3368 = vpop.f32.mrb[0].mxu0
        %v3369 = vadd.f32 %v2309, %v3368
        %v3370 = vpop.f32.mrb[0].mxu0
        %v3371 = vpop.f32.mrb[0].mxu0
        %v3372 = vadd.f32 %v2312, %v3371
        %v3373 = vpop.f32.mrb[0].mxu0
        %3374 = vmatprep.mubr.bf16.mxu0 0
        %3375 = vmatmul.mubr.bf16.gmra.mrb[0].mxu0 %v3088
        %v3376 = vpop.f32.mrb[0].mxu0
        %v3377 = vadd.f32 %v2317, %v3376
        %v3378 = vpop.f32.mrb[0].mxu0
        %v3379 = vpop.f32.mrb[0].mxu0
        %v3380 = vadd.f32 %v2320, %v3379
        %v3381 = vpop.f32.mrb[0].mxu0
        %3382 = vmatprep.mubr.bf16.mxu0 0
        %3383 = vmatmul.mubr.bf16.gmra.mrb[0].mxu0 %v3091
        %v3384 = vpop.f32.mrb[0].mxu0
        %v3385 = vadd.f32 %v2325, %v3384
        %v3386 = vpop.f32.mrb[0].mxu0
        %v3387 = vpop.f32.mrb[0].mxu0
        %v3388 = vadd.f32 %v2328, %v3387
        %v3389 = vpop.f32.mrb[0].mxu0
        %3390 = vmatprep.mubr.bf16.mxu0 0
        %3391 = vmatmul.mubr.bf16.gmra.mrb[0].mxu0 %v3094
        %v3392 = vpop.f32.mrb[0].mxu0
        %v3393 = vadd.f32 %v2333, %v3392
        %v3394 = vpop.f32.mrb[0].mxu0
        %v3395 = vpop.f32.mrb[0].mxu0
        %v3396 = vadd.f32 %v2336, %v3395
        %v3397 = vpop.f32.mrb[0].mxu0
        %3398 = vmatprep.mubr.bf16.mxu0 0
        %3399 = vmatmul.mubr.bf16.gmra.mrb[0].mxu0 %v3097
        %v3400 = vpop.f32.mrb[0].mxu0
        %v3401 = vadd.f32 %v2341, %v3400
        %v3402 = vpop.f32.mrb[0].mxu0
        %v3403 = vpop.f32.mrb[0].mxu0
        %v3404 = vadd.f32 %v2344, %v3403
        %v3405 = vpop.f32.mrb[0].mxu0
        %3406 = vmatprep.mubr.bf16.mxu0 0
        %3407 = vmatmul.mubr.bf16.gmra.mrb[0].mxu0 %v3100
        %v3408 = vpop.f32.mrb[0].mxu0
        %v3409 = vadd.f32 %v2349, %v3408
        %v3410 = vpop.f32.mrb[0].mxu0
        %v3411 = vpop.f32.mrb[0].mxu0
        %v3412 = vadd.f32 %v2352, %v3411
        %v3413 = vpop.f32.mrb[0].mxu0
        %3414 = vmatprep.mubr.bf16.mxu0 0
        %3415 = vmatmul.mubr.bf16.gmra.mrb[0].mxu0 %v3103
        %v3416 = vpop.f32.mrb[0].mxu0
        %v3417 = vadd.f32 %v2357, %v3416
        %v3418 = vpop.f32.mrb[0].mxu0
        %v3419 = vpop.f32.mrb[0].mxu0
        %v3420 = vadd.f32 %v2360, %v3419
        %v3421 = vpop.f32.mrb[0].mxu0
        %3422 = vmatprep.mubr.bf16.mxu0 0
        %3423 = vmatmul.mubr.bf16.gmra.mrb[0].mxu0 %v3106
        %v3424 = vpop.f32.mrb[0].mxu0
        %v3425 = vadd.f32 %v2365, %v3424
        %v3426 = vpop.f32.mrb[0].mxu0
        %v3427 = vpop.f32.mrb[0].mxu0
        %v3428 = vadd.f32 %v2368, %v3427
        %v3429 = vpop.f32.mrb[0].mxu0
        %3430 = vmatprep.mubr.bf16.mxu0 0
        %3431 = vmatmul.mubr.bf16.gmra.mrb[0].mxu0 %v3109
        %v3432 = vpop.f32.mrb[0].mxu0
        %v3433 = vadd.f32 %v2373, %v3432
        %v3434 = vpop.f32.mrb[0].mxu0
        %v3435 = vpop.f32.mrb[0].mxu0
        %v3436 = vadd.f32 %v2376, %v3435
        %v3437 = vpop.f32.mrb[0].mxu0
        %3438 = vmatprep.mubr.bf16.mxu0 0
        %3439 = vmatmul.mubr.bf16.gmra.mrb[0].mxu0 %v3112
        %v3440 = vpop.f32.mrb[0].mxu0
        %v3441 = vadd.f32 %v2381, %v3440
        %v3442 = vpop.f32.mrb[0].mxu0
        %v3443 = vpop.f32.mrb[0].mxu0
        %v3444 = vadd.f32 %v2384, %v3443
        %v3445 = vpop.f32.mrb[0].mxu0
        %3446 = vmatprep.mubr.bf16.mxu0 0
        %3447 = vmatmul.mubr.bf16.gmra.mrb[0].mxu0 %v3115
        %v3448 = vpop.f32.mrb[0].mxu0
        %v3449 = vadd.f32 %v2389, %v3448
        %v3450 = vpop.f32.mrb[0].mxu0
        %v3451 = vpop.f32.mrb[0].mxu0
        %v3452 = vadd.f32 %v2392, %v3451
        %v3453 = vpop.f32.mrb[0].mxu0
        %3454 = vmatprep.mubr.bf16.mxu0 0
        %3455 = vmatmul.mubr.bf16.gmra.mrb[0].mxu0 %v3118
        %v3456 = vpop.f32.mrb[0].mxu0
        %v3457 = vadd.f32 %v2397, %v3456
        %v3458 = vpop.f32.mrb[0].mxu0
        %v3459 = vpop.f32.mrb[0].mxu0
        %v3460 = vadd.f32 %v2400, %v3459
        %v3461 = vpop.f32.mrb[0].mxu0
        %3462 = vmatprep.mubr.bf16.mxu0 0
        %3463 = vmatmul.mubr.bf16.gmra.mrb[0].mxu0 %v3121
        %v3464 = vpop.f32.mrb[0].mxu0
        %v3465 = vadd.f32 %v2405, %v3464
        %v3466 = vpop.f32.mrb[0].mxu0
        %v3467 = vpop.f32.mrb[0].mxu0
        %v3468 = vadd.f32 %v2408, %v3467
        %v3469 = vpop.f32.mrb[0].mxu0
        %3470 = vmatprep.mubr.bf16.mxu0 0
        %3471 = vmatmul.mubr.bf16.gmra.mrb[0].mxu0 %v3124
        %v3472 = vpop.f32.mrb[0].mxu0
        %v3473 = vadd.f32 %v2413, %v3472
        %v3474 = vpop.f32.mrb[0].mxu0
        %v3475 = vpop.f32.mrb[0].mxu0
        %v3476 = vadd.f32 %v2416, %v3475
        %v3477 = vpop.f32.mrb[0].mxu0
        %3478 = vmatprep.mubr.bf16.mxu0 0
        %3479 = vmatmul.mubr.bf16.gmra.mrb[0].mxu0 %v3127
        %v3480 = vpop.f32.mrb[0].mxu0
        %v3481 = vadd.f32 %v2421, %v3480
        %v3482 = vpop.f32.mrb[0].mxu0
        %v3483 = vpop.f32.mrb[0].mxu0
        %v3484 = vadd.f32 %v2424, %v3483
        %v3485 = vpop.f32.mrb[0].mxu0
        %3486 = vmatprep.mubr.bf16.mxu0 0
        %3487 = vmatmul.mubr.bf16.gmra.mrb[0].mxu0 %v3130
        %v3488 = vpop.f32.mrb[0].mxu0
        %v3489 = vadd.f32 %v2429, %v3488
        %v3490 = vpop.f32.mrb[0].mxu0
        %v3491 = vpop.f32.mrb[0].mxu0
        %v3492 = vadd.f32 %v2432, %v3491
        %v3493 = vpop.f32.mrb[0].mxu0
        %3494 = vmatprep.mubr.bf16.mxu0 0
        %3495 = vmatmul.mubr.bf16.gmra.mrb[0].mxu0 %v3133
        %v3496 = vpop.f32.mrb[0].mxu0
        %v3497 = vadd.f32 %v2437, %v3496
        %v3498 = vpop.f32.mrb[0].mxu0
        %v3499 = vpop.f32.mrb[0].mxu0
        %v3500 = vadd.f32 %v2440, %v3499
        %v3501 = vpop.f32.mrb[0].mxu0
        %3502 = vmatprep.mubr.bf16.mxu0 0
        %3503 = vmatmul.mubr.bf16.gmra.mrb[0].mxu0 %v3136
        %v3504 = vpop.f32.mrb[0].mxu0
        %v3505 = vadd.f32 %v2445, %v3504
        %v3506 = vpop.f32.mrb[0].mxu0
        %v3507 = vpop.f32.mrb[0].mxu0
        %v3508 = vadd.f32 %v2448, %v3507
        %v3509 = vpop.f32.mrb[0].mxu0
        %3510 = vmatprep.mubr.bf16.mxu0 0
        %3511 = vmatmul.mubr.bf16.gmra.mrb[0].mxu0 %v3139
        %v3512 = vpop.f32.mrb[0].mxu0
        %v3513 = vadd.f32 %v2453, %v3512
        %v3514 = vpop.f32.mrb[0].mxu0
        %v3515 = vpop.f32.mrb[0].mxu0
        %v3516 = vadd.f32 %v2456, %v3515
        %v3517 = vpop.f32.mrb[0].mxu0
        %3518 = vmatprep.mubr.bf16.mxu0 0
        %3519 = vmatmul.mubr.bf16.gmra.mrb[0].mxu0 %v3142
        %v3520 = vpop.f32.mrb[0].mxu0
        %v3521 = vadd.f32 %v2461, %v3520
        %v3522 = vpop.f32.mrb[0].mxu0
        %v3523 = vpop.f32.mrb[0].mxu0
        %v3524 = vadd.f32 %v2464, %v3523
        %v3525 = vpop.f32.mrb[0].mxu0
        %3526 = vmatprep.mubr.bf16.mxu0 0
        %3527 = vmatmul.mubr.bf16.gmra.mrb[0].mxu0 %v3145
        %v3528 = vpop.f32.mrb[0].mxu0
        %v3529 = vadd.f32 %v2469, %v3528
        %v3530 = vpop.f32.mrb[0].mxu0
        %v3531 = vpop.f32.mrb[0].mxu0
        %v3532 = vadd.f32 %v2472, %v3531
        %v3533 = vpop.f32.mrb[0].mxu0
        %3534 = vmatprep.mubr.bf16.mxu0 0
        %3535 = vmatmul.mubr.bf16.gmra.mrb[0].mxu0 %v3148
        %v3536 = vpop.f32.mrb[0].mxu0
        %v3537 = vadd.f32 %v2477, %v3536
        %v3538 = vpop.f32.mrb[0].mxu0
        %v3539 = vpop.f32.mrb[0].mxu0
        %v3540 = vadd.f32 %v2480, %v3539
        %v3541 = vpop.f32.mrb[0].mxu0
        %3542 = vmatprep.mubr.bf16.mxu0 0
        %3543 = vmatmul.mubr.bf16.gmra.mrb[0].mxu0 %v3151
        %v3544 = vpop.f32.mrb[0].mxu0
        %v3545 = vadd.f32 %v2485, %v3544
        %v3546 = vpop.f32.mrb[0].mxu0
        %v3547 = vpop.f32.mrb[0].mxu0
        %v3548 = vadd.f32 %v2488, %v3547
        %v3549 = vpop.f32.mrb[0].mxu0
        %3550 = vmatprep.mubr.bf16.mxu0 0
        %3551 = vmatmul.mubr.bf16.gmra.mrb[0].mxu0 %v3154
        %v3552 = vpop.f32.mrb[0].mxu0
        %v3553 = vadd.f32 %v2493, %v3552
        %v3554 = vpop.f32.mrb[0].mxu0
        %v3555 = vpop.f32.mrb[0].mxu0
        %v3556 = vadd.f32 %v2496, %v3555
        %v3557 = vpop.f32.mrb[0].mxu0
        %3558 = vmatprep.mubr.bf16.mxu0 0
        %3559 = vmatmul.mubr.bf16.gmra.mrb[0].mxu0 %v3157
        %v3560 = vpop.f32.mrb[0].mxu0
        %v3561 = vadd.f32 %v2501, %v3560
        %v3562 = vpop.f32.mrb[0].mxu0
        %v3563 = vpop.f32.mrb[0].mxu0
        %v3564 = vadd.f32 %v2504, %v3563
        %v3565 = vpop.f32.mrb[0].mxu0
        %3566 = vmatprep.mubr.bf16.mxu0 0
        %3567 = vmatmul.mubr.bf16.gmra.mrb[0].mxu0 %v3160
        %v3568 = vpop.f32.mrb[0].mxu0
        %v3569 = vadd.f32 %v2509, %v3568
        %v3570 = vpop.f32.mrb[0].mxu0
        %v3571 = vpop.f32.mrb[0].mxu0
        %v3572 = vadd.f32 %v2512, %v3571
        %v3573 = vpop.f32.mrb[0].mxu0
        %3574 = vmatprep.mubr.bf16.mxu0 0
        %3575 = vmatmul.mubr.bf16.gmra.mrb[0].mxu0 %v3163
        %v3576 = vpop.f32.mrb[0].mxu0
        %v3577 = vadd.f32 %v2517, %v3576
        %v3578 = vpop.f32.mrb[0].mxu0
        %v3579 = vpop.f32.mrb[0].mxu0
        %v3580 = vadd.f32 %v2520, %v3579
        %v3581 = vpop.f32.mrb[0].mxu0
        %3582 = vmatprep.mubr.bf16.mxu0 0
        %3583 = vmatmul.mubr.bf16.gmra.mrb[0].mxu0 %v3166
        %v3584 = vpop.f32.mrb[0].mxu0
        %v3585 = vadd.f32 %v2525, %v3584
        %v3586 = vpop.f32.mrb[0].mxu0
        %v3587 = vpop.f32.mrb[0].mxu0
        %v3588 = vadd.f32 %v2528, %v3587
        %v3589 = vpop.f32.mrb[0].mxu0
        %3590 = vmatprep.mubr.bf16.mxu0 0
        %3591 = vmatmul.mubr.bf16.gmra.mrb[0].mxu0 %v3169
        %v3592 = vpop.f32.mrb[0].mxu0
        %v3593 = vadd.f32 %v2533, %v3592
        %v3594 = vpop.f32.mrb[0].mxu0
        %v3595 = vpop.f32.mrb[0].mxu0
        %v3596 = vadd.f32 %v2536, %v3595
        %v3597 = vpop.f32.mrb[0].mxu0
        %3598 = vmatprep.mubr.bf16.mxu0 0
        %3599 = vmatmul.mubr.bf16.gmra.mrb[0].mxu0 %v3172
        %v3600 = vpop.f32.mrb[0].mxu0
        %v3601 = vadd.f32 %v2541, %v3600
        %v3602 = vpop.f32.mrb[0].mxu0
        %v3603 = vpop.f32.mrb[0].mxu0
        %v3604 = vadd.f32 %v2544, %v3603
        %v3605 = vpop.f32.mrb[0].mxu0
        %3606 = vmatprep.mubr.bf16.mxu0 0
        %3607 = vmatmul.mubr.bf16.gmra.mrb[0].mxu0 %v3175
        %v3608 = vpop.f32.mrb[0].mxu0
        %v3609 = vadd.f32 %v2549, %v3608
        %v3610 = vpop.f32.mrb[0].mxu0
        %v3611 = vpop.f32.mrb[0].mxu0
        %v3612 = vadd.f32 %v2552, %v3611
        %v3613 = vpop.f32.mrb[0].mxu0
        %3614 = vmatprep.mubr.bf16.mxu0 0
        %3615 = vmatmul.mubr.bf16.gmra.mrb[0].mxu0 %v3178
        %v3616 = vpop.f32.mrb[0].mxu0
        %v3617 = vadd.f32 %v2557, %v3616
        %v3618 = vpop.f32.mrb[0].mxu0
        %v3619 = vpop.f32.mrb[0].mxu0
        %v3620 = vadd.f32 %v2560, %v3619
        %v3621 = vpop.f32.mrb[0].mxu0
        %3622 = vmatprep.mubr.bf16.mxu0 0
        %3623 = vmatmul.mubr.bf16.gmra.mrb[0].mxu0 %v3181
        %v3624 = vpop.f32.mrb[0].mxu0
        %v3625 = vadd.f32 %v2565, %v3624
        %v3626 = vpop.f32.mrb[0].mxu0
        %v3627 = vpop.f32.mrb[0].mxu0
        %v3628 = vadd.f32 %v2568, %v3627
        %v3629 = vpop.f32.mrb[0].mxu0
        %3630 = vmatprep.mubr.bf16.mxu0 0
        %3631 = vmatmul.mubr.bf16.gmra.mrb[0].mxu0 %v3184
        %v3632 = vpop.f32.mrb[0].mxu0
        %v3633 = vadd.f32 %v2573, %v3632
        %v3634 = vpop.f32.mrb[0].mxu0
        %v3635 = vpop.f32.mrb[0].mxu0
        %v3636 = vadd.f32 %v2576, %v3635
        %v3637 = vpop.f32.mrb[0].mxu0
        %3638 = vmatprep.mubr.bf16.mxu0 0
        %3639 = vmatmul.mubr.bf16.gmra.mrb[0].mxu0 %v3187
        %v3640 = vpop.f32.mrb[0].mxu0
        %v3641 = vadd.f32 %v2581, %v3640
        %v3642 = vpop.f32.mrb[0].mxu0
        %v3643 = vpop.f32.mrb[0].mxu0
        %v3644 = vadd.f32 %v2584, %v3643
        %v3645 = vpop.f32.mrb[0].mxu0
        %3646 = vmatprep.mubr.bf16.mxu0 0
        %3647 = vmatmul.mubr.bf16.gmra.mrb[0].mxu0 %v3190
        %v3648 = vpop.f32.mrb[0].mxu0
        %v3649 = vadd.f32 %v2589, %v3648
        %v3650 = vpop.f32.mrb[0].mxu0
        %v3651 = vpop.f32.mrb[0].mxu0
        %v3652 = vadd.f32 %v2592, %v3651
        %v3653 = vpop.f32.mrb[0].mxu0
        %3654 = vmatprep.mubr.bf16.mxu0 0
        %3655 = vmatmul.mubr.bf16.gmra.mrb[0].mxu0 %v3193
        %v3656 = vpop.f32.mrb[0].mxu0
        %v3657 = vadd.f32 %v2597, %v3656
        %v3658 = vpop.f32.mrb[0].mxu0
        %v3659 = vpop.f32.mrb[0].mxu0
        %v3660 = vadd.f32 %v2600, %v3659
        %v3661 = vpop.f32.mrb[0].mxu0
        %3662 = vmatprep.mubr.bf16.mxu0 0
        %3663 = vmatmul.mubr.bf16.gmra.mrb[0].mxu0 %v3196
        %v3664 = vpop.f32.mrb[0].mxu0
        %v3665 = vadd.f32 %v2605, %v3664
        %v3666 = vpop.f32.mrb[0].mxu0
        %v3667 = vpop.f32.mrb[0].mxu0
        %v3668 = vadd.f32 %v2608, %v3667
        %v3669 = vpop.f32.mrb[0].mxu0
        %3670 = vmatprep.mubr.bf16.mxu0 0
        %3671 = vmatmul.mubr.bf16.gmra.mrb[0].mxu0 %v3199
        %v3672 = vpop.f32.mrb[0].mxu0
        %v3673 = vadd.f32 %v2613, %v3672
        %v3674 = vpop.f32.mrb[0].mxu0
        %v3675 = vpop.f32.mrb[0].mxu0
        %v3676 = vadd.f32 %v2616, %v3675
        %v3677 = vpop.f32.mrb[0].mxu0
        %3678 = vmatprep.mubr.bf16.mxu0 0
        %3679 = vmatmul.mubr.bf16.gmra.mrb[0].mxu0 %v3202
        %v3680 = vpop.f32.mrb[0].mxu0
        %v3681 = vadd.f32 %v2621, %v3680
        %v3682 = vpop.f32.mrb[0].mxu0
        %v3683 = vpop.f32.mrb[0].mxu0
        %v3684 = vadd.f32 %v2624, %v3683
        %v3685 = vpop.f32.mrb[0].mxu0
        %3686 = vmatprep.mubr.bf16.mxu0 0
        %3687 = vmatmul.mubr.bf16.gmra.mrb[0].mxu0 %v3205
        %v3688 = vpop.f32.mrb[0].mxu0
        %v3689 = vadd.f32 %v2629, %v3688
        %v3690 = vpop.f32.mrb[0].mxu0
        %v3691 = vpop.f32.mrb[0].mxu0
        %v3692 = vadd.f32 %v2632, %v3691
        %v3693 = vpop.f32.mrb[0].mxu0
        %3694 = vmatprep.mubr.bf16.mxu0 0
        %3695 = vmatmul.mubr.bf16.gmra.mrb[0].mxu0 %v3208
        %v3696 = vpop.f32.mrb[0].mxu0
        %v3697 = vadd.f32 %v2637, %v3696
        %v3698 = vpop.f32.mrb[0].mxu0
        %v3699 = vpop.f32.mrb[0].mxu0
        %v3700 = vadd.f32 %v2640, %v3699
        %v3701 = vpop.f32.mrb[0].mxu0
        %3702 = vmatprep.mubr.bf16.mxu0 0
        %3703 = vmatmul.mubr.bf16.gmra.mrb[0].mxu0 %v3211
        %v3704 = vpop.f32.mrb[0].mxu0
        %v3705 = vadd.f32 %v2645, %v3704
        %v3706 = vpop.f32.mrb[0].mxu0
        %v3707 = vpop.f32.mrb[0].mxu0
        %v3708 = vadd.f32 %v2648, %v3707
        %v3709 = vpop.f32.mrb[0].mxu0
        %3710 = vmatprep.mubr.bf16.mxu0 0
        %3711 = vmatmul.mubr.bf16.gmra.mrb[0].mxu0 %v3214
        %v3712 = vpop.f32.mrb[0].mxu0
        %v3713 = vadd.f32 %v2653, %v3712
        %v3714 = vpop.f32.mrb[0].mxu0
        %v3715 = vpop.f32.mrb[0].mxu0
        %v3716 = vadd.f32 %v2656, %v3715
        %v3717 = vpop.f32.mrb[0].mxu0
        %3718 = vmatprep.mubr.bf16.mxu0 0
        %3719 = vmatmul.mubr.bf16.gmra.mrb[0].mxu0 %v3217
        %v3720 = vpop.f32.mrb[0].mxu0
        %v3721 = vadd.f32 %v2661, %v3720
        %v3722 = vpop.f32.mrb[0].mxu0
        %v3723 = vpop.f32.mrb[0].mxu0
        %v3724 = vadd.f32 %v2664, %v3723
        %v3725 = vpop.f32.mrb[0].mxu0
        %3726 = vmatprep.mubr.bf16.mxu0 0
        %3727 = vmatmul.mubr.bf16.gmra.mrb[0].mxu0 %v3220
        %v3728 = vpop.f32.mrb[0].mxu0
        %v3729 = vadd.f32 %v2669, %v3728
        %v3730 = vpop.f32.mrb[0].mxu0
        %v3731 = vpop.f32.mrb[0].mxu0
        %v3732 = vadd.f32 %v2672, %v3731
        %v3733 = vpop.f32.mrb[0].mxu0
        %3734 = vmatprep.mubr.bf16.mxu0 0
        %3735 = vmatmul.mubr.bf16.gmra.mrb[0].mxu0 %v3223
        %v3736 = vpop.f32.mrb[0].mxu0
        %v3737 = vadd.f32 %v2677, %v3736
        %v3738 = vpop.f32.mrb[0].mxu0
        %v3739 = vpop.f32.mrb[0].mxu0
        %v3740 = vadd.f32 %v2680, %v3739
        %v3741 = vpop.f32.mrb[0].mxu0
        %3742 = vmatprep.mubr.bf16.mxu0 0
        %3743 = vmatmul.mubr.bf16.gmra.mrb[0].mxu0 %v3226
        %v3744 = vpop.f32.mrb[0].mxu0
        %v3745 = vadd.f32 %v2685, %v3744
        %v3746 = vpop.f32.mrb[0].mxu0
        %v3747 = vpop.f32.mrb[0].mxu0
        %v3748 = vadd.f32 %v2688, %v3747
        %v3749 = vpop.f32.mrb[0].mxu0
        %3750 = vmatprep.mubr.bf16.mxu0 0
        %3751 = vmatmul.mubr.bf16.gmra.mrb[0].mxu0 %v3229
        %v3752 = vpop.f32.mrb[0].mxu0
        %v3753 = vadd.f32 %v2693, %v3752
        %v3754 = vpop.f32.mrb[0].mxu0
        %v3755 = vpop.f32.mrb[0].mxu0
        %v3756 = vadd.f32 %v2696, %v3755
        %v3757 = vpop.f32.mrb[0].mxu0
        %3758 = vmatprep.mubr.bf16.mxu0 0
        %3759 = vmatmul.mubr.bf16.gmra.mrb[0].mxu0 %v3232
        %v3760 = vpop.f32.mrb[0].mxu0
        %v3761 = vadd.f32 %v2701, %v3760
        %v3762 = vpop.f32.mrb[0].mxu0
        %v3763 = vpop.f32.mrb[0].mxu0
        %v3764 = vadd.f32 %v2704, %v3763
        %v3765 = vpop.f32.mrb[0].mxu0
        %3766 = vmatprep.mubr.bf16.mxu0 0
        %3767 = vmatmul.mubr.bf16.gmra.mrb[0].mxu0 %v3235
        %v3768 = vpop.f32.mrb[0].mxu0
        %v3769 = vadd.f32 %v2709, %v3768
        %v3770 = vpop.f32.mrb[0].mxu0
        %v3771 = vpop.f32.mrb[0].mxu0
        %v3772 = vadd.f32 %v2712, %v3771
        %v3773 = vpop.f32.mrb[0].mxu0
        %3774 = vmatprep.mubr.bf16.mxu0 0
        %3775 = vmatmul.mubr.bf16.gmra.mrb[0].mxu0 %v3238
        %v3776 = vpop.f32.mrb[0].mxu0
        %v3777 = vadd.f32 %v2717, %v3776
        %v3778 = vpop.f32.mrb[0].mxu0
        %v3779 = vpop.f32.mrb[0].mxu0
        %v3780 = vadd.f32 %v2720, %v3779
        %v3781 = vpop.f32.mrb[0].mxu0
        %3782 = vmatprep.mubr.bf16.mxu0 0
        %3783 = vmatmul.mubr.bf16.gmra.mrb[0].mxu0 %v3241
        %v3784 = vpop.f32.mrb[0].mxu0
        %v3785 = vadd.f32 %v2725, %v3784
        %v3786 = vpop.f32.mrb[0].mxu0
        %v3787 = vpop.f32.mrb[0].mxu0
        %v3788 = vadd.f32 %v2728, %v3787
        %v3789 = vpop.f32.mrb[0].mxu0
        %3790 = vdwg.mxu0
        %vm3823 = vcmask 1042432
        %vm3824 = vcmask 1046532
        %vm3825 = vmor %vm3823, %vm3824
        %v3826 = vrot.slane %v210, 5
        %v3827 = vrot.slane %v3826, 4
        %v3828 = vrot.slane %v211, 5
        %v3829 = vsel %vm3825, %v3827, %v3828
        %v3830 = vrot.slane %v3828, 4
        %v3831 = vrot.slane %v212, 5
        %v3832 = vsel %vm3825, %v3830, %v3831
        %v3833 = vrot.slane %v3831, 4
        %v3834 = vrot.slane %v213, 5
        %v3835 = vsel %vm3825, %v3833, %v3834
        %v3836 = vrot.slane %v3834, 4
        %v3837 = vrot.slane %v214, 5
        %v3838 = vsel %vm3825, %v3836, %v3837
        %v3839 = vrot.slane %v215, 5
        %v3840 = vrot.slane %v3839, 4
        %v3841 = vrot.slane %v216, 5
        %v3842 = vsel %vm3825, %v3840, %v3841
        %v3843 = vrot.slane %v3841, 4
        %v3844 = vrot.slane %v217, 5
        %v3845 = vsel %vm3825, %v3843, %v3844
        %v3846 = vrot.slane %v3844, 4
        %v3847 = vrot.slane %v218, 5
        %v3848 = vsel %vm3825, %v3846, %v3847
        %v3849 = vrot.slane %v3847, 4
        %v3850 = vrot.slane %v219, 5
        %v3851 = vsel %vm3825, %v3849, %v3850
        %v3852 = vrot.slane %v220, 5
        %v3853 = vrot.slane %v3852, 4
        %v3854 = vrot.slane %v221, 5
        %v3855 = vsel %vm3825, %v3853, %v3854
        %v3856 = vrot.slane %v3854, 4
        %v3857 = vrot.slane %v222, 5
        %v3858 = vsel %vm3825, %v3856, %v3857
        %v3859 = vrot.slane %v3857, 4
        %v3860 = vrot.slane %v223, 5
        %v3861 = vsel %vm3825, %v3859, %v3860
        %v3862 = vrot.slane %v3860, 4
        %v3863 = vrot.slane %v224, 5
        %v3864 = vsel %vm3825, %v3862, %v3863
        %v3865 = vrot.slane %v225, 5
        %v3866 = vrot.slane %v3865, 4
        %v3867 = vrot.slane %v226, 5
        %v3868 = vsel %vm3825, %v3866, %v3867
        %v3869 = vrot.slane %v3867, 4
        %v3870 = vrot.slane %v227, 5
        %v3871 = vsel %vm3825, %v3869, %v3870
        %v3872 = vrot.slane %v3870, 4
        %v3873 = vrot.slane %v228, 5
        %v3874 = vsel %vm3825, %v3872, %v3873
        %v3875 = vrot.slane %v3873, 4
        %v3876 = vrot.slane %v229, 5
        %v3877 = vsel %vm3825, %v3875, %v3876
        %v3878 = vrot.slane %v230, 5
        %v3879 = vrot.slane %v3878, 4
        %v3880 = vrot.slane %v231, 5
        %v3881 = vsel %vm3825, %v3879, %v3880
        %v3882 = vrot.slane %v3880, 4
        %v3883 = vrot.slane %v232, 5
        %v3884 = vsel %vm3825, %v3882, %v3883
        %v3885 = vrot.slane %v3883, 4
        %v3886 = vrot.slane %v233, 5
        %v3887 = vsel %vm3825, %v3885, %v3886
        %v3888 = vrot.slane %v3886, 4
        %v3889 = vrot.slane %v234, 5
        %v3890 = vsel %vm3825, %v3888, %v3889
        %v3891 = vrot.slane %v235, 5
        %v3892 = vrot.slane %v3891, 4
        %v3893 = vrot.slane %v236, 5
        %v3894 = vsel %vm3825, %v3892, %v3893
        %v3895 = vrot.slane %v3893, 4
        %v3896 = vrot.slane %v237, 5
        %v3897 = vsel %vm3825, %v3895, %v3896
        %v3898 = vrot.slane %v3896, 4
        %v3899 = vrot.slane %v238, 5
        %v3900 = vsel %vm3825, %v3898, %v3899
        %v3901 = vrot.slane %v3899, 4
        %v3902 = vrot.slane %v239, 5
        %v3903 = vsel %vm3825, %v3901, %v3902
        %v3904 = vrot.slane %v240, 5
        %v3905 = vrot.slane %v3904, 4
        %v3906 = vrot.slane %v241, 5
        %v3907 = vsel %vm3825, %v3905, %v3906
        %v3908 = vrot.slane %v3906, 4
        %v3909 = vrot.slane %v242, 5
        %v3910 = vsel %vm3825, %v3908, %v3909
        %v3911 = vrot.slane %v3909, 4
        %v3912 = vrot.slane %v243, 5
        %v3913 = vsel %vm3825, %v3911, %v3912
        %v3914 = vrot.slane %v3912, 4
        %v3915 = vrot.slane %v244, 5
        %v3916 = vsel %vm3825, %v3914, %v3915
        %v3917 = vrot.slane %v245, 5
        %v3918 = vrot.slane %v3917, 4
        %v3919 = vrot.slane %v246, 5
        %v3920 = vsel %vm3825, %v3918, %v3919
        %v3921 = vrot.slane %v3919, 4
        %v3922 = vrot.slane %v247, 5
        %v3923 = vsel %vm3825, %v3921, %v3922
        %v3924 = vrot.slane %v3922, 4
        %v3925 = vrot.slane %v248, 5
        %v3926 = vsel %vm3825, %v3924, %v3925
        %v3927 = vrot.slane %v3925, 4
        %v3928 = vrot.slane %v249, 5
        %v3929 = vsel %vm3825, %v3927, %v3928
        %v3930 = vrot.slane %v250, 5
        %v3931 = vrot.slane %v3930, 4
        %v3932 = vrot.slane %v251, 5
        %v3933 = vsel %vm3825, %v3931, %v3932
        %v3934 = vrot.slane %v3932, 4
        %v3935 = vrot.slane %v252, 5
        %v3936 = vsel %vm3825, %v3934, %v3935
        %v3937 = vrot.slane %v3935, 4
        %v3938 = vrot.slane %v253, 5
        %v3939 = vsel %vm3825, %v3937, %v3938
        %v3940 = vrot.slane %v3938, 4
        %v3941 = vrot.slane %v254, 5
        %v3942 = vsel %vm3825, %v3940, %v3941
        %v3943 = vrot.slane %v255, 5
        %v3944 = vrot.slane %v3943, 4
        %v3945 = vrot.slane %v256, 5
        %v3946 = vsel %vm3825, %v3944, %v3945
        %v3947 = vrot.slane %v3945, 4
        %v3948 = vrot.slane %v257, 5
        %v3949 = vsel %vm3825, %v3947, %v3948
        %v3950 = vrot.slane %v3948, 4
        %v3951 = vrot.slane %v258, 5
        %v3952 = vsel %vm3825, %v3950, %v3951
        %v3953 = vrot.slane %v3951, 4
        %v3954 = vrot.slane %v259, 5
        %v3955 = vsel %vm3825, %v3953, %v3954
        %v3956 = vrot.slane %v260, 5
        %v3957 = vrot.slane %v3956, 4
        %v3958 = vrot.slane %v261, 5
        %v3959 = vsel %vm3825, %v3957, %v3958
        %v3960 = vrot.slane %v3958, 4
        %v3961 = vrot.slane %v262, 5
        %v3962 = vsel %vm3825, %v3960, %v3961
        %v3963 = vrot.slane %v3961, 4
        %v3964 = vrot.slane %v263, 5
        %v3965 = vsel %vm3825, %v3963, %v3964
        %v3966 = vrot.slane %v3964, 4
        %v3967 = vrot.slane %v264, 5
        %v3968 = vsel %vm3825, %v3966, %v3967
        %v3969 = vrot.slane %v265, 5
        %v3970 = vrot.slane %v3969, 4
        %v3971 = vrot.slane %v266, 5
        %v3972 = vsel %vm3825, %v3970, %v3971
        %v3973 = vrot.slane %v3971, 4
        %v3974 = vrot.slane %v267, 5
        %v3975 = vsel %vm3825, %v3973, %v3974
        %v3976 = vrot.slane %v3974, 4
        %v3977 = vrot.slane %v268, 5
        %v3978 = vsel %vm3825, %v3976, %v3977
        %v3979 = vrot.slane %v3977, 4
        %v3980 = vrot.slane %v269, 5
        %v3981 = vsel %vm3825, %v3979, %v3980
        %v3982 = vrot.slane %v270, 5
        %v3983 = vrot.slane %v3982, 4
        %v3984 = vrot.slane %v271, 5
        %v3985 = vsel %vm3825, %v3983, %v3984
        %v3986 = vrot.slane %v3984, 4
        %v3987 = vrot.slane %v272, 5
        %v3988 = vsel %vm3825, %v3986, %v3987
        %v3989 = vrot.slane %v3987, 4
        %v3990 = vrot.slane %v273, 5
        %v3991 = vsel %vm3825, %v3989, %v3990
        %v3992 = vrot.slane %v3990, 4
        %v3993 = vrot.slane %v274, 5
        %v3994 = vsel %vm3825, %v3992, %v3993
        %v3995 = vrot.slane %v275, 5
        %v3996 = vrot.slane %v3995, 4
        %v3997 = vrot.slane %v276, 5
        %v3998 = vsel %vm3825, %v3996, %v3997
        %v3999 = vrot.slane %v3997, 4
        %v4000 = vrot.slane %v277, 5
        %v4001 = vsel %vm3825, %v3999, %v4000
        %v4002 = vrot.slane %v4000, 4
        %v4003 = vrot.slane %v278, 5
        %v4004 = vsel %vm3825, %v4002, %v4003
        %v4005 = vrot.slane %v4003, 4
        %v4006 = vrot.slane %v279, 5
        %v4007 = vsel %vm3825, %v4005, %v4006
        %v4008 = vrot.slane %v280, 5
        %v4009 = vrot.slane %v4008, 4
        %v4010 = vrot.slane %v281, 5
        %v4011 = vsel %vm3825, %v4009, %v4010
        %v4012 = vrot.slane %v4010, 4
        %v4013 = vrot.slane %v282, 5
        %v4014 = vsel %vm3825, %v4012, %v4013
        %v4015 = vrot.slane %v4013, 4
        %v4016 = vrot.slane %v283, 5
        %v4017 = vsel %vm3825, %v4015, %v4016
        %v4018 = vrot.slane %v4016, 4
        %v4019 = vrot.slane %v284, 5
        %v4020 = vsel %vm3825, %v4018, %v4019
        %v4021 = vrot.slane %v285, 5
        %v4022 = vrot.slane %v4021, 4
        %v4023 = vrot.slane %v286, 5
        %v4024 = vsel %vm3825, %v4022, %v4023
        %v4025 = vrot.slane %v4023, 4
        %v4026 = vrot.slane %v287, 5
        %v4027 = vsel %vm3825, %v4025, %v4026
        %v4028 = vrot.slane %v4026, 4
        %v4029 = vrot.slane %v288, 5
        %v4030 = vsel %vm3825, %v4028, %v4029
        %v4031 = vrot.slane %v4029, 4
        %v4032 = vrot.slane %v289, 5
        %v4033 = vsel %vm3825, %v4031, %v4032
        %v4034 = vrot.slane %v290, 5
        %v4035 = vrot.slane %v4034, 4
        %v4036 = vrot.slane %v291, 5
        %v4037 = vsel %vm3825, %v4035, %v4036
        %v4038 = vrot.slane %v4036, 4
        %v4039 = vrot.slane %v292, 5
        %v4040 = vsel %vm3825, %v4038, %v4039
        %v4041 = vrot.slane %v4039, 4
        %v4042 = vrot.slane %v293, 5
        %v4043 = vsel %vm3825, %v4041, %v4042
        %v4044 = vrot.slane %v4042, 4
        %v4045 = vrot.slane %v294, 5
        %v4046 = vsel %vm3825, %v4044, %v4045
        %v4047 = vrot.slane %v295, 5
        %v4048 = vrot.slane %v4047, 4
        %v4049 = vrot.slane %v296, 5
        %v4050 = vsel %vm3825, %v4048, %v4049
        %v4051 = vrot.slane %v4049, 4
        %v4052 = vrot.slane %v297, 5
        %v4053 = vsel %vm3825, %v4051, %v4052
        %v4054 = vrot.slane %v4052, 4
        %v4055 = vrot.slane %v298, 5
        %v4056 = vsel %vm3825, %v4054, %v4055
        %v4057 = vrot.slane %v4055, 4
        %v4058 = vrot.slane %v299, 5
        %v4059 = vsel %vm3825, %v4057, %v4058
        %v4060 = vrot.slane %v300, 5
        %v4061 = vrot.slane %v4060, 4
        %v4062 = vrot.slane %v301, 5
        %v4063 = vsel %vm3825, %v4061, %v4062
        %v4064 = vrot.slane %v4062, 4
        %v4065 = vrot.slane %v302, 5
        %v4066 = vsel %vm3825, %v4064, %v4065
        %v4067 = vrot.slane %v4065, 4
        %v4068 = vrot.slane %v303, 5
        %v4069 = vsel %vm3825, %v4067, %v4068
        %v4070 = vrot.slane %v4068, 4
        %v4071 = vrot.slane %v304, 5
        %v4072 = vsel %vm3825, %v4070, %v4071
        %v4073 = vrot.slane %v305, 5
        %v4074 = vrot.slane %v4073, 4
        %v4075 = vrot.slane %v306, 5
        %v4076 = vsel %vm3825, %v4074, %v4075
        %v4077 = vrot.slane %v4075, 4
        %v4078 = vrot.slane %v307, 5
        %v4079 = vsel %vm3825, %v4077, %v4078
        %v4080 = vrot.slane %v4078, 4
        %v4081 = vrot.slane %v308, 5
        %v4082 = vsel %vm3825, %v4080, %v4081
        %v4083 = vrot.slane %v4081, 4
        %v4084 = vrot.slane %v309, 5
        %v4085 = vsel %vm3825, %v4083, %v4084
        %v4086 = vrot.slane %v310, 5
        %v4087 = vrot.slane %v4086, 4
        %v4088 = vrot.slane %v311, 5
        %v4089 = vsel %vm3825, %v4087, %v4088
        %v4090 = vrot.slane %v4088, 4
        %v4091 = vrot.slane %v312, 5
        %v4092 = vsel %vm3825, %v4090, %v4091
        %v4093 = vrot.slane %v4091, 4
        %v4094 = vrot.slane %v313, 5
        %v4095 = vsel %vm3825, %v4093, %v4094
        %v4096 = vrot.slane %v4094, 4
        %v4097 = vrot.slane %v314, 5
        %v4098 = vsel %vm3825, %v4096, %v4097
        %v4099 = vrot.slane %v315, 5
        %v4100 = vrot.slane %v4099, 4
        %v4101 = vrot.slane %v316, 5
        %v4102 = vsel %vm3825, %v4100, %v4101
        %v4103 = vrot.slane %v4101, 4
        %v4104 = vrot.slane %v317, 5
        %v4105 = vsel %vm3825, %v4103, %v4104
        %v4106 = vrot.slane %v4104, 4
        %v4107 = vrot.slane %v318, 5
        %v4108 = vsel %vm3825, %v4106, %v4107
        %v4109 = vrot.slane %v4107, 4
        %v4110 = vrot.slane %v319, 5
        %v4111 = vsel %vm3825, %v4109, %v4110
        %v4112 = vrot.slane %v320, 5
        %v4113 = vrot.slane %v4112, 4
        %v4114 = vrot.slane %v321, 5
        %v4115 = vsel %vm3825, %v4113, %v4114
        %v4116 = vrot.slane %v4114, 4
        %v4117 = vrot.slane %v322, 5
        %v4118 = vsel %vm3825, %v4116, %v4117
        %v4119 = vrot.slane %v4117, 4
        %v4120 = vrot.slane %v323, 5
        %v4121 = vsel %vm3825, %v4119, %v4120
        %v4122 = vrot.slane %v4120, 4
        %v4123 = vrot.slane %v324, 5
        %v4124 = vsel %vm3825, %v4122, %v4123
        %v4125 = vrot.slane %v325, 5
        %v4126 = vrot.slane %v4125, 4
        %v4127 = vrot.slane %v326, 5
        %v4128 = vsel %vm3825, %v4126, %v4127
        %v4129 = vrot.slane %v4127, 4
        %v4130 = vrot.slane %v327, 5
        %v4131 = vsel %vm3825, %v4129, %v4130
        %v4132 = vrot.slane %v4130, 4
        %v4133 = vrot.slane %v328, 5
        %v4134 = vsel %vm3825, %v4132, %v4133
        %v4135 = vrot.slane %v4133, 4
        %v4136 = vrot.slane %v329, 5
        %v4137 = vsel %vm3825, %v4135, %v4136
        %v4138 = vrot.slane %v330, 5
        %v4139 = vrot.slane %v4138, 4
        %v4140 = vrot.slane %v331, 5
        %v4141 = vsel %vm3825, %v4139, %v4140
        %v4142 = vrot.slane %v4140, 4
        %v4143 = vrot.slane %v332, 5
        %v4144 = vsel %vm3825, %v4142, %v4143
        %v4145 = vrot.slane %v4143, 4
        %v4146 = vrot.slane %v333, 5
        %v4147 = vsel %vm3825, %v4145, %v4146
        %v4148 = vrot.slane %v4146, 4
        %v4149 = vrot.slane %v334, 5
        %v4150 = vsel %vm3825, %v4148, %v4149
        %v4151 = vrot.slane %v335, 5
        %v4152 = vrot.slane %v4151, 4
        %v4153 = vrot.slane %v336, 5
        %v4154 = vsel %vm3825, %v4152, %v4153
        %v4155 = vrot.slane %v4153, 4
        %v4156 = vrot.slane %v337, 5
        %v4157 = vsel %vm3825, %v4155, %v4156
        %v4158 = vrot.slane %v4156, 4
        %v4159 = vrot.slane %v338, 5
        %v4160 = vsel %vm3825, %v4158, %v4159
        %v4161 = vrot.slane %v4159, 4
        %v4162 = vrot.slane %v339, 5
        %v4163 = vsel %vm3825, %v4161, %v4162
        %v4164 = vrot.slane %v340, 5
        %v4165 = vrot.slane %v4164, 4
        %v4166 = vrot.slane %v341, 5
        %v4167 = vsel %vm3825, %v4165, %v4166
        %v4168 = vrot.slane %v4166, 4
        %v4169 = vrot.slane %v342, 5
        %v4170 = vsel %vm3825, %v4168, %v4169
        %v4171 = vrot.slane %v4169, 4
        %v4172 = vrot.slane %v343, 5
        %v4173 = vsel %vm3825, %v4171, %v4172
        %v4174 = vrot.slane %v4172, 4
        %v4175 = vrot.slane %v344, 5
        %v4176 = vsel %vm3825, %v4174, %v4175
        %v4177 = vrot.slane %v345, 5
        %v4178 = vrot.slane %v4177, 4
        %v4179 = vrot.slane %v346, 5
        %v4180 = vsel %vm3825, %v4178, %v4179
        %v4181 = vrot.slane %v4179, 4
        %v4182 = vrot.slane %v347, 5
        %v4183 = vsel %vm3825, %v4181, %v4182
        %v4184 = vrot.slane %v4182, 4
        %v4185 = vrot.slane %v348, 5
        %v4186 = vsel %vm3825, %v4184, %v4185
        %v4187 = vrot.slane %v4185, 4
        %v4188 = vrot.slane %v349, 5
        %v4189 = vsel %vm3825, %v4187, %v4188
        %v4190 = vrot.slane %v350, 5
        %v4191 = vrot.slane %v4190, 4
        %v4192 = vrot.slane %v351, 5
        %v4193 = vsel %vm3825, %v4191, %v4192
        %v4194 = vrot.slane %v4192, 4
        %v4195 = vrot.slane %v352, 5
        %v4196 = vsel %vm3825, %v4194, %v4195
        %v4197 = vrot.slane %v4195, 4
        %v4198 = vrot.slane %v353, 5
        %v4199 = vsel %vm3825, %v4197, %v4198
        %v4200 = vrot.slane %v4198, 4
        %v4201 = vrot.slane %v354, 5
        %v4202 = vsel %vm3825, %v4200, %v4201
        %v4203 = vrot.slane %v355, 5
        %v4204 = vrot.slane %v4203, 4
        %v4205 = vrot.slane %v356, 5
        %v4206 = vsel %vm3825, %v4204, %v4205
        %v4207 = vrot.slane %v4205, 4
        %v4208 = vrot.slane %v357, 5
        %v4209 = vsel %vm3825, %v4207, %v4208
        %v4210 = vrot.slane %v4208, 4
        %v4211 = vrot.slane %v358, 5
        %v4212 = vsel %vm3825, %v4210, %v4211
        %v4213 = vrot.slane %v4211, 4
        %v4214 = vrot.slane %v359, 5
        %v4215 = vsel %vm3825, %v4213, %v4214
        %v4216 = vrot.slane %v360, 5
        %v4217 = vrot.slane %v4216, 4
        %v4218 = vrot.slane %v361, 5
        %v4219 = vsel %vm3825, %v4217, %v4218
        %v4220 = vrot.slane %v4218, 4
        %v4221 = vrot.slane %v362, 5
        %v4222 = vsel %vm3825, %v4220, %v4221
        %v4223 = vrot.slane %v4221, 4
        %v4224 = vrot.slane %v363, 5
        %v4225 = vsel %vm3825, %v4223, %v4224
        %v4226 = vrot.slane %v4224, 4
        %v4227 = vrot.slane %v364, 5
        %v4228 = vsel %vm3825, %v4226, %v4227
        %v4229 = vrot.slane %v365, 5
        %v4230 = vrot.slane %v4229, 4
        %v4231 = vrot.slane %v366, 5
        %v4232 = vsel %vm3825, %v4230, %v4231
        %v4233 = vrot.slane %v4231, 4
        %v4234 = vrot.slane %v367, 5
        %v4235 = vsel %vm3825, %v4233, %v4234
        %v4236 = vrot.slane %v4234, 4
        %v4237 = vrot.slane %v368, 5
        %v4238 = vsel %vm3825, %v4236, %v4237
        %v4239 = vrot.slane %v4237, 4
        %v4240 = vrot.slane %v369, 5
        %v4241 = vsel %vm3825, %v4239, %v4240
        %s4242 = scalar_lea.vmem %s208, 4
        %v4243 = vld [vmem:[%s4242] sm:$0x3]
        %v4244 = vunpack.c.l.b16 %v3829
        %v4245 = vunpack.c.l.b16 %v3832
        %v4246 = vunpack.c.l.b16 %v3835
        %v4247 = vunpack.c.l.b16 %v3838
        %v4248 = vunpack.c.l.b16 %v3842
        %v4249 = vunpack.c.l.b16 %v3845
        %v4250 = vunpack.c.l.b16 %v3848
        %v4251 = vunpack.c.l.b16 %v3851
        %v4252 = vunpack.c.l.b16 %v3855
        %v4253 = vunpack.c.l.b16 %v3858
        %v4254 = vunpack.c.l.b16 %v3861
        %v4255 = vunpack.c.l.b16 %v3864
        %v4256 = vunpack.c.l.b16 %v3868
        %v4257 = vunpack.c.l.b16 %v3871
        %v4258 = vunpack.c.l.b16 %v3874
        %v4259 = vunpack.c.l.b16 %v3877
        %v4260 = vunpack.c.l.b16 %v3881
        %v4261 = vunpack.c.l.b16 %v3884
        %v4262 = vunpack.c.l.b16 %v3887
        %v4263 = vunpack.c.l.b16 %v3890
        %v4264 = vunpack.c.l.b16 %v3894
        %v4265 = vunpack.c.l.b16 %v3897
        %v4266 = vunpack.c.l.b16 %v3900
        %v4267 = vunpack.c.l.b16 %v3903
        %v4268 = vunpack.c.l.b16 %v3907
        %v4269 = vunpack.c.l.b16 %v3910
        %v4270 = vunpack.c.l.b16 %v3913
        %v4271 = vunpack.c.l.b16 %v3916
        %v4272 = vunpack.c.l.b16 %v3920
        %v4273 = vunpack.c.l.b16 %v3923
        %v4274 = vunpack.c.l.b16 %v3926
        %v4275 = vunpack.c.l.b16 %v3929
        %v4276 = vunpack.c.l.b16 %v3933
        %v4277 = vunpack.c.l.b16 %v3936
        %v4278 = vunpack.c.l.b16 %v3939
        %v4279 = vunpack.c.l.b16 %v3942
        %v4280 = vunpack.c.l.b16 %v3946
        %v4281 = vunpack.c.l.b16 %v3949
        %v4282 = vunpack.c.l.b16 %v3952
        %v4283 = vunpack.c.l.b16 %v3955
        %v4284 = vunpack.c.l.b16 %v3959
        %v4285 = vunpack.c.l.b16 %v3962
        %v4286 = vunpack.c.l.b16 %v3965
        %v4287 = vunpack.c.l.b16 %v3968
        %v4288 = vunpack.c.l.b16 %v3972
        %v4289 = vunpack.c.l.b16 %v3975
        %v4290 = vunpack.c.l.b16 %v3978
        %v4291 = vunpack.c.l.b16 %v3981
        %v4292 = vunpack.c.l.b16 %v3985
        %v4293 = vunpack.c.l.b16 %v3988
        %v4294 = vunpack.c.l.b16 %v3991
        %v4295 = vunpack.c.l.b16 %v3994
        %v4296 = vunpack.c.l.b16 %v3998
        %v4297 = vunpack.c.l.b16 %v4001
        %v4298 = vunpack.c.l.b16 %v4004
        %v4299 = vunpack.c.l.b16 %v4007
        %v4300 = vunpack.c.l.b16 %v4011
        %v4301 = vunpack.c.l.b16 %v4014
        %v4302 = vunpack.c.l.b16 %v4017
        %v4303 = vunpack.c.l.b16 %v4020
        %v4304 = vunpack.c.l.b16 %v4024
        %v4305 = vunpack.c.l.b16 %v4027
        %v4306 = vunpack.c.l.b16 %v4030
        %v4307 = vunpack.c.l.b16 %v4033
        %v4308 = vunpack.c.l.b16 %v4037
        %v4309 = vunpack.c.l.b16 %v4040
        %v4310 = vunpack.c.l.b16 %v4043
        %v4311 = vunpack.c.l.b16 %v4046
        %v4312 = vunpack.c.l.b16 %v4050
        %v4313 = vunpack.c.l.b16 %v4053
        %v4314 = vunpack.c.l.b16 %v4056
        %v4315 = vunpack.c.l.b16 %v4059
        %v4316 = vunpack.c.l.b16 %v4063
        %v4317 = vunpack.c.l.b16 %v4066
        %v4318 = vunpack.c.l.b16 %v4069
        %v4319 = vunpack.c.l.b16 %v4072
        %v4320 = vunpack.c.l.b16 %v4076
        %v4321 = vunpack.c.l.b16 %v4079
        %v4322 = vunpack.c.l.b16 %v4082
        %v4323 = vunpack.c.l.b16 %v4085
        %v4324 = vunpack.c.l.b16 %v4089
        %v4325 = vunpack.c.l.b16 %v4092
        %v4326 = vunpack.c.l.b16 %v4095
        %v4327 = vunpack.c.l.b16 %v4098
        %v4328 = vunpack.c.l.b16 %v4102
        %v4329 = vunpack.c.l.b16 %v4105
        %v4330 = vunpack.c.l.b16 %v4108
        %v4331 = vunpack.c.l.b16 %v4111
        %v4332 = vunpack.c.l.b16 %v4115
        %v4333 = vunpack.c.l.b16 %v4118
        %v4334 = vunpack.c.l.b16 %v4121
        %v4335 = vunpack.c.l.b16 %v4124
        %v4336 = vunpack.c.l.b16 %v4128
        %v4337 = vunpack.c.l.b16 %v4131
        %v4338 = vunpack.c.l.b16 %v4134
        %v4339 = vunpack.c.l.b16 %v4137
        %v4340 = vunpack.c.l.b16 %v4141
        %v4341 = vunpack.c.l.b16 %v4144
        %v4342 = vunpack.c.l.b16 %v4147
        %v4343 = vunpack.c.l.b16 %v4150
        %v4344 = vunpack.c.l.b16 %v4154
        %v4345 = vunpack.c.l.b16 %v4157
        %v4346 = vunpack.c.l.b16 %v4160
        %v4347 = vunpack.c.l.b16 %v4163
        %v4348 = vunpack.c.l.b16 %v4167
        %v4349 = vunpack.c.l.b16 %v4170
        %v4350 = vunpack.c.l.b16 %v4173
        %v4351 = vunpack.c.l.b16 %v4176
        %v4352 = vunpack.c.l.b16 %v4180
        %v4353 = vunpack.c.l.b16 %v4183
        %v4354 = vunpack.c.l.b16 %v4186
        %v4355 = vunpack.c.l.b16 %v4189
        %v4356 = vunpack.c.l.b16 %v4193
        %v4357 = vunpack.c.l.b16 %v4196
        %v4358 = vunpack.c.l.b16 %v4199
        %v4359 = vunpack.c.l.b16 %v4202
        %v4360 = vunpack.c.l.b16 %v4206
        %v4361 = vunpack.c.l.b16 %v4209
        %v4362 = vunpack.c.l.b16 %v4212
        %v4363 = vunpack.c.l.b16 %v4215
        %v4364 = vunpack.c.l.b16 %v4219
        %v4365 = vunpack.c.l.b16 %v4222
        %v4366 = vunpack.c.l.b16 %v4225
        %v4367 = vunpack.c.l.b16 %v4228
        %v4368 = vunpack.c.l.b16 %v4232
        %v4369 = vunpack.c.l.b16 %v4235
        %v4370 = vunpack.c.l.b16 %v4238
        %v4371 = vunpack.c.l.b16 %v4241
        %v4372 = vpack.c.b16 %v4245, %v4244
        %v4373 = vpack.c.b16 %v4247, %v4246
        %v4374 = vpack.c.b16 %v4249, %v4248
        %v4375 = vpack.c.b16 %v4251, %v4250
        %v4376 = vpack.c.b16 %v4253, %v4252
        %v4377 = vpack.c.b16 %v4255, %v4254
        %v4378 = vpack.c.b16 %v4257, %v4256
        %v4379 = vpack.c.b16 %v4259, %v4258
        %v4380 = vpack.c.b16 %v4261, %v4260
        %v4381 = vpack.c.b16 %v4263, %v4262
        %v4382 = vpack.c.b16 %v4265, %v4264
        %v4383 = vpack.c.b16 %v4267, %v4266
        %v4384 = vpack.c.b16 %v4269, %v4268
        %v4385 = vpack.c.b16 %v4271, %v4270
        %v4386 = vpack.c.b16 %v4273, %v4272
        %v4387 = vpack.c.b16 %v4275, %v4274
        %v4388 = vpack.c.b16 %v4277, %v4276
        %v4389 = vpack.c.b16 %v4279, %v4278
        %v4390 = vpack.c.b16 %v4281, %v4280
        %v4391 = vpack.c.b16 %v4283, %v4282
        %v4392 = vpack.c.b16 %v4285, %v4284
        %v4393 = vpack.c.b16 %v4287, %v4286
        %v4394 = vpack.c.b16 %v4289, %v4288
        %v4395 = vpack.c.b16 %v4291, %v4290
        %v4396 = vpack.c.b16 %v4293, %v4292
        %v4397 = vpack.c.b16 %v4295, %v4294
        %v4398 = vpack.c.b16 %v4297, %v4296
        %v4399 = vpack.c.b16 %v4299, %v4298
        %v4400 = vpack.c.b16 %v4301, %v4300
        %v4401 = vpack.c.b16 %v4303, %v4302
        %v4402 = vpack.c.b16 %v4305, %v4304
        %v4403 = vpack.c.b16 %v4307, %v4306
        %v4404 = vpack.c.b16 %v4309, %v4308
        %v4405 = vpack.c.b16 %v4311, %v4310
        %v4406 = vpack.c.b16 %v4313, %v4312
        %v4407 = vpack.c.b16 %v4315, %v4314
        %v4408 = vpack.c.b16 %v4317, %v4316
        %v4409 = vpack.c.b16 %v4319, %v4318
        %v4410 = vpack.c.b16 %v4321, %v4320
        %v4411 = vpack.c.b16 %v4323, %v4322
        %v4412 = vpack.c.b16 %v4325, %v4324
        %v4413 = vpack.c.b16 %v4327, %v4326
        %v4414 = vpack.c.b16 %v4329, %v4328
        %v4415 = vpack.c.b16 %v4331, %v4330
        %v4416 = vpack.c.b16 %v4333, %v4332
        %v4417 = vpack.c.b16 %v4335, %v4334
        %v4418 = vpack.c.b16 %v4337, %v4336
        %v4419 = vpack.c.b16 %v4339, %v4338
        %v4420 = vpack.c.b16 %v4341, %v4340
        %v4421 = vpack.c.b16 %v4343, %v4342
        %v4422 = vpack.c.b16 %v4345, %v4344
        %v4423 = vpack.c.b16 %v4347, %v4346
        %v4424 = vpack.c.b16 %v4349, %v4348
        %v4425 = vpack.c.b16 %v4351, %v4350
        %v4426 = vpack.c.b16 %v4353, %v4352
        %v4427 = vpack.c.b16 %v4355, %v4354
        %v4428 = vpack.c.b16 %v4357, %v4356
        %v4429 = vpack.c.b16 %v4359, %v4358
        %v4430 = vpack.c.b16 %v4361, %v4360
        %v4431 = vpack.c.b16 %v4363, %v4362
        %v4432 = vpack.c.b16 %v4365, %v4364
        %v4433 = vpack.c.b16 %v4367, %v4366
        %v4434 = vpack.c.b16 %v4369, %v4368
        %v4435 = vpack.c.b16 %v4371, %v4370
        %v4437 = vsel %vm1986, %v4372, 0
        %v4440 = vsel %vm1986, %v4373, 0
        %v4443 = vsel %vm1986, %v4374, 0
        %v4446 = vsel %vm1986, %v4375, 0
        %v4449 = vsel %vm1986, %v4376, 0
        %v4452 = vsel %vm1986, %v4377, 0
        %v4455 = vsel %vm1986, %v4378, 0
        %v4458 = vsel %vm1986, %v4379, 0
        %v4461 = vsel %vm1986, %v4380, 0
        %v4464 = vsel %vm1986, %v4381, 0
        %v4467 = vsel %vm1986, %v4382, 0
        %v4470 = vsel %vm1986, %v4383, 0
        %v4473 = vsel %vm1986, %v4384, 0
        %v4476 = vsel %vm1986, %v4385, 0
        %v4479 = vsel %vm1986, %v4386, 0
        %v4482 = vsel %vm1986, %v4387, 0
        %v4485 = vsel %vm1986, %v4388, 0
        %v4488 = vsel %vm1986, %v4389, 0
        %v4491 = vsel %vm1986, %v4390, 0
        %v4494 = vsel %vm1986, %v4391, 0
        %v4497 = vsel %vm1986, %v4392, 0
        %v4500 = vsel %vm1986, %v4393, 0
        %v4503 = vsel %vm1986, %v4394, 0
        %v4506 = vsel %vm1986, %v4395, 0
        %v4509 = vsel %vm1986, %v4396, 0
        %v4512 = vsel %vm1986, %v4397, 0
        %v4515 = vsel %vm1986, %v4398, 0
        %v4518 = vsel %vm1986, %v4399, 0
        %v4521 = vsel %vm1986, %v4400, 0
        %v4524 = vsel %vm1986, %v4401, 0
        %v4527 = vsel %vm1986, %v4402, 0
        %v4530 = vsel %vm1986, %v4403, 0
        %v4533 = vsel %vm1986, %v4404, 0
        %v4536 = vsel %vm1986, %v4405, 0
        %v4539 = vsel %vm1986, %v4406, 0
        %v4542 = vsel %vm1986, %v4407, 0
        %v4545 = vsel %vm1986, %v4408, 0
        %v4548 = vsel %vm1986, %v4409, 0
        %v4551 = vsel %vm1986, %v4410, 0
        %v4554 = vsel %vm1986, %v4411, 0
        %v4557 = vsel %vm1986, %v4412, 0
        %v4560 = vsel %vm1986, %v4413, 0
        %v4563 = vsel %vm1986, %v4414, 0
        %v4566 = vsel %vm1986, %v4415, 0
        %v4569 = vsel %vm1986, %v4416, 0
        %v4572 = vsel %vm1986, %v4417, 0
        %v4575 = vsel %vm1986, %v4418, 0
        %v4578 = vsel %vm1986, %v4419, 0
        %v4581 = vsel %vm1986, %v4420, 0
        %v4584 = vsel %vm1986, %v4421, 0
        %v4587 = vsel %vm1986, %v4422, 0
        %v4590 = vsel %vm1986, %v4423, 0
        %v4593 = vsel %vm1986, %v4424, 0
        %v4596 = vsel %vm1986, %v4425, 0
        %v4599 = vsel %vm1986, %v4426, 0
        %v4602 = vsel %vm1986, %v4427, 0
        %v4605 = vsel %vm1986, %v4428, 0
        %v4608 = vsel %vm1986, %v4429, 0
        %v4611 = vsel %vm1986, %v4430, 0
        %v4614 = vsel %vm1986, %v4431, 0
        %v4617 = vsel %vm1986, %v4432, 0
        %v4620 = vsel %vm1986, %v4433, 0
        %v4623 = vsel %vm1986, %v4434, 0
        %v4626 = vsel %vm1986, %v4435, 0
        %v4629 = vand.u32 %v4243, %v2182
        %4631 = vmatprep.subr.bf16.mxu0 0
        %4632 = vmatpush1.bf16.msra.mxu0 %v4629
        %4633 = vmatprep.subr.bf16.mxu0 0
        %4634 = vmatpush1.bf16.msra.mxu0 0
        %4635 = vmatprep.subr.bf16.mxu0 0
        %4636 = vmatpush1.bf16.msra.mxu0 0
        %4637 = vmatprep.subr.bf16.mxu0 0
        %4638 = vmatpush1.bf16.msra.mxu0 0
        %4639 = vmatprep.subr.bf16.mxu0 0
        %4640 = vmatpush1.bf16.msra.mxu0 0
        %4641 = vmatprep.subr.bf16.mxu0 0
        %4642 = vmatpush1.bf16.msra.mxu0 0
        %4643 = vmatprep.subr.bf16.mxu0 0
        %4644 = vmatpush1.bf16.msra.mxu0 0
        %4645 = vmatprep.subr.bf16.mxu0 0
        %4646 = vmatpush1.bf16.msra.mxu0 0
        %4647 = vmatprep.subr.bf16.mxu0 0
        %4648 = vmatpush1.bf16.msra.mxu0 0
        %4649 = vmatprep.subr.bf16.mxu0 0
        %4650 = vmatpush1.bf16.msra.mxu0 0
        %4651 = vmatprep.subr.bf16.mxu0 0
        %4652 = vmatpush1.bf16.msra.mxu0 0
        %4653 = vmatprep.subr.bf16.mxu0 0
        %4654 = vmatpush1.bf16.msra.mxu0 0
        %4655 = vmatprep.subr.bf16.mxu0 0
        %4656 = vmatpush1.bf16.msra.mxu0 0
        %4657 = vmatprep.subr.bf16.mxu0 0
        %4658 = vmatpush1.bf16.msra.mxu0 0
        %4659 = vmatprep.subr.bf16.mxu0 0
        %4660 = vmatpush1.bf16.msra.mxu0 0
        %4661 = vmatprep.subr.bf16.mxu0 0
        %4662 = vmatpush1.bf16.msra.mxu0 0
        %4663 = vmatprep.mubr.bf16.mxu0 0
        %4664 = vmatmul.mubr.bf16.gmra.mrb[0].mxu0 %v4437
        %v4665 = vpop.f32.mrb[0].mxu0
        %v4666 = vadd.f32 0.0, %v4665
        %v4667 = vpop.f32.mrb[0].mxu0
        %v4668 = vpop.f32.mrb[0].mxu0
        %v4669 = vadd.f32 0.0, %v4668
        %v4670 = vpop.f32.mrb[0].mxu0
        %4671 = vmatprep.mubr.bf16.mxu0 0
        %4672 = vmatmul.mubr.bf16.gmra.mrb[0].mxu0 %v4440
        %v4673 = vpop.f32.mrb[0].mxu0
        %v4674 = vadd.f32 0.0, %v4673
        %v4675 = vpop.f32.mrb[0].mxu0
        %v4676 = vpop.f32.mrb[0].mxu0
        %v4677 = vadd.f32 0.0, %v4676
        %v4678 = vpop.f32.mrb[0].mxu0
        %4679 = vmatprep.mubr.bf16.mxu0 0
        %4680 = vmatmul.mubr.bf16.gmra.mrb[0].mxu0 %v4443
        %v4681 = vpop.f32.mrb[0].mxu0
        %v4682 = vadd.f32 0.0, %v4681
        %v4683 = vpop.f32.mrb[0].mxu0
        %v4684 = vpop.f32.mrb[0].mxu0
        %v4685 = vadd.f32 0.0, %v4684
        %v4686 = vpop.f32.mrb[0].mxu0
        %4687 = vmatprep.mubr.bf16.mxu0 0
        %4688 = vmatmul.mubr.bf16.gmra.mrb[0].mxu0 %v4446
        %v4689 = vpop.f32.mrb[0].mxu0
        %v4690 = vadd.f32 0.0, %v4689
        %v4691 = vpop.f32.mrb[0].mxu0
        %v4692 = vpop.f32.mrb[0].mxu0
        %v4693 = vadd.f32 0.0, %v4692
        %v4694 = vpop.f32.mrb[0].mxu0
        %4695 = vmatprep.mubr.bf16.mxu0 0
        %4696 = vmatmul.mubr.bf16.gmra.mrb[0].mxu0 %v4449
        %v4697 = vpop.f32.mrb[0].mxu0
        %v4698 = vadd.f32 0.0, %v4697
        %v4699 = vpop.f32.mrb[0].mxu0
        %v4700 = vpop.f32.mrb[0].mxu0
        %v4701 = vadd.f32 0.0, %v4700
        %v4702 = vpop.f32.mrb[0].mxu0
        %4703 = vmatprep.mubr.bf16.mxu0 0
        %4704 = vmatmul.mubr.bf16.gmra.mrb[0].mxu0 %v4452
        %v4705 = vpop.f32.mrb[0].mxu0
        %v4706 = vadd.f32 0.0, %v4705
        %v4707 = vpop.f32.mrb[0].mxu0
        %v4708 = vpop.f32.mrb[0].mxu0
        %v4709 = vadd.f32 0.0, %v4708
        %v4710 = vpop.f32.mrb[0].mxu0
        %4711 = vmatprep.mubr.bf16.mxu0 0
        %4712 = vmatmul.mubr.bf16.gmra.mrb[0].mxu0 %v4455
        %v4713 = vpop.f32.mrb[0].mxu0
        %v4714 = vadd.f32 0.0, %v4713
        %v4715 = vpop.f32.mrb[0].mxu0
        %v4716 = vpop.f32.mrb[0].mxu0
        %v4717 = vadd.f32 0.0, %v4716
        %v4718 = vpop.f32.mrb[0].mxu0
        %4719 = vmatprep.mubr.bf16.mxu0 0
        %4720 = vmatmul.mubr.bf16.gmra.mrb[0].mxu0 %v4458
        %v4721 = vpop.f32.mrb[0].mxu0
        %v4722 = vadd.f32 0.0, %v4721
        %v4723 = vpop.f32.mrb[0].mxu0
        %v4724 = vpop.f32.mrb[0].mxu0
        %v4725 = vadd.f32 0.0, %v4724
        %v4726 = vpop.f32.mrb[0].mxu0
        %4727 = vmatprep.mubr.bf16.mxu0 0
        %4728 = vmatmul.mubr.bf16.gmra.mrb[0].mxu0 %v4461
        %v4729 = vpop.f32.mrb[0].mxu0
        %v4730 = vadd.f32 0.0, %v4729
        %v4731 = vpop.f32.mrb[0].mxu0
        %v4732 = vpop.f32.mrb[0].mxu0
        %v4733 = vadd.f32 0.0, %v4732
        %v4734 = vpop.f32.mrb[0].mxu0
        %4735 = vmatprep.mubr.bf16.mxu0 0
        %4736 = vmatmul.mubr.bf16.gmra.mrb[0].mxu0 %v4464
        %v4737 = vpop.f32.mrb[0].mxu0
        %v4738 = vadd.f32 0.0, %v4737
        %v4739 = vpop.f32.mrb[0].mxu0
        %v4740 = vpop.f32.mrb[0].mxu0
        %v4741 = vadd.f32 0.0, %v4740
        %v4742 = vpop.f32.mrb[0].mxu0
        %4743 = vmatprep.mubr.bf16.mxu0 0
        %4744 = vmatmul.mubr.bf16.gmra.mrb[0].mxu0 %v4467
        %v4745 = vpop.f32.mrb[0].mxu0
        %v4746 = vadd.f32 0.0, %v4745
        %v4747 = vpop.f32.mrb[0].mxu0
        %v4748 = vpop.f32.mrb[0].mxu0
        %v4749 = vadd.f32 0.0, %v4748
        %v4750 = vpop.f32.mrb[0].mxu0
        %4751 = vmatprep.mubr.bf16.mxu0 0
        %4752 = vmatmul.mubr.bf16.gmra.mrb[0].mxu0 %v4470
        %v4753 = vpop.f32.mrb[0].mxu0
        %v4754 = vadd.f32 0.0, %v4753
        %v4755 = vpop.f32.mrb[0].mxu0
        %v4756 = vpop.f32.mrb[0].mxu0
        %v4757 = vadd.f32 0.0, %v4756
        %v4758 = vpop.f32.mrb[0].mxu0
        %4759 = vmatprep.mubr.bf16.mxu0 0
        %4760 = vmatmul.mubr.bf16.gmra.mrb[0].mxu0 %v4473
        %v4761 = vpop.f32.mrb[0].mxu0
        %v4762 = vadd.f32 0.0, %v4761
        %v4763 = vpop.f32.mrb[0].mxu0
        %v4764 = vpop.f32.mrb[0].mxu0
        %v4765 = vadd.f32 0.0, %v4764
        %v4766 = vpop.f32.mrb[0].mxu0
        %4767 = vmatprep.mubr.bf16.mxu0 0
        %4768 = vmatmul.mubr.bf16.gmra.mrb[0].mxu0 %v4476
        %v4769 = vpop.f32.mrb[0].mxu0
        %v4770 = vadd.f32 0.0, %v4769
        %v4771 = vpop.f32.mrb[0].mxu0
        %v4772 = vpop.f32.mrb[0].mxu0
        %v4773 = vadd.f32 0.0, %v4772
        %v4774 = vpop.f32.mrb[0].mxu0
        %4775 = vmatprep.mubr.bf16.mxu0 0
        %4776 = vmatmul.mubr.bf16.gmra.mrb[0].mxu0 %v4479
        %v4777 = vpop.f32.mrb[0].mxu0
        %v4778 = vadd.f32 0.0, %v4777
        %v4779 = vpop.f32.mrb[0].mxu0
        %v4780 = vpop.f32.mrb[0].mxu0
        %v4781 = vadd.f32 0.0, %v4780
        %v4782 = vpop.f32.mrb[0].mxu0
        %4783 = vmatprep.mubr.bf16.mxu0 0
        %4784 = vmatmul.mubr.bf16.gmra.mrb[0].mxu0 %v4482
        %v4785 = vpop.f32.mrb[0].mxu0
        %v4786 = vadd.f32 0.0, %v4785
        %v4787 = vpop.f32.mrb[0].mxu0
        %v4788 = vpop.f32.mrb[0].mxu0
        %v4789 = vadd.f32 0.0, %v4788
        %v4790 = vpop.f32.mrb[0].mxu0
        %4791 = vmatprep.mubr.bf16.mxu0 0
        %4792 = vmatmul.mubr.bf16.gmra.mrb[0].mxu0 %v4485
        %v4793 = vpop.f32.mrb[0].mxu0
        %v4794 = vadd.f32 0.0, %v4793
        %v4795 = vpop.f32.mrb[0].mxu0
        %v4796 = vpop.f32.mrb[0].mxu0
        %v4797 = vadd.f32 0.0, %v4796
        %v4798 = vpop.f32.mrb[0].mxu0
        %4799 = vmatprep.mubr.bf16.mxu0 0
        %4800 = vmatmul.mubr.bf16.gmra.mrb[0].mxu0 %v4488
        %v4801 = vpop.f32.mrb[0].mxu0
        %v4802 = vadd.f32 0.0, %v4801
        %v4803 = vpop.f32.mrb[0].mxu0
        %v4804 = vpop.f32.mrb[0].mxu0
        %v4805 = vadd.f32 0.0, %v4804
        %v4806 = vpop.f32.mrb[0].mxu0
        %4807 = vmatprep.mubr.bf16.mxu0 0
        %4808 = vmatmul.mubr.bf16.gmra.mrb[0].mxu0 %v4491
        %v4809 = vpop.f32.mrb[0].mxu0
        %v4810 = vadd.f32 0.0, %v4809
        %v4811 = vpop.f32.mrb[0].mxu0
        %v4812 = vpop.f32.mrb[0].mxu0
        %v4813 = vadd.f32 0.0, %v4812
        %v4814 = vpop.f32.mrb[0].mxu0
        %4815 = vmatprep.mubr.bf16.mxu0 0
        %4816 = vmatmul.mubr.bf16.gmra.mrb[0].mxu0 %v4494
        %v4817 = vpop.f32.mrb[0].mxu0
        %v4818 = vadd.f32 0.0, %v4817
        %v4819 = vpop.f32.mrb[0].mxu0
        %v4820 = vpop.f32.mrb[0].mxu0
        %v4821 = vadd.f32 0.0, %v4820
        %v4822 = vpop.f32.mrb[0].mxu0
        %4823 = vmatprep.mubr.bf16.mxu0 0
        %4824 = vmatmul.mubr.bf16.gmra.mrb[0].mxu0 %v4497
        %v4825 = vpop.f32.mrb[0].mxu0
        %v4826 = vadd.f32 0.0, %v4825
        %v4827 = vpop.f32.mrb[0].mxu0
        %v4828 = vpop.f32.mrb[0].mxu0
        %v4829 = vadd.f32 0.0, %v4828
        %v4830 = vpop.f32.mrb[0].mxu0
        %4831 = vmatprep.mubr.bf16.mxu0 0
        %4832 = vmatmul.mubr.bf16.gmra.mrb[0].mxu0 %v4500
        %v4833 = vpop.f32.mrb[0].mxu0
        %v4834 = vadd.f32 0.0, %v4833
        %v4835 = vpop.f32.mrb[0].mxu0
        %v4836 = vpop.f32.mrb[0].mxu0
        %v4837 = vadd.f32 0.0, %v4836
        %v4838 = vpop.f32.mrb[0].mxu0
        %4839 = vmatprep.mubr.bf16.mxu0 0
        %4840 = vmatmul.mubr.bf16.gmra.mrb[0].mxu0 %v4503
        %v4841 = vpop.f32.mrb[0].mxu0
        %v4842 = vadd.f32 0.0, %v4841
        %v4843 = vpop.f32.mrb[0].mxu0
        %v4844 = vpop.f32.mrb[0].mxu0
        %v4845 = vadd.f32 0.0, %v4844
        %v4846 = vpop.f32.mrb[0].mxu0
        %4847 = vmatprep.mubr.bf16.mxu0 0
        %4848 = vmatmul.mubr.bf16.gmra.mrb[0].mxu0 %v4506
        %v4849 = vpop.f32.mrb[0].mxu0
        %v4850 = vadd.f32 0.0, %v4849
        %v4851 = vpop.f32.mrb[0].mxu0
        %v4852 = vpop.f32.mrb[0].mxu0
        %v4853 = vadd.f32 0.0, %v4852
        %v4854 = vpop.f32.mrb[0].mxu0
        %4855 = vmatprep.mubr.bf16.mxu0 0
        %4856 = vmatmul.mubr.bf16.gmra.mrb[0].mxu0 %v4509
        %v4857 = vpop.f32.mrb[0].mxu0
        %v4858 = vadd.f32 0.0, %v4857
        %v4859 = vpop.f32.mrb[0].mxu0
        %v4860 = vpop.f32.mrb[0].mxu0
        %v4861 = vadd.f32 0.0, %v4860
        %v4862 = vpop.f32.mrb[0].mxu0
        %4863 = vmatprep.mubr.bf16.mxu0 0
        %4864 = vmatmul.mubr.bf16.gmra.mrb[0].mxu0 %v4512
        %v4865 = vpop.f32.mrb[0].mxu0
        %v4866 = vadd.f32 0.0, %v4865
        %v4867 = vpop.f32.mrb[0].mxu0
        %v4868 = vpop.f32.mrb[0].mxu0
        %v4869 = vadd.f32 0.0, %v4868
        %v4870 = vpop.f32.mrb[0].mxu0
        %4871 = vmatprep.mubr.bf16.mxu0 0
        %4872 = vmatmul.mubr.bf16.gmra.mrb[0].mxu0 %v4515
        %v4873 = vpop.f32.mrb[0].mxu0
        %v4874 = vadd.f32 0.0, %v4873
        %v4875 = vpop.f32.mrb[0].mxu0
        %v4876 = vpop.f32.mrb[0].mxu0
        %v4877 = vadd.f32 0.0, %v4876
        %v4878 = vpop.f32.mrb[0].mxu0
        %4879 = vmatprep.mubr.bf16.mxu0 0
        %4880 = vmatmul.mubr.bf16.gmra.mrb[0].mxu0 %v4518
        %v4881 = vpop.f32.mrb[0].mxu0
        %v4882 = vadd.f32 0.0, %v4881
        %v4883 = vpop.f32.mrb[0].mxu0
        %v4884 = vpop.f32.mrb[0].mxu0
        %v4885 = vadd.f32 0.0, %v4884
        %v4886 = vpop.f32.mrb[0].mxu0
        %4887 = vmatprep.mubr.bf16.mxu0 0
        %4888 = vmatmul.mubr.bf16.gmra.mrb[0].mxu0 %v4521
        %v4889 = vpop.f32.mrb[0].mxu0
        %v4890 = vadd.f32 0.0, %v4889
        %v4891 = vpop.f32.mrb[0].mxu0
        %v4892 = vpop.f32.mrb[0].mxu0
        %v4893 = vadd.f32 0.0, %v4892
        %v4894 = vpop.f32.mrb[0].mxu0
        %4895 = vmatprep.mubr.bf16.mxu0 0
        %4896 = vmatmul.mubr.bf16.gmra.mrb[0].mxu0 %v4524
        %v4897 = vpop.f32.mrb[0].mxu0
        %v4898 = vadd.f32 0.0, %v4897
        %v4899 = vpop.f32.mrb[0].mxu0
        %v4900 = vpop.f32.mrb[0].mxu0
        %v4901 = vadd.f32 0.0, %v4900
        %v4902 = vpop.f32.mrb[0].mxu0
        %4903 = vmatprep.mubr.bf16.mxu0 0
        %4904 = vmatmul.mubr.bf16.gmra.mrb[0].mxu0 %v4527
        %v4905 = vpop.f32.mrb[0].mxu0
        %v4906 = vadd.f32 0.0, %v4905
        %v4907 = vpop.f32.mrb[0].mxu0
        %v4908 = vpop.f32.mrb[0].mxu0
        %v4909 = vadd.f32 0.0, %v4908
        %v4910 = vpop.f32.mrb[0].mxu0
        %4911 = vmatprep.mubr.bf16.mxu0 0
        %4912 = vmatmul.mubr.bf16.gmra.mrb[0].mxu0 %v4530
        %v4913 = vpop.f32.mrb[0].mxu0
        %v4914 = vadd.f32 0.0, %v4913
        %v4915 = vpop.f32.mrb[0].mxu0
        %v4916 = vpop.f32.mrb[0].mxu0
        %v4917 = vadd.f32 0.0, %v4916
        %v4918 = vpop.f32.mrb[0].mxu0
        %4919 = vmatprep.mubr.bf16.mxu0 0
        %4920 = vmatmul.mubr.bf16.gmra.mrb[0].mxu0 %v4533
        %v4921 = vpop.f32.mrb[0].mxu0
        %v4922 = vadd.f32 0.0, %v4921
        %v4923 = vpop.f32.mrb[0].mxu0
        %v4924 = vpop.f32.mrb[0].mxu0
        %v4925 = vadd.f32 0.0, %v4924
        %v4926 = vpop.f32.mrb[0].mxu0
        %4927 = vmatprep.mubr.bf16.mxu0 0
        %4928 = vmatmul.mubr.bf16.gmra.mrb[0].mxu0 %v4536
        %v4929 = vpop.f32.mrb[0].mxu0
        %v4930 = vadd.f32 0.0, %v4929
        %v4931 = vpop.f32.mrb[0].mxu0
        %v4932 = vpop.f32.mrb[0].mxu0
        %v4933 = vadd.f32 0.0, %v4932
        %v4934 = vpop.f32.mrb[0].mxu0
        %4935 = vmatprep.mubr.bf16.mxu0 0
        %4936 = vmatmul.mubr.bf16.gmra.mrb[0].mxu0 %v4539
        %v4937 = vpop.f32.mrb[0].mxu0
        %v4938 = vadd.f32 0.0, %v4937
        %v4939 = vpop.f32.mrb[0].mxu0
        %v4940 = vpop.f32.mrb[0].mxu0
        %v4941 = vadd.f32 0.0, %v4940
        %v4942 = vpop.f32.mrb[0].mxu0
        %4943 = vmatprep.mubr.bf16.mxu0 0
        %4944 = vmatmul.mubr.bf16.gmra.mrb[0].mxu0 %v4542
        %v4945 = vpop.f32.mrb[0].mxu0
        %v4946 = vadd.f32 0.0, %v4945
        %v4947 = vpop.f32.mrb[0].mxu0
        %v4948 = vpop.f32.mrb[0].mxu0
        %v4949 = vadd.f32 0.0, %v4948
        %v4950 = vpop.f32.mrb[0].mxu0
        %4951 = vmatprep.mubr.bf16.mxu0 0
        %4952 = vmatmul.mubr.bf16.gmra.mrb[0].mxu0 %v4545
        %v4953 = vpop.f32.mrb[0].mxu0
        %v4954 = vadd.f32 0.0, %v4953
        %v4955 = vpop.f32.mrb[0].mxu0
        %v4956 = vpop.f32.mrb[0].mxu0
        %v4957 = vadd.f32 0.0, %v4956
        %v4958 = vpop.f32.mrb[0].mxu0
        %4959 = vmatprep.mubr.bf16.mxu0 0
        %4960 = vmatmul.mubr.bf16.gmra.mrb[0].mxu0 %v4548
        %v4961 = vpop.f32.mrb[0].mxu0
        %v4962 = vadd.f32 0.0, %v4961
        %v4963 = vpop.f32.mrb[0].mxu0
        %v4964 = vpop.f32.mrb[0].mxu0
        %v4965 = vadd.f32 0.0, %v4964
        %v4966 = vpop.f32.mrb[0].mxu0
        %4967 = vmatprep.mubr.bf16.mxu0 0
        %4968 = vmatmul.mubr.bf16.gmra.mrb[0].mxu0 %v4551
        %v4969 = vpop.f32.mrb[0].mxu0
        %v4970 = vadd.f32 0.0, %v4969
        %v4971 = vpop.f32.mrb[0].mxu0
        %v4972 = vpop.f32.mrb[0].mxu0
        %v4973 = vadd.f32 0.0, %v4972
        %v4974 = vpop.f32.mrb[0].mxu0
        %4975 = vmatprep.mubr.bf16.mxu0 0
        %4976 = vmatmul.mubr.bf16.gmra.mrb[0].mxu0 %v4554
        %v4977 = vpop.f32.mrb[0].mxu0
        %v4978 = vadd.f32 0.0, %v4977
        %v4979 = vpop.f32.mrb[0].mxu0
        %v4980 = vpop.f32.mrb[0].mxu0
        %v4981 = vadd.f32 0.0, %v4980
        %v4982 = vpop.f32.mrb[0].mxu0
        %4983 = vmatprep.mubr.bf16.mxu0 0
        %4984 = vmatmul.mubr.bf16.gmra.mrb[0].mxu0 %v4557
        %v4985 = vpop.f32.mrb[0].mxu0
        %v4986 = vadd.f32 0.0, %v4985
        %v4987 = vpop.f32.mrb[0].mxu0
        %v4988 = vpop.f32.mrb[0].mxu0
        %v4989 = vadd.f32 0.0, %v4988
        %v4990 = vpop.f32.mrb[0].mxu0
        %4991 = vmatprep.mubr.bf16.mxu0 0
        %4992 = vmatmul.mubr.bf16.gmra.mrb[0].mxu0 %v4560
        %v4993 = vpop.f32.mrb[0].mxu0
        %v4994 = vadd.f32 0.0, %v4993
        %v4995 = vpop.f32.mrb[0].mxu0
        %v4996 = vpop.f32.mrb[0].mxu0
        %v4997 = vadd.f32 0.0, %v4996
        %v4998 = vpop.f32.mrb[0].mxu0
        %4999 = vmatprep.mubr.bf16.mxu0 0
        %5000 = vmatmul.mubr.bf16.gmra.mrb[0].mxu0 %v4563
        %v5001 = vpop.f32.mrb[0].mxu0
        %v5002 = vadd.f32 0.0, %v5001
        %v5003 = vpop.f32.mrb[0].mxu0
        %v5004 = vpop.f32.mrb[0].mxu0
        %v5005 = vadd.f32 0.0, %v5004
        %v5006 = vpop.f32.mrb[0].mxu0
        %5007 = vmatprep.mubr.bf16.mxu0 0
        %5008 = vmatmul.mubr.bf16.gmra.mrb[0].mxu0 %v4566
        %v5009 = vpop.f32.mrb[0].mxu0
        %v5010 = vadd.f32 0.0, %v5009
        %v5011 = vpop.f32.mrb[0].mxu0
        %v5012 = vpop.f32.mrb[0].mxu0
        %v5013 = vadd.f32 0.0, %v5012
        %v5014 = vpop.f32.mrb[0].mxu0
        %5015 = vmatprep.mubr.bf16.mxu0 0
        %5016 = vmatmul.mubr.bf16.gmra.mrb[0].mxu0 %v4569
        %v5017 = vpop.f32.mrb[0].mxu0
        %v5018 = vadd.f32 0.0, %v5017
        %v5019 = vpop.f32.mrb[0].mxu0
        %v5020 = vpop.f32.mrb[0].mxu0
        %v5021 = vadd.f32 0.0, %v5020
        %v5022 = vpop.f32.mrb[0].mxu0
        %5023 = vmatprep.mubr.bf16.mxu0 0
        %5024 = vmatmul.mubr.bf16.gmra.mrb[0].mxu0 %v4572
        %v5025 = vpop.f32.mrb[0].mxu0
        %v5026 = vadd.f32 0.0, %v5025
        %v5027 = vpop.f32.mrb[0].mxu0
        %v5028 = vpop.f32.mrb[0].mxu0
        %v5029 = vadd.f32 0.0, %v5028
        %v5030 = vpop.f32.mrb[0].mxu0
        %5031 = vmatprep.mubr.bf16.mxu0 0
        %5032 = vmatmul.mubr.bf16.gmra.mrb[0].mxu0 %v4575
        %v5033 = vpop.f32.mrb[0].mxu0
        %v5034 = vadd.f32 0.0, %v5033
        %v5035 = vpop.f32.mrb[0].mxu0
        %v5036 = vpop.f32.mrb[0].mxu0
        %v5037 = vadd.f32 0.0, %v5036
        %v5038 = vpop.f32.mrb[0].mxu0
        %5039 = vmatprep.mubr.bf16.mxu0 0
        %5040 = vmatmul.mubr.bf16.gmra.mrb[0].mxu0 %v4578
        %v5041 = vpop.f32.mrb[0].mxu0
        %v5042 = vadd.f32 0.0, %v5041
        %v5043 = vpop.f32.mrb[0].mxu0
        %v5044 = vpop.f32.mrb[0].mxu0
        %v5045 = vadd.f32 0.0, %v5044
        %v5046 = vpop.f32.mrb[0].mxu0
        %5047 = vmatprep.mubr.bf16.mxu0 0
        %5048 = vmatmul.mubr.bf16.gmra.mrb[0].mxu0 %v4581
        %v5049 = vpop.f32.mrb[0].mxu0
        %v5050 = vadd.f32 0.0, %v5049
        %v5051 = vpop.f32.mrb[0].mxu0
        %v5052 = vpop.f32.mrb[0].mxu0
        %v5053 = vadd.f32 0.0, %v5052
        %v5054 = vpop.f32.mrb[0].mxu0
        %5055 = vmatprep.mubr.bf16.mxu0 0
        %5056 = vmatmul.mubr.bf16.gmra.mrb[0].mxu0 %v4584
        %v5057 = vpop.f32.mrb[0].mxu0
        %v5058 = vadd.f32 0.0, %v5057
        %v5059 = vpop.f32.mrb[0].mxu0
        %v5060 = vpop.f32.mrb[0].mxu0
        %v5061 = vadd.f32 0.0, %v5060
        %v5062 = vpop.f32.mrb[0].mxu0
        %5063 = vmatprep.mubr.bf16.mxu0 0
        %5064 = vmatmul.mubr.bf16.gmra.mrb[0].mxu0 %v4587
        %v5065 = vpop.f32.mrb[0].mxu0
        %v5066 = vadd.f32 0.0, %v5065
        %v5067 = vpop.f32.mrb[0].mxu0
        %v5068 = vpop.f32.mrb[0].mxu0
        %v5069 = vadd.f32 0.0, %v5068
        %v5070 = vpop.f32.mrb[0].mxu0
        %5071 = vmatprep.mubr.bf16.mxu0 0
        %5072 = vmatmul.mubr.bf16.gmra.mrb[0].mxu0 %v4590
        %v5073 = vpop.f32.mrb[0].mxu0
        %v5074 = vadd.f32 0.0, %v5073
        %v5075 = vpop.f32.mrb[0].mxu0
        %v5076 = vpop.f32.mrb[0].mxu0
        %v5077 = vadd.f32 0.0, %v5076
        %v5078 = vpop.f32.mrb[0].mxu0
        %5079 = vmatprep.mubr.bf16.mxu0 0
        %5080 = vmatmul.mubr.bf16.gmra.mrb[0].mxu0 %v4593
        %v5081 = vpop.f32.mrb[0].mxu0
        %v5082 = vadd.f32 0.0, %v5081
        %v5083 = vpop.f32.mrb[0].mxu0
        %v5084 = vpop.f32.mrb[0].mxu0
        %v5085 = vadd.f32 0.0, %v5084
        %v5086 = vpop.f32.mrb[0].mxu0
        %5087 = vmatprep.mubr.bf16.mxu0 0
        %5088 = vmatmul.mubr.bf16.gmra.mrb[0].mxu0 %v4596
        %v5089 = vpop.f32.mrb[0].mxu0
        %v5090 = vadd.f32 0.0, %v5089
        %v5091 = vpop.f32.mrb[0].mxu0
        %v5092 = vpop.f32.mrb[0].mxu0
        %v5093 = vadd.f32 0.0, %v5092
        %v5094 = vpop.f32.mrb[0].mxu0
        %5095 = vmatprep.mubr.bf16.mxu0 0
        %5096 = vmatmul.mubr.bf16.gmra.mrb[0].mxu0 %v4599
        %v5097 = vpop.f32.mrb[0].mxu0
        %v5098 = vadd.f32 0.0, %v5097
        %v5099 = vpop.f32.mrb[0].mxu0
        %v5100 = vpop.f32.mrb[0].mxu0
        %v5101 = vadd.f32 0.0, %v5100
        %v5102 = vpop.f32.mrb[0].mxu0
        %5103 = vmatprep.mubr.bf16.mxu0 0
        %5104 = vmatmul.mubr.bf16.gmra.mrb[0].mxu0 %v4602
        %v5105 = vpop.f32.mrb[0].mxu0
        %v5106 = vadd.f32 0.0, %v5105
        %v5107 = vpop.f32.mrb[0].mxu0
        %v5108 = vpop.f32.mrb[0].mxu0
        %v5109 = vadd.f32 0.0, %v5108
        %v5110 = vpop.f32.mrb[0].mxu0
        %5111 = vmatprep.mubr.bf16.mxu0 0
        %5112 = vmatmul.mubr.bf16.gmra.mrb[0].mxu0 %v4605
        %v5113 = vpop.f32.mrb[0].mxu0
        %v5114 = vadd.f32 0.0, %v5113
        %v5115 = vpop.f32.mrb[0].mxu0
        %v5116 = vpop.f32.mrb[0].mxu0
        %v5117 = vadd.f32 0.0, %v5116
        %v5118 = vpop.f32.mrb[0].mxu0
        %5119 = vmatprep.mubr.bf16.mxu0 0
        %5120 = vmatmul.mubr.bf16.gmra.mrb[0].mxu0 %v4608
        %v5121 = vpop.f32.mrb[0].mxu0
        %v5122 = vadd.f32 0.0, %v5121
        %v5123 = vpop.f32.mrb[0].mxu0
        %v5124 = vpop.f32.mrb[0].mxu0
        %v5125 = vadd.f32 0.0, %v5124
        %v5126 = vpop.f32.mrb[0].mxu0
        %5127 = vmatprep.mubr.bf16.mxu0 0
        %5128 = vmatmul.mubr.bf16.gmra.mrb[0].mxu0 %v4611
        %v5129 = vpop.f32.mrb[0].mxu0
        %v5130 = vadd.f32 0.0, %v5129
        %v5131 = vpop.f32.mrb[0].mxu0
        %v5132 = vpop.f32.mrb[0].mxu0
        %v5133 = vadd.f32 0.0, %v5132
        %v5134 = vpop.f32.mrb[0].mxu0
        %5135 = vmatprep.mubr.bf16.mxu0 0
        %5136 = vmatmul.mubr.bf16.gmra.mrb[0].mxu0 %v4614
        %v5137 = vpop.f32.mrb[0].mxu0
        %v5138 = vadd.f32 0.0, %v5137
        %v5139 = vpop.f32.mrb[0].mxu0
        %v5140 = vpop.f32.mrb[0].mxu0
        %v5141 = vadd.f32 0.0, %v5140
        %v5142 = vpop.f32.mrb[0].mxu0
        %5143 = vmatprep.mubr.bf16.mxu0 0
        %5144 = vmatmul.mubr.bf16.gmra.mrb[0].mxu0 %v4617
        %v5145 = vpop.f32.mrb[0].mxu0
        %v5146 = vadd.f32 0.0, %v5145
        %v5147 = vpop.f32.mrb[0].mxu0
        %v5148 = vpop.f32.mrb[0].mxu0
        %v5149 = vadd.f32 0.0, %v5148
        %v5150 = vpop.f32.mrb[0].mxu0
        %5151 = vmatprep.mubr.bf16.mxu0 0
        %5152 = vmatmul.mubr.bf16.gmra.mrb[0].mxu0 %v4620
        %v5153 = vpop.f32.mrb[0].mxu0
        %v5154 = vadd.f32 0.0, %v5153
        %v5155 = vpop.f32.mrb[0].mxu0
        %v5156 = vpop.f32.mrb[0].mxu0
        %v5157 = vadd.f32 0.0, %v5156
        %v5158 = vpop.f32.mrb[0].mxu0
        %5159 = vmatprep.mubr.bf16.mxu0 0
        %5160 = vmatmul.mubr.bf16.gmra.mrb[0].mxu0 %v4623
        %v5161 = vpop.f32.mrb[0].mxu0
        %v5162 = vadd.f32 0.0, %v5161
        %v5163 = vpop.f32.mrb[0].mxu0
        %v5164 = vpop.f32.mrb[0].mxu0
        %v5165 = vadd.f32 0.0, %v5164
        %v5166 = vpop.f32.mrb[0].mxu0
        %5167 = vmatprep.mubr.bf16.mxu0 0
        %5168 = vmatmul.mubr.bf16.gmra.mrb[0].mxu0 %v4626
        %v5169 = vpop.f32.mrb[0].mxu0
        %v5170 = vadd.f32 0.0, %v5169
        %v5171 = vpop.f32.mrb[0].mxu0
        %v5172 = vpop.f32.mrb[0].mxu0
        %v5173 = vadd.f32 0.0, %v5172
        %v5174 = vpop.f32.mrb[0].mxu0
        %5175 = vdwg.mxu0
        %v5176 = vadd.f32 %v3281, %v4666
        %v5177 = vadd.f32 %v3284, %v4669
        %v5178 = vadd.f32 %v3289, %v4674
        %v5179 = vadd.f32 %v3292, %v4677
        %v5180 = vadd.f32 %v3297, %v4682
        %v5181 = vadd.f32 %v3300, %v4685
        %v5182 = vadd.f32 %v3305, %v4690
        %v5183 = vadd.f32 %v3308, %v4693
        %v5184 = vadd.f32 %v3313, %v4698
        %v5185 = vadd.f32 %v3316, %v4701
        %v5186 = vadd.f32 %v3321, %v4706
        %v5187 = vadd.f32 %v3324, %v4709
        %v5188 = vadd.f32 %v3329, %v4714
        %v5189 = vadd.f32 %v3332, %v4717
        %v5190 = vadd.f32 %v3337, %v4722
        %v5191 = vadd.f32 %v3340, %v4725
        %v5192 = vadd.f32 %v3345, %v4730
        %v5193 = vadd.f32 %v3348, %v4733
        %v5194 = vadd.f32 %v3353, %v4738
        %v5195 = vadd.f32 %v3356, %v4741
        %v5196 = vadd.f32 %v3361, %v4746
        %v5197 = vadd.f32 %v3364, %v4749
        %v5198 = vadd.f32 %v3369, %v4754
        %v5199 = vadd.f32 %v3372, %v4757
        %v5200 = vadd.f32 %v3377, %v4762
        %v5201 = vadd.f32 %v3380, %v4765
        %v5202 = vadd.f32 %v3385, %v4770
        %v5203 = vadd.f32 %v3388, %v4773
        %v5204 = vadd.f32 %v3393, %v4778
        %v5205 = vadd.f32 %v3396, %v4781
        %v5206 = vadd.f32 %v3401, %v4786
        %v5207 = vadd.f32 %v3404, %v4789
        %v5208 = vadd.f32 %v3409, %v4794
        %v5209 = vadd.f32 %v3412, %v4797
        %v5210 = vadd.f32 %v3417, %v4802
        %v5211 = vadd.f32 %v3420, %v4805
        %v5212 = vadd.f32 %v3425, %v4810
        %v5213 = vadd.f32 %v3428, %v4813
        %v5214 = vadd.f32 %v3433, %v4818
        %v5215 = vadd.f32 %v3436, %v4821
        %v5216 = vadd.f32 %v3441, %v4826
        %v5217 = vadd.f32 %v3444, %v4829
        %v5218 = vadd.f32 %v3449, %v4834
        %v5219 = vadd.f32 %v3452, %v4837
        %v5220 = vadd.f32 %v3457, %v4842
        %v5221 = vadd.f32 %v3460, %v4845
        %v5222 = vadd.f32 %v3465, %v4850
        %v5223 = vadd.f32 %v3468, %v4853
        %v5224 = vadd.f32 %v3473, %v4858
        %v5225 = vadd.f32 %v3476, %v4861
        %v5226 = vadd.f32 %v3481, %v4866
        %v5227 = vadd.f32 %v3484, %v4869
        %v5228 = vadd.f32 %v3489, %v4874
        %v5229 = vadd.f32 %v3492, %v4877
        %v5230 = vadd.f32 %v3497, %v4882
        %v5231 = vadd.f32 %v3500, %v4885
        %v5232 = vadd.f32 %v3505, %v4890
        %v5233 = vadd.f32 %v3508, %v4893
        %v5234 = vadd.f32 %v3513, %v4898
        %v5235 = vadd.f32 %v3516, %v4901
        %v5236 = vadd.f32 %v3521, %v4906
        %v5237 = vadd.f32 %v3524, %v4909
        %v5238 = vadd.f32 %v3529, %v4914
        %v5239 = vadd.f32 %v3532, %v4917
        %v5240 = vadd.f32 %v3537, %v4922
        %v5241 = vadd.f32 %v3540, %v4925
        %v5242 = vadd.f32 %v3545, %v4930
        %v5243 = vadd.f32 %v3548, %v4933
        %v5244 = vadd.f32 %v3553, %v4938
        %v5245 = vadd.f32 %v3556, %v4941
        %v5246 = vadd.f32 %v3561, %v4946
        %v5247 = vadd.f32 %v3564, %v4949
        %v5248 = vadd.f32 %v3569, %v4954
        %v5249 = vadd.f32 %v3572, %v4957
        %v5250 = vadd.f32 %v3577, %v4962
        %v5251 = vadd.f32 %v3580, %v4965
        %v5252 = vadd.f32 %v3585, %v4970
        %v5253 = vadd.f32 %v3588, %v4973
        %v5254 = vadd.f32 %v3593, %v4978
        %v5255 = vadd.f32 %v3596, %v4981
        %v5256 = vadd.f32 %v3601, %v4986
        %v5257 = vadd.f32 %v3604, %v4989
        %v5258 = vadd.f32 %v3609, %v4994
        %v5259 = vadd.f32 %v3612, %v4997
        %v5260 = vadd.f32 %v3617, %v5002
        %v5261 = vadd.f32 %v3620, %v5005
        %v5262 = vadd.f32 %v3625, %v5010
        %v5263 = vadd.f32 %v3628, %v5013
        %v5264 = vadd.f32 %v3633, %v5018
        %v5265 = vadd.f32 %v3636, %v5021
        %v5266 = vadd.f32 %v3641, %v5026
        %v5267 = vadd.f32 %v3644, %v5029
        %v5268 = vadd.f32 %v3649, %v5034
        %v5269 = vadd.f32 %v3652, %v5037
        %v5270 = vadd.f32 %v3657, %v5042
        %v5271 = vadd.f32 %v3660, %v5045
        %v5272 = vadd.f32 %v3665, %v5050
        %v5273 = vadd.f32 %v3668, %v5053
        %v5274 = vadd.f32 %v3673, %v5058
        %v5275 = vadd.f32 %v3676, %v5061
        %v5276 = vadd.f32 %v3681, %v5066
        %v5277 = vadd.f32 %v3684, %v5069
        %v5278 = vadd.f32 %v3689, %v5074
        %v5279 = vadd.f32 %v3692, %v5077
        %v5280 = vadd.f32 %v3697, %v5082
        %v5281 = vadd.f32 %v3700, %v5085
        %v5282 = vadd.f32 %v3705, %v5090
        %v5283 = vadd.f32 %v3708, %v5093
        %v5284 = vadd.f32 %v3713, %v5098
        %v5285 = vadd.f32 %v3716, %v5101
        %v5286 = vadd.f32 %v3721, %v5106
        %v5287 = vadd.f32 %v3724, %v5109
        %v5288 = vadd.f32 %v3729, %v5114
        %v5289 = vadd.f32 %v3732, %v5117
        %v5290 = vadd.f32 %v3737, %v5122
        %v5291 = vadd.f32 %v3740, %v5125
        %v5292 = vadd.f32 %v3745, %v5130
        %v5293 = vadd.f32 %v3748, %v5133
        %v5294 = vadd.f32 %v3753, %v5138
        %v5295 = vadd.f32 %v3756, %v5141
        %v5296 = vadd.f32 %v3761, %v5146
        %v5297 = vadd.f32 %v3764, %v5149
        %v5298 = vadd.f32 %v3769, %v5154
        %v5299 = vadd.f32 %v3772, %v5157
        %v5300 = vadd.f32 %v3777, %v5162
        %v5301 = vadd.f32 %v3780, %v5165
        %v5302 = vadd.f32 %v3785, %v5170
        %v5303 = vadd.f32 %v3788, %v5173
        %s5304 = scalar_lea.vmem %s208, 6
        %v5305 = vld [vmem:[%s5304] sm:$0x3]
        %v5310 = vunpack.c.l.b16 %v370
        %v5311 = vunpack.c.l.b16 %v371
        %v5312 = vunpack.c.l.b16 %v372
        %v5313 = vunpack.c.l.b16 %v373
        %v5314 = vpack.c.b16 %v5311, %v5310
        %v5315 = vpack.c.b16 %v5313, %v5312
        %v5317 = vsel %vm1986, %v5314, 0
        %v5320 = vsel %vm1986, %v5315, 0
        %v5323 = vand.u32 %v5305, %v2182
        %5325 = vmatprep.subr.bf16.mxu0 0
        %5326 = vmatpush1.bf16.msra.mxu0 %v5323
        %5327 = vmatprep.subr.bf16.mxu0 0
        %5328 = vmatpush1.bf16.msra.mxu0 0
        %5329 = vmatprep.subr.bf16.mxu0 0
        %5330 = vmatpush1.bf16.msra.mxu0 0
        %5331 = vmatprep.subr.bf16.mxu0 0
        %5332 = vmatpush1.bf16.msra.mxu0 0
        %5333 = vmatprep.subr.bf16.mxu0 0
        %5334 = vmatpush1.bf16.msra.mxu0 0
        %5335 = vmatprep.subr.bf16.mxu0 0
        %5336 = vmatpush1.bf16.msra.mxu0 0
        %5337 = vmatprep.subr.bf16.mxu0 0
        %5338 = vmatpush1.bf16.msra.mxu0 0
        %5339 = vmatprep.subr.bf16.mxu0 0
        %5340 = vmatpush1.bf16.msra.mxu0 0
        %5341 = vmatprep.subr.bf16.mxu0 0
        %5342 = vmatpush1.bf16.msra.mxu0 0
        %5343 = vmatprep.subr.bf16.mxu0 0
        %5344 = vmatpush1.bf16.msra.mxu0 0
        %5345 = vmatprep.subr.bf16.mxu0 0
        %5346 = vmatpush1.bf16.msra.mxu0 0
        %5347 = vmatprep.subr.bf16.mxu0 0
        %5348 = vmatpush1.bf16.msra.mxu0 0
        %5349 = vmatprep.subr.bf16.mxu0 0
        %5350 = vmatpush1.bf16.msra.mxu0 0
        %5351 = vmatprep.subr.bf16.mxu0 0
        %5352 = vmatpush1.bf16.msra.mxu0 0
        %5353 = vmatprep.subr.bf16.mxu0 0
        %5354 = vmatpush1.bf16.msra.mxu0 0
        %5355 = vmatprep.subr.bf16.mxu0 0
        %5356 = vmatpush1.bf16.msra.mxu0 0
        %5357 = vmatprep.mubr.bf16.mxu0 0
        %5358 = vmatmul.mubr.bf16.gmra.mrb[0].mxu0 %v3058
        %v5359 = vpop.f32.mrb[0].mxu0
        %v5360 = vadd.f32 0.0, %v5359
        %v5361 = vpop.f32.mrb[0].mxu0
        %v5362 = vpop.f32.mrb[0].mxu0
        %v5363 = vadd.f32 0.0, %v5362
        %v5364 = vpop.f32.mrb[0].mxu0
        %5365 = vmatprep.mubr.bf16.mxu0 0
        %5366 = vmatmul.mubr.bf16.gmra.mrb[0].mxu0 %v3061
        %v5367 = vpop.f32.mrb[0].mxu0
        %v5368 = vadd.f32 0.0, %v5367
        %v5369 = vpop.f32.mrb[0].mxu0
        %v5370 = vpop.f32.mrb[0].mxu0
        %v5371 = vadd.f32 0.0, %v5370
        %v5372 = vpop.f32.mrb[0].mxu0
        %5373 = vmatprep.mubr.bf16.mxu0 0
        %5374 = vmatmul.mubr.bf16.gmra.mrb[0].mxu0 %v3064
        %v5375 = vpop.f32.mrb[0].mxu0
        %v5376 = vadd.f32 0.0, %v5375
        %v5377 = vpop.f32.mrb[0].mxu0
        %v5378 = vpop.f32.mrb[0].mxu0
        %v5379 = vadd.f32 0.0, %v5378
        %v5380 = vpop.f32.mrb[0].mxu0
        %5381 = vmatprep.mubr.bf16.mxu0 0
        %5382 = vmatmul.mubr.bf16.gmra.mrb[0].mxu0 %v3067
        %v5383 = vpop.f32.mrb[0].mxu0
        %v5384 = vadd.f32 0.0, %v5383
        %v5385 = vpop.f32.mrb[0].mxu0
        %v5386 = vpop.f32.mrb[0].mxu0
        %v5387 = vadd.f32 0.0, %v5386
        %v5388 = vpop.f32.mrb[0].mxu0
        %5389 = vmatprep.mubr.bf16.mxu0 0
        %5390 = vmatmul.mubr.bf16.gmra.mrb[0].mxu0 %v3070
        %v5391 = vpop.f32.mrb[0].mxu0
        %v5392 = vadd.f32 0.0, %v5391
        %v5393 = vpop.f32.mrb[0].mxu0
        %v5394 = vpop.f32.mrb[0].mxu0
        %v5395 = vadd.f32 0.0, %v5394
        %v5396 = vpop.f32.mrb[0].mxu0
        %5397 = vmatprep.mubr.bf16.mxu0 0
        %5398 = vmatmul.mubr.bf16.gmra.mrb[0].mxu0 %v3073
        %v5399 = vpop.f32.mrb[0].mxu0
        %v5400 = vadd.f32 0.0, %v5399
        %v5401 = vpop.f32.mrb[0].mxu0
        %v5402 = vpop.f32.mrb[0].mxu0
        %v5403 = vadd.f32 0.0, %v5402
        %v5404 = vpop.f32.mrb[0].mxu0
        %5405 = vmatprep.mubr.bf16.mxu0 0
        %5406 = vmatmul.mubr.bf16.gmra.mrb[0].mxu0 %v3076
        %v5407 = vpop.f32.mrb[0].mxu0
        %v5408 = vadd.f32 0.0, %v5407
        %v5409 = vpop.f32.mrb[0].mxu0
        %v5410 = vpop.f32.mrb[0].mxu0
        %v5411 = vadd.f32 0.0, %v5410
        %v5412 = vpop.f32.mrb[0].mxu0
        %5413 = vmatprep.mubr.bf16.mxu0 0
        %5414 = vmatmul.mubr.bf16.gmra.mrb[0].mxu0 %v3079
        %v5415 = vpop.f32.mrb[0].mxu0
        %v5416 = vadd.f32 0.0, %v5415
        %v5417 = vpop.f32.mrb[0].mxu0
        %v5418 = vpop.f32.mrb[0].mxu0
        %v5419 = vadd.f32 0.0, %v5418
        %v5420 = vpop.f32.mrb[0].mxu0
        %5421 = vmatprep.mubr.bf16.mxu0 0
        %5422 = vmatmul.mubr.bf16.gmra.mrb[0].mxu0 %v3082
        %v5423 = vpop.f32.mrb[0].mxu0
        %v5424 = vadd.f32 0.0, %v5423
        %v5425 = vpop.f32.mrb[0].mxu0
        %v5426 = vpop.f32.mrb[0].mxu0
        %v5427 = vadd.f32 0.0, %v5426
        %v5428 = vpop.f32.mrb[0].mxu0
        %5429 = vmatprep.mubr.bf16.mxu0 0
        %5430 = vmatmul.mubr.bf16.gmra.mrb[0].mxu0 %v3085
        %v5431 = vpop.f32.mrb[0].mxu0
        %v5432 = vadd.f32 0.0, %v5431
        %v5433 = vpop.f32.mrb[0].mxu0
        %v5434 = vpop.f32.mrb[0].mxu0
        %v5435 = vadd.f32 0.0, %v5434
        %v5436 = vpop.f32.mrb[0].mxu0
        %5437 = vmatprep.mubr.bf16.mxu0 0
        %5438 = vmatmul.mubr.bf16.gmra.mrb[0].mxu0 %v3088
        %v5439 = vpop.f32.mrb[0].mxu0
        %v5440 = vadd.f32 0.0, %v5439
        %v5441 = vpop.f32.mrb[0].mxu0
        %v5442 = vpop.f32.mrb[0].mxu0
        %v5443 = vadd.f32 0.0, %v5442
        %v5444 = vpop.f32.mrb[0].mxu0
        %5445 = vmatprep.mubr.bf16.mxu0 0
        %5446 = vmatmul.mubr.bf16.gmra.mrb[0].mxu0 %v3091
        %v5447 = vpop.f32.mrb[0].mxu0
        %v5448 = vadd.f32 0.0, %v5447
        %v5449 = vpop.f32.mrb[0].mxu0
        %v5450 = vpop.f32.mrb[0].mxu0
        %v5451 = vadd.f32 0.0, %v5450
        %v5452 = vpop.f32.mrb[0].mxu0
        %5453 = vmatprep.mubr.bf16.mxu0 0
        %5454 = vmatmul.mubr.bf16.gmra.mrb[0].mxu0 %v3094
        %v5455 = vpop.f32.mrb[0].mxu0
        %v5456 = vadd.f32 0.0, %v5455
        %v5457 = vpop.f32.mrb[0].mxu0
        %v5458 = vpop.f32.mrb[0].mxu0
        %v5459 = vadd.f32 0.0, %v5458
        %v5460 = vpop.f32.mrb[0].mxu0
        %5461 = vmatprep.mubr.bf16.mxu0 0
        %5462 = vmatmul.mubr.bf16.gmra.mrb[0].mxu0 %v3097
        %v5463 = vpop.f32.mrb[0].mxu0
        %v5464 = vadd.f32 0.0, %v5463
        %v5465 = vpop.f32.mrb[0].mxu0
        %v5466 = vpop.f32.mrb[0].mxu0
        %v5467 = vadd.f32 0.0, %v5466
        %v5468 = vpop.f32.mrb[0].mxu0
        %5469 = vmatprep.mubr.bf16.mxu0 0
        %5470 = vmatmul.mubr.bf16.gmra.mrb[0].mxu0 %v3100
        %v5471 = vpop.f32.mrb[0].mxu0
        %v5472 = vadd.f32 0.0, %v5471
        %v5473 = vpop.f32.mrb[0].mxu0
        %v5474 = vpop.f32.mrb[0].mxu0
        %v5475 = vadd.f32 0.0, %v5474
        %v5476 = vpop.f32.mrb[0].mxu0
        %5477 = vmatprep.mubr.bf16.mxu0 0
        %5478 = vmatmul.mubr.bf16.gmra.mrb[0].mxu0 %v3103
        %v5479 = vpop.f32.mrb[0].mxu0
        %v5480 = vadd.f32 0.0, %v5479
        %v5481 = vpop.f32.mrb[0].mxu0
        %v5482 = vpop.f32.mrb[0].mxu0
        %v5483 = vadd.f32 0.0, %v5482
        %v5484 = vpop.f32.mrb[0].mxu0
        %5485 = vmatprep.mubr.bf16.mxu0 0
        %5486 = vmatmul.mubr.bf16.gmra.mrb[0].mxu0 %v3106
        %v5487 = vpop.f32.mrb[0].mxu0
        %v5488 = vadd.f32 0.0, %v5487
        %v5489 = vpop.f32.mrb[0].mxu0
        %v5490 = vpop.f32.mrb[0].mxu0
        %v5491 = vadd.f32 0.0, %v5490
        %v5492 = vpop.f32.mrb[0].mxu0
        %5493 = vmatprep.mubr.bf16.mxu0 0
        %5494 = vmatmul.mubr.bf16.gmra.mrb[0].mxu0 %v3109
        %v5495 = vpop.f32.mrb[0].mxu0
        %v5496 = vadd.f32 0.0, %v5495
        %v5497 = vpop.f32.mrb[0].mxu0
        %v5498 = vpop.f32.mrb[0].mxu0
        %v5499 = vadd.f32 0.0, %v5498
        %v5500 = vpop.f32.mrb[0].mxu0
        %5501 = vmatprep.mubr.bf16.mxu0 0
        %5502 = vmatmul.mubr.bf16.gmra.mrb[0].mxu0 %v3112
        %v5503 = vpop.f32.mrb[0].mxu0
        %v5504 = vadd.f32 0.0, %v5503
        %v5505 = vpop.f32.mrb[0].mxu0
        %v5506 = vpop.f32.mrb[0].mxu0
        %v5507 = vadd.f32 0.0, %v5506
        %v5508 = vpop.f32.mrb[0].mxu0
        %5509 = vmatprep.mubr.bf16.mxu0 0
        %5510 = vmatmul.mubr.bf16.gmra.mrb[0].mxu0 %v3115
        %v5511 = vpop.f32.mrb[0].mxu0
        %v5512 = vadd.f32 0.0, %v5511
        %v5513 = vpop.f32.mrb[0].mxu0
        %v5514 = vpop.f32.mrb[0].mxu0
        %v5515 = vadd.f32 0.0, %v5514
        %v5516 = vpop.f32.mrb[0].mxu0
        %5517 = vmatprep.mubr.bf16.mxu0 0
        %5518 = vmatmul.mubr.bf16.gmra.mrb[0].mxu0 %v3118
        %v5519 = vpop.f32.mrb[0].mxu0
        %v5520 = vadd.f32 0.0, %v5519
        %v5521 = vpop.f32.mrb[0].mxu0
        %v5522 = vpop.f32.mrb[0].mxu0
        %v5523 = vadd.f32 0.0, %v5522
        %v5524 = vpop.f32.mrb[0].mxu0
        %5525 = vmatprep.mubr.bf16.mxu0 0
        %5526 = vmatmul.mubr.bf16.gmra.mrb[0].mxu0 %v3121
        %v5527 = vpop.f32.mrb[0].mxu0
        %v5528 = vadd.f32 0.0, %v5527
        %v5529 = vpop.f32.mrb[0].mxu0
        %v5530 = vpop.f32.mrb[0].mxu0
        %v5531 = vadd.f32 0.0, %v5530
        %v5532 = vpop.f32.mrb[0].mxu0
        %5533 = vmatprep.mubr.bf16.mxu0 0
        %5534 = vmatmul.mubr.bf16.gmra.mrb[0].mxu0 %v3124
        %v5535 = vpop.f32.mrb[0].mxu0
        %v5536 = vadd.f32 0.0, %v5535
        %v5537 = vpop.f32.mrb[0].mxu0
        %v5538 = vpop.f32.mrb[0].mxu0
        %v5539 = vadd.f32 0.0, %v5538
        %v5540 = vpop.f32.mrb[0].mxu0
        %5541 = vmatprep.mubr.bf16.mxu0 0
        %5542 = vmatmul.mubr.bf16.gmra.mrb[0].mxu0 %v3127
        %v5543 = vpop.f32.mrb[0].mxu0
        %v5544 = vadd.f32 0.0, %v5543
        %v5545 = vpop.f32.mrb[0].mxu0
        %v5546 = vpop.f32.mrb[0].mxu0
        %v5547 = vadd.f32 0.0, %v5546
        %v5548 = vpop.f32.mrb[0].mxu0
        %5549 = vmatprep.mubr.bf16.mxu0 0
        %5550 = vmatmul.mubr.bf16.gmra.mrb[0].mxu0 %v3130
        %v5551 = vpop.f32.mrb[0].mxu0
        %v5552 = vadd.f32 0.0, %v5551
        %v5553 = vpop.f32.mrb[0].mxu0
        %v5554 = vpop.f32.mrb[0].mxu0
        %v5555 = vadd.f32 0.0, %v5554
        %v5556 = vpop.f32.mrb[0].mxu0
        %5557 = vmatprep.mubr.bf16.mxu0 0
        %5558 = vmatmul.mubr.bf16.gmra.mrb[0].mxu0 %v3133
        %v5559 = vpop.f32.mrb[0].mxu0
        %v5560 = vadd.f32 0.0, %v5559
        %v5561 = vpop.f32.mrb[0].mxu0
        %v5562 = vpop.f32.mrb[0].mxu0
        %v5563 = vadd.f32 0.0, %v5562
        %v5564 = vpop.f32.mrb[0].mxu0
        %5565 = vmatprep.mubr.bf16.mxu0 0
        %5566 = vmatmul.mubr.bf16.gmra.mrb[0].mxu0 %v3136
        %v5567 = vpop.f32.mrb[0].mxu0
        %v5568 = vadd.f32 0.0, %v5567
        %v5569 = vpop.f32.mrb[0].mxu0
        %v5570 = vpop.f32.mrb[0].mxu0
        %v5571 = vadd.f32 0.0, %v5570
        %v5572 = vpop.f32.mrb[0].mxu0
        %5573 = vmatprep.mubr.bf16.mxu0 0
        %5574 = vmatmul.mubr.bf16.gmra.mrb[0].mxu0 %v3139
        %v5575 = vpop.f32.mrb[0].mxu0
        %v5576 = vadd.f32 0.0, %v5575
        %v5577 = vpop.f32.mrb[0].mxu0
        %v5578 = vpop.f32.mrb[0].mxu0
        %v5579 = vadd.f32 0.0, %v5578
        %v5580 = vpop.f32.mrb[0].mxu0
        %5581 = vmatprep.mubr.bf16.mxu0 0
        %5582 = vmatmul.mubr.bf16.gmra.mrb[0].mxu0 %v3142
        %v5583 = vpop.f32.mrb[0].mxu0
        %v5584 = vadd.f32 0.0, %v5583
        %v5585 = vpop.f32.mrb[0].mxu0
        %v5586 = vpop.f32.mrb[0].mxu0
        %v5587 = vadd.f32 0.0, %v5586
        %v5588 = vpop.f32.mrb[0].mxu0
        %5589 = vmatprep.mubr.bf16.mxu0 0
        %5590 = vmatmul.mubr.bf16.gmra.mrb[0].mxu0 %v3145
        %v5591 = vpop.f32.mrb[0].mxu0
        %v5592 = vadd.f32 0.0, %v5591
        %v5593 = vpop.f32.mrb[0].mxu0
        %v5594 = vpop.f32.mrb[0].mxu0
        %v5595 = vadd.f32 0.0, %v5594
        %v5596 = vpop.f32.mrb[0].mxu0
        %5597 = vmatprep.mubr.bf16.mxu0 0
        %5598 = vmatmul.mubr.bf16.gmra.mrb[0].mxu0 %v3148
        %v5599 = vpop.f32.mrb[0].mxu0
        %v5600 = vadd.f32 0.0, %v5599
        %v5601 = vpop.f32.mrb[0].mxu0
        %v5602 = vpop.f32.mrb[0].mxu0
        %v5603 = vadd.f32 0.0, %v5602
        %v5604 = vpop.f32.mrb[0].mxu0
        %5605 = vmatprep.mubr.bf16.mxu0 0
        %5606 = vmatmul.mubr.bf16.gmra.mrb[0].mxu0 %v3151
        %v5607 = vpop.f32.mrb[0].mxu0
        %v5608 = vadd.f32 0.0, %v5607
        %v5609 = vpop.f32.mrb[0].mxu0
        %v5610 = vpop.f32.mrb[0].mxu0
        %v5611 = vadd.f32 0.0, %v5610
        %v5612 = vpop.f32.mrb[0].mxu0
        %5613 = vmatprep.mubr.bf16.mxu0 0
        %5614 = vmatmul.mubr.bf16.gmra.mrb[0].mxu0 %v3154
        %v5615 = vpop.f32.mrb[0].mxu0
        %v5616 = vadd.f32 0.0, %v5615
        %v5617 = vpop.f32.mrb[0].mxu0
        %v5618 = vpop.f32.mrb[0].mxu0
        %v5619 = vadd.f32 0.0, %v5618
        %v5620 = vpop.f32.mrb[0].mxu0
        %5621 = vmatprep.mubr.bf16.mxu0 0
        %5622 = vmatmul.mubr.bf16.gmra.mrb[0].mxu0 %v3157
        %v5623 = vpop.f32.mrb[0].mxu0
        %v5624 = vadd.f32 0.0, %v5623
        %v5625 = vpop.f32.mrb[0].mxu0
        %v5626 = vpop.f32.mrb[0].mxu0
        %v5627 = vadd.f32 0.0, %v5626
        %v5628 = vpop.f32.mrb[0].mxu0
        %5629 = vmatprep.mubr.bf16.mxu0 0
        %5630 = vmatmul.mubr.bf16.gmra.mrb[0].mxu0 %v3160
        %v5631 = vpop.f32.mrb[0].mxu0
        %v5632 = vadd.f32 0.0, %v5631
        %v5633 = vpop.f32.mrb[0].mxu0
        %v5634 = vpop.f32.mrb[0].mxu0
        %v5635 = vadd.f32 0.0, %v5634
        %v5636 = vpop.f32.mrb[0].mxu0
        %5637 = vmatprep.mubr.bf16.mxu0 0
        %5638 = vmatmul.mubr.bf16.gmra.mrb[0].mxu0 %v3163
        %v5639 = vpop.f32.mrb[0].mxu0
        %v5640 = vadd.f32 0.0, %v5639
        %v5641 = vpop.f32.mrb[0].mxu0
        %v5642 = vpop.f32.mrb[0].mxu0
        %v5643 = vadd.f32 0.0, %v5642
        %v5644 = vpop.f32.mrb[0].mxu0
        %5645 = vmatprep.mubr.bf16.mxu0 0
        %5646 = vmatmul.mubr.bf16.gmra.mrb[0].mxu0 %v3166
        %v5647 = vpop.f32.mrb[0].mxu0
        %v5648 = vadd.f32 0.0, %v5647
        %v5649 = vpop.f32.mrb[0].mxu0
        %v5650 = vpop.f32.mrb[0].mxu0
        %v5651 = vadd.f32 0.0, %v5650
        %v5652 = vpop.f32.mrb[0].mxu0
        %5653 = vmatprep.mubr.bf16.mxu0 0
        %5654 = vmatmul.mubr.bf16.gmra.mrb[0].mxu0 %v3169
        %v5655 = vpop.f32.mrb[0].mxu0
        %v5656 = vadd.f32 0.0, %v5655
        %v5657 = vpop.f32.mrb[0].mxu0
        %v5658 = vpop.f32.mrb[0].mxu0
        %v5659 = vadd.f32 0.0, %v5658
        %v5660 = vpop.f32.mrb[0].mxu0
        %5661 = vmatprep.mubr.bf16.mxu0 0
        %5662 = vmatmul.mubr.bf16.gmra.mrb[0].mxu0 %v3172
        %v5663 = vpop.f32.mrb[0].mxu0
        %v5664 = vadd.f32 0.0, %v5663
        %v5665 = vpop.f32.mrb[0].mxu0
        %v5666 = vpop.f32.mrb[0].mxu0
        %v5667 = vadd.f32 0.0, %v5666
        %v5668 = vpop.f32.mrb[0].mxu0
        %5669 = vmatprep.mubr.bf16.mxu0 0
        %5670 = vmatmul.mubr.bf16.gmra.mrb[0].mxu0 %v3175
        %v5671 = vpop.f32.mrb[0].mxu0
        %v5672 = vadd.f32 0.0, %v5671
        %v5673 = vpop.f32.mrb[0].mxu0
        %v5674 = vpop.f32.mrb[0].mxu0
        %v5675 = vadd.f32 0.0, %v5674
        %v5676 = vpop.f32.mrb[0].mxu0
        %5677 = vmatprep.mubr.bf16.mxu0 0
        %5678 = vmatmul.mubr.bf16.gmra.mrb[0].mxu0 %v3178
        %v5679 = vpop.f32.mrb[0].mxu0
        %v5680 = vadd.f32 0.0, %v5679
        %v5681 = vpop.f32.mrb[0].mxu0
        %v5682 = vpop.f32.mrb[0].mxu0
        %v5683 = vadd.f32 0.0, %v5682
        %v5684 = vpop.f32.mrb[0].mxu0
        %5685 = vmatprep.mubr.bf16.mxu0 0
        %5686 = vmatmul.mubr.bf16.gmra.mrb[0].mxu0 %v3181
        %v5687 = vpop.f32.mrb[0].mxu0
        %v5688 = vadd.f32 0.0, %v5687
        %v5689 = vpop.f32.mrb[0].mxu0
        %v5690 = vpop.f32.mrb[0].mxu0
        %v5691 = vadd.f32 0.0, %v5690
        %v5692 = vpop.f32.mrb[0].mxu0
        %5693 = vmatprep.mubr.bf16.mxu0 0
        %5694 = vmatmul.mubr.bf16.gmra.mrb[0].mxu0 %v3184
        %v5695 = vpop.f32.mrb[0].mxu0
        %v5696 = vadd.f32 0.0, %v5695
        %v5697 = vpop.f32.mrb[0].mxu0
        %v5698 = vpop.f32.mrb[0].mxu0
        %v5699 = vadd.f32 0.0, %v5698
        %v5700 = vpop.f32.mrb[0].mxu0
        %5701 = vmatprep.mubr.bf16.mxu0 0
        %5702 = vmatmul.mubr.bf16.gmra.mrb[0].mxu0 %v3187
        %v5703 = vpop.f32.mrb[0].mxu0
        %v5704 = vadd.f32 0.0, %v5703
        %v5705 = vpop.f32.mrb[0].mxu0
        %v5706 = vpop.f32.mrb[0].mxu0
        %v5707 = vadd.f32 0.0, %v5706
        %v5708 = vpop.f32.mrb[0].mxu0
        %5709 = vmatprep.mubr.bf16.mxu0 0
        %5710 = vmatmul.mubr.bf16.gmra.mrb[0].mxu0 %v3190
        %v5711 = vpop.f32.mrb[0].mxu0
        %v5712 = vadd.f32 0.0, %v5711
        %v5713 = vpop.f32.mrb[0].mxu0
        %v5714 = vpop.f32.mrb[0].mxu0
        %v5715 = vadd.f32 0.0, %v5714
        %v5716 = vpop.f32.mrb[0].mxu0
        %5717 = vmatprep.mubr.bf16.mxu0 0
        %5718 = vmatmul.mubr.bf16.gmra.mrb[0].mxu0 %v3193
        %v5719 = vpop.f32.mrb[0].mxu0
        %v5720 = vadd.f32 0.0, %v5719
        %v5721 = vpop.f32.mrb[0].mxu0
        %v5722 = vpop.f32.mrb[0].mxu0
        %v5723 = vadd.f32 0.0, %v5722
        %v5724 = vpop.f32.mrb[0].mxu0
        %5725 = vmatprep.mubr.bf16.mxu0 0
        %5726 = vmatmul.mubr.bf16.gmra.mrb[0].mxu0 %v3196
        %v5727 = vpop.f32.mrb[0].mxu0
        %v5728 = vadd.f32 0.0, %v5727
        %v5729 = vpop.f32.mrb[0].mxu0
        %v5730 = vpop.f32.mrb[0].mxu0
        %v5731 = vadd.f32 0.0, %v5730
        %v5732 = vpop.f32.mrb[0].mxu0
        %5733 = vmatprep.mubr.bf16.mxu0 0
        %5734 = vmatmul.mubr.bf16.gmra.mrb[0].mxu0 %v3199
        %v5735 = vpop.f32.mrb[0].mxu0
        %v5736 = vadd.f32 0.0, %v5735
        %v5737 = vpop.f32.mrb[0].mxu0
        %v5738 = vpop.f32.mrb[0].mxu0
        %v5739 = vadd.f32 0.0, %v5738
        %v5740 = vpop.f32.mrb[0].mxu0
        %5741 = vmatprep.mubr.bf16.mxu0 0
        %5742 = vmatmul.mubr.bf16.gmra.mrb[0].mxu0 %v3202
        %v5743 = vpop.f32.mrb[0].mxu0
        %v5744 = vadd.f32 0.0, %v5743
        %v5745 = vpop.f32.mrb[0].mxu0
        %v5746 = vpop.f32.mrb[0].mxu0
        %v5747 = vadd.f32 0.0, %v5746
        %v5748 = vpop.f32.mrb[0].mxu0
        %5749 = vmatprep.mubr.bf16.mxu0 0
        %5750 = vmatmul.mubr.bf16.gmra.mrb[0].mxu0 %v3205
        %v5751 = vpop.f32.mrb[0].mxu0
        %v5752 = vadd.f32 0.0, %v5751
        %v5753 = vpop.f32.mrb[0].mxu0
        %v5754 = vpop.f32.mrb[0].mxu0
        %v5755 = vadd.f32 0.0, %v5754
        %v5756 = vpop.f32.mrb[0].mxu0
        %5757 = vmatprep.mubr.bf16.mxu0 0
        %5758 = vmatmul.mubr.bf16.gmra.mrb[0].mxu0 %v3208
        %v5759 = vpop.f32.mrb[0].mxu0
        %v5760 = vadd.f32 0.0, %v5759
        %v5761 = vpop.f32.mrb[0].mxu0
        %v5762 = vpop.f32.mrb[0].mxu0
        %v5763 = vadd.f32 0.0, %v5762
        %v5764 = vpop.f32.mrb[0].mxu0
        %5765 = vmatprep.mubr.bf16.mxu0 0
        %5766 = vmatmul.mubr.bf16.gmra.mrb[0].mxu0 %v3211
        %v5767 = vpop.f32.mrb[0].mxu0
        %v5768 = vadd.f32 0.0, %v5767
        %v5769 = vpop.f32.mrb[0].mxu0
        %v5770 = vpop.f32.mrb[0].mxu0
        %v5771 = vadd.f32 0.0, %v5770
        %v5772 = vpop.f32.mrb[0].mxu0
        %5773 = vmatprep.mubr.bf16.mxu0 0
        %5774 = vmatmul.mubr.bf16.gmra.mrb[0].mxu0 %v3214
        %v5775 = vpop.f32.mrb[0].mxu0
        %v5776 = vadd.f32 0.0, %v5775
        %v5777 = vpop.f32.mrb[0].mxu0
        %v5778 = vpop.f32.mrb[0].mxu0
        %v5779 = vadd.f32 0.0, %v5778
        %v5780 = vpop.f32.mrb[0].mxu0
        %5781 = vmatprep.mubr.bf16.mxu0 0
        %5782 = vmatmul.mubr.bf16.gmra.mrb[0].mxu0 %v3217
        %v5783 = vpop.f32.mrb[0].mxu0
        %v5784 = vadd.f32 0.0, %v5783
        %v5785 = vpop.f32.mrb[0].mxu0
        %v5786 = vpop.f32.mrb[0].mxu0
        %v5787 = vadd.f32 0.0, %v5786
        %v5788 = vpop.f32.mrb[0].mxu0
        %5789 = vmatprep.mubr.bf16.mxu0 0
        %5790 = vmatmul.mubr.bf16.gmra.mrb[0].mxu0 %v3220
        %v5791 = vpop.f32.mrb[0].mxu0
        %v5792 = vadd.f32 0.0, %v5791
        %v5793 = vpop.f32.mrb[0].mxu0
        %v5794 = vpop.f32.mrb[0].mxu0
        %v5795 = vadd.f32 0.0, %v5794
        %v5796 = vpop.f32.mrb[0].mxu0
        %5797 = vmatprep.mubr.bf16.mxu0 0
        %5798 = vmatmul.mubr.bf16.gmra.mrb[0].mxu0 %v3223
        %v5799 = vpop.f32.mrb[0].mxu0
        %v5800 = vadd.f32 0.0, %v5799
        %v5801 = vpop.f32.mrb[0].mxu0
        %v5802 = vpop.f32.mrb[0].mxu0
        %v5803 = vadd.f32 0.0, %v5802
        %v5804 = vpop.f32.mrb[0].mxu0
        %5805 = vmatprep.mubr.bf16.mxu0 0
        %5806 = vmatmul.mubr.bf16.gmra.mrb[0].mxu0 %v3226
        %v5807 = vpop.f32.mrb[0].mxu0
        %v5808 = vadd.f32 0.0, %v5807
        %v5809 = vpop.f32.mrb[0].mxu0
        %v5810 = vpop.f32.mrb[0].mxu0
        %v5811 = vadd.f32 0.0, %v5810
        %v5812 = vpop.f32.mrb[0].mxu0
        %5813 = vmatprep.mubr.bf16.mxu0 0
        %5814 = vmatmul.mubr.bf16.gmra.mrb[0].mxu0 %v3229
        %v5815 = vpop.f32.mrb[0].mxu0
        %v5816 = vadd.f32 0.0, %v5815
        %v5817 = vpop.f32.mrb[0].mxu0
        %v5818 = vpop.f32.mrb[0].mxu0
        %v5819 = vadd.f32 0.0, %v5818
        %v5820 = vpop.f32.mrb[0].mxu0
        %5821 = vmatprep.mubr.bf16.mxu0 0
        %5822 = vmatmul.mubr.bf16.gmra.mrb[0].mxu0 %v3232
        %v5823 = vpop.f32.mrb[0].mxu0
        %v5824 = vadd.f32 0.0, %v5823
        %v5825 = vpop.f32.mrb[0].mxu0
        %v5826 = vpop.f32.mrb[0].mxu0
        %v5827 = vadd.f32 0.0, %v5826
        %v5828 = vpop.f32.mrb[0].mxu0
        %5829 = vmatprep.mubr.bf16.mxu0 0
        %5830 = vmatmul.mubr.bf16.gmra.mrb[0].mxu0 %v3235
        %v5831 = vpop.f32.mrb[0].mxu0
        %v5832 = vadd.f32 0.0, %v5831
        %v5833 = vpop.f32.mrb[0].mxu0
        %v5834 = vpop.f32.mrb[0].mxu0
        %v5835 = vadd.f32 0.0, %v5834
        %v5836 = vpop.f32.mrb[0].mxu0
        %5837 = vmatprep.mubr.bf16.mxu0 0
        %5838 = vmatmul.mubr.bf16.gmra.mrb[0].mxu0 %v3238
        %v5839 = vpop.f32.mrb[0].mxu0
        %v5840 = vadd.f32 0.0, %v5839
        %v5841 = vpop.f32.mrb[0].mxu0
        %v5842 = vpop.f32.mrb[0].mxu0
        %v5843 = vadd.f32 0.0, %v5842
        %v5844 = vpop.f32.mrb[0].mxu0
        %5845 = vmatprep.mubr.bf16.mxu0 0
        %5846 = vmatmul.mubr.bf16.gmra.mrb[0].mxu0 %v3241
        %v5847 = vpop.f32.mrb[0].mxu0
        %v5848 = vadd.f32 0.0, %v5847
        %v5849 = vpop.f32.mrb[0].mxu0
        %v5850 = vpop.f32.mrb[0].mxu0
        %v5851 = vadd.f32 0.0, %v5850
        %v5852 = vpop.f32.mrb[0].mxu0
        %5853 = vmatprep.mubr.bf16.mxu0 0
        %5854 = vmatmul.mubr.bf16.gmra.mrb[0].mxu0 %v5317
        %v5855 = vpop.f32.mrb[0].mxu0
        %v5856 = vadd.f32 0.0, %v5855
        %v5857 = vpop.f32.mrb[0].mxu0
        %v5858 = vpop.f32.mrb[0].mxu0
        %v5859 = vadd.f32 0.0, %v5858
        %v5860 = vpop.f32.mrb[0].mxu0
        %5861 = vmatprep.mubr.bf16.mxu0 0
        %5862 = vmatmul.mubr.bf16.gmra.mrb[0].mxu0 %v5320
        %v5863 = vpop.f32.mrb[0].mxu0
        %v5864 = vadd.f32 0.0, %v5863
        %v5865 = vpop.f32.mrb[0].mxu0
        %v5866 = vpop.f32.mrb[0].mxu0
        %v5867 = vadd.f32 0.0, %v5866
        %v5868 = vpop.f32.mrb[0].mxu0
        %5869 = vdwg.mxu0
        %v5870 = vadd.f32 %v5176, %v5360
        %v5871 = vadd.f32 %v5177, %v5363
        %v5872 = vadd.f32 %v5178, %v5368
        %v5873 = vadd.f32 %v5179, %v5371
        %v5874 = vadd.f32 %v5180, %v5376
        %v5875 = vadd.f32 %v5181, %v5379
        %v5876 = vadd.f32 %v5182, %v5384
        %v5877 = vadd.f32 %v5183, %v5387
        %v5878 = vadd.f32 %v5184, %v5392
        %v5879 = vadd.f32 %v5185, %v5395
        %v5880 = vadd.f32 %v5186, %v5400
        %v5881 = vadd.f32 %v5187, %v5403
        %v5882 = vadd.f32 %v5188, %v5408
        %v5883 = vadd.f32 %v5189, %v5411
        %v5884 = vadd.f32 %v5190, %v5416
        %v5885 = vadd.f32 %v5191, %v5419
        %v5886 = vadd.f32 %v5192, %v5424
        %v5887 = vadd.f32 %v5193, %v5427
        %v5888 = vadd.f32 %v5194, %v5432
        %v5889 = vadd.f32 %v5195, %v5435
        %v5890 = vadd.f32 %v5196, %v5440
        %v5891 = vadd.f32 %v5197, %v5443
        %v5892 = vadd.f32 %v5198, %v5448
        %v5893 = vadd.f32 %v5199, %v5451
        %v5894 = vadd.f32 %v5200, %v5456
        %v5895 = vadd.f32 %v5201, %v5459
        %v5896 = vadd.f32 %v5202, %v5464
        %v5897 = vadd.f32 %v5203, %v5467
        %v5898 = vadd.f32 %v5204, %v5472
        %v5899 = vadd.f32 %v5205, %v5475
        %v5900 = vadd.f32 %v5206, %v5480
        %v5901 = vadd.f32 %v5207, %v5483
        %v5902 = vadd.f32 %v5208, %v5488
        %v5903 = vadd.f32 %v5209, %v5491
        %v5904 = vadd.f32 %v5210, %v5496
        %v5905 = vadd.f32 %v5211, %v5499
        %v5906 = vadd.f32 %v5212, %v5504
        %v5907 = vadd.f32 %v5213, %v5507
        %v5908 = vadd.f32 %v5214, %v5512
        %v5909 = vadd.f32 %v5215, %v5515
        %v5910 = vadd.f32 %v5216, %v5520
        %v5911 = vadd.f32 %v5217, %v5523
        %v5912 = vadd.f32 %v5218, %v5528
        %v5913 = vadd.f32 %v5219, %v5531
        %v5914 = vadd.f32 %v5220, %v5536
        %v5915 = vadd.f32 %v5221, %v5539
        %v5916 = vadd.f32 %v5222, %v5544
        %v5917 = vadd.f32 %v5223, %v5547
        %v5918 = vadd.f32 %v5224, %v5552
        %v5919 = vadd.f32 %v5225, %v5555
        %v5920 = vadd.f32 %v5226, %v5560
        %v5921 = vadd.f32 %v5227, %v5563
        %v5922 = vadd.f32 %v5228, %v5568
        %v5923 = vadd.f32 %v5229, %v5571
        %v5924 = vadd.f32 %v5230, %v5576
        %v5925 = vadd.f32 %v5231, %v5579
        %v5926 = vadd.f32 %v5232, %v5584
        %v5927 = vadd.f32 %v5233, %v5587
        %v5928 = vadd.f32 %v5234, %v5592
        %v5929 = vadd.f32 %v5235, %v5595
        %v5930 = vadd.f32 %v5236, %v5600
        %v5931 = vadd.f32 %v5237, %v5603
        %v5932 = vadd.f32 %v5238, %v5608
        %v5933 = vadd.f32 %v5239, %v5611
        %v5934 = vadd.f32 %v5240, %v5616
        %v5935 = vadd.f32 %v5241, %v5619
        %v5936 = vadd.f32 %v5242, %v5624
        %v5937 = vadd.f32 %v5243, %v5627
        %v5938 = vadd.f32 %v5244, %v5632
        %v5939 = vadd.f32 %v5245, %v5635
        %v5940 = vadd.f32 %v5246, %v5640
        %v5941 = vadd.f32 %v5247, %v5643
        %v5942 = vadd.f32 %v5248, %v5648
        %v5943 = vadd.f32 %v5249, %v5651
        %v5944 = vadd.f32 %v5250, %v5656
        %v5945 = vadd.f32 %v5251, %v5659
        %v5946 = vadd.f32 %v5252, %v5664
        %v5947 = vadd.f32 %v5253, %v5667
        %v5948 = vadd.f32 %v5254, %v5672
        %v5949 = vadd.f32 %v5255, %v5675
        %v5950 = vadd.f32 %v5256, %v5680
        %v5951 = vadd.f32 %v5257, %v5683
        %v5952 = vadd.f32 %v5258, %v5688
        %v5953 = vadd.f32 %v5259, %v5691
        %v5954 = vadd.f32 %v5260, %v5696
        %v5955 = vadd.f32 %v5261, %v5699
        %v5956 = vadd.f32 %v5262, %v5704
        %v5957 = vadd.f32 %v5263, %v5707
        %v5958 = vadd.f32 %v5264, %v5712
        %v5959 = vadd.f32 %v5265, %v5715
        %v5960 = vadd.f32 %v5266, %v5720
        %v5961 = vadd.f32 %v5267, %v5723
        %v5962 = vadd.f32 %v5268, %v5728
        %v5963 = vadd.f32 %v5269, %v5731
        %v5964 = vadd.f32 %v5270, %v5736
        %v5965 = vadd.f32 %v5271, %v5739
        %v5966 = vadd.f32 %v5272, %v5744
        %v5967 = vadd.f32 %v5273, %v5747
        %v5968 = vadd.f32 %v5274, %v5752
        %v5969 = vadd.f32 %v5275, %v5755
        %v5970 = vadd.f32 %v5276, %v5760
        %v5971 = vadd.f32 %v5277, %v5763
        %v5972 = vadd.f32 %v5278, %v5768
        %v5973 = vadd.f32 %v5279, %v5771
        %v5974 = vadd.f32 %v5280, %v5776
        %v5975 = vadd.f32 %v5281, %v5779
        %v5976 = vadd.f32 %v5282, %v5784
        %v5977 = vadd.f32 %v5283, %v5787
        %v5978 = vadd.f32 %v5284, %v5792
        %v5979 = vadd.f32 %v5285, %v5795
        %v5980 = vadd.f32 %v5286, %v5800
        %v5981 = vadd.f32 %v5287, %v5803
        %v5982 = vadd.f32 %v5288, %v5808
        %v5983 = vadd.f32 %v5289, %v5811
        %v5984 = vadd.f32 %v5290, %v5816
        %v5985 = vadd.f32 %v5291, %v5819
        %v5986 = vadd.f32 %v5292, %v5824
        %v5987 = vadd.f32 %v5293, %v5827
        %v5988 = vadd.f32 %v5294, %v5832
        %v5989 = vadd.f32 %v5295, %v5835
        %v5990 = vadd.f32 %v5296, %v5840
        %v5991 = vadd.f32 %v5297, %v5843
        %v5992 = vadd.f32 %v5298, %v5848
        %v5993 = vadd.f32 %v5299, %v5851
        %v5994 = vadd.f32 %v5300, %v5856
        %v5995 = vadd.f32 %v5301, %v5859
        %v5996 = vadd.f32 %v5302, %v5864
        %v5997 = vadd.f32 %v5303, %v5867
        %v5999 = vshrl.u32 %v370, 16
        %v6001 = vrot.slane %v5999, 4
        %v6002 = vshll.u32 %v370, 16
        %v6004 = vrot.slane %v6002, 5
        %v6005 = vor.u32 %v6001, %v6004
        %v6006 = vrot.slane %v6005, 4
        %v6008 = vshll.u32 %v371, 16
        %v6010 = vrot.slane %v6008, 5
        %v6011 = vsel %vm383, %v6006, %v6010
        %v6012 = vshrl.u32 %v371, 16
        %v6014 = vrot.slane %v6012, 4
        %v6015 = vor.u32 %v6014, %v6010
        %v6016 = vrot.slane %v6015, 4
        %v6018 = vshll.u32 %v372, 16
        %v6020 = vrot.slane %v6018, 5
        %v6021 = vsel %vm383, %v6016, %v6020
        %v6022 = vshrl.u32 %v372, 16
        %v6024 = vrot.slane %v6022, 4
        %v6025 = vor.u32 %v6024, %v6020
        %v6026 = vrot.slane %v6025, 4
        %v6028 = vshll.u32 %v373, 16
        %v6030 = vrot.slane %v6028, 5
        %v6031 = vsel %vm383, %v6026, %v6030
        %v6032 = vshrl.u32 %v373, 16
        %v6034 = vrot.slane %v6032, 4
        %v6035 = vor.u32 %v6034, %v6030
        %v6036 = vrot.slane %v6035, 4
        %v6038 = vshll.u32 %v374, 16
        %v6040 = vrot.slane %v6038, 5
        %v6041 = vsel %vm383, %v6036, %v6040
        %s6042 = scalar_lea.vmem %s208, 8
        %v6043 = vld [vmem:[%s6042] sm:$0x3]
        %v6044 = vunpack.c.l.b16 %v6011
        %v6045 = vunpack.c.l.b16 %v6021
        %v6046 = vunpack.c.l.b16 %v6031
        %v6047 = vunpack.c.l.b16 %v6041
        %v6048 = vpack.c.b16 %v6045, %v6044
        %v6049 = vpack.c.b16 %v6047, %v6046
        %v6051 = vsel %vm1986, %v6048, 0
        %v6054 = vsel %vm1986, %v6049, 0
        %v6057 = vand.u32 %v6043, %v2182
        %6059 = vmatprep.subr.bf16.mxu0 0
        %6060 = vmatpush1.bf16.msra.mxu0 %v6057
        %6061 = vmatprep.subr.bf16.mxu0 0
        %6062 = vmatpush1.bf16.msra.mxu0 0
        %6063 = vmatprep.subr.bf16.mxu0 0
        %6064 = vmatpush1.bf16.msra.mxu0 0
        %6065 = vmatprep.subr.bf16.mxu0 0
        %6066 = vmatpush1.bf16.msra.mxu0 0
        %6067 = vmatprep.subr.bf16.mxu0 0
        %6068 = vmatpush1.bf16.msra.mxu0 0
        %6069 = vmatprep.subr.bf16.mxu0 0
        %6070 = vmatpush1.bf16.msra.mxu0 0
        %6071 = vmatprep.subr.bf16.mxu0 0
        %6072 = vmatpush1.bf16.msra.mxu0 0
        %6073 = vmatprep.subr.bf16.mxu0 0
        %6074 = vmatpush1.bf16.msra.mxu0 0
        %6075 = vmatprep.subr.bf16.mxu0 0
        %6076 = vmatpush1.bf16.msra.mxu0 0
        %6077 = vmatprep.subr.bf16.mxu0 0
        %6078 = vmatpush1.bf16.msra.mxu0 0
        %6079 = vmatprep.subr.bf16.mxu0 0
        %6080 = vmatpush1.bf16.msra.mxu0 0
        %6081 = vmatprep.subr.bf16.mxu0 0
        %6082 = vmatpush1.bf16.msra.mxu0 0
        %6083 = vmatprep.subr.bf16.mxu0 0
        %6084 = vmatpush1.bf16.msra.mxu0 0
        %6085 = vmatprep.subr.bf16.mxu0 0
        %6086 = vmatpush1.bf16.msra.mxu0 0
        %6087 = vmatprep.subr.bf16.mxu0 0
        %6088 = vmatpush1.bf16.msra.mxu0 0
        %6089 = vmatprep.subr.bf16.mxu0 0
        %6090 = vmatpush1.bf16.msra.mxu0 0
        %6091 = vmatprep.mubr.bf16.mxu0 0
        %6092 = vmatmul.mubr.bf16.gmra.mrb[0].mxu0 %v1994
        %v6093 = vpop.f32.mrb[0].mxu0
        %v6094 = vadd.f32 0.0, %v6093
        %v6095 = vpop.f32.mrb[0].mxu0
        %v6096 = vpop.f32.mrb[0].mxu0
        %v6097 = vadd.f32 0.0, %v6096
        %v6098 = vpop.f32.mrb[0].mxu0
        %6099 = vmatprep.mubr.bf16.mxu0 0
        %6100 = vmatmul.mubr.bf16.gmra.mrb[0].mxu0 %v1997
        %v6101 = vpop.f32.mrb[0].mxu0
        %v6102 = vadd.f32 0.0, %v6101
        %v6103 = vpop.f32.mrb[0].mxu0
        %v6104 = vpop.f32.mrb[0].mxu0
        %v6105 = vadd.f32 0.0, %v6104
        %v6106 = vpop.f32.mrb[0].mxu0
        %6107 = vmatprep.mubr.bf16.mxu0 0
        %6108 = vmatmul.mubr.bf16.gmra.mrb[0].mxu0 %v2000
        %v6109 = vpop.f32.mrb[0].mxu0
        %v6110 = vadd.f32 0.0, %v6109
        %v6111 = vpop.f32.mrb[0].mxu0
        %v6112 = vpop.f32.mrb[0].mxu0
        %v6113 = vadd.f32 0.0, %v6112
        %v6114 = vpop.f32.mrb[0].mxu0
        %6115 = vmatprep.mubr.bf16.mxu0 0
        %6116 = vmatmul.mubr.bf16.gmra.mrb[0].mxu0 %v2003
        %v6117 = vpop.f32.mrb[0].mxu0
        %v6118 = vadd.f32 0.0, %v6117
        %v6119 = vpop.f32.mrb[0].mxu0
        %v6120 = vpop.f32.mrb[0].mxu0
        %v6121 = vadd.f32 0.0, %v6120
        %v6122 = vpop.f32.mrb[0].mxu0
        %6123 = vmatprep.mubr.bf16.mxu0 0
        %6124 = vmatmul.mubr.bf16.gmra.mrb[0].mxu0 %v2006
        %v6125 = vpop.f32.mrb[0].mxu0
        %v6126 = vadd.f32 0.0, %v6125
        %v6127 = vpop.f32.mrb[0].mxu0
        %v6128 = vpop.f32.mrb[0].mxu0
        %v6129 = vadd.f32 0.0, %v6128
        %v6130 = vpop.f32.mrb[0].mxu0
        %6131 = vmatprep.mubr.bf16.mxu0 0
        %6132 = vmatmul.mubr.bf16.gmra.mrb[0].mxu0 %v2009
        %v6133 = vpop.f32.mrb[0].mxu0
        %v6134 = vadd.f32 0.0, %v6133
        %v6135 = vpop.f32.mrb[0].mxu0
        %v6136 = vpop.f32.mrb[0].mxu0
        %v6137 = vadd.f32 0.0, %v6136
        %v6138 = vpop.f32.mrb[0].mxu0
        %6139 = vmatprep.mubr.bf16.mxu0 0
        %6140 = vmatmul.mubr.bf16.gmra.mrb[0].mxu0 %v2012
        %v6141 = vpop.f32.mrb[0].mxu0
        %v6142 = vadd.f32 0.0, %v6141
        %v6143 = vpop.f32.mrb[0].mxu0
        %v6144 = vpop.f32.mrb[0].mxu0
        %v6145 = vadd.f32 0.0, %v6144
        %v6146 = vpop.f32.mrb[0].mxu0
        %6147 = vmatprep.mubr.bf16.mxu0 0
        %6148 = vmatmul.mubr.bf16.gmra.mrb[0].mxu0 %v2015
        %v6149 = vpop.f32.mrb[0].mxu0
        %v6150 = vadd.f32 0.0, %v6149
        %v6151 = vpop.f32.mrb[0].mxu0
        %v6152 = vpop.f32.mrb[0].mxu0
        %v6153 = vadd.f32 0.0, %v6152
        %v6154 = vpop.f32.mrb[0].mxu0
        %6155 = vmatprep.mubr.bf16.mxu0 0
        %6156 = vmatmul.mubr.bf16.gmra.mrb[0].mxu0 %v2018
        %v6157 = vpop.f32.mrb[0].mxu0
        %v6158 = vadd.f32 0.0, %v6157
        %v6159 = vpop.f32.mrb[0].mxu0
        %v6160 = vpop.f32.mrb[0].mxu0
        %v6161 = vadd.f32 0.0, %v6160
        %v6162 = vpop.f32.mrb[0].mxu0
        %6163 = vmatprep.mubr.bf16.mxu0 0
        %6164 = vmatmul.mubr.bf16.gmra.mrb[0].mxu0 %v2021
        %v6165 = vpop.f32.mrb[0].mxu0
        %v6166 = vadd.f32 0.0, %v6165
        %v6167 = vpop.f32.mrb[0].mxu0
        %v6168 = vpop.f32.mrb[0].mxu0
        %v6169 = vadd.f32 0.0, %v6168
        %v6170 = vpop.f32.mrb[0].mxu0
        %6171 = vmatprep.mubr.bf16.mxu0 0
        %6172 = vmatmul.mubr.bf16.gmra.mrb[0].mxu0 %v2024
        %v6173 = vpop.f32.mrb[0].mxu0
        %v6174 = vadd.f32 0.0, %v6173
        %v6175 = vpop.f32.mrb[0].mxu0
        %v6176 = vpop.f32.mrb[0].mxu0
        %v6177 = vadd.f32 0.0, %v6176
        %v6178 = vpop.f32.mrb[0].mxu0
        %6179 = vmatprep.mubr.bf16.mxu0 0
        %6180 = vmatmul.mubr.bf16.gmra.mrb[0].mxu0 %v2027
        %v6181 = vpop.f32.mrb[0].mxu0
        %v6182 = vadd.f32 0.0, %v6181
        %v6183 = vpop.f32.mrb[0].mxu0
        %v6184 = vpop.f32.mrb[0].mxu0
        %v6185 = vadd.f32 0.0, %v6184
        %v6186 = vpop.f32.mrb[0].mxu0
        %6187 = vmatprep.mubr.bf16.mxu0 0
        %6188 = vmatmul.mubr.bf16.gmra.mrb[0].mxu0 %v2030
        %v6189 = vpop.f32.mrb[0].mxu0
        %v6190 = vadd.f32 0.0, %v6189
        %v6191 = vpop.f32.mrb[0].mxu0
        %v6192 = vpop.f32.mrb[0].mxu0
        %v6193 = vadd.f32 0.0, %v6192
        %v6194 = vpop.f32.mrb[0].mxu0
        %6195 = vmatprep.mubr.bf16.mxu0 0
        %6196 = vmatmul.mubr.bf16.gmra.mrb[0].mxu0 %v2033
        %v6197 = vpop.f32.mrb[0].mxu0
        %v6198 = vadd.f32 0.0, %v6197
        %v6199 = vpop.f32.mrb[0].mxu0
        %v6200 = vpop.f32.mrb[0].mxu0
        %v6201 = vadd.f32 0.0, %v6200
        %v6202 = vpop.f32.mrb[0].mxu0
        %6203 = vmatprep.mubr.bf16.mxu0 0
        %6204 = vmatmul.mubr.bf16.gmra.mrb[0].mxu0 %v2036
        %v6205 = vpop.f32.mrb[0].mxu0
        %v6206 = vadd.f32 0.0, %v6205
        %v6207 = vpop.f32.mrb[0].mxu0
        %v6208 = vpop.f32.mrb[0].mxu0
        %v6209 = vadd.f32 0.0, %v6208
        %v6210 = vpop.f32.mrb[0].mxu0
        %6211 = vmatprep.mubr.bf16.mxu0 0
        %6212 = vmatmul.mubr.bf16.gmra.mrb[0].mxu0 %v2039
        %v6213 = vpop.f32.mrb[0].mxu0
        %v6214 = vadd.f32 0.0, %v6213
        %v6215 = vpop.f32.mrb[0].mxu0
        %v6216 = vpop.f32.mrb[0].mxu0
        %v6217 = vadd.f32 0.0, %v6216
        %v6218 = vpop.f32.mrb[0].mxu0
        %6219 = vmatprep.mubr.bf16.mxu0 0
        %6220 = vmatmul.mubr.bf16.gmra.mrb[0].mxu0 %v2042
        %v6221 = vpop.f32.mrb[0].mxu0
        %v6222 = vadd.f32 0.0, %v6221
        %v6223 = vpop.f32.mrb[0].mxu0
        %v6224 = vpop.f32.mrb[0].mxu0
        %v6225 = vadd.f32 0.0, %v6224
        %v6226 = vpop.f32.mrb[0].mxu0
        %6227 = vmatprep.mubr.bf16.mxu0 0
        %6228 = vmatmul.mubr.bf16.gmra.mrb[0].mxu0 %v2045
        %v6229 = vpop.f32.mrb[0].mxu0
        %v6230 = vadd.f32 0.0, %v6229
        %v6231 = vpop.f32.mrb[0].mxu0
        %v6232 = vpop.f32.mrb[0].mxu0
        %v6233 = vadd.f32 0.0, %v6232
        %v6234 = vpop.f32.mrb[0].mxu0
        %6235 = vmatprep.mubr.bf16.mxu0 0
        %6236 = vmatmul.mubr.bf16.gmra.mrb[0].mxu0 %v2048
        %v6237 = vpop.f32.mrb[0].mxu0
        %v6238 = vadd.f32 0.0, %v6237
        %v6239 = vpop.f32.mrb[0].mxu0
        %v6240 = vpop.f32.mrb[0].mxu0
        %v6241 = vadd.f32 0.0, %v6240
        %v6242 = vpop.f32.mrb[0].mxu0
        %6243 = vmatprep.mubr.bf16.mxu0 0
        %6244 = vmatmul.mubr.bf16.gmra.mrb[0].mxu0 %v2051
        %v6245 = vpop.f32.mrb[0].mxu0
        %v6246 = vadd.f32 0.0, %v6245
        %v6247 = vpop.f32.mrb[0].mxu0
        %v6248 = vpop.f32.mrb[0].mxu0
        %v6249 = vadd.f32 0.0, %v6248
        %v6250 = vpop.f32.mrb[0].mxu0
        %6251 = vmatprep.mubr.bf16.mxu0 0
        %6252 = vmatmul.mubr.bf16.gmra.mrb[0].mxu0 %v2054
        %v6253 = vpop.f32.mrb[0].mxu0
        %v6254 = vadd.f32 0.0, %v6253
        %v6255 = vpop.f32.mrb[0].mxu0
        %v6256 = vpop.f32.mrb[0].mxu0
        %v6257 = vadd.f32 0.0, %v6256
        %v6258 = vpop.f32.mrb[0].mxu0
        %6259 = vmatprep.mubr.bf16.mxu0 0
        %6260 = vmatmul.mubr.bf16.gmra.mrb[0].mxu0 %v2057
        %v6261 = vpop.f32.mrb[0].mxu0
        %v6262 = vadd.f32 0.0, %v6261
        %v6263 = vpop.f32.mrb[0].mxu0
        %v6264 = vpop.f32.mrb[0].mxu0
        %v6265 = vadd.f32 0.0, %v6264
        %v6266 = vpop.f32.mrb[0].mxu0
        %6267 = vmatprep.mubr.bf16.mxu0 0
        %6268 = vmatmul.mubr.bf16.gmra.mrb[0].mxu0 %v2060
        %v6269 = vpop.f32.mrb[0].mxu0
        %v6270 = vadd.f32 0.0, %v6269
        %v6271 = vpop.f32.mrb[0].mxu0
        %v6272 = vpop.f32.mrb[0].mxu0
        %v6273 = vadd.f32 0.0, %v6272
        %v6274 = vpop.f32.mrb[0].mxu0
        %6275 = vmatprep.mubr.bf16.mxu0 0
        %6276 = vmatmul.mubr.bf16.gmra.mrb[0].mxu0 %v2063
        %v6277 = vpop.f32.mrb[0].mxu0
        %v6278 = vadd.f32 0.0, %v6277
        %v6279 = vpop.f32.mrb[0].mxu0
        %v6280 = vpop.f32.mrb[0].mxu0
        %v6281 = vadd.f32 0.0, %v6280
        %v6282 = vpop.f32.mrb[0].mxu0
        %6283 = vmatprep.mubr.bf16.mxu0 0
        %6284 = vmatmul.mubr.bf16.gmra.mrb[0].mxu0 %v2066
        %v6285 = vpop.f32.mrb[0].mxu0
        %v6286 = vadd.f32 0.0, %v6285
        %v6287 = vpop.f32.mrb[0].mxu0
        %v6288 = vpop.f32.mrb[0].mxu0
        %v6289 = vadd.f32 0.0, %v6288
        %v6290 = vpop.f32.mrb[0].mxu0
        %6291 = vmatprep.mubr.bf16.mxu0 0
        %6292 = vmatmul.mubr.bf16.gmra.mrb[0].mxu0 %v2069
        %v6293 = vpop.f32.mrb[0].mxu0
        %v6294 = vadd.f32 0.0, %v6293
        %v6295 = vpop.f32.mrb[0].mxu0
        %v6296 = vpop.f32.mrb[0].mxu0
        %v6297 = vadd.f32 0.0, %v6296
        %v6298 = vpop.f32.mrb[0].mxu0
        %6299 = vmatprep.mubr.bf16.mxu0 0
        %6300 = vmatmul.mubr.bf16.gmra.mrb[0].mxu0 %v2072
        %v6301 = vpop.f32.mrb[0].mxu0
        %v6302 = vadd.f32 0.0, %v6301
        %v6303 = vpop.f32.mrb[0].mxu0
        %v6304 = vpop.f32.mrb[0].mxu0
        %v6305 = vadd.f32 0.0, %v6304
        %v6306 = vpop.f32.mrb[0].mxu0
        %6307 = vmatprep.mubr.bf16.mxu0 0
        %6308 = vmatmul.mubr.bf16.gmra.mrb[0].mxu0 %v2075
        %v6309 = vpop.f32.mrb[0].mxu0
        %v6310 = vadd.f32 0.0, %v6309
        %v6311 = vpop.f32.mrb[0].mxu0
        %v6312 = vpop.f32.mrb[0].mxu0
        %v6313 = vadd.f32 0.0, %v6312
        %v6314 = vpop.f32.mrb[0].mxu0
        %6315 = vmatprep.mubr.bf16.mxu0 0
        %6316 = vmatmul.mubr.bf16.gmra.mrb[0].mxu0 %v2078
        %v6317 = vpop.f32.mrb[0].mxu0
        %v6318 = vadd.f32 0.0, %v6317
        %v6319 = vpop.f32.mrb[0].mxu0
        %v6320 = vpop.f32.mrb[0].mxu0
        %v6321 = vadd.f32 0.0, %v6320
        %v6322 = vpop.f32.mrb[0].mxu0
        %6323 = vmatprep.mubr.bf16.mxu0 0
        %6324 = vmatmul.mubr.bf16.gmra.mrb[0].mxu0 %v2081
        %v6325 = vpop.f32.mrb[0].mxu0
        %v6326 = vadd.f32 0.0, %v6325
        %v6327 = vpop.f32.mrb[0].mxu0
        %v6328 = vpop.f32.mrb[0].mxu0
        %v6329 = vadd.f32 0.0, %v6328
        %v6330 = vpop.f32.mrb[0].mxu0
        %6331 = vmatprep.mubr.bf16.mxu0 0
        %6332 = vmatmul.mubr.bf16.gmra.mrb[0].mxu0 %v2084
        %v6333 = vpop.f32.mrb[0].mxu0
        %v6334 = vadd.f32 0.0, %v6333
        %v6335 = vpop.f32.mrb[0].mxu0
        %v6336 = vpop.f32.mrb[0].mxu0
        %v6337 = vadd.f32 0.0, %v6336
        %v6338 = vpop.f32.mrb[0].mxu0
        %6339 = vmatprep.mubr.bf16.mxu0 0
        %6340 = vmatmul.mubr.bf16.gmra.mrb[0].mxu0 %v2087
        %v6341 = vpop.f32.mrb[0].mxu0
        %v6342 = vadd.f32 0.0, %v6341
        %v6343 = vpop.f32.mrb[0].mxu0
        %v6344 = vpop.f32.mrb[0].mxu0
        %v6345 = vadd.f32 0.0, %v6344
        %v6346 = vpop.f32.mrb[0].mxu0
        %6347 = vmatprep.mubr.bf16.mxu0 0
        %6348 = vmatmul.mubr.bf16.gmra.mrb[0].mxu0 %v2090
        %v6349 = vpop.f32.mrb[0].mxu0
        %v6350 = vadd.f32 0.0, %v6349
        %v6351 = vpop.f32.mrb[0].mxu0
        %v6352 = vpop.f32.mrb[0].mxu0
        %v6353 = vadd.f32 0.0, %v6352
        %v6354 = vpop.f32.mrb[0].mxu0
        %6355 = vmatprep.mubr.bf16.mxu0 0
        %6356 = vmatmul.mubr.bf16.gmra.mrb[0].mxu0 %v2093
        %v6357 = vpop.f32.mrb[0].mxu0
        %v6358 = vadd.f32 0.0, %v6357
        %v6359 = vpop.f32.mrb[0].mxu0
        %v6360 = vpop.f32.mrb[0].mxu0
        %v6361 = vadd.f32 0.0, %v6360
        %v6362 = vpop.f32.mrb[0].mxu0
        %6363 = vmatprep.mubr.bf16.mxu0 0
        %6364 = vmatmul.mubr.bf16.gmra.mrb[0].mxu0 %v2096
        %v6365 = vpop.f32.mrb[0].mxu0
        %v6366 = vadd.f32 0.0, %v6365
        %v6367 = vpop.f32.mrb[0].mxu0
        %v6368 = vpop.f32.mrb[0].mxu0
        %v6369 = vadd.f32 0.0, %v6368
        %v6370 = vpop.f32.mrb[0].mxu0
        %6371 = vmatprep.mubr.bf16.mxu0 0
        %6372 = vmatmul.mubr.bf16.gmra.mrb[0].mxu0 %v2099
        %v6373 = vpop.f32.mrb[0].mxu0
        %v6374 = vadd.f32 0.0, %v6373
        %v6375 = vpop.f32.mrb[0].mxu0
        %v6376 = vpop.f32.mrb[0].mxu0
        %v6377 = vadd.f32 0.0, %v6376
        %v6378 = vpop.f32.mrb[0].mxu0
        %6379 = vmatprep.mubr.bf16.mxu0 0
        %6380 = vmatmul.mubr.bf16.gmra.mrb[0].mxu0 %v2102
        %v6381 = vpop.f32.mrb[0].mxu0
        %v6382 = vadd.f32 0.0, %v6381
        %v6383 = vpop.f32.mrb[0].mxu0
        %v6384 = vpop.f32.mrb[0].mxu0
        %v6385 = vadd.f32 0.0, %v6384
        %v6386 = vpop.f32.mrb[0].mxu0
        %6387 = vmatprep.mubr.bf16.mxu0 0
        %6388 = vmatmul.mubr.bf16.gmra.mrb[0].mxu0 %v2105
        %v6389 = vpop.f32.mrb[0].mxu0
        %v6390 = vadd.f32 0.0, %v6389
        %v6391 = vpop.f32.mrb[0].mxu0
        %v6392 = vpop.f32.mrb[0].mxu0
        %v6393 = vadd.f32 0.0, %v6392
        %v6394 = vpop.f32.mrb[0].mxu0
        %6395 = vmatprep.mubr.bf16.mxu0 0
        %6396 = vmatmul.mubr.bf16.gmra.mrb[0].mxu0 %v2108
        %v6397 = vpop.f32.mrb[0].mxu0
        %v6398 = vadd.f32 0.0, %v6397
        %v6399 = vpop.f32.mrb[0].mxu0
        %v6400 = vpop.f32.mrb[0].mxu0
        %v6401 = vadd.f32 0.0, %v6400
        %v6402 = vpop.f32.mrb[0].mxu0
        %6403 = vmatprep.mubr.bf16.mxu0 0
        %6404 = vmatmul.mubr.bf16.gmra.mrb[0].mxu0 %v2111
        %v6405 = vpop.f32.mrb[0].mxu0
        %v6406 = vadd.f32 0.0, %v6405
        %v6407 = vpop.f32.mrb[0].mxu0
        %v6408 = vpop.f32.mrb[0].mxu0
        %v6409 = vadd.f32 0.0, %v6408
        %v6410 = vpop.f32.mrb[0].mxu0
        %6411 = vmatprep.mubr.bf16.mxu0 0
        %6412 = vmatmul.mubr.bf16.gmra.mrb[0].mxu0 %v2114
        %v6413 = vpop.f32.mrb[0].mxu0
        %v6414 = vadd.f32 0.0, %v6413
        %v6415 = vpop.f32.mrb[0].mxu0
        %v6416 = vpop.f32.mrb[0].mxu0
        %v6417 = vadd.f32 0.0, %v6416
        %v6418 = vpop.f32.mrb[0].mxu0
        %6419 = vmatprep.mubr.bf16.mxu0 0
        %6420 = vmatmul.mubr.bf16.gmra.mrb[0].mxu0 %v2117
        %v6421 = vpop.f32.mrb[0].mxu0
        %v6422 = vadd.f32 0.0, %v6421
        %v6423 = vpop.f32.mrb[0].mxu0
        %v6424 = vpop.f32.mrb[0].mxu0
        %v6425 = vadd.f32 0.0, %v6424
        %v6426 = vpop.f32.mrb[0].mxu0
        %6427 = vmatprep.mubr.bf16.mxu0 0
        %6428 = vmatmul.mubr.bf16.gmra.mrb[0].mxu0 %v2120
        %v6429 = vpop.f32.mrb[0].mxu0
        %v6430 = vadd.f32 0.0, %v6429
        %v6431 = vpop.f32.mrb[0].mxu0
        %v6432 = vpop.f32.mrb[0].mxu0
        %v6433 = vadd.f32 0.0, %v6432
        %v6434 = vpop.f32.mrb[0].mxu0
        %6435 = vmatprep.mubr.bf16.mxu0 0
        %6436 = vmatmul.mubr.bf16.gmra.mrb[0].mxu0 %v2123
        %v6437 = vpop.f32.mrb[0].mxu0
        %v6438 = vadd.f32 0.0, %v6437
        %v6439 = vpop.f32.mrb[0].mxu0
        %v6440 = vpop.f32.mrb[0].mxu0
        %v6441 = vadd.f32 0.0, %v6440
        %v6442 = vpop.f32.mrb[0].mxu0
        %6443 = vmatprep.mubr.bf16.mxu0 0
        %6444 = vmatmul.mubr.bf16.gmra.mrb[0].mxu0 %v2126
        %v6445 = vpop.f32.mrb[0].mxu0
        %v6446 = vadd.f32 0.0, %v6445
        %v6447 = vpop.f32.mrb[0].mxu0
        %v6448 = vpop.f32.mrb[0].mxu0
        %v6449 = vadd.f32 0.0, %v6448
        %v6450 = vpop.f32.mrb[0].mxu0
        %6451 = vmatprep.mubr.bf16.mxu0 0
        %6452 = vmatmul.mubr.bf16.gmra.mrb[0].mxu0 %v2129
        %v6453 = vpop.f32.mrb[0].mxu0
        %v6454 = vadd.f32 0.0, %v6453
        %v6455 = vpop.f32.mrb[0].mxu0
        %v6456 = vpop.f32.mrb[0].mxu0
        %v6457 = vadd.f32 0.0, %v6456
        %v6458 = vpop.f32.mrb[0].mxu0
        %6459 = vmatprep.mubr.bf16.mxu0 0
        %6460 = vmatmul.mubr.bf16.gmra.mrb[0].mxu0 %v2132
        %v6461 = vpop.f32.mrb[0].mxu0
        %v6462 = vadd.f32 0.0, %v6461
        %v6463 = vpop.f32.mrb[0].mxu0
        %v6464 = vpop.f32.mrb[0].mxu0
        %v6465 = vadd.f32 0.0, %v6464
        %v6466 = vpop.f32.mrb[0].mxu0
        %6467 = vmatprep.mubr.bf16.mxu0 0
        %6468 = vmatmul.mubr.bf16.gmra.mrb[0].mxu0 %v2135
        %v6469 = vpop.f32.mrb[0].mxu0
        %v6470 = vadd.f32 0.0, %v6469
        %v6471 = vpop.f32.mrb[0].mxu0
        %v6472 = vpop.f32.mrb[0].mxu0
        %v6473 = vadd.f32 0.0, %v6472
        %v6474 = vpop.f32.mrb[0].mxu0
        %6475 = vmatprep.mubr.bf16.mxu0 0
        %6476 = vmatmul.mubr.bf16.gmra.mrb[0].mxu0 %v2138
        %v6477 = vpop.f32.mrb[0].mxu0
        %v6478 = vadd.f32 0.0, %v6477
        %v6479 = vpop.f32.mrb[0].mxu0
        %v6480 = vpop.f32.mrb[0].mxu0
        %v6481 = vadd.f32 0.0, %v6480
        %v6482 = vpop.f32.mrb[0].mxu0
        %6483 = vmatprep.mubr.bf16.mxu0 0
        %6484 = vmatmul.mubr.bf16.gmra.mrb[0].mxu0 %v2141
        %v6485 = vpop.f32.mrb[0].mxu0
        %v6486 = vadd.f32 0.0, %v6485
        %v6487 = vpop.f32.mrb[0].mxu0
        %v6488 = vpop.f32.mrb[0].mxu0
        %v6489 = vadd.f32 0.0, %v6488
        %v6490 = vpop.f32.mrb[0].mxu0
        %6491 = vmatprep.mubr.bf16.mxu0 0
        %6492 = vmatmul.mubr.bf16.gmra.mrb[0].mxu0 %v2144
        %v6493 = vpop.f32.mrb[0].mxu0
        %v6494 = vadd.f32 0.0, %v6493
        %v6495 = vpop.f32.mrb[0].mxu0
        %v6496 = vpop.f32.mrb[0].mxu0
        %v6497 = vadd.f32 0.0, %v6496
        %v6498 = vpop.f32.mrb[0].mxu0
        %6499 = vmatprep.mubr.bf16.mxu0 0
        %6500 = vmatmul.mubr.bf16.gmra.mrb[0].mxu0 %v2147
        %v6501 = vpop.f32.mrb[0].mxu0
        %v6502 = vadd.f32 0.0, %v6501
        %v6503 = vpop.f32.mrb[0].mxu0
        %v6504 = vpop.f32.mrb[0].mxu0
        %v6505 = vadd.f32 0.0, %v6504
        %v6506 = vpop.f32.mrb[0].mxu0
        %6507 = vmatprep.mubr.bf16.mxu0 0
        %6508 = vmatmul.mubr.bf16.gmra.mrb[0].mxu0 %v2150
        %v6509 = vpop.f32.mrb[0].mxu0
        %v6510 = vadd.f32 0.0, %v6509
        %v6511 = vpop.f32.mrb[0].mxu0
        %v6512 = vpop.f32.mrb[0].mxu0
        %v6513 = vadd.f32 0.0, %v6512
        %v6514 = vpop.f32.mrb[0].mxu0
        %6515 = vmatprep.mubr.bf16.mxu0 0
        %6516 = vmatmul.mubr.bf16.gmra.mrb[0].mxu0 %v2153
        %v6517 = vpop.f32.mrb[0].mxu0
        %v6518 = vadd.f32 0.0, %v6517
        %v6519 = vpop.f32.mrb[0].mxu0
        %v6520 = vpop.f32.mrb[0].mxu0
        %v6521 = vadd.f32 0.0, %v6520
        %v6522 = vpop.f32.mrb[0].mxu0
        %6523 = vmatprep.mubr.bf16.mxu0 0
        %6524 = vmatmul.mubr.bf16.gmra.mrb[0].mxu0 %v2156
        %v6525 = vpop.f32.mrb[0].mxu0
        %v6526 = vadd.f32 0.0, %v6525
        %v6527 = vpop.f32.mrb[0].mxu0
        %v6528 = vpop.f32.mrb[0].mxu0
        %v6529 = vadd.f32 0.0, %v6528
        %v6530 = vpop.f32.mrb[0].mxu0
        %6531 = vmatprep.mubr.bf16.mxu0 0
        %6532 = vmatmul.mubr.bf16.gmra.mrb[0].mxu0 %v2159
        %v6533 = vpop.f32.mrb[0].mxu0
        %v6534 = vadd.f32 0.0, %v6533
        %v6535 = vpop.f32.mrb[0].mxu0
        %v6536 = vpop.f32.mrb[0].mxu0
        %v6537 = vadd.f32 0.0, %v6536
        %v6538 = vpop.f32.mrb[0].mxu0
        %6539 = vmatprep.mubr.bf16.mxu0 0
        %6540 = vmatmul.mubr.bf16.gmra.mrb[0].mxu0 %v2162
        %v6541 = vpop.f32.mrb[0].mxu0
        %v6542 = vadd.f32 0.0, %v6541
        %v6543 = vpop.f32.mrb[0].mxu0
        %v6544 = vpop.f32.mrb[0].mxu0
        %v6545 = vadd.f32 0.0, %v6544
        %v6546 = vpop.f32.mrb[0].mxu0
        %6547 = vmatprep.mubr.bf16.mxu0 0
        %6548 = vmatmul.mubr.bf16.gmra.mrb[0].mxu0 %v2165
        %v6549 = vpop.f32.mrb[0].mxu0
        %v6550 = vadd.f32 0.0, %v6549
        %v6551 = vpop.f32.mrb[0].mxu0
        %v6552 = vpop.f32.mrb[0].mxu0
        %v6553 = vadd.f32 0.0, %v6552
        %v6554 = vpop.f32.mrb[0].mxu0
        %6555 = vmatprep.mubr.bf16.mxu0 0
        %6556 = vmatmul.mubr.bf16.gmra.mrb[0].mxu0 %v2168
        %v6557 = vpop.f32.mrb[0].mxu0
        %v6558 = vadd.f32 0.0, %v6557
        %v6559 = vpop.f32.mrb[0].mxu0
        %v6560 = vpop.f32.mrb[0].mxu0
        %v6561 = vadd.f32 0.0, %v6560
        %v6562 = vpop.f32.mrb[0].mxu0
        %6563 = vmatprep.mubr.bf16.mxu0 0
        %6564 = vmatmul.mubr.bf16.gmra.mrb[0].mxu0 %v2171
        %v6565 = vpop.f32.mrb[0].mxu0
        %v6566 = vadd.f32 0.0, %v6565
        %v6567 = vpop.f32.mrb[0].mxu0
        %v6568 = vpop.f32.mrb[0].mxu0
        %v6569 = vadd.f32 0.0, %v6568
        %v6570 = vpop.f32.mrb[0].mxu0
        %6571 = vmatprep.mubr.bf16.mxu0 0
        %6572 = vmatmul.mubr.bf16.gmra.mrb[0].mxu0 %v2174
        %v6573 = vpop.f32.mrb[0].mxu0
        %v6574 = vadd.f32 0.0, %v6573
        %v6575 = vpop.f32.mrb[0].mxu0
        %v6576 = vpop.f32.mrb[0].mxu0
        %v6577 = vadd.f32 0.0, %v6576
        %v6578 = vpop.f32.mrb[0].mxu0
        %6579 = vmatprep.mubr.bf16.mxu0 0
        %6580 = vmatmul.mubr.bf16.gmra.mrb[0].mxu0 %v2177
        %v6581 = vpop.f32.mrb[0].mxu0
        %v6582 = vadd.f32 0.0, %v6581
        %v6583 = vpop.f32.mrb[0].mxu0
        %v6584 = vpop.f32.mrb[0].mxu0
        %v6585 = vadd.f32 0.0, %v6584
        %v6586 = vpop.f32.mrb[0].mxu0
        %6587 = vmatprep.mubr.bf16.mxu0 0
        %6588 = vmatmul.mubr.bf16.gmra.mrb[0].mxu0 %v6051
        %v6589 = vpop.f32.mrb[0].mxu0
        %v6590 = vadd.f32 0.0, %v6589
        %v6591 = vpop.f32.mrb[0].mxu0
        %v6592 = vpop.f32.mrb[0].mxu0
        %v6593 = vadd.f32 0.0, %v6592
        %v6594 = vpop.f32.mrb[0].mxu0
        %6595 = vmatprep.mubr.bf16.mxu0 0
        %6596 = vmatmul.mubr.bf16.gmra.mrb[0].mxu0 %v6054
        %v6597 = vpop.f32.mrb[0].mxu0
        %v6598 = vadd.f32 0.0, %v6597
        %v6599 = vpop.f32.mrb[0].mxu0
        %v6600 = vpop.f32.mrb[0].mxu0
        %v6601 = vadd.f32 0.0, %v6600
        %v6602 = vpop.f32.mrb[0].mxu0
        %6603 = vdwg.mxu0
        %v6604 = vadd.f32 %v5870, %v6094
        %v6605 = vadd.f32 %v5871, %v6097
        %v6606 = vadd.f32 %v5872, %v6102
        %v6607 = vadd.f32 %v5873, %v6105
        %v6608 = vadd.f32 %v5874, %v6110
        %v6609 = vadd.f32 %v5875, %v6113
        %v6610 = vadd.f32 %v5876, %v6118
        %v6611 = vadd.f32 %v5877, %v6121
        %v6612 = vadd.f32 %v5878, %v6126
        %v6613 = vadd.f32 %v5879, %v6129
        %v6614 = vadd.f32 %v5880, %v6134
        %v6615 = vadd.f32 %v5881, %v6137
        %v6616 = vadd.f32 %v5882, %v6142
        %v6617 = vadd.f32 %v5883, %v6145
        %v6618 = vadd.f32 %v5884, %v6150
        %v6619 = vadd.f32 %v5885, %v6153
        %v6620 = vadd.f32 %v5886, %v6158
        %v6621 = vadd.f32 %v5887, %v6161
        %v6622 = vadd.f32 %v5888, %v6166
        %v6623 = vadd.f32 %v5889, %v6169
        %v6624 = vadd.f32 %v5890, %v6174
        %v6625 = vadd.f32 %v5891, %v6177
        %v6626 = vadd.f32 %v5892, %v6182
        %v6627 = vadd.f32 %v5893, %v6185
        %v6628 = vadd.f32 %v5894, %v6190
        %v6629 = vadd.f32 %v5895, %v6193
        %v6630 = vadd.f32 %v5896, %v6198
        %v6631 = vadd.f32 %v5897, %v6201
        %v6632 = vadd.f32 %v5898, %v6206
        %v6633 = vadd.f32 %v5899, %v6209
        %v6634 = vadd.f32 %v5900, %v6214
        %v6635 = vadd.f32 %v5901, %v6217
        %v6636 = vadd.f32 %v5902, %v6222
        %v6637 = vadd.f32 %v5903, %v6225
        %v6638 = vadd.f32 %v5904, %v6230
        %v6639 = vadd.f32 %v5905, %v6233
        %v6640 = vadd.f32 %v5906, %v6238
        %v6641 = vadd.f32 %v5907, %v6241
        %v6642 = vadd.f32 %v5908, %v6246
        %v6643 = vadd.f32 %v5909, %v6249
        %v6644 = vadd.f32 %v5910, %v6254
        %v6645 = vadd.f32 %v5911, %v6257
        %v6646 = vadd.f32 %v5912, %v6262
        %v6647 = vadd.f32 %v5913, %v6265
        %v6648 = vadd.f32 %v5914, %v6270
        %v6649 = vadd.f32 %v5915, %v6273
        %v6650 = vadd.f32 %v5916, %v6278
        %v6651 = vadd.f32 %v5917, %v6281
        %v6652 = vadd.f32 %v5918, %v6286
        %v6653 = vadd.f32 %v5919, %v6289
        %v6654 = vadd.f32 %v5920, %v6294
        %v6655 = vadd.f32 %v5921, %v6297
        %v6656 = vadd.f32 %v5922, %v6302
        %v6657 = vadd.f32 %v5923, %v6305
        %v6658 = vadd.f32 %v5924, %v6310
        %v6659 = vadd.f32 %v5925, %v6313
        %v6660 = vadd.f32 %v5926, %v6318
        %v6661 = vadd.f32 %v5927, %v6321
        %v6662 = vadd.f32 %v5928, %v6326
        %v6663 = vadd.f32 %v5929, %v6329
        %v6664 = vadd.f32 %v5930, %v6334
        %v6665 = vadd.f32 %v5931, %v6337
        %v6666 = vadd.f32 %v5932, %v6342
        %v6667 = vadd.f32 %v5933, %v6345
        %v6668 = vadd.f32 %v5934, %v6350
        %v6669 = vadd.f32 %v5935, %v6353
        %v6670 = vadd.f32 %v5936, %v6358
        %v6671 = vadd.f32 %v5937, %v6361
        %v6672 = vadd.f32 %v5938, %v6366
        %v6673 = vadd.f32 %v5939, %v6369
        %v6674 = vadd.f32 %v5940, %v6374
        %v6675 = vadd.f32 %v5941, %v6377
        %v6676 = vadd.f32 %v5942, %v6382
        %v6677 = vadd.f32 %v5943, %v6385
        %v6678 = vadd.f32 %v5944, %v6390
        %v6679 = vadd.f32 %v5945, %v6393
        %v6680 = vadd.f32 %v5946, %v6398
        %v6681 = vadd.f32 %v5947, %v6401
        %v6682 = vadd.f32 %v5948, %v6406
        %v6683 = vadd.f32 %v5949, %v6409
        %v6684 = vadd.f32 %v5950, %v6414
        %v6685 = vadd.f32 %v5951, %v6417
        %v6686 = vadd.f32 %v5952, %v6422
        %v6687 = vadd.f32 %v5953, %v6425
        %v6688 = vadd.f32 %v5954, %v6430
        %v6689 = vadd.f32 %v5955, %v6433
        %v6690 = vadd.f32 %v5956, %v6438
        %v6691 = vadd.f32 %v5957, %v6441
        %v6692 = vadd.f32 %v5958, %v6446
        %v6693 = vadd.f32 %v5959, %v6449
        %v6694 = vadd.f32 %v5960, %v6454
        %v6695 = vadd.f32 %v5961, %v6457
        %v6696 = vadd.f32 %v5962, %v6462
        %v6697 = vadd.f32 %v5963, %v6465
        %v6698 = vadd.f32 %v5964, %v6470
        %v6699 = vadd.f32 %v5965, %v6473
        %v6700 = vadd.f32 %v5966, %v6478
        %v6701 = vadd.f32 %v5967, %v6481
        %v6702 = vadd.f32 %v5968, %v6486
        %v6703 = vadd.f32 %v5969, %v6489
        %v6704 = vadd.f32 %v5970, %v6494
        %v6705 = vadd.f32 %v5971, %v6497
        %v6706 = vadd.f32 %v5972, %v6502
        %v6707 = vadd.f32 %v5973, %v6505
        %v6708 = vadd.f32 %v5974, %v6510
        %v6709 = vadd.f32 %v5975, %v6513
        %v6710 = vadd.f32 %v5976, %v6518
        %v6711 = vadd.f32 %v5977, %v6521
        %v6712 = vadd.f32 %v5978, %v6526
        %v6713 = vadd.f32 %v5979, %v6529
        %v6714 = vadd.f32 %v5980, %v6534
        %v6715 = vadd.f32 %v5981, %v6537
        %v6716 = vadd.f32 %v5982, %v6542
        %v6717 = vadd.f32 %v5983, %v6545
        %v6718 = vadd.f32 %v5984, %v6550
        %v6719 = vadd.f32 %v5985, %v6553
        %v6720 = vadd.f32 %v5986, %v6558
        %v6721 = vadd.f32 %v5987, %v6561
        %v6722 = vadd.f32 %v5988, %v6566
        %v6723 = vadd.f32 %v5989, %v6569
        %v6724 = vadd.f32 %v5990, %v6574
        %v6725 = vadd.f32 %v5991, %v6577
        %v6726 = vadd.f32 %v5992, %v6582
        %v6727 = vadd.f32 %v5993, %v6585
        %v6728 = vadd.f32 %v5994, %v6590
        %v6729 = vadd.f32 %v5995, %v6593
        %v6730 = vadd.f32 %v5996, %v6598
        %v6731 = vadd.f32 %v5997, %v6601
        %v6733 = vrot.slane %v370, 5
        %v6734 = vrot.slane %v6733, 4
        %v6735 = vrot.slane %v371, 5
        %v6736 = vsel %vm3825, %v6734, %v6735
        %v6737 = vrot.slane %v6735, 4
        %v6738 = vrot.slane %v372, 5
        %v6739 = vsel %vm3825, %v6737, %v6738
        %v6740 = vrot.slane %v6738, 4
        %v6741 = vrot.slane %v373, 5
        %v6742 = vsel %vm3825, %v6740, %v6741
        %v6743 = vrot.slane %v6741, 4
        %v6744 = vrot.slane %v374, 5
        %v6745 = vsel %vm3825, %v6743, %v6744
        %s6746 = scalar_lea.vmem %s208, 10
        %v6747 = vld [vmem:[%s6746] sm:$0x3]
        %v6748 = vunpack.c.l.b16 %v6736
        %v6749 = vunpack.c.l.b16 %v6739
        %v6750 = vunpack.c.l.b16 %v6742
        %v6751 = vunpack.c.l.b16 %v6745
        %v6752 = vpack.c.b16 %v6749, %v6748
        %v6753 = vpack.c.b16 %v6751, %v6750
        %v6755 = vsel %vm1986, %v6752, 0
        %v6758 = vsel %vm1986, %v6753, 0
        %v6761 = vand.u32 %v6747, %v2182
        %6763 = vmatprep.subr.bf16.mxu0 0
        %6764 = vmatpush1.bf16.msra.mxu0 %v6761
        %6765 = vmatprep.subr.bf16.mxu0 0
        %6766 = vmatpush1.bf16.msra.mxu0 0
        %6767 = vmatprep.subr.bf16.mxu0 0
        %6768 = vmatpush1.bf16.msra.mxu0 0
        %6769 = vmatprep.subr.bf16.mxu0 0
        %6770 = vmatpush1.bf16.msra.mxu0 0
        %6771 = vmatprep.subr.bf16.mxu0 0
        %6772 = vmatpush1.bf16.msra.mxu0 0
        %6773 = vmatprep.subr.bf16.mxu0 0
        %6774 = vmatpush1.bf16.msra.mxu0 0
        %6775 = vmatprep.subr.bf16.mxu0 0
        %6776 = vmatpush1.bf16.msra.mxu0 0
        %6777 = vmatprep.subr.bf16.mxu0 0
        %6778 = vmatpush1.bf16.msra.mxu0 0
        %6779 = vmatprep.subr.bf16.mxu0 0
        %6780 = vmatpush1.bf16.msra.mxu0 0
        %6781 = vmatprep.subr.bf16.mxu0 0
        %6782 = vmatpush1.bf16.msra.mxu0 0
        %6783 = vmatprep.subr.bf16.mxu0 0
        %6784 = vmatpush1.bf16.msra.mxu0 0
        %6785 = vmatprep.subr.bf16.mxu0 0
        %6786 = vmatpush1.bf16.msra.mxu0 0
        %6787 = vmatprep.subr.bf16.mxu0 0
        %6788 = vmatpush1.bf16.msra.mxu0 0
        %6789 = vmatprep.subr.bf16.mxu0 0
        %6790 = vmatpush1.bf16.msra.mxu0 0
        %6791 = vmatprep.subr.bf16.mxu0 0
        %6792 = vmatpush1.bf16.msra.mxu0 0
        %6793 = vmatprep.subr.bf16.mxu0 0
        %6794 = vmatpush1.bf16.msra.mxu0 0
        %6795 = vmatprep.mubr.bf16.mxu0 0
        %6796 = vmatmul.mubr.bf16.gmra.mrb[0].mxu0 %v4443
        %v6797 = vpop.f32.mrb[0].mxu0
        %v6798 = vadd.f32 0.0, %v6797
        %v6799 = vpop.f32.mrb[0].mxu0
        %v6800 = vpop.f32.mrb[0].mxu0
        %v6801 = vadd.f32 0.0, %v6800
        %v6802 = vpop.f32.mrb[0].mxu0
        %6803 = vmatprep.mubr.bf16.mxu0 0
        %6804 = vmatmul.mubr.bf16.gmra.mrb[0].mxu0 %v4446
        %v6805 = vpop.f32.mrb[0].mxu0
        %v6806 = vadd.f32 0.0, %v6805
        %v6807 = vpop.f32.mrb[0].mxu0
        %v6808 = vpop.f32.mrb[0].mxu0
        %v6809 = vadd.f32 0.0, %v6808
        %v6810 = vpop.f32.mrb[0].mxu0
        %6811 = vmatprep.mubr.bf16.mxu0 0
        %6812 = vmatmul.mubr.bf16.gmra.mrb[0].mxu0 %v4449
        %v6813 = vpop.f32.mrb[0].mxu0
        %v6814 = vadd.f32 0.0, %v6813
        %v6815 = vpop.f32.mrb[0].mxu0
        %v6816 = vpop.f32.mrb[0].mxu0
        %v6817 = vadd.f32 0.0, %v6816
        %v6818 = vpop.f32.mrb[0].mxu0
        %6819 = vmatprep.mubr.bf16.mxu0 0
        %6820 = vmatmul.mubr.bf16.gmra.mrb[0].mxu0 %v4452
        %v6821 = vpop.f32.mrb[0].mxu0
        %v6822 = vadd.f32 0.0, %v6821
        %v6823 = vpop.f32.mrb[0].mxu0
        %v6824 = vpop.f32.mrb[0].mxu0
        %v6825 = vadd.f32 0.0, %v6824
        %v6826 = vpop.f32.mrb[0].mxu0
        %6827 = vmatprep.mubr.bf16.mxu0 0
        %6828 = vmatmul.mubr.bf16.gmra.mrb[0].mxu0 %v4455
        %v6829 = vpop.f32.mrb[0].mxu0
        %v6830 = vadd.f32 0.0, %v6829
        %v6831 = vpop.f32.mrb[0].mxu0
        %v6832 = vpop.f32.mrb[0].mxu0
        %v6833 = vadd.f32 0.0, %v6832
        %v6834 = vpop.f32.mrb[0].mxu0
        %6835 = vmatprep.mubr.bf16.mxu0 0
        %6836 = vmatmul.mubr.bf16.gmra.mrb[0].mxu0 %v4458
        %v6837 = vpop.f32.mrb[0].mxu0
        %v6838 = vadd.f32 0.0, %v6837
        %v6839 = vpop.f32.mrb[0].mxu0
        %v6840 = vpop.f32.mrb[0].mxu0
        %v6841 = vadd.f32 0.0, %v6840
        %v6842 = vpop.f32.mrb[0].mxu0
        %6843 = vmatprep.mubr.bf16.mxu0 0
        %6844 = vmatmul.mubr.bf16.gmra.mrb[0].mxu0 %v4461
        %v6845 = vpop.f32.mrb[0].mxu0
        %v6846 = vadd.f32 0.0, %v6845
        %v6847 = vpop.f32.mrb[0].mxu0
        %v6848 = vpop.f32.mrb[0].mxu0
        %v6849 = vadd.f32 0.0, %v6848
        %v6850 = vpop.f32.mrb[0].mxu0
        %6851 = vmatprep.mubr.bf16.mxu0 0
        %6852 = vmatmul.mubr.bf16.gmra.mrb[0].mxu0 %v4464
        %v6853 = vpop.f32.mrb[0].mxu0
        %v6854 = vadd.f32 0.0, %v6853
        %v6855 = vpop.f32.mrb[0].mxu0
        %v6856 = vpop.f32.mrb[0].mxu0
        %v6857 = vadd.f32 0.0, %v6856
        %v6858 = vpop.f32.mrb[0].mxu0
        %6859 = vmatprep.mubr.bf16.mxu0 0
        %6860 = vmatmul.mubr.bf16.gmra.mrb[0].mxu0 %v4467
        %v6861 = vpop.f32.mrb[0].mxu0
        %v6862 = vadd.f32 0.0, %v6861
        %v6863 = vpop.f32.mrb[0].mxu0
        %v6864 = vpop.f32.mrb[0].mxu0
        %v6865 = vadd.f32 0.0, %v6864
        %v6866 = vpop.f32.mrb[0].mxu0
        %6867 = vmatprep.mubr.bf16.mxu0 0
        %6868 = vmatmul.mubr.bf16.gmra.mrb[0].mxu0 %v4470
        %v6869 = vpop.f32.mrb[0].mxu0
        %v6870 = vadd.f32 0.0, %v6869
        %v6871 = vpop.f32.mrb[0].mxu0
        %v6872 = vpop.f32.mrb[0].mxu0
        %v6873 = vadd.f32 0.0, %v6872
        %v6874 = vpop.f32.mrb[0].mxu0
        %6875 = vmatprep.mubr.bf16.mxu0 0
        %6876 = vmatmul.mubr.bf16.gmra.mrb[0].mxu0 %v4473
        %v6877 = vpop.f32.mrb[0].mxu0
        %v6878 = vadd.f32 0.0, %v6877
        %v6879 = vpop.f32.mrb[0].mxu0
        %v6880 = vpop.f32.mrb[0].mxu0
        %v6881 = vadd.f32 0.0, %v6880
        %v6882 = vpop.f32.mrb[0].mxu0
        %6883 = vmatprep.mubr.bf16.mxu0 0
        %6884 = vmatmul.mubr.bf16.gmra.mrb[0].mxu0 %v4476
        %v6885 = vpop.f32.mrb[0].mxu0
        %v6886 = vadd.f32 0.0, %v6885
        %v6887 = vpop.f32.mrb[0].mxu0
        %v6888 = vpop.f32.mrb[0].mxu0
        %v6889 = vadd.f32 0.0, %v6888
        %v6890 = vpop.f32.mrb[0].mxu0
        %6891 = vmatprep.mubr.bf16.mxu0 0
        %6892 = vmatmul.mubr.bf16.gmra.mrb[0].mxu0 %v4479
        %v6893 = vpop.f32.mrb[0].mxu0
        %v6894 = vadd.f32 0.0, %v6893
        %v6895 = vpop.f32.mrb[0].mxu0
        %v6896 = vpop.f32.mrb[0].mxu0
        %v6897 = vadd.f32 0.0, %v6896
        %v6898 = vpop.f32.mrb[0].mxu0
        %6899 = vmatprep.mubr.bf16.mxu0 0
        %6900 = vmatmul.mubr.bf16.gmra.mrb[0].mxu0 %v4482
        %v6901 = vpop.f32.mrb[0].mxu0
        %v6902 = vadd.f32 0.0, %v6901
        %v6903 = vpop.f32.mrb[0].mxu0
        %v6904 = vpop.f32.mrb[0].mxu0
        %v6905 = vadd.f32 0.0, %v6904
        %v6906 = vpop.f32.mrb[0].mxu0
        %6907 = vmatprep.mubr.bf16.mxu0 0
        %6908 = vmatmul.mubr.bf16.gmra.mrb[0].mxu0 %v4485
        %v6909 = vpop.f32.mrb[0].mxu0
        %v6910 = vadd.f32 0.0, %v6909
        %v6911 = vpop.f32.mrb[0].mxu0
        %v6912 = vpop.f32.mrb[0].mxu0
        %v6913 = vadd.f32 0.0, %v6912
        %v6914 = vpop.f32.mrb[0].mxu0
        %6915 = vmatprep.mubr.bf16.mxu0 0
        %6916 = vmatmul.mubr.bf16.gmra.mrb[0].mxu0 %v4488
        %v6917 = vpop.f32.mrb[0].mxu0
        %v6918 = vadd.f32 0.0, %v6917
        %v6919 = vpop.f32.mrb[0].mxu0
        %v6920 = vpop.f32.mrb[0].mxu0
        %v6921 = vadd.f32 0.0, %v6920
        %v6922 = vpop.f32.mrb[0].mxu0
        %6923 = vmatprep.mubr.bf16.mxu0 0
        %6924 = vmatmul.mubr.bf16.gmra.mrb[0].mxu0 %v4491
        %v6925 = vpop.f32.mrb[0].mxu0
        %v6926 = vadd.f32 0.0, %v6925
        %v6927 = vpop.f32.mrb[0].mxu0
        %v6928 = vpop.f32.mrb[0].mxu0
        %v6929 = vadd.f32 0.0, %v6928
        %v6930 = vpop.f32.mrb[0].mxu0
        %6931 = vmatprep.mubr.bf16.mxu0 0
        %6932 = vmatmul.mubr.bf16.gmra.mrb[0].mxu0 %v4494
        %v6933 = vpop.f32.mrb[0].mxu0
        %v6934 = vadd.f32 0.0, %v6933
        %v6935 = vpop.f32.mrb[0].mxu0
        %v6936 = vpop.f32.mrb[0].mxu0
        %v6937 = vadd.f32 0.0, %v6936
        %v6938 = vpop.f32.mrb[0].mxu0
        %6939 = vmatprep.mubr.bf16.mxu0 0
        %6940 = vmatmul.mubr.bf16.gmra.mrb[0].mxu0 %v4497
        %v6941 = vpop.f32.mrb[0].mxu0
        %v6942 = vadd.f32 0.0, %v6941
        %v6943 = vpop.f32.mrb[0].mxu0
        %v6944 = vpop.f32.mrb[0].mxu0
        %v6945 = vadd.f32 0.0, %v6944
        %v6946 = vpop.f32.mrb[0].mxu0
        %6947 = vmatprep.mubr.bf16.mxu0 0
        %6948 = vmatmul.mubr.bf16.gmra.mrb[0].mxu0 %v4500
        %v6949 = vpop.f32.mrb[0].mxu0
        %v6950 = vadd.f32 0.0, %v6949
        %v6951 = vpop.f32.mrb[0].mxu0
        %v6952 = vpop.f32.mrb[0].mxu0
        %v6953 = vadd.f32 0.0, %v6952
        %v6954 = vpop.f32.mrb[0].mxu0
        %6955 = vmatprep.mubr.bf16.mxu0 0
        %6956 = vmatmul.mubr.bf16.gmra.mrb[0].mxu0 %v4503
        %v6957 = vpop.f32.mrb[0].mxu0
        %v6958 = vadd.f32 0.0, %v6957
        %v6959 = vpop.f32.mrb[0].mxu0
        %v6960 = vpop.f32.mrb[0].mxu0
        %v6961 = vadd.f32 0.0, %v6960
        %v6962 = vpop.f32.mrb[0].mxu0
        %6963 = vmatprep.mubr.bf16.mxu0 0
        %6964 = vmatmul.mubr.bf16.gmra.mrb[0].mxu0 %v4506
        %v6965 = vpop.f32.mrb[0].mxu0
        %v6966 = vadd.f32 0.0, %v6965
        %v6967 = vpop.f32.mrb[0].mxu0
        %v6968 = vpop.f32.mrb[0].mxu0
        %v6969 = vadd.f32 0.0, %v6968
        %v6970 = vpop.f32.mrb[0].mxu0
        %6971 = vmatprep.mubr.bf16.mxu0 0
        %6972 = vmatmul.mubr.bf16.gmra.mrb[0].mxu0 %v4509
        %v6973 = vpop.f32.mrb[0].mxu0
        %v6974 = vadd.f32 0.0, %v6973
        %v6975 = vpop.f32.mrb[0].mxu0
        %v6976 = vpop.f32.mrb[0].mxu0
        %v6977 = vadd.f32 0.0, %v6976
        %v6978 = vpop.f32.mrb[0].mxu0
        %6979 = vmatprep.mubr.bf16.mxu0 0
        %6980 = vmatmul.mubr.bf16.gmra.mrb[0].mxu0 %v4512
        %v6981 = vpop.f32.mrb[0].mxu0
        %v6982 = vadd.f32 0.0, %v6981
        %v6983 = vpop.f32.mrb[0].mxu0
        %v6984 = vpop.f32.mrb[0].mxu0
        %v6985 = vadd.f32 0.0, %v6984
        %v6986 = vpop.f32.mrb[0].mxu0
        %6987 = vmatprep.mubr.bf16.mxu0 0
        %6988 = vmatmul.mubr.bf16.gmra.mrb[0].mxu0 %v4515
        %v6989 = vpop.f32.mrb[0].mxu0
        %v6990 = vadd.f32 0.0, %v6989
        %v6991 = vpop.f32.mrb[0].mxu0
        %v6992 = vpop.f32.mrb[0].mxu0
        %v6993 = vadd.f32 0.0, %v6992
        %v6994 = vpop.f32.mrb[0].mxu0
        %6995 = vmatprep.mubr.bf16.mxu0 0
        %6996 = vmatmul.mubr.bf16.gmra.mrb[0].mxu0 %v4518
        %v6997 = vpop.f32.mrb[0].mxu0
        %v6998 = vadd.f32 0.0, %v6997
        %v6999 = vpop.f32.mrb[0].mxu0
        %v7000 = vpop.f32.mrb[0].mxu0
        %v7001 = vadd.f32 0.0, %v7000
        %v7002 = vpop.f32.mrb[0].mxu0
        %7003 = vmatprep.mubr.bf16.mxu0 0
        %7004 = vmatmul.mubr.bf16.gmra.mrb[0].mxu0 %v4521
        %v7005 = vpop.f32.mrb[0].mxu0
        %v7006 = vadd.f32 0.0, %v7005
        %v7007 = vpop.f32.mrb[0].mxu0
        %v7008 = vpop.f32.mrb[0].mxu0
        %v7009 = vadd.f32 0.0, %v7008
        %v7010 = vpop.f32.mrb[0].mxu0
        %7011 = vmatprep.mubr.bf16.mxu0 0
        %7012 = vmatmul.mubr.bf16.gmra.mrb[0].mxu0 %v4524
        %v7013 = vpop.f32.mrb[0].mxu0
        %v7014 = vadd.f32 0.0, %v7013
        %v7015 = vpop.f32.mrb[0].mxu0
        %v7016 = vpop.f32.mrb[0].mxu0
        %v7017 = vadd.f32 0.0, %v7016
        %v7018 = vpop.f32.mrb[0].mxu0
        %7019 = vmatprep.mubr.bf16.mxu0 0
        %7020 = vmatmul.mubr.bf16.gmra.mrb[0].mxu0 %v4527
        %v7021 = vpop.f32.mrb[0].mxu0
        %v7022 = vadd.f32 0.0, %v7021
        %v7023 = vpop.f32.mrb[0].mxu0
        %v7024 = vpop.f32.mrb[0].mxu0
        %v7025 = vadd.f32 0.0, %v7024
        %v7026 = vpop.f32.mrb[0].mxu0
        %7027 = vmatprep.mubr.bf16.mxu0 0
        %7028 = vmatmul.mubr.bf16.gmra.mrb[0].mxu0 %v4530
        %v7029 = vpop.f32.mrb[0].mxu0
        %v7030 = vadd.f32 0.0, %v7029
        %v7031 = vpop.f32.mrb[0].mxu0
        %v7032 = vpop.f32.mrb[0].mxu0
        %v7033 = vadd.f32 0.0, %v7032
        %v7034 = vpop.f32.mrb[0].mxu0
        %7035 = vmatprep.mubr.bf16.mxu0 0
        %7036 = vmatmul.mubr.bf16.gmra.mrb[0].mxu0 %v4533
        %v7037 = vpop.f32.mrb[0].mxu0
        %v7038 = vadd.f32 0.0, %v7037
        %v7039 = vpop.f32.mrb[0].mxu0
        %v7040 = vpop.f32.mrb[0].mxu0
        %v7041 = vadd.f32 0.0, %v7040
        %v7042 = vpop.f32.mrb[0].mxu0
        %7043 = vmatprep.mubr.bf16.mxu0 0
        %7044 = vmatmul.mubr.bf16.gmra.mrb[0].mxu0 %v4536
        %v7045 = vpop.f32.mrb[0].mxu0
        %v7046 = vadd.f32 0.0, %v7045
        %v7047 = vpop.f32.mrb[0].mxu0
        %v7048 = vpop.f32.mrb[0].mxu0
        %v7049 = vadd.f32 0.0, %v7048
        %v7050 = vpop.f32.mrb[0].mxu0
        %7051 = vmatprep.mubr.bf16.mxu0 0
        %7052 = vmatmul.mubr.bf16.gmra.mrb[0].mxu0 %v4539
        %v7053 = vpop.f32.mrb[0].mxu0
        %v7054 = vadd.f32 0.0, %v7053
        %v7055 = vpop.f32.mrb[0].mxu0
        %v7056 = vpop.f32.mrb[0].mxu0
        %v7057 = vadd.f32 0.0, %v7056
        %v7058 = vpop.f32.mrb[0].mxu0
        %7059 = vmatprep.mubr.bf16.mxu0 0
        %7060 = vmatmul.mubr.bf16.gmra.mrb[0].mxu0 %v4542
        %v7061 = vpop.f32.mrb[0].mxu0
        %v7062 = vadd.f32 0.0, %v7061
        %v7063 = vpop.f32.mrb[0].mxu0
        %v7064 = vpop.f32.mrb[0].mxu0
        %v7065 = vadd.f32 0.0, %v7064
        %v7066 = vpop.f32.mrb[0].mxu0
        %7067 = vmatprep.mubr.bf16.mxu0 0
        %7068 = vmatmul.mubr.bf16.gmra.mrb[0].mxu0 %v4545
        %v7069 = vpop.f32.mrb[0].mxu0
        %v7070 = vadd.f32 0.0, %v7069
        %v7071 = vpop.f32.mrb[0].mxu0
        %v7072 = vpop.f32.mrb[0].mxu0
        %v7073 = vadd.f32 0.0, %v7072
        %v7074 = vpop.f32.mrb[0].mxu0
        %7075 = vmatprep.mubr.bf16.mxu0 0
        %7076 = vmatmul.mubr.bf16.gmra.mrb[0].mxu0 %v4548
        %v7077 = vpop.f32.mrb[0].mxu0
        %v7078 = vadd.f32 0.0, %v7077
        %v7079 = vpop.f32.mrb[0].mxu0
        %v7080 = vpop.f32.mrb[0].mxu0
        %v7081 = vadd.f32 0.0, %v7080
        %v7082 = vpop.f32.mrb[0].mxu0
        %7083 = vmatprep.mubr.bf16.mxu0 0
        %7084 = vmatmul.mubr.bf16.gmra.mrb[0].mxu0 %v4551
        %v7085 = vpop.f32.mrb[0].mxu0
        %v7086 = vadd.f32 0.0, %v7085
        %v7087 = vpop.f32.mrb[0].mxu0
        %v7088 = vpop.f32.mrb[0].mxu0
        %v7089 = vadd.f32 0.0, %v7088
        %v7090 = vpop.f32.mrb[0].mxu0
        %7091 = vmatprep.mubr.bf16.mxu0 0
        %7092 = vmatmul.mubr.bf16.gmra.mrb[0].mxu0 %v4554
        %v7093 = vpop.f32.mrb[0].mxu0
        %v7094 = vadd.f32 0.0, %v7093
        %v7095 = vpop.f32.mrb[0].mxu0
        %v7096 = vpop.f32.mrb[0].mxu0
        %v7097 = vadd.f32 0.0, %v7096
        %v7098 = vpop.f32.mrb[0].mxu0
        %7099 = vmatprep.mubr.bf16.mxu0 0
        %7100 = vmatmul.mubr.bf16.gmra.mrb[0].mxu0 %v4557
        %v7101 = vpop.f32.mrb[0].mxu0
        %v7102 = vadd.f32 0.0, %v7101
        %v7103 = vpop.f32.mrb[0].mxu0
        %v7104 = vpop.f32.mrb[0].mxu0
        %v7105 = vadd.f32 0.0, %v7104
        %v7106 = vpop.f32.mrb[0].mxu0
        %7107 = vmatprep.mubr.bf16.mxu0 0
        %7108 = vmatmul.mubr.bf16.gmra.mrb[0].mxu0 %v4560
        %v7109 = vpop.f32.mrb[0].mxu0
        %v7110 = vadd.f32 0.0, %v7109
        %v7111 = vpop.f32.mrb[0].mxu0
        %v7112 = vpop.f32.mrb[0].mxu0
        %v7113 = vadd.f32 0.0, %v7112
        %v7114 = vpop.f32.mrb[0].mxu0
        %7115 = vmatprep.mubr.bf16.mxu0 0
        %7116 = vmatmul.mubr.bf16.gmra.mrb[0].mxu0 %v4563
        %v7117 = vpop.f32.mrb[0].mxu0
        %v7118 = vadd.f32 0.0, %v7117
        %v7119 = vpop.f32.mrb[0].mxu0
        %v7120 = vpop.f32.mrb[0].mxu0
        %v7121 = vadd.f32 0.0, %v7120
        %v7122 = vpop.f32.mrb[0].mxu0
        %7123 = vmatprep.mubr.bf16.mxu0 0
        %7124 = vmatmul.mubr.bf16.gmra.mrb[0].mxu0 %v4566
        %v7125 = vpop.f32.mrb[0].mxu0
        %v7126 = vadd.f32 0.0, %v7125
        %v7127 = vpop.f32.mrb[0].mxu0
        %v7128 = vpop.f32.mrb[0].mxu0
        %v7129 = vadd.f32 0.0, %v7128
        %v7130 = vpop.f32.mrb[0].mxu0
        %7131 = vmatprep.mubr.bf16.mxu0 0
        %7132 = vmatmul.mubr.bf16.gmra.mrb[0].mxu0 %v4569
        %v7133 = vpop.f32.mrb[0].mxu0
        %v7134 = vadd.f32 0.0, %v7133
        %v7135 = vpop.f32.mrb[0].mxu0
        %v7136 = vpop.f32.mrb[0].mxu0
        %v7137 = vadd.f32 0.0, %v7136
        %v7138 = vpop.f32.mrb[0].mxu0
        %7139 = vmatprep.mubr.bf16.mxu0 0
        %7140 = vmatmul.mubr.bf16.gmra.mrb[0].mxu0 %v4572
        %v7141 = vpop.f32.mrb[0].mxu0
        %v7142 = vadd.f32 0.0, %v7141
        %v7143 = vpop.f32.mrb[0].mxu0
        %v7144 = vpop.f32.mrb[0].mxu0
        %v7145 = vadd.f32 0.0, %v7144
        %v7146 = vpop.f32.mrb[0].mxu0
        %7147 = vmatprep.mubr.bf16.mxu0 0
        %7148 = vmatmul.mubr.bf16.gmra.mrb[0].mxu0 %v4575
        %v7149 = vpop.f32.mrb[0].mxu0
        %v7150 = vadd.f32 0.0, %v7149
        %v7151 = vpop.f32.mrb[0].mxu0
        %v7152 = vpop.f32.mrb[0].mxu0
        %v7153 = vadd.f32 0.0, %v7152
        %v7154 = vpop.f32.mrb[0].mxu0
        %7155 = vmatprep.mubr.bf16.mxu0 0
        %7156 = vmatmul.mubr.bf16.gmra.mrb[0].mxu0 %v4578
        %v7157 = vpop.f32.mrb[0].mxu0
        %v7158 = vadd.f32 0.0, %v7157
        %v7159 = vpop.f32.mrb[0].mxu0
        %v7160 = vpop.f32.mrb[0].mxu0
        %v7161 = vadd.f32 0.0, %v7160
        %v7162 = vpop.f32.mrb[0].mxu0
        %7163 = vmatprep.mubr.bf16.mxu0 0
        %7164 = vmatmul.mubr.bf16.gmra.mrb[0].mxu0 %v4581
        %v7165 = vpop.f32.mrb[0].mxu0
        %v7166 = vadd.f32 0.0, %v7165
        %v7167 = vpop.f32.mrb[0].mxu0
        %v7168 = vpop.f32.mrb[0].mxu0
        %v7169 = vadd.f32 0.0, %v7168
        %v7170 = vpop.f32.mrb[0].mxu0
        %7171 = vmatprep.mubr.bf16.mxu0 0
        %7172 = vmatmul.mubr.bf16.gmra.mrb[0].mxu0 %v4584
        %v7173 = vpop.f32.mrb[0].mxu0
        %v7174 = vadd.f32 0.0, %v7173
        %v7175 = vpop.f32.mrb[0].mxu0
        %v7176 = vpop.f32.mrb[0].mxu0
        %v7177 = vadd.f32 0.0, %v7176
        %v7178 = vpop.f32.mrb[0].mxu0
        %7179 = vmatprep.mubr.bf16.mxu0 0
        %7180 = vmatmul.mubr.bf16.gmra.mrb[0].mxu0 %v4587
        %v7181 = vpop.f32.mrb[0].mxu0
        %v7182 = vadd.f32 0.0, %v7181
        %v7183 = vpop.f32.mrb[0].mxu0
        %v7184 = vpop.f32.mrb[0].mxu0
        %v7185 = vadd.f32 0.0, %v7184
        %v7186 = vpop.f32.mrb[0].mxu0
        %7187 = vmatprep.mubr.bf16.mxu0 0
        %7188 = vmatmul.mubr.bf16.gmra.mrb[0].mxu0 %v4590
        %v7189 = vpop.f32.mrb[0].mxu0
        %v7190 = vadd.f32 0.0, %v7189
        %v7191 = vpop.f32.mrb[0].mxu0
        %v7192 = vpop.f32.mrb[0].mxu0
        %v7193 = vadd.f32 0.0, %v7192
        %v7194 = vpop.f32.mrb[0].mxu0
        %7195 = vmatprep.mubr.bf16.mxu0 0
        %7196 = vmatmul.mubr.bf16.gmra.mrb[0].mxu0 %v4593
        %v7197 = vpop.f32.mrb[0].mxu0
        %v7198 = vadd.f32 0.0, %v7197
        %v7199 = vpop.f32.mrb[0].mxu0
        %v7200 = vpop.f32.mrb[0].mxu0
        %v7201 = vadd.f32 0.0, %v7200
        %v7202 = vpop.f32.mrb[0].mxu0
        %7203 = vmatprep.mubr.bf16.mxu0 0
        %7204 = vmatmul.mubr.bf16.gmra.mrb[0].mxu0 %v4596
        %v7205 = vpop.f32.mrb[0].mxu0
        %v7206 = vadd.f32 0.0, %v7205
        %v7207 = vpop.f32.mrb[0].mxu0
        %v7208 = vpop.f32.mrb[0].mxu0
        %v7209 = vadd.f32 0.0, %v7208
        %v7210 = vpop.f32.mrb[0].mxu0
        %7211 = vmatprep.mubr.bf16.mxu0 0
        %7212 = vmatmul.mubr.bf16.gmra.mrb[0].mxu0 %v4599
        %v7213 = vpop.f32.mrb[0].mxu0
        %v7214 = vadd.f32 0.0, %v7213
        %v7215 = vpop.f32.mrb[0].mxu0
        %v7216 = vpop.f32.mrb[0].mxu0
        %v7217 = vadd.f32 0.0, %v7216
        %v7218 = vpop.f32.mrb[0].mxu0
        %7219 = vmatprep.mubr.bf16.mxu0 0
        %7220 = vmatmul.mubr.bf16.gmra.mrb[0].mxu0 %v4602
        %v7221 = vpop.f32.mrb[0].mxu0
        %v7222 = vadd.f32 0.0, %v7221
        %v7223 = vpop.f32.mrb[0].mxu0
        %v7224 = vpop.f32.mrb[0].mxu0
        %v7225 = vadd.f32 0.0, %v7224
        %v7226 = vpop.f32.mrb[0].mxu0
        %7227 = vmatprep.mubr.bf16.mxu0 0
        %7228 = vmatmul.mubr.bf16.gmra.mrb[0].mxu0 %v4605
        %v7229 = vpop.f32.mrb[0].mxu0
        %v7230 = vadd.f32 0.0, %v7229
        %v7231 = vpop.f32.mrb[0].mxu0
        %v7232 = vpop.f32.mrb[0].mxu0
        %v7233 = vadd.f32 0.0, %v7232
        %v7234 = vpop.f32.mrb[0].mxu0
        %7235 = vmatprep.mubr.bf16.mxu0 0
        %7236 = vmatmul.mubr.bf16.gmra.mrb[0].mxu0 %v4608
        %v7237 = vpop.f32.mrb[0].mxu0
        %v7238 = vadd.f32 0.0, %v7237
        %v7239 = vpop.f32.mrb[0].mxu0
        %v7240 = vpop.f32.mrb[0].mxu0
        %v7241 = vadd.f32 0.0, %v7240
        %v7242 = vpop.f32.mrb[0].mxu0
        %7243 = vmatprep.mubr.bf16.mxu0 0
        %7244 = vmatmul.mubr.bf16.gmra.mrb[0].mxu0 %v4611
        %v7245 = vpop.f32.mrb[0].mxu0
        %v7246 = vadd.f32 0.0, %v7245
        %v7247 = vpop.f32.mrb[0].mxu0
        %v7248 = vpop.f32.mrb[0].mxu0
        %v7249 = vadd.f32 0.0, %v7248
        %v7250 = vpop.f32.mrb[0].mxu0
        %7251 = vmatprep.mubr.bf16.mxu0 0
        %7252 = vmatmul.mubr.bf16.gmra.mrb[0].mxu0 %v4614
        %v7253 = vpop.f32.mrb[0].mxu0
        %v7254 = vadd.f32 0.0, %v7253
        %v7255 = vpop.f32.mrb[0].mxu0
        %v7256 = vpop.f32.mrb[0].mxu0
        %v7257 = vadd.f32 0.0, %v7256
        %v7258 = vpop.f32.mrb[0].mxu0
        %7259 = vmatprep.mubr.bf16.mxu0 0
        %7260 = vmatmul.mubr.bf16.gmra.mrb[0].mxu0 %v4617
        %v7261 = vpop.f32.mrb[0].mxu0
        %v7262 = vadd.f32 0.0, %v7261
        %v7263 = vpop.f32.mrb[0].mxu0
        %v7264 = vpop.f32.mrb[0].mxu0
        %v7265 = vadd.f32 0.0, %v7264
        %v7266 = vpop.f32.mrb[0].mxu0
        %7267 = vmatprep.mubr.bf16.mxu0 0
        %7268 = vmatmul.mubr.bf16.gmra.mrb[0].mxu0 %v4620
        %v7269 = vpop.f32.mrb[0].mxu0
        %v7270 = vadd.f32 0.0, %v7269
        %v7271 = vpop.f32.mrb[0].mxu0
        %v7272 = vpop.f32.mrb[0].mxu0
        %v7273 = vadd.f32 0.0, %v7272
        %v7274 = vpop.f32.mrb[0].mxu0
        %7275 = vmatprep.mubr.bf16.mxu0 0
        %7276 = vmatmul.mubr.bf16.gmra.mrb[0].mxu0 %v4623
        %v7277 = vpop.f32.mrb[0].mxu0
        %v7278 = vadd.f32 0.0, %v7277
        %v7279 = vpop.f32.mrb[0].mxu0
        %v7280 = vpop.f32.mrb[0].mxu0
        %v7281 = vadd.f32 0.0, %v7280
        %v7282 = vpop.f32.mrb[0].mxu0
        %7283 = vmatprep.mubr.bf16.mxu0 0
        %7284 = vmatmul.mubr.bf16.gmra.mrb[0].mxu0 %v4626
        %v7285 = vpop.f32.mrb[0].mxu0
        %v7286 = vadd.f32 0.0, %v7285
        %v7287 = vpop.f32.mrb[0].mxu0
        %v7288 = vpop.f32.mrb[0].mxu0
        %v7289 = vadd.f32 0.0, %v7288
        %v7290 = vpop.f32.mrb[0].mxu0
        %7291 = vmatprep.mubr.bf16.mxu0 0
        %7292 = vmatmul.mubr.bf16.gmra.mrb[0].mxu0 %v6755
        %v7293 = vpop.f32.mrb[0].mxu0
        %v7294 = vadd.f32 0.0, %v7293
        %v7295 = vpop.f32.mrb[0].mxu0
        %v7296 = vpop.f32.mrb[0].mxu0
        %v7297 = vadd.f32 0.0, %v7296
        %v7298 = vpop.f32.mrb[0].mxu0
        %7299 = vmatprep.mubr.bf16.mxu0 0
        %7300 = vmatmul.mubr.bf16.gmra.mrb[0].mxu0 %v6758
        %v7301 = vpop.f32.mrb[0].mxu0
        %v7302 = vadd.f32 0.0, %v7301
        %v7303 = vpop.f32.mrb[0].mxu0
        %v7304 = vpop.f32.mrb[0].mxu0
        %v7305 = vadd.f32 0.0, %v7304
        %v7306 = vpop.f32.mrb[0].mxu0
        %7307 = vdwg.mxu0
        %v7308 = vadd.f32 %v6604, %v6798
        %v7309 = vadd.f32 %v6605, %v6801
        %v7310 = vadd.f32 %v6606, %v6806
        %v7311 = vadd.f32 %v6607, %v6809
        %v7312 = vadd.f32 %v6608, %v6814
        %v7313 = vadd.f32 %v6609, %v6817
        %v7314 = vadd.f32 %v6610, %v6822
        %v7315 = vadd.f32 %v6611, %v6825
        %v7316 = vadd.f32 %v6612, %v6830
        %v7317 = vadd.f32 %v6613, %v6833
        %v7318 = vadd.f32 %v6614, %v6838
        %v7319 = vadd.f32 %v6615, %v6841
        %v7320 = vadd.f32 %v6616, %v6846
        %v7321 = vadd.f32 %v6617, %v6849
        %v7322 = vadd.f32 %v6618, %v6854
        %v7323 = vadd.f32 %v6619, %v6857
        %v7324 = vadd.f32 %v6620, %v6862
        %v7325 = vadd.f32 %v6621, %v6865
        %v7326 = vadd.f32 %v6622, %v6870
        %v7327 = vadd.f32 %v6623, %v6873
        %v7328 = vadd.f32 %v6624, %v6878
        %v7329 = vadd.f32 %v6625, %v6881
        %v7330 = vadd.f32 %v6626, %v6886
        %v7331 = vadd.f32 %v6627, %v6889
        %v7332 = vadd.f32 %v6628, %v6894
        %v7333 = vadd.f32 %v6629, %v6897
        %v7334 = vadd.f32 %v6630, %v6902
        %v7335 = vadd.f32 %v6631, %v6905
        %v7336 = vadd.f32 %v6632, %v6910
        %v7337 = vadd.f32 %v6633, %v6913
        %v7338 = vadd.f32 %v6634, %v6918
        %v7339 = vadd.f32 %v6635, %v6921
        %v7340 = vadd.f32 %v6636, %v6926
        %v7341 = vadd.f32 %v6637, %v6929
        %v7342 = vadd.f32 %v6638, %v6934
        %v7343 = vadd.f32 %v6639, %v6937
        %v7344 = vadd.f32 %v6640, %v6942
        %v7345 = vadd.f32 %v6641, %v6945
        %v7346 = vadd.f32 %v6642, %v6950
        %v7347 = vadd.f32 %v6643, %v6953
        %v7348 = vadd.f32 %v6644, %v6958
        %v7349 = vadd.f32 %v6645, %v6961
        %v7350 = vadd.f32 %v6646, %v6966
        %v7351 = vadd.f32 %v6647, %v6969
        %v7352 = vadd.f32 %v6648, %v6974
        %v7353 = vadd.f32 %v6649, %v6977
        %v7354 = vadd.f32 %v6650, %v6982
        %v7355 = vadd.f32 %v6651, %v6985
        %v7356 = vadd.f32 %v6652, %v6990
        %v7357 = vadd.f32 %v6653, %v6993
        %v7358 = vadd.f32 %v6654, %v6998
        %v7359 = vadd.f32 %v6655, %v7001
        %v7360 = vadd.f32 %v6656, %v7006
        %v7361 = vadd.f32 %v6657, %v7009
        %v7362 = vadd.f32 %v6658, %v7014
        %v7363 = vadd.f32 %v6659, %v7017
        %v7364 = vadd.f32 %v6660, %v7022
        %v7365 = vadd.f32 %v6661, %v7025
        %v7366 = vadd.f32 %v6662, %v7030
        %v7367 = vadd.f32 %v6663, %v7033
        %v7368 = vadd.f32 %v6664, %v7038
        %v7369 = vadd.f32 %v6665, %v7041
        %v7370 = vadd.f32 %v6666, %v7046
        %v7371 = vadd.f32 %v6667, %v7049
        %v7372 = vadd.f32 %v6668, %v7054
        %v7373 = vadd.f32 %v6669, %v7057
        %v7374 = vadd.f32 %v6670, %v7062
        %v7375 = vadd.f32 %v6671, %v7065
        %v7376 = vadd.f32 %v6672, %v7070
        %v7377 = vadd.f32 %v6673, %v7073
        %v7378 = vadd.f32 %v6674, %v7078
        %v7379 = vadd.f32 %v6675, %v7081
        %v7380 = vadd.f32 %v6676, %v7086
        %v7381 = vadd.f32 %v6677, %v7089
        %v7382 = vadd.f32 %v6678, %v7094
        %v7383 = vadd.f32 %v6679, %v7097
        %v7384 = vadd.f32 %v6680, %v7102
        %v7385 = vadd.f32 %v6681, %v7105
        %v7386 = vadd.f32 %v6682, %v7110
        %v7387 = vadd.f32 %v6683, %v7113
        %v7388 = vadd.f32 %v6684, %v7118
        %v7389 = vadd.f32 %v6685, %v7121
        %v7390 = vadd.f32 %v6686, %v7126
        %v7391 = vadd.f32 %v6687, %v7129
        %v7392 = vadd.f32 %v6688, %v7134
        %v7393 = vadd.f32 %v6689, %v7137
        %v7394 = vadd.f32 %v6690, %v7142
        %v7395 = vadd.f32 %v6691, %v7145
        %v7396 = vadd.f32 %v6692, %v7150
        %v7397 = vadd.f32 %v6693, %v7153
        %v7398 = vadd.f32 %v6694, %v7158
        %v7399 = vadd.f32 %v6695, %v7161
        %v7400 = vadd.f32 %v6696, %v7166
        %v7401 = vadd.f32 %v6697, %v7169
        %v7402 = vadd.f32 %v6698, %v7174
        %v7403 = vadd.f32 %v6699, %v7177
        %v7404 = vadd.f32 %v6700, %v7182
        %v7405 = vadd.f32 %v6701, %v7185
        %v7406 = vadd.f32 %v6702, %v7190
        %v7407 = vadd.f32 %v6703, %v7193
        %v7408 = vadd.f32 %v6704, %v7198
        %v7409 = vadd.f32 %v6705, %v7201
        %v7410 = vadd.f32 %v6706, %v7206
        %v7411 = vadd.f32 %v6707, %v7209
        %v7412 = vadd.f32 %v6708, %v7214
        %v7413 = vadd.f32 %v6709, %v7217
        %v7414 = vadd.f32 %v6710, %v7222
        %v7415 = vadd.f32 %v6711, %v7225
        %v7416 = vadd.f32 %v6712, %v7230
        %v7417 = vadd.f32 %v6713, %v7233
        %v7418 = vadd.f32 %v6714, %v7238
        %v7419 = vadd.f32 %v6715, %v7241
        %v7420 = vadd.f32 %v6716, %v7246
        %v7421 = vadd.f32 %v6717, %v7249
        %v7422 = vadd.f32 %v6718, %v7254
        %v7423 = vadd.f32 %v6719, %v7257
        %v7424 = vadd.f32 %v6720, %v7262
        %v7425 = vadd.f32 %v6721, %v7265
        %v7426 = vadd.f32 %v6722, %v7270
        %v7427 = vadd.f32 %v6723, %v7273
        %v7428 = vadd.f32 %v6724, %v7278
        %v7429 = vadd.f32 %v6725, %v7281
        %v7430 = vadd.f32 %v6726, %v7286
        %v7431 = vadd.f32 %v6727, %v7289
        %v7432 = vadd.f32 %v6728, %v7294
        %v7433 = vadd.f32 %v6729, %v7297
        %v7434 = vadd.f32 %v6730, %v7302
        %v7435 = vadd.f32 %v6731, %v7305
        %s7436 = scalar_lea.vmem %s208, 12
        %v7437 = vld [vmem:[%s7436] sm:$0x3]
        %v7442 = vunpack.c.l.b16 %v375
        %v7443 = vunpack.c.l.b16 %v376
        %v7444 = vunpack.c.l.b16 %v377
        %v7445 = vunpack.c.l.b16 %v378
        %v7446 = vpack.c.b16 %v7443, %v7442
        %v7447 = vpack.c.b16 %v7445, %v7444
        %v7449 = vsel %vm1986, %v7446, 0
        %v7452 = vsel %vm1986, %v7447, 0
        %v7455 = vand.u32 %v7437, %v2182
        %7457 = vmatprep.subr.bf16.mxu0 0
        %7458 = vmatpush1.bf16.msra.mxu0 %v7455
        %7459 = vmatprep.subr.bf16.mxu0 0
        %7460 = vmatpush1.bf16.msra.mxu0 0
        %7461 = vmatprep.subr.bf16.mxu0 0
        %7462 = vmatpush1.bf16.msra.mxu0 0
        %7463 = vmatprep.subr.bf16.mxu0 0
        %7464 = vmatpush1.bf16.msra.mxu0 0
        %7465 = vmatprep.subr.bf16.mxu0 0
        %7466 = vmatpush1.bf16.msra.mxu0 0
        %7467 = vmatprep.subr.bf16.mxu0 0
        %7468 = vmatpush1.bf16.msra.mxu0 0
        %7469 = vmatprep.subr.bf16.mxu0 0
        %7470 = vmatpush1.bf16.msra.mxu0 0
        %7471 = vmatprep.subr.bf16.mxu0 0
        %7472 = vmatpush1.bf16.msra.mxu0 0
        %7473 = vmatprep.subr.bf16.mxu0 0
        %7474 = vmatpush1.bf16.msra.mxu0 0
        %7475 = vmatprep.subr.bf16.mxu0 0
        %7476 = vmatpush1.bf16.msra.mxu0 0
        %7477 = vmatprep.subr.bf16.mxu0 0
        %7478 = vmatpush1.bf16.msra.mxu0 0
        %7479 = vmatprep.subr.bf16.mxu0 0
        %7480 = vmatpush1.bf16.msra.mxu0 0
        %7481 = vmatprep.subr.bf16.mxu0 0
        %7482 = vmatpush1.bf16.msra.mxu0 0
        %7483 = vmatprep.subr.bf16.mxu0 0
        %7484 = vmatpush1.bf16.msra.mxu0 0
        %7485 = vmatprep.subr.bf16.mxu0 0
        %7486 = vmatpush1.bf16.msra.mxu0 0
        %7487 = vmatprep.subr.bf16.mxu0 0
        %7488 = vmatpush1.bf16.msra.mxu0 0
        %7489 = vmatprep.mubr.bf16.mxu0 0
        %7490 = vmatmul.mubr.bf16.gmra.mrb[0].mxu0 %v3064
        %v7491 = vpop.f32.mrb[0].mxu0
        %v7492 = vadd.f32 0.0, %v7491
        %v7493 = vpop.f32.mrb[0].mxu0
        %v7494 = vpop.f32.mrb[0].mxu0
        %v7495 = vadd.f32 0.0, %v7494
        %v7496 = vpop.f32.mrb[0].mxu0
        %7497 = vmatprep.mubr.bf16.mxu0 0
        %7498 = vmatmul.mubr.bf16.gmra.mrb[0].mxu0 %v3067
        %v7499 = vpop.f32.mrb[0].mxu0
        %v7500 = vadd.f32 0.0, %v7499
        %v7501 = vpop.f32.mrb[0].mxu0
        %v7502 = vpop.f32.mrb[0].mxu0
        %v7503 = vadd.f32 0.0, %v7502
        %v7504 = vpop.f32.mrb[0].mxu0
        %7505 = vmatprep.mubr.bf16.mxu0 0
        %7506 = vmatmul.mubr.bf16.gmra.mrb[0].mxu0 %v3070
        %v7507 = vpop.f32.mrb[0].mxu0
        %v7508 = vadd.f32 0.0, %v7507
        %v7509 = vpop.f32.mrb[0].mxu0
        %v7510 = vpop.f32.mrb[0].mxu0
        %v7511 = vadd.f32 0.0, %v7510
        %v7512 = vpop.f32.mrb[0].mxu0
        %7513 = vmatprep.mubr.bf16.mxu0 0
        %7514 = vmatmul.mubr.bf16.gmra.mrb[0].mxu0 %v3073
        %v7515 = vpop.f32.mrb[0].mxu0
        %v7516 = vadd.f32 0.0, %v7515
        %v7517 = vpop.f32.mrb[0].mxu0
        %v7518 = vpop.f32.mrb[0].mxu0
        %v7519 = vadd.f32 0.0, %v7518
        %v7520 = vpop.f32.mrb[0].mxu0
        %7521 = vmatprep.mubr.bf16.mxu0 0
        %7522 = vmatmul.mubr.bf16.gmra.mrb[0].mxu0 %v3076
        %v7523 = vpop.f32.mrb[0].mxu0
        %v7524 = vadd.f32 0.0, %v7523
        %v7525 = vpop.f32.mrb[0].mxu0
        %v7526 = vpop.f32.mrb[0].mxu0
        %v7527 = vadd.f32 0.0, %v7526
        %v7528 = vpop.f32.mrb[0].mxu0
        %7529 = vmatprep.mubr.bf16.mxu0 0
        %7530 = vmatmul.mubr.bf16.gmra.mrb[0].mxu0 %v3079
        %v7531 = vpop.f32.mrb[0].mxu0
        %v7532 = vadd.f32 0.0, %v7531
        %v7533 = vpop.f32.mrb[0].mxu0
        %v7534 = vpop.f32.mrb[0].mxu0
        %v7535 = vadd.f32 0.0, %v7534
        %v7536 = vpop.f32.mrb[0].mxu0
        %7537 = vmatprep.mubr.bf16.mxu0 0
        %7538 = vmatmul.mubr.bf16.gmra.mrb[0].mxu0 %v3082
        %v7539 = vpop.f32.mrb[0].mxu0
        %v7540 = vadd.f32 0.0, %v7539
        %v7541 = vpop.f32.mrb[0].mxu0
        %v7542 = vpop.f32.mrb[0].mxu0
        %v7543 = vadd.f32 0.0, %v7542
        %v7544 = vpop.f32.mrb[0].mxu0
        %7545 = vmatprep.mubr.bf16.mxu0 0
        %7546 = vmatmul.mubr.bf16.gmra.mrb[0].mxu0 %v3085
        %v7547 = vpop.f32.mrb[0].mxu0
        %v7548 = vadd.f32 0.0, %v7547
        %v7549 = vpop.f32.mrb[0].mxu0
        %v7550 = vpop.f32.mrb[0].mxu0
        %v7551 = vadd.f32 0.0, %v7550
        %v7552 = vpop.f32.mrb[0].mxu0
        %7553 = vmatprep.mubr.bf16.mxu0 0
        %7554 = vmatmul.mubr.bf16.gmra.mrb[0].mxu0 %v3088
        %v7555 = vpop.f32.mrb[0].mxu0
        %v7556 = vadd.f32 0.0, %v7555
        %v7557 = vpop.f32.mrb[0].mxu0
        %v7558 = vpop.f32.mrb[0].mxu0
        %v7559 = vadd.f32 0.0, %v7558
        %v7560 = vpop.f32.mrb[0].mxu0
        %7561 = vmatprep.mubr.bf16.mxu0 0
        %7562 = vmatmul.mubr.bf16.gmra.mrb[0].mxu0 %v3091
        %v7563 = vpop.f32.mrb[0].mxu0
        %v7564 = vadd.f32 0.0, %v7563
        %v7565 = vpop.f32.mrb[0].mxu0
        %v7566 = vpop.f32.mrb[0].mxu0
        %v7567 = vadd.f32 0.0, %v7566
        %v7568 = vpop.f32.mrb[0].mxu0
        %7569 = vmatprep.mubr.bf16.mxu0 0
        %7570 = vmatmul.mubr.bf16.gmra.mrb[0].mxu0 %v3094
        %v7571 = vpop.f32.mrb[0].mxu0
        %v7572 = vadd.f32 0.0, %v7571
        %v7573 = vpop.f32.mrb[0].mxu0
        %v7574 = vpop.f32.mrb[0].mxu0
        %v7575 = vadd.f32 0.0, %v7574
        %v7576 = vpop.f32.mrb[0].mxu0
        %7577 = vmatprep.mubr.bf16.mxu0 0
        %7578 = vmatmul.mubr.bf16.gmra.mrb[0].mxu0 %v3097
        %v7579 = vpop.f32.mrb[0].mxu0
        %v7580 = vadd.f32 0.0, %v7579
        %v7581 = vpop.f32.mrb[0].mxu0
        %v7582 = vpop.f32.mrb[0].mxu0
        %v7583 = vadd.f32 0.0, %v7582
        %v7584 = vpop.f32.mrb[0].mxu0
        %7585 = vmatprep.mubr.bf16.mxu0 0
        %7586 = vmatmul.mubr.bf16.gmra.mrb[0].mxu0 %v3100
        %v7587 = vpop.f32.mrb[0].mxu0
        %v7588 = vadd.f32 0.0, %v7587
        %v7589 = vpop.f32.mrb[0].mxu0
        %v7590 = vpop.f32.mrb[0].mxu0
        %v7591 = vadd.f32 0.0, %v7590
        %v7592 = vpop.f32.mrb[0].mxu0
        %7593 = vmatprep.mubr.bf16.mxu0 0
        %7594 = vmatmul.mubr.bf16.gmra.mrb[0].mxu0 %v3103
        %v7595 = vpop.f32.mrb[0].mxu0
        %v7596 = vadd.f32 0.0, %v7595
        %v7597 = vpop.f32.mrb[0].mxu0
        %v7598 = vpop.f32.mrb[0].mxu0
        %v7599 = vadd.f32 0.0, %v7598
        %v7600 = vpop.f32.mrb[0].mxu0
        %7601 = vmatprep.mubr.bf16.mxu0 0
        %7602 = vmatmul.mubr.bf16.gmra.mrb[0].mxu0 %v3106
        %v7603 = vpop.f32.mrb[0].mxu0
        %v7604 = vadd.f32 0.0, %v7603
        %v7605 = vpop.f32.mrb[0].mxu0
        %v7606 = vpop.f32.mrb[0].mxu0
        %v7607 = vadd.f32 0.0, %v7606
        %v7608 = vpop.f32.mrb[0].mxu0
        %7609 = vmatprep.mubr.bf16.mxu0 0
        %7610 = vmatmul.mubr.bf16.gmra.mrb[0].mxu0 %v3109
        %v7611 = vpop.f32.mrb[0].mxu0
        %v7612 = vadd.f32 0.0, %v7611
        %v7613 = vpop.f32.mrb[0].mxu0
        %v7614 = vpop.f32.mrb[0].mxu0
        %v7615 = vadd.f32 0.0, %v7614
        %v7616 = vpop.f32.mrb[0].mxu0
        %7617 = vmatprep.mubr.bf16.mxu0 0
        %7618 = vmatmul.mubr.bf16.gmra.mrb[0].mxu0 %v3112
        %v7619 = vpop.f32.mrb[0].mxu0
        %v7620 = vadd.f32 0.0, %v7619
        %v7621 = vpop.f32.mrb[0].mxu0
        %v7622 = vpop.f32.mrb[0].mxu0
        %v7623 = vadd.f32 0.0, %v7622
        %v7624 = vpop.f32.mrb[0].mxu0
        %7625 = vmatprep.mubr.bf16.mxu0 0
        %7626 = vmatmul.mubr.bf16.gmra.mrb[0].mxu0 %v3115
        %v7627 = vpop.f32.mrb[0].mxu0
        %v7628 = vadd.f32 0.0, %v7627
        %v7629 = vpop.f32.mrb[0].mxu0
        %v7630 = vpop.f32.mrb[0].mxu0
        %v7631 = vadd.f32 0.0, %v7630
        %v7632 = vpop.f32.mrb[0].mxu0
        %7633 = vmatprep.mubr.bf16.mxu0 0
        %7634 = vmatmul.mubr.bf16.gmra.mrb[0].mxu0 %v3118
        %v7635 = vpop.f32.mrb[0].mxu0
        %v7636 = vadd.f32 0.0, %v7635
        %v7637 = vpop.f32.mrb[0].mxu0
        %v7638 = vpop.f32.mrb[0].mxu0
        %v7639 = vadd.f32 0.0, %v7638
        %v7640 = vpop.f32.mrb[0].mxu0
        %7641 = vmatprep.mubr.bf16.mxu0 0
        %7642 = vmatmul.mubr.bf16.gmra.mrb[0].mxu0 %v3121
        %v7643 = vpop.f32.mrb[0].mxu0
        %v7644 = vadd.f32 0.0, %v7643
        %v7645 = vpop.f32.mrb[0].mxu0
        %v7646 = vpop.f32.mrb[0].mxu0
        %v7647 = vadd.f32 0.0, %v7646
        %v7648 = vpop.f32.mrb[0].mxu0
        %7649 = vmatprep.mubr.bf16.mxu0 0
        %7650 = vmatmul.mubr.bf16.gmra.mrb[0].mxu0 %v3124
        %v7651 = vpop.f32.mrb[0].mxu0
        %v7652 = vadd.f32 0.0, %v7651
        %v7653 = vpop.f32.mrb[0].mxu0
        %v7654 = vpop.f32.mrb[0].mxu0
        %v7655 = vadd.f32 0.0, %v7654
        %v7656 = vpop.f32.mrb[0].mxu0
        %7657 = vmatprep.mubr.bf16.mxu0 0
        %7658 = vmatmul.mubr.bf16.gmra.mrb[0].mxu0 %v3127
        %v7659 = vpop.f32.mrb[0].mxu0
        %v7660 = vadd.f32 0.0, %v7659
        %v7661 = vpop.f32.mrb[0].mxu0
        %v7662 = vpop.f32.mrb[0].mxu0
        %v7663 = vadd.f32 0.0, %v7662
        %v7664 = vpop.f32.mrb[0].mxu0
        %7665 = vmatprep.mubr.bf16.mxu0 0
        %7666 = vmatmul.mubr.bf16.gmra.mrb[0].mxu0 %v3130
        %v7667 = vpop.f32.mrb[0].mxu0
        %v7668 = vadd.f32 0.0, %v7667
        %v7669 = vpop.f32.mrb[0].mxu0
        %v7670 = vpop.f32.mrb[0].mxu0
        %v7671 = vadd.f32 0.0, %v7670
        %v7672 = vpop.f32.mrb[0].mxu0
        %7673 = vmatprep.mubr.bf16.mxu0 0
        %7674 = vmatmul.mubr.bf16.gmra.mrb[0].mxu0 %v3133
        %v7675 = vpop.f32.mrb[0].mxu0
        %v7676 = vadd.f32 0.0, %v7675
        %v7677 = vpop.f32.mrb[0].mxu0
        %v7678 = vpop.f32.mrb[0].mxu0
        %v7679 = vadd.f32 0.0, %v7678
        %v7680 = vpop.f32.mrb[0].mxu0
        %7681 = vmatprep.mubr.bf16.mxu0 0
        %7682 = vmatmul.mubr.bf16.gmra.mrb[0].mxu0 %v3136
        %v7683 = vpop.f32.mrb[0].mxu0
        %v7684 = vadd.f32 0.0, %v7683
        %v7685 = vpop.f32.mrb[0].mxu0
        %v7686 = vpop.f32.mrb[0].mxu0
        %v7687 = vadd.f32 0.0, %v7686
        %v7688 = vpop.f32.mrb[0].mxu0
        %7689 = vmatprep.mubr.bf16.mxu0 0
        %7690 = vmatmul.mubr.bf16.gmra.mrb[0].mxu0 %v3139
        %v7691 = vpop.f32.mrb[0].mxu0
        %v7692 = vadd.f32 0.0, %v7691
        %v7693 = vpop.f32.mrb[0].mxu0
        %v7694 = vpop.f32.mrb[0].mxu0
        %v7695 = vadd.f32 0.0, %v7694
        %v7696 = vpop.f32.mrb[0].mxu0
        %7697 = vmatprep.mubr.bf16.mxu0 0
        %7698 = vmatmul.mubr.bf16.gmra.mrb[0].mxu0 %v3142
        %v7699 = vpop.f32.mrb[0].mxu0
        %v7700 = vadd.f32 0.0, %v7699
        %v7701 = vpop.f32.mrb[0].mxu0
        %v7702 = vpop.f32.mrb[0].mxu0
        %v7703 = vadd.f32 0.0, %v7702
        %v7704 = vpop.f32.mrb[0].mxu0
        %7705 = vmatprep.mubr.bf16.mxu0 0
        %7706 = vmatmul.mubr.bf16.gmra.mrb[0].mxu0 %v3145
        %v7707 = vpop.f32.mrb[0].mxu0
        %v7708 = vadd.f32 0.0, %v7707
        %v7709 = vpop.f32.mrb[0].mxu0
        %v7710 = vpop.f32.mrb[0].mxu0
        %v7711 = vadd.f32 0.0, %v7710
        %v7712 = vpop.f32.mrb[0].mxu0
        %7713 = vmatprep.mubr.bf16.mxu0 0
        %7714 = vmatmul.mubr.bf16.gmra.mrb[0].mxu0 %v3148
        %v7715 = vpop.f32.mrb[0].mxu0
        %v7716 = vadd.f32 0.0, %v7715
        %v7717 = vpop.f32.mrb[0].mxu0
        %v7718 = vpop.f32.mrb[0].mxu0
        %v7719 = vadd.f32 0.0, %v7718
        %v7720 = vpop.f32.mrb[0].mxu0
        %7721 = vmatprep.mubr.bf16.mxu0 0
        %7722 = vmatmul.mubr.bf16.gmra.mrb[0].mxu0 %v3151
        %v7723 = vpop.f32.mrb[0].mxu0
        %v7724 = vadd.f32 0.0, %v7723
        %v7725 = vpop.f32.mrb[0].mxu0
        %v7726 = vpop.f32.mrb[0].mxu0
        %v7727 = vadd.f32 0.0, %v7726
        %v7728 = vpop.f32.mrb[0].mxu0
        %7729 = vmatprep.mubr.bf16.mxu0 0
        %7730 = vmatmul.mubr.bf16.gmra.mrb[0].mxu0 %v3154
        %v7731 = vpop.f32.mrb[0].mxu0
        %v7732 = vadd.f32 0.0, %v7731
        %v7733 = vpop.f32.mrb[0].mxu0
        %v7734 = vpop.f32.mrb[0].mxu0
        %v7735 = vadd.f32 0.0, %v7734
        %v7736 = vpop.f32.mrb[0].mxu0
        %7737 = vmatprep.mubr.bf16.mxu0 0
        %7738 = vmatmul.mubr.bf16.gmra.mrb[0].mxu0 %v3157
        %v7739 = vpop.f32.mrb[0].mxu0
        %v7740 = vadd.f32 0.0, %v7739
        %v7741 = vpop.f32.mrb[0].mxu0
        %v7742 = vpop.f32.mrb[0].mxu0
        %v7743 = vadd.f32 0.0, %v7742
        %v7744 = vpop.f32.mrb[0].mxu0
        %7745 = vmatprep.mubr.bf16.mxu0 0
        %7746 = vmatmul.mubr.bf16.gmra.mrb[0].mxu0 %v3160
        %v7747 = vpop.f32.mrb[0].mxu0
        %v7748 = vadd.f32 0.0, %v7747
        %v7749 = vpop.f32.mrb[0].mxu0
        %v7750 = vpop.f32.mrb[0].mxu0
        %v7751 = vadd.f32 0.0, %v7750
        %v7752 = vpop.f32.mrb[0].mxu0
        %7753 = vmatprep.mubr.bf16.mxu0 0
        %7754 = vmatmul.mubr.bf16.gmra.mrb[0].mxu0 %v3163
        %v7755 = vpop.f32.mrb[0].mxu0
        %v7756 = vadd.f32 0.0, %v7755
        %v7757 = vpop.f32.mrb[0].mxu0
        %v7758 = vpop.f32.mrb[0].mxu0
        %v7759 = vadd.f32 0.0, %v7758
        %v7760 = vpop.f32.mrb[0].mxu0
        %7761 = vmatprep.mubr.bf16.mxu0 0
        %7762 = vmatmul.mubr.bf16.gmra.mrb[0].mxu0 %v3166
        %v7763 = vpop.f32.mrb[0].mxu0
        %v7764 = vadd.f32 0.0, %v7763
        %v7765 = vpop.f32.mrb[0].mxu0
        %v7766 = vpop.f32.mrb[0].mxu0
        %v7767 = vadd.f32 0.0, %v7766
        %v7768 = vpop.f32.mrb[0].mxu0
        %7769 = vmatprep.mubr.bf16.mxu0 0
        %7770 = vmatmul.mubr.bf16.gmra.mrb[0].mxu0 %v3169
        %v7771 = vpop.f32.mrb[0].mxu0
        %v7772 = vadd.f32 0.0, %v7771
        %v7773 = vpop.f32.mrb[0].mxu0
        %v7774 = vpop.f32.mrb[0].mxu0
        %v7775 = vadd.f32 0.0, %v7774
        %v7776 = vpop.f32.mrb[0].mxu0
        %7777 = vmatprep.mubr.bf16.mxu0 0
        %7778 = vmatmul.mubr.bf16.gmra.mrb[0].mxu0 %v3172
        %v7779 = vpop.f32.mrb[0].mxu0
        %v7780 = vadd.f32 0.0, %v7779
        %v7781 = vpop.f32.mrb[0].mxu0
        %v7782 = vpop.f32.mrb[0].mxu0
        %v7783 = vadd.f32 0.0, %v7782
        %v7784 = vpop.f32.mrb[0].mxu0
        %7785 = vmatprep.mubr.bf16.mxu0 0
        %7786 = vmatmul.mubr.bf16.gmra.mrb[0].mxu0 %v3175
        %v7787 = vpop.f32.mrb[0].mxu0
        %v7788 = vadd.f32 0.0, %v7787
        %v7789 = vpop.f32.mrb[0].mxu0
        %v7790 = vpop.f32.mrb[0].mxu0
        %v7791 = vadd.f32 0.0, %v7790
        %v7792 = vpop.f32.mrb[0].mxu0
        %7793 = vmatprep.mubr.bf16.mxu0 0
        %7794 = vmatmul.mubr.bf16.gmra.mrb[0].mxu0 %v3178
        %v7795 = vpop.f32.mrb[0].mxu0
        %v7796 = vadd.f32 0.0, %v7795
        %v7797 = vpop.f32.mrb[0].mxu0
        %v7798 = vpop.f32.mrb[0].mxu0
        %v7799 = vadd.f32 0.0, %v7798
        %v7800 = vpop.f32.mrb[0].mxu0
        %7801 = vmatprep.mubr.bf16.mxu0 0
        %7802 = vmatmul.mubr.bf16.gmra.mrb[0].mxu0 %v3181
        %v7803 = vpop.f32.mrb[0].mxu0
        %v7804 = vadd.f32 0.0, %v7803
        %v7805 = vpop.f32.mrb[0].mxu0
        %v7806 = vpop.f32.mrb[0].mxu0
        %v7807 = vadd.f32 0.0, %v7806
        %v7808 = vpop.f32.mrb[0].mxu0
        %7809 = vmatprep.mubr.bf16.mxu0 0
        %7810 = vmatmul.mubr.bf16.gmra.mrb[0].mxu0 %v3184
        %v7811 = vpop.f32.mrb[0].mxu0
        %v7812 = vadd.f32 0.0, %v7811
        %v7813 = vpop.f32.mrb[0].mxu0
        %v7814 = vpop.f32.mrb[0].mxu0
        %v7815 = vadd.f32 0.0, %v7814
        %v7816 = vpop.f32.mrb[0].mxu0
        %7817 = vmatprep.mubr.bf16.mxu0 0
        %7818 = vmatmul.mubr.bf16.gmra.mrb[0].mxu0 %v3187
        %v7819 = vpop.f32.mrb[0].mxu0
        %v7820 = vadd.f32 0.0, %v7819
        %v7821 = vpop.f32.mrb[0].mxu0
        %v7822 = vpop.f32.mrb[0].mxu0
        %v7823 = vadd.f32 0.0, %v7822
        %v7824 = vpop.f32.mrb[0].mxu0
        %7825 = vmatprep.mubr.bf16.mxu0 0
        %7826 = vmatmul.mubr.bf16.gmra.mrb[0].mxu0 %v3190
        %v7827 = vpop.f32.mrb[0].mxu0
        %v7828 = vadd.f32 0.0, %v7827
        %v7829 = vpop.f32.mrb[0].mxu0
        %v7830 = vpop.f32.mrb[0].mxu0
        %v7831 = vadd.f32 0.0, %v7830
        %v7832 = vpop.f32.mrb[0].mxu0
        %7833 = vmatprep.mubr.bf16.mxu0 0
        %7834 = vmatmul.mubr.bf16.gmra.mrb[0].mxu0 %v3193
        %v7835 = vpop.f32.mrb[0].mxu0
        %v7836 = vadd.f32 0.0, %v7835
        %v7837 = vpop.f32.mrb[0].mxu0
        %v7838 = vpop.f32.mrb[0].mxu0
        %v7839 = vadd.f32 0.0, %v7838
        %v7840 = vpop.f32.mrb[0].mxu0
        %7841 = vmatprep.mubr.bf16.mxu0 0
        %7842 = vmatmul.mubr.bf16.gmra.mrb[0].mxu0 %v3196
        %v7843 = vpop.f32.mrb[0].mxu0
        %v7844 = vadd.f32 0.0, %v7843
        %v7845 = vpop.f32.mrb[0].mxu0
        %v7846 = vpop.f32.mrb[0].mxu0
        %v7847 = vadd.f32 0.0, %v7846
        %v7848 = vpop.f32.mrb[0].mxu0
        %7849 = vmatprep.mubr.bf16.mxu0 0
        %7850 = vmatmul.mubr.bf16.gmra.mrb[0].mxu0 %v3199
        %v7851 = vpop.f32.mrb[0].mxu0
        %v7852 = vadd.f32 0.0, %v7851
        %v7853 = vpop.f32.mrb[0].mxu0
        %v7854 = vpop.f32.mrb[0].mxu0
        %v7855 = vadd.f32 0.0, %v7854
        %v7856 = vpop.f32.mrb[0].mxu0
        %7857 = vmatprep.mubr.bf16.mxu0 0
        %7858 = vmatmul.mubr.bf16.gmra.mrb[0].mxu0 %v3202
        %v7859 = vpop.f32.mrb[0].mxu0
        %v7860 = vadd.f32 0.0, %v7859
        %v7861 = vpop.f32.mrb[0].mxu0
        %v7862 = vpop.f32.mrb[0].mxu0
        %v7863 = vadd.f32 0.0, %v7862
        %v7864 = vpop.f32.mrb[0].mxu0
        %7865 = vmatprep.mubr.bf16.mxu0 0
        %7866 = vmatmul.mubr.bf16.gmra.mrb[0].mxu0 %v3205
        %v7867 = vpop.f32.mrb[0].mxu0
        %v7868 = vadd.f32 0.0, %v7867
        %v7869 = vpop.f32.mrb[0].mxu0
        %v7870 = vpop.f32.mrb[0].mxu0
        %v7871 = vadd.f32 0.0, %v7870
        %v7872 = vpop.f32.mrb[0].mxu0
        %7873 = vmatprep.mubr.bf16.mxu0 0
        %7874 = vmatmul.mubr.bf16.gmra.mrb[0].mxu0 %v3208
        %v7875 = vpop.f32.mrb[0].mxu0
        %v7876 = vadd.f32 0.0, %v7875
        %v7877 = vpop.f32.mrb[0].mxu0
        %v7878 = vpop.f32.mrb[0].mxu0
        %v7879 = vadd.f32 0.0, %v7878
        %v7880 = vpop.f32.mrb[0].mxu0
        %7881 = vmatprep.mubr.bf16.mxu0 0
        %7882 = vmatmul.mubr.bf16.gmra.mrb[0].mxu0 %v3211
        %v7883 = vpop.f32.mrb[0].mxu0
        %v7884 = vadd.f32 0.0, %v7883
        %v7885 = vpop.f32.mrb[0].mxu0
        %v7886 = vpop.f32.mrb[0].mxu0
        %v7887 = vadd.f32 0.0, %v7886
        %v7888 = vpop.f32.mrb[0].mxu0
        %7889 = vmatprep.mubr.bf16.mxu0 0
        %7890 = vmatmul.mubr.bf16.gmra.mrb[0].mxu0 %v3214
        %v7891 = vpop.f32.mrb[0].mxu0
        %v7892 = vadd.f32 0.0, %v7891
        %v7893 = vpop.f32.mrb[0].mxu0
        %v7894 = vpop.f32.mrb[0].mxu0
        %v7895 = vadd.f32 0.0, %v7894
        %v7896 = vpop.f32.mrb[0].mxu0
        %7897 = vmatprep.mubr.bf16.mxu0 0
        %7898 = vmatmul.mubr.bf16.gmra.mrb[0].mxu0 %v3217
        %v7899 = vpop.f32.mrb[0].mxu0
        %v7900 = vadd.f32 0.0, %v7899
        %v7901 = vpop.f32.mrb[0].mxu0
        %v7902 = vpop.f32.mrb[0].mxu0
        %v7903 = vadd.f32 0.0, %v7902
        %v7904 = vpop.f32.mrb[0].mxu0
        %7905 = vmatprep.mubr.bf16.mxu0 0
        %7906 = vmatmul.mubr.bf16.gmra.mrb[0].mxu0 %v3220
        %v7907 = vpop.f32.mrb[0].mxu0
        %v7908 = vadd.f32 0.0, %v7907
        %v7909 = vpop.f32.mrb[0].mxu0
        %v7910 = vpop.f32.mrb[0].mxu0
        %v7911 = vadd.f32 0.0, %v7910
        %v7912 = vpop.f32.mrb[0].mxu0
        %7913 = vmatprep.mubr.bf16.mxu0 0
        %7914 = vmatmul.mubr.bf16.gmra.mrb[0].mxu0 %v3223
        %v7915 = vpop.f32.mrb[0].mxu0
        %v7916 = vadd.f32 0.0, %v7915
        %v7917 = vpop.f32.mrb[0].mxu0
        %v7918 = vpop.f32.mrb[0].mxu0
        %v7919 = vadd.f32 0.0, %v7918
        %v7920 = vpop.f32.mrb[0].mxu0
        %7921 = vmatprep.mubr.bf16.mxu0 0
        %7922 = vmatmul.mubr.bf16.gmra.mrb[0].mxu0 %v3226
        %v7923 = vpop.f32.mrb[0].mxu0
        %v7924 = vadd.f32 0.0, %v7923
        %v7925 = vpop.f32.mrb[0].mxu0
        %v7926 = vpop.f32.mrb[0].mxu0
        %v7927 = vadd.f32 0.0, %v7926
        %v7928 = vpop.f32.mrb[0].mxu0
        %7929 = vmatprep.mubr.bf16.mxu0 0
        %7930 = vmatmul.mubr.bf16.gmra.mrb[0].mxu0 %v3229
        %v7931 = vpop.f32.mrb[0].mxu0
        %v7932 = vadd.f32 0.0, %v7931
        %v7933 = vpop.f32.mrb[0].mxu0
        %v7934 = vpop.f32.mrb[0].mxu0
        %v7935 = vadd.f32 0.0, %v7934
        %v7936 = vpop.f32.mrb[0].mxu0
        %7937 = vmatprep.mubr.bf16.mxu0 0
        %7938 = vmatmul.mubr.bf16.gmra.mrb[0].mxu0 %v3232
        %v7939 = vpop.f32.mrb[0].mxu0
        %v7940 = vadd.f32 0.0, %v7939
        %v7941 = vpop.f32.mrb[0].mxu0
        %v7942 = vpop.f32.mrb[0].mxu0
        %v7943 = vadd.f32 0.0, %v7942
        %v7944 = vpop.f32.mrb[0].mxu0
        %7945 = vmatprep.mubr.bf16.mxu0 0
        %7946 = vmatmul.mubr.bf16.gmra.mrb[0].mxu0 %v3235
        %v7947 = vpop.f32.mrb[0].mxu0
        %v7948 = vadd.f32 0.0, %v7947
        %v7949 = vpop.f32.mrb[0].mxu0
        %v7950 = vpop.f32.mrb[0].mxu0
        %v7951 = vadd.f32 0.0, %v7950
        %v7952 = vpop.f32.mrb[0].mxu0
        %7953 = vmatprep.mubr.bf16.mxu0 0
        %7954 = vmatmul.mubr.bf16.gmra.mrb[0].mxu0 %v3238
        %v7955 = vpop.f32.mrb[0].mxu0
        %v7956 = vadd.f32 0.0, %v7955
        %v7957 = vpop.f32.mrb[0].mxu0
        %v7958 = vpop.f32.mrb[0].mxu0
        %v7959 = vadd.f32 0.0, %v7958
        %v7960 = vpop.f32.mrb[0].mxu0
        %7961 = vmatprep.mubr.bf16.mxu0 0
        %7962 = vmatmul.mubr.bf16.gmra.mrb[0].mxu0 %v3241
        %v7963 = vpop.f32.mrb[0].mxu0
        %v7964 = vadd.f32 0.0, %v7963
        %v7965 = vpop.f32.mrb[0].mxu0
        %v7966 = vpop.f32.mrb[0].mxu0
        %v7967 = vadd.f32 0.0, %v7966
        %v7968 = vpop.f32.mrb[0].mxu0
        %7969 = vmatprep.mubr.bf16.mxu0 0
        %7970 = vmatmul.mubr.bf16.gmra.mrb[0].mxu0 %v5317
        %v7971 = vpop.f32.mrb[0].mxu0
        %v7972 = vadd.f32 0.0, %v7971
        %v7973 = vpop.f32.mrb[0].mxu0
        %v7974 = vpop.f32.mrb[0].mxu0
        %v7975 = vadd.f32 0.0, %v7974
        %v7976 = vpop.f32.mrb[0].mxu0
        %7977 = vmatprep.mubr.bf16.mxu0 0
        %7978 = vmatmul.mubr.bf16.gmra.mrb[0].mxu0 %v5320
        %v7979 = vpop.f32.mrb[0].mxu0
        %v7980 = vadd.f32 0.0, %v7979
        %v7981 = vpop.f32.mrb[0].mxu0
        %v7982 = vpop.f32.mrb[0].mxu0
        %v7983 = vadd.f32 0.0, %v7982
        %v7984 = vpop.f32.mrb[0].mxu0
        %7985 = vmatprep.mubr.bf16.mxu0 0
        %7986 = vmatmul.mubr.bf16.gmra.mrb[0].mxu0 %v7449
        %v7987 = vpop.f32.mrb[0].mxu0
        %v7988 = vadd.f32 0.0, %v7987
        %v7989 = vpop.f32.mrb[0].mxu0
        %v7990 = vpop.f32.mrb[0].mxu0
        %v7991 = vadd.f32 0.0, %v7990
        %v7992 = vpop.f32.mrb[0].mxu0
        %7993 = vmatprep.mubr.bf16.mxu0 0
        %7994 = vmatmul.mubr.bf16.gmra.mrb[0].mxu0 %v7452
        %v7995 = vpop.f32.mrb[0].mxu0
        %v7996 = vadd.f32 0.0, %v7995
        %v7997 = vpop.f32.mrb[0].mxu0
        %v7998 = vpop.f32.mrb[0].mxu0
        %v7999 = vadd.f32 0.0, %v7998
        %v8000 = vpop.f32.mrb[0].mxu0
        %8001 = vdwg.mxu0
        %v8002 = vadd.f32 %v7308, %v7492
        %v8003 = vadd.f32 %v7309, %v7495
        %v8004 = vadd.f32 %v7310, %v7500
        %v8005 = vadd.f32 %v7311, %v7503
        %v8006 = vadd.f32 %v7312, %v7508
        %v8007 = vadd.f32 %v7313, %v7511
        %v8008 = vadd.f32 %v7314, %v7516
        %v8009 = vadd.f32 %v7315, %v7519
        %v8010 = vadd.f32 %v7316, %v7524
        %v8011 = vadd.f32 %v7317, %v7527
        %v8012 = vadd.f32 %v7318, %v7532
        %v8013 = vadd.f32 %v7319, %v7535
        %v8014 = vadd.f32 %v7320, %v7540
        %v8015 = vadd.f32 %v7321, %v7543
        %v8016 = vadd.f32 %v7322, %v7548
        %v8017 = vadd.f32 %v7323, %v7551
        %v8018 = vadd.f32 %v7324, %v7556
        %v8019 = vadd.f32 %v7325, %v7559
        %v8020 = vadd.f32 %v7326, %v7564
        %v8021 = vadd.f32 %v7327, %v7567
        %v8022 = vadd.f32 %v7328, %v7572
        %v8023 = vadd.f32 %v7329, %v7575
        %v8024 = vadd.f32 %v7330, %v7580
        %v8025 = vadd.f32 %v7331, %v7583
        %v8026 = vadd.f32 %v7332, %v7588
        %v8027 = vadd.f32 %v7333, %v7591
        %v8028 = vadd.f32 %v7334, %v7596
        %v8029 = vadd.f32 %v7335, %v7599
        %v8030 = vadd.f32 %v7336, %v7604
        %v8031 = vadd.f32 %v7337, %v7607
        %v8032 = vadd.f32 %v7338, %v7612
        %v8033 = vadd.f32 %v7339, %v7615
        %v8034 = vadd.f32 %v7340, %v7620
        %v8035 = vadd.f32 %v7341, %v7623
        %v8036 = vadd.f32 %v7342, %v7628
        %v8037 = vadd.f32 %v7343, %v7631
        %v8038 = vadd.f32 %v7344, %v7636
        %v8039 = vadd.f32 %v7345, %v7639
        %v8040 = vadd.f32 %v7346, %v7644
        %v8041 = vadd.f32 %v7347, %v7647
        %v8042 = vadd.f32 %v7348, %v7652
        %v8043 = vadd.f32 %v7349, %v7655
        %v8044 = vadd.f32 %v7350, %v7660
        %v8045 = vadd.f32 %v7351, %v7663
        %v8046 = vadd.f32 %v7352, %v7668
        %v8047 = vadd.f32 %v7353, %v7671
        %v8048 = vadd.f32 %v7354, %v7676
        %v8049 = vadd.f32 %v7355, %v7679
        %v8050 = vadd.f32 %v7356, %v7684
        %v8051 = vadd.f32 %v7357, %v7687
        %v8052 = vadd.f32 %v7358, %v7692
        %v8053 = vadd.f32 %v7359, %v7695
        %v8054 = vadd.f32 %v7360, %v7700
        %v8055 = vadd.f32 %v7361, %v7703
        %v8056 = vadd.f32 %v7362, %v7708
        %v8057 = vadd.f32 %v7363, %v7711
        %v8058 = vadd.f32 %v7364, %v7716
        %v8059 = vadd.f32 %v7365, %v7719
        %v8060 = vadd.f32 %v7366, %v7724
        %v8061 = vadd.f32 %v7367, %v7727
        %v8062 = vadd.f32 %v7368, %v7732
        %v8063 = vadd.f32 %v7369, %v7735
        %v8064 = vadd.f32 %v7370, %v7740
        %v8065 = vadd.f32 %v7371, %v7743
        %v8066 = vadd.f32 %v7372, %v7748
        %v8067 = vadd.f32 %v7373, %v7751
        %v8068 = vadd.f32 %v7374, %v7756
        %v8069 = vadd.f32 %v7375, %v7759
        %v8070 = vadd.f32 %v7376, %v7764
        %v8071 = vadd.f32 %v7377, %v7767
        %v8072 = vadd.f32 %v7378, %v7772
        %v8073 = vadd.f32 %v7379, %v7775
        %v8074 = vadd.f32 %v7380, %v7780
        %v8075 = vadd.f32 %v7381, %v7783
        %v8076 = vadd.f32 %v7382, %v7788
        %v8077 = vadd.f32 %v7383, %v7791
        %v8078 = vadd.f32 %v7384, %v7796
        %v8079 = vadd.f32 %v7385, %v7799
        %v8080 = vadd.f32 %v7386, %v7804
        %v8081 = vadd.f32 %v7387, %v7807
        %v8082 = vadd.f32 %v7388, %v7812
        %v8083 = vadd.f32 %v7389, %v7815
        %v8084 = vadd.f32 %v7390, %v7820
        %v8085 = vadd.f32 %v7391, %v7823
        %v8086 = vadd.f32 %v7392, %v7828
        %v8087 = vadd.f32 %v7393, %v7831
        %v8088 = vadd.f32 %v7394, %v7836
        %v8089 = vadd.f32 %v7395, %v7839
        %v8090 = vadd.f32 %v7396, %v7844
        %v8091 = vadd.f32 %v7397, %v7847
        %v8092 = vadd.f32 %v7398, %v7852
        %v8093 = vadd.f32 %v7399, %v7855
        %v8094 = vadd.f32 %v7400, %v7860
        %v8095 = vadd.f32 %v7401, %v7863
        %v8096 = vadd.f32 %v7402, %v7868
        %v8097 = vadd.f32 %v7403, %v7871
        %v8098 = vadd.f32 %v7404, %v7876
        %v8099 = vadd.f32 %v7405, %v7879
        %v8100 = vadd.f32 %v7406, %v7884
        %v8101 = vadd.f32 %v7407, %v7887
        %v8102 = vadd.f32 %v7408, %v7892
        %v8103 = vadd.f32 %v7409, %v7895
        %v8104 = vadd.f32 %v7410, %v7900
        %v8105 = vadd.f32 %v7411, %v7903
        %v8106 = vadd.f32 %v7412, %v7908
        %v8107 = vadd.f32 %v7413, %v7911
        %v8108 = vadd.f32 %v7414, %v7916
        %v8109 = vadd.f32 %v7415, %v7919
        %v8110 = vadd.f32 %v7416, %v7924
        %v8111 = vadd.f32 %v7417, %v7927
        %v8112 = vadd.f32 %v7418, %v7932
        %v8113 = vadd.f32 %v7419, %v7935
        %v8114 = vadd.f32 %v7420, %v7940
        %v8115 = vadd.f32 %v7421, %v7943
        %v8116 = vadd.f32 %v7422, %v7948
        %v8117 = vadd.f32 %v7423, %v7951
        %v8118 = vadd.f32 %v7424, %v7956
        %v8119 = vadd.f32 %v7425, %v7959
        %v8120 = vadd.f32 %v7426, %v7964
        %v8121 = vadd.f32 %v7427, %v7967
        %v8122 = vadd.f32 %v7428, %v7972
        %v8123 = vadd.f32 %v7429, %v7975
        %v8124 = vadd.f32 %v7430, %v7980
        %v8125 = vadd.f32 %v7431, %v7983
        %v8126 = vadd.f32 %v7432, %v7988
        %v8127 = vadd.f32 %v7433, %v7991
        %v8128 = vadd.f32 %v7434, %v7996
        %v8129 = vadd.f32 %v7435, %v7999
        %v8131 = vshrl.u32 %v375, 16
        %v8133 = vrot.slane %v8131, 4
        %v8134 = vshll.u32 %v375, 16
        %v8136 = vrot.slane %v8134, 5
        %v8137 = vor.u32 %v8133, %v8136
        %v8138 = vrot.slane %v8137, 4
        %v8140 = vshll.u32 %v376, 16
        %v8142 = vrot.slane %v8140, 5
        %v8143 = vsel %vm383, %v8138, %v8142
        %v8144 = vshrl.u32 %v376, 16
        %v8146 = vrot.slane %v8144, 4
        %v8147 = vor.u32 %v8146, %v8142
        %v8148 = vrot.slane %v8147, 4
        %v8150 = vshll.u32 %v377, 16
        %v8152 = vrot.slane %v8150, 5
        %v8153 = vsel %vm383, %v8148, %v8152
        %v8154 = vshrl.u32 %v377, 16
        %v8156 = vrot.slane %v8154, 4
        %v8157 = vor.u32 %v8156, %v8152
        %v8158 = vrot.slane %v8157, 4
        %v8160 = vshll.u32 %v378, 16
        %v8162 = vrot.slane %v8160, 5
        %v8163 = vsel %vm383, %v8158, %v8162
        %v8164 = vshrl.u32 %v378, 16
        %v8166 = vrot.slane %v8164, 4
        %v8167 = vor.u32 %v8166, %v8162
        %v8168 = vrot.slane %v8167, 4
        %v8170 = vshll.u32 %v379, 16
        %v8172 = vrot.slane %v8170, 5
        %v8173 = vsel %vm383, %v8168, %v8172
        %s8174 = scalar_lea.vmem %s208, 14
        %v8175 = vld [vmem:[%s8174] sm:$0x3]
        %v8176 = vunpack.c.l.b16 %v8143
        %v8177 = vunpack.c.l.b16 %v8153
        %v8178 = vunpack.c.l.b16 %v8163
        %v8179 = vunpack.c.l.b16 %v8173
        %v8180 = vpack.c.b16 %v8177, %v8176
        %v8181 = vpack.c.b16 %v8179, %v8178
        %v8183 = vsel %vm1986, %v8180, 0
        %v8186 = vsel %vm1986, %v8181, 0
        %v8189 = vand.u32 %v8175, %v2182
        %8191 = vmatprep.subr.bf16.mxu0 0
        %8192 = vmatpush1.bf16.msra.mxu0 %v8189
        %8193 = vmatprep.subr.bf16.mxu0 0
        %8194 = vmatpush1.bf16.msra.mxu0 0
        %8195 = vmatprep.subr.bf16.mxu0 0
        %8196 = vmatpush1.bf16.msra.mxu0 0
        %8197 = vmatprep.subr.bf16.mxu0 0
        %8198 = vmatpush1.bf16.msra.mxu0 0
        %8199 = vmatprep.subr.bf16.mxu0 0
        %8200 = vmatpush1.bf16.msra.mxu0 0
        %8201 = vmatprep.subr.bf16.mxu0 0
        %8202 = vmatpush1.bf16.msra.mxu0 0
        %8203 = vmatprep.subr.bf16.mxu0 0
        %8204 = vmatpush1.bf16.msra.mxu0 0
        %8205 = vmatprep.subr.bf16.mxu0 0
        %8206 = vmatpush1.bf16.msra.mxu0 0
        %8207 = vmatprep.subr.bf16.mxu0 0
        %8208 = vmatpush1.bf16.msra.mxu0 0
        %8209 = vmatprep.subr.bf16.mxu0 0
        %8210 = vmatpush1.bf16.msra.mxu0 0
        %8211 = vmatprep.subr.bf16.mxu0 0
        %8212 = vmatpush1.bf16.msra.mxu0 0
        %8213 = vmatprep.subr.bf16.mxu0 0
        %8214 = vmatpush1.bf16.msra.mxu0 0
        %8215 = vmatprep.subr.bf16.mxu0 0
        %8216 = vmatpush1.bf16.msra.mxu0 0
        %8217 = vmatprep.subr.bf16.mxu0 0
        %8218 = vmatpush1.bf16.msra.mxu0 0
        %8219 = vmatprep.subr.bf16.mxu0 0
        %8220 = vmatpush1.bf16.msra.mxu0 0
        %8221 = vmatprep.subr.bf16.mxu0 0
        %8222 = vmatpush1.bf16.msra.mxu0 0
        %8223 = vmatprep.mubr.bf16.mxu0 0
        %8224 = vmatmul.mubr.bf16.gmra.mrb[0].mxu0 %v2000
        %v8225 = vpop.f32.mrb[0].mxu0
        %v8226 = vadd.f32 0.0, %v8225
        %v8227 = vpop.f32.mrb[0].mxu0
        %v8228 = vpop.f32.mrb[0].mxu0
        %v8229 = vadd.f32 0.0, %v8228
        %v8230 = vpop.f32.mrb[0].mxu0
        %8231 = vmatprep.mubr.bf16.mxu0 0
        %8232 = vmatmul.mubr.bf16.gmra.mrb[0].mxu0 %v2003
        %v8233 = vpop.f32.mrb[0].mxu0
        %v8234 = vadd.f32 0.0, %v8233
        %v8235 = vpop.f32.mrb[0].mxu0
        %v8236 = vpop.f32.mrb[0].mxu0
        %v8237 = vadd.f32 0.0, %v8236
        %v8238 = vpop.f32.mrb[0].mxu0
        %8239 = vmatprep.mubr.bf16.mxu0 0
        %8240 = vmatmul.mubr.bf16.gmra.mrb[0].mxu0 %v2006
        %v8241 = vpop.f32.mrb[0].mxu0
        %v8242 = vadd.f32 0.0, %v8241
        %v8243 = vpop.f32.mrb[0].mxu0
        %v8244 = vpop.f32.mrb[0].mxu0
        %v8245 = vadd.f32 0.0, %v8244
        %v8246 = vpop.f32.mrb[0].mxu0
        %8247 = vmatprep.mubr.bf16.mxu0 0
        %8248 = vmatmul.mubr.bf16.gmra.mrb[0].mxu0 %v2009
        %v8249 = vpop.f32.mrb[0].mxu0
        %v8250 = vadd.f32 0.0, %v8249
        %v8251 = vpop.f32.mrb[0].mxu0
        %v8252 = vpop.f32.mrb[0].mxu0
        %v8253 = vadd.f32 0.0, %v8252
        %v8254 = vpop.f32.mrb[0].mxu0
        %8255 = vmatprep.mubr.bf16.mxu0 0
        %8256 = vmatmul.mubr.bf16.gmra.mrb[0].mxu0 %v2012
        %v8257 = vpop.f32.mrb[0].mxu0
        %v8258 = vadd.f32 0.0, %v8257
        %v8259 = vpop.f32.mrb[0].mxu0
        %v8260 = vpop.f32.mrb[0].mxu0
        %v8261 = vadd.f32 0.0, %v8260
        %v8262 = vpop.f32.mrb[0].mxu0
        %8263 = vmatprep.mubr.bf16.mxu0 0
        %8264 = vmatmul.mubr.bf16.gmra.mrb[0].mxu0 %v2015
        %v8265 = vpop.f32.mrb[0].mxu0
        %v8266 = vadd.f32 0.0, %v8265
        %v8267 = vpop.f32.mrb[0].mxu0
        %v8268 = vpop.f32.mrb[0].mxu0
        %v8269 = vadd.f32 0.0, %v8268
        %v8270 = vpop.f32.mrb[0].mxu0
        %8271 = vmatprep.mubr.bf16.mxu0 0
        %8272 = vmatmul.mubr.bf16.gmra.mrb[0].mxu0 %v2018
        %v8273 = vpop.f32.mrb[0].mxu0
        %v8274 = vadd.f32 0.0, %v8273
        %v8275 = vpop.f32.mrb[0].mxu0
        %v8276 = vpop.f32.mrb[0].mxu0
        %v8277 = vadd.f32 0.0, %v8276
        %v8278 = vpop.f32.mrb[0].mxu0
        %8279 = vmatprep.mubr.bf16.mxu0 0
        %8280 = vmatmul.mubr.bf16.gmra.mrb[0].mxu0 %v2021
        %v8281 = vpop.f32.mrb[0].mxu0
        %v8282 = vadd.f32 0.0, %v8281
        %v8283 = vpop.f32.mrb[0].mxu0
        %v8284 = vpop.f32.mrb[0].mxu0
        %v8285 = vadd.f32 0.0, %v8284
        %v8286 = vpop.f32.mrb[0].mxu0
        %8287 = vmatprep.mubr.bf16.mxu0 0
        %8288 = vmatmul.mubr.bf16.gmra.mrb[0].mxu0 %v2024
        %v8289 = vpop.f32.mrb[0].mxu0
        %v8290 = vadd.f32 0.0, %v8289
        %v8291 = vpop.f32.mrb[0].mxu0
        %v8292 = vpop.f32.mrb[0].mxu0
        %v8293 = vadd.f32 0.0, %v8292
        %v8294 = vpop.f32.mrb[0].mxu0
        %8295 = vmatprep.mubr.bf16.mxu0 0
        %8296 = vmatmul.mubr.bf16.gmra.mrb[0].mxu0 %v2027
        %v8297 = vpop.f32.mrb[0].mxu0
        %v8298 = vadd.f32 0.0, %v8297
        %v8299 = vpop.f32.mrb[0].mxu0
        %v8300 = vpop.f32.mrb[0].mxu0
        %v8301 = vadd.f32 0.0, %v8300
        %v8302 = vpop.f32.mrb[0].mxu0
        %8303 = vmatprep.mubr.bf16.mxu0 0
        %8304 = vmatmul.mubr.bf16.gmra.mrb[0].mxu0 %v2030
        %v8305 = vpop.f32.mrb[0].mxu0
        %v8306 = vadd.f32 0.0, %v8305
        %v8307 = vpop.f32.mrb[0].mxu0
        %v8308 = vpop.f32.mrb[0].mxu0
        %v8309 = vadd.f32 0.0, %v8308
        %v8310 = vpop.f32.mrb[0].mxu0
        %8311 = vmatprep.mubr.bf16.mxu0 0
        %8312 = vmatmul.mubr.bf16.gmra.mrb[0].mxu0 %v2033
        %v8313 = vpop.f32.mrb[0].mxu0
        %v8314 = vadd.f32 0.0, %v8313
        %v8315 = vpop.f32.mrb[0].mxu0
        %v8316 = vpop.f32.mrb[0].mxu0
        %v8317 = vadd.f32 0.0, %v8316
        %v8318 = vpop.f32.mrb[0].mxu0
        %8319 = vmatprep.mubr.bf16.mxu0 0
        %8320 = vmatmul.mubr.bf16.gmra.mrb[0].mxu0 %v2036
        %v8321 = vpop.f32.mrb[0].mxu0
        %v8322 = vadd.f32 0.0, %v8321
        %v8323 = vpop.f32.mrb[0].mxu0
        %v8324 = vpop.f32.mrb[0].mxu0
        %v8325 = vadd.f32 0.0, %v8324
        %v8326 = vpop.f32.mrb[0].mxu0
        %8327 = vmatprep.mubr.bf16.mxu0 0
        %8328 = vmatmul.mubr.bf16.gmra.mrb[0].mxu0 %v2039
        %v8329 = vpop.f32.mrb[0].mxu0
        %v8330 = vadd.f32 0.0, %v8329
        %v8331 = vpop.f32.mrb[0].mxu0
        %v8332 = vpop.f32.mrb[0].mxu0
        %v8333 = vadd.f32 0.0, %v8332
        %v8334 = vpop.f32.mrb[0].mxu0
        %8335 = vmatprep.mubr.bf16.mxu0 0
        %8336 = vmatmul.mubr.bf16.gmra.mrb[0].mxu0 %v2042
        %v8337 = vpop.f32.mrb[0].mxu0
        %v8338 = vadd.f32 0.0, %v8337
        %v8339 = vpop.f32.mrb[0].mxu0
        %v8340 = vpop.f32.mrb[0].mxu0
        %v8341 = vadd.f32 0.0, %v8340
        %v8342 = vpop.f32.mrb[0].mxu0
        %8343 = vmatprep.mubr.bf16.mxu0 0
        %8344 = vmatmul.mubr.bf16.gmra.mrb[0].mxu0 %v2045
        %v8345 = vpop.f32.mrb[0].mxu0
        %v8346 = vadd.f32 0.0, %v8345
        %v8347 = vpop.f32.mrb[0].mxu0
        %v8348 = vpop.f32.mrb[0].mxu0
        %v8349 = vadd.f32 0.0, %v8348
        %v8350 = vpop.f32.mrb[0].mxu0
        %8351 = vmatprep.mubr.bf16.mxu0 0
        %8352 = vmatmul.mubr.bf16.gmra.mrb[0].mxu0 %v2048
        %v8353 = vpop.f32.mrb[0].mxu0
        %v8354 = vadd.f32 0.0, %v8353
        %v8355 = vpop.f32.mrb[0].mxu0
        %v8356 = vpop.f32.mrb[0].mxu0
        %v8357 = vadd.f32 0.0, %v8356
        %v8358 = vpop.f32.mrb[0].mxu0
        %8359 = vmatprep.mubr.bf16.mxu0 0
        %8360 = vmatmul.mubr.bf16.gmra.mrb[0].mxu0 %v2051
        %v8361 = vpop.f32.mrb[0].mxu0
        %v8362 = vadd.f32 0.0, %v8361
        %v8363 = vpop.f32.mrb[0].mxu0
        %v8364 = vpop.f32.mrb[0].mxu0
        %v8365 = vadd.f32 0.0, %v8364
        %v8366 = vpop.f32.mrb[0].mxu0
        %8367 = vmatprep.mubr.bf16.mxu0 0
        %8368 = vmatmul.mubr.bf16.gmra.mrb[0].mxu0 %v2054
        %v8369 = vpop.f32.mrb[0].mxu0
        %v8370 = vadd.f32 0.0, %v8369
        %v8371 = vpop.f32.mrb[0].mxu0
        %v8372 = vpop.f32.mrb[0].mxu0
        %v8373 = vadd.f32 0.0, %v8372
        %v8374 = vpop.f32.mrb[0].mxu0
        %8375 = vmatprep.mubr.bf16.mxu0 0
        %8376 = vmatmul.mubr.bf16.gmra.mrb[0].mxu0 %v2057
        %v8377 = vpop.f32.mrb[0].mxu0
        %v8378 = vadd.f32 0.0, %v8377
        %v8379 = vpop.f32.mrb[0].mxu0
        %v8380 = vpop.f32.mrb[0].mxu0
        %v8381 = vadd.f32 0.0, %v8380
        %v8382 = vpop.f32.mrb[0].mxu0
        %8383 = vmatprep.mubr.bf16.mxu0 0
        %8384 = vmatmul.mubr.bf16.gmra.mrb[0].mxu0 %v2060
        %v8385 = vpop.f32.mrb[0].mxu0
        %v8386 = vadd.f32 0.0, %v8385
        %v8387 = vpop.f32.mrb[0].mxu0
        %v8388 = vpop.f32.mrb[0].mxu0
        %v8389 = vadd.f32 0.0, %v8388
        %v8390 = vpop.f32.mrb[0].mxu0
        %8391 = vmatprep.mubr.bf16.mxu0 0
        %8392 = vmatmul.mubr.bf16.gmra.mrb[0].mxu0 %v2063
        %v8393 = vpop.f32.mrb[0].mxu0
        %v8394 = vadd.f32 0.0, %v8393
        %v8395 = vpop.f32.mrb[0].mxu0
        %v8396 = vpop.f32.mrb[0].mxu0
        %v8397 = vadd.f32 0.0, %v8396
        %v8398 = vpop.f32.mrb[0].mxu0
        %8399 = vmatprep.mubr.bf16.mxu0 0
        %8400 = vmatmul.mubr.bf16.gmra.mrb[0].mxu0 %v2066
        %v8401 = vpop.f32.mrb[0].mxu0
        %v8402 = vadd.f32 0.0, %v8401
        %v8403 = vpop.f32.mrb[0].mxu0
        %v8404 = vpop.f32.mrb[0].mxu0
        %v8405 = vadd.f32 0.0, %v8404
        %v8406 = vpop.f32.mrb[0].mxu0
        %8407 = vmatprep.mubr.bf16.mxu0 0
        %8408 = vmatmul.mubr.bf16.gmra.mrb[0].mxu0 %v2069
        %v8409 = vpop.f32.mrb[0].mxu0
        %v8410 = vadd.f32 0.0, %v8409
        %v8411 = vpop.f32.mrb[0].mxu0
        %v8412 = vpop.f32.mrb[0].mxu0
        %v8413 = vadd.f32 0.0, %v8412
        %v8414 = vpop.f32.mrb[0].mxu0
        %8415 = vmatprep.mubr.bf16.mxu0 0
        %8416 = vmatmul.mubr.bf16.gmra.mrb[0].mxu0 %v2072
        %v8417 = vpop.f32.mrb[0].mxu0
        %v8418 = vadd.f32 0.0, %v8417
        %v8419 = vpop.f32.mrb[0].mxu0
        %v8420 = vpop.f32.mrb[0].mxu0
        %v8421 = vadd.f32 0.0, %v8420
        %v8422 = vpop.f32.mrb[0].mxu0
        %8423 = vmatprep.mubr.bf16.mxu0 0
        %8424 = vmatmul.mubr.bf16.gmra.mrb[0].mxu0 %v2075
        %v8425 = vpop.f32.mrb[0].mxu0
        %v8426 = vadd.f32 0.0, %v8425
        %v8427 = vpop.f32.mrb[0].mxu0
        %v8428 = vpop.f32.mrb[0].mxu0
        %v8429 = vadd.f32 0.0, %v8428
        %v8430 = vpop.f32.mrb[0].mxu0
        %8431 = vmatprep.mubr.bf16.mxu0 0
        %8432 = vmatmul.mubr.bf16.gmra.mrb[0].mxu0 %v2078
        %v8433 = vpop.f32.mrb[0].mxu0
        %v8434 = vadd.f32 0.0, %v8433
        %v8435 = vpop.f32.mrb[0].mxu0
        %v8436 = vpop.f32.mrb[0].mxu0
        %v8437 = vadd.f32 0.0, %v8436
        %v8438 = vpop.f32.mrb[0].mxu0
        %8439 = vmatprep.mubr.bf16.mxu0 0
        %8440 = vmatmul.mubr.bf16.gmra.mrb[0].mxu0 %v2081
        %v8441 = vpop.f32.mrb[0].mxu0
        %v8442 = vadd.f32 0.0, %v8441
        %v8443 = vpop.f32.mrb[0].mxu0
        %v8444 = vpop.f32.mrb[0].mxu0
        %v8445 = vadd.f32 0.0, %v8444
        %v8446 = vpop.f32.mrb[0].mxu0
        %8447 = vmatprep.mubr.bf16.mxu0 0
        %8448 = vmatmul.mubr.bf16.gmra.mrb[0].mxu0 %v2084
        %v8449 = vpop.f32.mrb[0].mxu0
        %v8450 = vadd.f32 0.0, %v8449
        %v8451 = vpop.f32.mrb[0].mxu0
        %v8452 = vpop.f32.mrb[0].mxu0
        %v8453 = vadd.f32 0.0, %v8452
        %v8454 = vpop.f32.mrb[0].mxu0
        %8455 = vmatprep.mubr.bf16.mxu0 0
        %8456 = vmatmul.mubr.bf16.gmra.mrb[0].mxu0 %v2087
        %v8457 = vpop.f32.mrb[0].mxu0
        %v8458 = vadd.f32 0.0, %v8457
        %v8459 = vpop.f32.mrb[0].mxu0
        %v8460 = vpop.f32.mrb[0].mxu0
        %v8461 = vadd.f32 0.0, %v8460
        %v8462 = vpop.f32.mrb[0].mxu0
        %8463 = vmatprep.mubr.bf16.mxu0 0
        %8464 = vmatmul.mubr.bf16.gmra.mrb[0].mxu0 %v2090
        %v8465 = vpop.f32.mrb[0].mxu0
        %v8466 = vadd.f32 0.0, %v8465
        %v8467 = vpop.f32.mrb[0].mxu0
        %v8468 = vpop.f32.mrb[0].mxu0
        %v8469 = vadd.f32 0.0, %v8468
        %v8470 = vpop.f32.mrb[0].mxu0
        %8471 = vmatprep.mubr.bf16.mxu0 0
        %8472 = vmatmul.mubr.bf16.gmra.mrb[0].mxu0 %v2093
        %v8473 = vpop.f32.mrb[0].mxu0
        %v8474 = vadd.f32 0.0, %v8473
        %v8475 = vpop.f32.mrb[0].mxu0
        %v8476 = vpop.f32.mrb[0].mxu0
        %v8477 = vadd.f32 0.0, %v8476
        %v8478 = vpop.f32.mrb[0].mxu0
        %8479 = vmatprep.mubr.bf16.mxu0 0
        %8480 = vmatmul.mubr.bf16.gmra.mrb[0].mxu0 %v2096
        %v8481 = vpop.f32.mrb[0].mxu0
        %v8482 = vadd.f32 0.0, %v8481
        %v8483 = vpop.f32.mrb[0].mxu0
        %v8484 = vpop.f32.mrb[0].mxu0
        %v8485 = vadd.f32 0.0, %v8484
        %v8486 = vpop.f32.mrb[0].mxu0
        %8487 = vmatprep.mubr.bf16.mxu0 0
        %8488 = vmatmul.mubr.bf16.gmra.mrb[0].mxu0 %v2099
        %v8489 = vpop.f32.mrb[0].mxu0
        %v8490 = vadd.f32 0.0, %v8489
        %v8491 = vpop.f32.mrb[0].mxu0
        %v8492 = vpop.f32.mrb[0].mxu0
        %v8493 = vadd.f32 0.0, %v8492
        %v8494 = vpop.f32.mrb[0].mxu0
        %8495 = vmatprep.mubr.bf16.mxu0 0
        %8496 = vmatmul.mubr.bf16.gmra.mrb[0].mxu0 %v2102
        %v8497 = vpop.f32.mrb[0].mxu0
        %v8498 = vadd.f32 0.0, %v8497
        %v8499 = vpop.f32.mrb[0].mxu0
        %v8500 = vpop.f32.mrb[0].mxu0
        %v8501 = vadd.f32 0.0, %v8500
        %v8502 = vpop.f32.mrb[0].mxu0
        %8503 = vmatprep.mubr.bf16.mxu0 0
        %8504 = vmatmul.mubr.bf16.gmra.mrb[0].mxu0 %v2105
        %v8505 = vpop.f32.mrb[0].mxu0
        %v8506 = vadd.f32 0.0, %v8505
        %v8507 = vpop.f32.mrb[0].mxu0
        %v8508 = vpop.f32.mrb[0].mxu0
        %v8509 = vadd.f32 0.0, %v8508
        %v8510 = vpop.f32.mrb[0].mxu0
        %8511 = vmatprep.mubr.bf16.mxu0 0
        %8512 = vmatmul.mubr.bf16.gmra.mrb[0].mxu0 %v2108
        %v8513 = vpop.f32.mrb[0].mxu0
        %v8514 = vadd.f32 0.0, %v8513
        %v8515 = vpop.f32.mrb[0].mxu0
        %v8516 = vpop.f32.mrb[0].mxu0
        %v8517 = vadd.f32 0.0, %v8516
        %v8518 = vpop.f32.mrb[0].mxu0
        %8519 = vmatprep.mubr.bf16.mxu0 0
        %8520 = vmatmul.mubr.bf16.gmra.mrb[0].mxu0 %v2111
        %v8521 = vpop.f32.mrb[0].mxu0
        %v8522 = vadd.f32 0.0, %v8521
        %v8523 = vpop.f32.mrb[0].mxu0
        %v8524 = vpop.f32.mrb[0].mxu0
        %v8525 = vadd.f32 0.0, %v8524
        %v8526 = vpop.f32.mrb[0].mxu0
        %8527 = vmatprep.mubr.bf16.mxu0 0
        %8528 = vmatmul.mubr.bf16.gmra.mrb[0].mxu0 %v2114
        %v8529 = vpop.f32.mrb[0].mxu0
        %v8530 = vadd.f32 0.0, %v8529
        %v8531 = vpop.f32.mrb[0].mxu0
        %v8532 = vpop.f32.mrb[0].mxu0
        %v8533 = vadd.f32 0.0, %v8532
        %v8534 = vpop.f32.mrb[0].mxu0
        %8535 = vmatprep.mubr.bf16.mxu0 0
        %8536 = vmatmul.mubr.bf16.gmra.mrb[0].mxu0 %v2117
        %v8537 = vpop.f32.mrb[0].mxu0
        %v8538 = vadd.f32 0.0, %v8537
        %v8539 = vpop.f32.mrb[0].mxu0
        %v8540 = vpop.f32.mrb[0].mxu0
        %v8541 = vadd.f32 0.0, %v8540
        %v8542 = vpop.f32.mrb[0].mxu0
        %8543 = vmatprep.mubr.bf16.mxu0 0
        %8544 = vmatmul.mubr.bf16.gmra.mrb[0].mxu0 %v2120
        %v8545 = vpop.f32.mrb[0].mxu0
        %v8546 = vadd.f32 0.0, %v8545
        %v8547 = vpop.f32.mrb[0].mxu0
        %v8548 = vpop.f32.mrb[0].mxu0
        %v8549 = vadd.f32 0.0, %v8548
        %v8550 = vpop.f32.mrb[0].mxu0
        %8551 = vmatprep.mubr.bf16.mxu0 0
        %8552 = vmatmul.mubr.bf16.gmra.mrb[0].mxu0 %v2123
        %v8553 = vpop.f32.mrb[0].mxu0
        %v8554 = vadd.f32 0.0, %v8553
        %v8555 = vpop.f32.mrb[0].mxu0
        %v8556 = vpop.f32.mrb[0].mxu0
        %v8557 = vadd.f32 0.0, %v8556
        %v8558 = vpop.f32.mrb[0].mxu0
        %8559 = vmatprep.mubr.bf16.mxu0 0
        %8560 = vmatmul.mubr.bf16.gmra.mrb[0].mxu0 %v2126
        %v8561 = vpop.f32.mrb[0].mxu0
        %v8562 = vadd.f32 0.0, %v8561
        %v8563 = vpop.f32.mrb[0].mxu0
        %v8564 = vpop.f32.mrb[0].mxu0
        %v8565 = vadd.f32 0.0, %v8564
        %v8566 = vpop.f32.mrb[0].mxu0
        %8567 = vmatprep.mubr.bf16.mxu0 0
        %8568 = vmatmul.mubr.bf16.gmra.mrb[0].mxu0 %v2129
        %v8569 = vpop.f32.mrb[0].mxu0
        %v8570 = vadd.f32 0.0, %v8569
        %v8571 = vpop.f32.mrb[0].mxu0
        %v8572 = vpop.f32.mrb[0].mxu0
        %v8573 = vadd.f32 0.0, %v8572
        %v8574 = vpop.f32.mrb[0].mxu0
        %8575 = vmatprep.mubr.bf16.mxu0 0
        %8576 = vmatmul.mubr.bf16.gmra.mrb[0].mxu0 %v2132
        %v8577 = vpop.f32.mrb[0].mxu0
        %v8578 = vadd.f32 0.0, %v8577
        %v8579 = vpop.f32.mrb[0].mxu0
        %v8580 = vpop.f32.mrb[0].mxu0
        %v8581 = vadd.f32 0.0, %v8580
        %v8582 = vpop.f32.mrb[0].mxu0
        %8583 = vmatprep.mubr.bf16.mxu0 0
        %8584 = vmatmul.mubr.bf16.gmra.mrb[0].mxu0 %v2135
        %v8585 = vpop.f32.mrb[0].mxu0
        %v8586 = vadd.f32 0.0, %v8585
        %v8587 = vpop.f32.mrb[0].mxu0
        %v8588 = vpop.f32.mrb[0].mxu0
        %v8589 = vadd.f32 0.0, %v8588
        %v8590 = vpop.f32.mrb[0].mxu0
        %8591 = vmatprep.mubr.bf16.mxu0 0
        %8592 = vmatmul.mubr.bf16.gmra.mrb[0].mxu0 %v2138
        %v8593 = vpop.f32.mrb[0].mxu0
        %v8594 = vadd.f32 0.0, %v8593
        %v8595 = vpop.f32.mrb[0].mxu0
        %v8596 = vpop.f32.mrb[0].mxu0
        %v8597 = vadd.f32 0.0, %v8596
        %v8598 = vpop.f32.mrb[0].mxu0
        %8599 = vmatprep.mubr.bf16.mxu0 0
        %8600 = vmatmul.mubr.bf16.gmra.mrb[0].mxu0 %v2141
        %v8601 = vpop.f32.mrb[0].mxu0
        %v8602 = vadd.f32 0.0, %v8601
        %v8603 = vpop.f32.mrb[0].mxu0
        %v8604 = vpop.f32.mrb[0].mxu0
        %v8605 = vadd.f32 0.0, %v8604
        %v8606 = vpop.f32.mrb[0].mxu0
        %8607 = vmatprep.mubr.bf16.mxu0 0
        %8608 = vmatmul.mubr.bf16.gmra.mrb[0].mxu0 %v2144
        %v8609 = vpop.f32.mrb[0].mxu0
        %v8610 = vadd.f32 0.0, %v8609
        %v8611 = vpop.f32.mrb[0].mxu0
        %v8612 = vpop.f32.mrb[0].mxu0
        %v8613 = vadd.f32 0.0, %v8612
        %v8614 = vpop.f32.mrb[0].mxu0
        %8615 = vmatprep.mubr.bf16.mxu0 0
        %8616 = vmatmul.mubr.bf16.gmra.mrb[0].mxu0 %v2147
        %v8617 = vpop.f32.mrb[0].mxu0
        %v8618 = vadd.f32 0.0, %v8617
        %v8619 = vpop.f32.mrb[0].mxu0
        %v8620 = vpop.f32.mrb[0].mxu0
        %v8621 = vadd.f32 0.0, %v8620
        %v8622 = vpop.f32.mrb[0].mxu0
        %8623 = vmatprep.mubr.bf16.mxu0 0
        %8624 = vmatmul.mubr.bf16.gmra.mrb[0].mxu0 %v2150
        %v8625 = vpop.f32.mrb[0].mxu0
        %v8626 = vadd.f32 0.0, %v8625
        %v8627 = vpop.f32.mrb[0].mxu0
        %v8628 = vpop.f32.mrb[0].mxu0
        %v8629 = vadd.f32 0.0, %v8628
        %v8630 = vpop.f32.mrb[0].mxu0
        %8631 = vmatprep.mubr.bf16.mxu0 0
        %8632 = vmatmul.mubr.bf16.gmra.mrb[0].mxu0 %v2153
        %v8633 = vpop.f32.mrb[0].mxu0
        %v8634 = vadd.f32 0.0, %v8633
        %v8635 = vpop.f32.mrb[0].mxu0
        %v8636 = vpop.f32.mrb[0].mxu0
        %v8637 = vadd.f32 0.0, %v8636
        %v8638 = vpop.f32.mrb[0].mxu0
        %8639 = vmatprep.mubr.bf16.mxu0 0
        %8640 = vmatmul.mubr.bf16.gmra.mrb[0].mxu0 %v2156
        %v8641 = vpop.f32.mrb[0].mxu0
        %v8642 = vadd.f32 0.0, %v8641
        %v8643 = vpop.f32.mrb[0].mxu0
        %v8644 = vpop.f32.mrb[0].mxu0
        %v8645 = vadd.f32 0.0, %v8644
        %v8646 = vpop.f32.mrb[0].mxu0
        %8647 = vmatprep.mubr.bf16.mxu0 0
        %8648 = vmatmul.mubr.bf16.gmra.mrb[0].mxu0 %v2159
        %v8649 = vpop.f32.mrb[0].mxu0
        %v8650 = vadd.f32 0.0, %v8649
        %v8651 = vpop.f32.mrb[0].mxu0
        %v8652 = vpop.f32.mrb[0].mxu0
        %v8653 = vadd.f32 0.0, %v8652
        %v8654 = vpop.f32.mrb[0].mxu0
        %8655 = vmatprep.mubr.bf16.mxu0 0
        %8656 = vmatmul.mubr.bf16.gmra.mrb[0].mxu0 %v2162
        %v8657 = vpop.f32.mrb[0].mxu0
        %v8658 = vadd.f32 0.0, %v8657
        %v8659 = vpop.f32.mrb[0].mxu0
        %v8660 = vpop.f32.mrb[0].mxu0
        %v8661 = vadd.f32 0.0, %v8660
        %v8662 = vpop.f32.mrb[0].mxu0
        %8663 = vmatprep.mubr.bf16.mxu0 0
        %8664 = vmatmul.mubr.bf16.gmra.mrb[0].mxu0 %v2165
        %v8665 = vpop.f32.mrb[0].mxu0
        %v8666 = vadd.f32 0.0, %v8665
        %v8667 = vpop.f32.mrb[0].mxu0
        %v8668 = vpop.f32.mrb[0].mxu0
        %v8669 = vadd.f32 0.0, %v8668
        %v8670 = vpop.f32.mrb[0].mxu0
        %8671 = vmatprep.mubr.bf16.mxu0 0
        %8672 = vmatmul.mubr.bf16.gmra.mrb[0].mxu0 %v2168
        %v8673 = vpop.f32.mrb[0].mxu0
        %v8674 = vadd.f32 0.0, %v8673
        %v8675 = vpop.f32.mrb[0].mxu0
        %v8676 = vpop.f32.mrb[0].mxu0
        %v8677 = vadd.f32 0.0, %v8676
        %v8678 = vpop.f32.mrb[0].mxu0
        %8679 = vmatprep.mubr.bf16.mxu0 0
        %8680 = vmatmul.mubr.bf16.gmra.mrb[0].mxu0 %v2171
        %v8681 = vpop.f32.mrb[0].mxu0
        %v8682 = vadd.f32 0.0, %v8681
        %v8683 = vpop.f32.mrb[0].mxu0
        %v8684 = vpop.f32.mrb[0].mxu0
        %v8685 = vadd.f32 0.0, %v8684
        %v8686 = vpop.f32.mrb[0].mxu0
        %8687 = vmatprep.mubr.bf16.mxu0 0
        %8688 = vmatmul.mubr.bf16.gmra.mrb[0].mxu0 %v2174
        %v8689 = vpop.f32.mrb[0].mxu0
        %v8690 = vadd.f32 0.0, %v8689
        %v8691 = vpop.f32.mrb[0].mxu0
        %v8692 = vpop.f32.mrb[0].mxu0
        %v8693 = vadd.f32 0.0, %v8692
        %v8694 = vpop.f32.mrb[0].mxu0
        %8695 = vmatprep.mubr.bf16.mxu0 0
        %8696 = vmatmul.mubr.bf16.gmra.mrb[0].mxu0 %v2177
        %v8697 = vpop.f32.mrb[0].mxu0
        %v8698 = vadd.f32 0.0, %v8697
        %v8699 = vpop.f32.mrb[0].mxu0
        %v8700 = vpop.f32.mrb[0].mxu0
        %v8701 = vadd.f32 0.0, %v8700
        %v8702 = vpop.f32.mrb[0].mxu0
        %8703 = vmatprep.mubr.bf16.mxu0 0
        %8704 = vmatmul.mubr.bf16.gmra.mrb[0].mxu0 %v6051
        %v8705 = vpop.f32.mrb[0].mxu0
        %v8706 = vadd.f32 0.0, %v8705
        %v8707 = vpop.f32.mrb[0].mxu0
        %v8708 = vpop.f32.mrb[0].mxu0
        %v8709 = vadd.f32 0.0, %v8708
        %v8710 = vpop.f32.mrb[0].mxu0
        %8711 = vmatprep.mubr.bf16.mxu0 0
        %8712 = vmatmul.mubr.bf16.gmra.mrb[0].mxu0 %v6054
        %v8713 = vpop.f32.mrb[0].mxu0
        %v8714 = vadd.f32 0.0, %v8713
        %v8715 = vpop.f32.mrb[0].mxu0
        %v8716 = vpop.f32.mrb[0].mxu0
        %v8717 = vadd.f32 0.0, %v8716
        %v8718 = vpop.f32.mrb[0].mxu0
        %8719 = vmatprep.mubr.bf16.mxu0 0
        %8720 = vmatmul.mubr.bf16.gmra.mrb[0].mxu0 %v8183
        %v8721 = vpop.f32.mrb[0].mxu0
        %v8722 = vadd.f32 0.0, %v8721
        %v8723 = vpop.f32.mrb[0].mxu0
        %v8724 = vpop.f32.mrb[0].mxu0
        %v8725 = vadd.f32 0.0, %v8724
        %v8726 = vpop.f32.mrb[0].mxu0
        %8727 = vmatprep.mubr.bf16.mxu0 0
        %8728 = vmatmul.mubr.bf16.gmra.mrb[0].mxu0 %v8186
        %v8729 = vpop.f32.mrb[0].mxu0
        %v8730 = vadd.f32 0.0, %v8729
        %v8731 = vpop.f32.mrb[0].mxu0
        %v8732 = vpop.f32.mrb[0].mxu0
        %v8733 = vadd.f32 0.0, %v8732
        %v8734 = vpop.f32.mrb[0].mxu0
        %8735 = vdwg.mxu0
        %v8736 = vadd.f32 %v8002, %v8226
        %v8737 = vadd.f32 %v8003, %v8229
        %v8738 = vadd.f32 %v8004, %v8234
        %v8739 = vadd.f32 %v8005, %v8237
        %v8740 = vadd.f32 %v8006, %v8242
        %v8741 = vadd.f32 %v8007, %v8245
        %v8742 = vadd.f32 %v8008, %v8250
        %v8743 = vadd.f32 %v8009, %v8253
        %v8744 = vadd.f32 %v8010, %v8258
        %v8745 = vadd.f32 %v8011, %v8261
        %v8746 = vadd.f32 %v8012, %v8266
        %v8747 = vadd.f32 %v8013, %v8269
        %v8748 = vadd.f32 %v8014, %v8274
        %v8749 = vadd.f32 %v8015, %v8277
        %v8750 = vadd.f32 %v8016, %v8282
        %v8751 = vadd.f32 %v8017, %v8285
        %v8752 = vadd.f32 %v8018, %v8290
        %v8753 = vadd.f32 %v8019, %v8293
        %v8754 = vadd.f32 %v8020, %v8298
        %v8755 = vadd.f32 %v8021, %v8301
        %v8756 = vadd.f32 %v8022, %v8306
        %v8757 = vadd.f32 %v8023, %v8309
        %v8758 = vadd.f32 %v8024, %v8314
        %v8759 = vadd.f32 %v8025, %v8317
        %v8760 = vadd.f32 %v8026, %v8322
        %v8761 = vadd.f32 %v8027, %v8325
        %v8762 = vadd.f32 %v8028, %v8330
        %v8763 = vadd.f32 %v8029, %v8333
        %v8764 = vadd.f32 %v8030, %v8338
        %v8765 = vadd.f32 %v8031, %v8341
        %v8766 = vadd.f32 %v8032, %v8346
        %v8767 = vadd.f32 %v8033, %v8349
        %v8768 = vadd.f32 %v8034, %v8354
        %v8769 = vadd.f32 %v8035, %v8357
        %v8770 = vadd.f32 %v8036, %v8362
        %v8771 = vadd.f32 %v8037, %v8365
        %v8772 = vadd.f32 %v8038, %v8370
        %v8773 = vadd.f32 %v8039, %v8373
        %v8774 = vadd.f32 %v8040, %v8378
        %v8775 = vadd.f32 %v8041, %v8381
        %v8776 = vadd.f32 %v8042, %v8386
        %v8777 = vadd.f32 %v8043, %v8389
        %v8778 = vadd.f32 %v8044, %v8394
        %v8779 = vadd.f32 %v8045, %v8397
        %v8780 = vadd.f32 %v8046, %v8402
        %v8781 = vadd.f32 %v8047, %v8405
        %v8782 = vadd.f32 %v8048, %v8410
        %v8783 = vadd.f32 %v8049, %v8413
        %v8784 = vadd.f32 %v8050, %v8418
        %v8785 = vadd.f32 %v8051, %v8421
        %v8786 = vadd.f32 %v8052, %v8426
        %v8787 = vadd.f32 %v8053, %v8429
        %v8788 = vadd.f32 %v8054, %v8434
        %v8789 = vadd.f32 %v8055, %v8437
        %v8790 = vadd.f32 %v8056, %v8442
        %v8791 = vadd.f32 %v8057, %v8445
        %v8792 = vadd.f32 %v8058, %v8450
        %v8793 = vadd.f32 %v8059, %v8453
        %v8794 = vadd.f32 %v8060, %v8458
        %v8795 = vadd.f32 %v8061, %v8461
        %v8796 = vadd.f32 %v8062, %v8466
        %v8797 = vadd.f32 %v8063, %v8469
        %v8798 = vadd.f32 %v8064, %v8474
        %v8799 = vadd.f32 %v8065, %v8477
        %v8800 = vadd.f32 %v8066, %v8482
        %v8801 = vadd.f32 %v8067, %v8485
        %v8802 = vadd.f32 %v8068, %v8490
        %v8803 = vadd.f32 %v8069, %v8493
        %v8804 = vadd.f32 %v8070, %v8498
        %v8805 = vadd.f32 %v8071, %v8501
        %v8806 = vadd.f32 %v8072, %v8506
        %v8807 = vadd.f32 %v8073, %v8509
        %v8808 = vadd.f32 %v8074, %v8514
        %v8809 = vadd.f32 %v8075, %v8517
        %v8810 = vadd.f32 %v8076, %v8522
        %v8811 = vadd.f32 %v8077, %v8525
        %v8812 = vadd.f32 %v8078, %v8530
        %v8813 = vadd.f32 %v8079, %v8533
        %v8814 = vadd.f32 %v8080, %v8538
        %v8815 = vadd.f32 %v8081, %v8541
        %v8816 = vadd.f32 %v8082, %v8546
        %v8817 = vadd.f32 %v8083, %v8549
        %v8818 = vadd.f32 %v8084, %v8554
        %v8819 = vadd.f32 %v8085, %v8557
        %v8820 = vadd.f32 %v8086, %v8562
        %v8821 = vadd.f32 %v8087, %v8565
        %v8822 = vadd.f32 %v8088, %v8570
        %v8823 = vadd.f32 %v8089, %v8573
        %v8824 = vadd.f32 %v8090, %v8578
        %v8825 = vadd.f32 %v8091, %v8581
        %v8826 = vadd.f32 %v8092, %v8586
        %v8827 = vadd.f32 %v8093, %v8589
        %v8828 = vadd.f32 %v8094, %v8594
        %v8829 = vadd.f32 %v8095, %v8597
        %v8830 = vadd.f32 %v8096, %v8602
        %v8831 = vadd.f32 %v8097, %v8605
        %v8832 = vadd.f32 %v8098, %v8610
        %v8833 = vadd.f32 %v8099, %v8613
        %v8834 = vadd.f32 %v8100, %v8618
        %v8835 = vadd.f32 %v8101, %v8621
        %v8836 = vadd.f32 %v8102, %v8626
        %v8837 = vadd.f32 %v8103, %v8629
        %v8838 = vadd.f32 %v8104, %v8634
        %v8839 = vadd.f32 %v8105, %v8637
        %v8840 = vadd.f32 %v8106, %v8642
        %v8841 = vadd.f32 %v8107, %v8645
        %v8842 = vadd.f32 %v8108, %v8650
        %v8843 = vadd.f32 %v8109, %v8653
        %v8844 = vadd.f32 %v8110, %v8658
        %v8845 = vadd.f32 %v8111, %v8661
        %v8846 = vadd.f32 %v8112, %v8666
        %v8847 = vadd.f32 %v8113, %v8669
        %v8848 = vadd.f32 %v8114, %v8674
        %v8849 = vadd.f32 %v8115, %v8677
        %v8850 = vadd.f32 %v8116, %v8682
        %v8851 = vadd.f32 %v8117, %v8685
        %v8852 = vadd.f32 %v8118, %v8690
        %v8853 = vadd.f32 %v8119, %v8693
        %v8854 = vadd.f32 %v8120, %v8698
        %v8855 = vadd.f32 %v8121, %v8701
        %v8856 = vadd.f32 %v8122, %v8706
        %v8857 = vadd.f32 %v8123, %v8709
        %v8858 = vadd.f32 %v8124, %v8714
        %v8859 = vadd.f32 %v8125, %v8717
        %v8860 = vadd.f32 %v8126, %v8722
        %v8861 = vadd.f32 %v8127, %v8725
        %v8862 = vadd.f32 %v8128, %v8730
        %v8863 = vadd.f32 %v8129, %v8733
        %v8865 = vrot.slane %v375, 5
        %v8866 = vrot.slane %v8865, 4
        %v8867 = vrot.slane %v376, 5
        %v8868 = vsel %vm3825, %v8866, %v8867
        %v8869 = vrot.slane %v8867, 4
        %v8870 = vrot.slane %v377, 5
        %v8871 = vsel %vm3825, %v8869, %v8870
        %v8872 = vrot.slane %v8870, 4
        %v8873 = vrot.slane %v378, 5
        %v8874 = vsel %vm3825, %v8872, %v8873
        %v8875 = vrot.slane %v8873, 4
        %v8876 = vrot.slane %v379, 5
        %v8877 = vsel %vm3825, %v8875, %v8876
        %s8878 = scalar_lea.vmem %s208, 16
        %v8879 = vld [vmem:[%s8878] sm:$0x3]
        %v8880 = vunpack.c.l.b16 %v8868
        %v8881 = vunpack.c.l.b16 %v8871
        %v8882 = vunpack.c.l.b16 %v8874
        %v8883 = vunpack.c.l.b16 %v8877
        %v8884 = vpack.c.b16 %v8881, %v8880
        %v8885 = vpack.c.b16 %v8883, %v8882
        %v8887 = vsel %vm1986, %v8884, 0
        %v8890 = vsel %vm1986, %v8885, 0
        %v8893 = vand.u32 %v8879, %v2182
        %8895 = vmatprep.subr.bf16.mxu0 0
        %8896 = vmatpush1.bf16.msra.mxu0 %v8893
        %8897 = vmatprep.subr.bf16.mxu0 0
        %8898 = vmatpush1.bf16.msra.mxu0 0
        %8899 = vmatprep.subr.bf16.mxu0 0
        %8900 = vmatpush1.bf16.msra.mxu0 0
        %8901 = vmatprep.subr.bf16.mxu0 0
        %8902 = vmatpush1.bf16.msra.mxu0 0
        %8903 = vmatprep.subr.bf16.mxu0 0
        %8904 = vmatpush1.bf16.msra.mxu0 0
        %8905 = vmatprep.subr.bf16.mxu0 0
        %8906 = vmatpush1.bf16.msra.mxu0 0
        %8907 = vmatprep.subr.bf16.mxu0 0
        %8908 = vmatpush1.bf16.msra.mxu0 0
        %8909 = vmatprep.subr.bf16.mxu0 0
        %8910 = vmatpush1.bf16.msra.mxu0 0
        %8911 = vmatprep.subr.bf16.mxu0 0
        %8912 = vmatpush1.bf16.msra.mxu0 0
        %8913 = vmatprep.subr.bf16.mxu0 0
        %8914 = vmatpush1.bf16.msra.mxu0 0
        %8915 = vmatprep.subr.bf16.mxu0 0
        %8916 = vmatpush1.bf16.msra.mxu0 0
        %8917 = vmatprep.subr.bf16.mxu0 0
        %8918 = vmatpush1.bf16.msra.mxu0 0
        %8919 = vmatprep.subr.bf16.mxu0 0
        %8920 = vmatpush1.bf16.msra.mxu0 0
        %8921 = vmatprep.subr.bf16.mxu0 0
        %8922 = vmatpush1.bf16.msra.mxu0 0
        %8923 = vmatprep.subr.bf16.mxu0 0
        %8924 = vmatpush1.bf16.msra.mxu0 0
        %8925 = vmatprep.subr.bf16.mxu0 0
        %8926 = vmatpush1.bf16.msra.mxu0 0
        %8927 = vmatprep.mubr.bf16.mxu0 0
        %8928 = vmatmul.mubr.bf16.gmra.mrb[0].mxu0 %v4449
        %v8929 = vpop.f32.mrb[0].mxu0
        %v8930 = vadd.f32 0.0, %v8929
        %v8931 = vpop.f32.mrb[0].mxu0
        %v8932 = vpop.f32.mrb[0].mxu0
        %v8933 = vadd.f32 0.0, %v8932
        %v8934 = vpop.f32.mrb[0].mxu0
        %8935 = vmatprep.mubr.bf16.mxu0 0
        %8936 = vmatmul.mubr.bf16.gmra.mrb[0].mxu0 %v4452
        %v8937 = vpop.f32.mrb[0].mxu0
        %v8938 = vadd.f32 0.0, %v8937
        %v8939 = vpop.f32.mrb[0].mxu0
        %v8940 = vpop.f32.mrb[0].mxu0
        %v8941 = vadd.f32 0.0, %v8940
        %v8942 = vpop.f32.mrb[0].mxu0
        %8943 = vmatprep.mubr.bf16.mxu0 0
        %8944 = vmatmul.mubr.bf16.gmra.mrb[0].mxu0 %v4455
        %v8945 = vpop.f32.mrb[0].mxu0
        %v8946 = vadd.f32 0.0, %v8945
        %v8947 = vpop.f32.mrb[0].mxu0
        %v8948 = vpop.f32.mrb[0].mxu0
        %v8949 = vadd.f32 0.0, %v8948
        %v8950 = vpop.f32.mrb[0].mxu0
        %8951 = vmatprep.mubr.bf16.mxu0 0
        %8952 = vmatmul.mubr.bf16.gmra.mrb[0].mxu0 %v4458
        %v8953 = vpop.f32.mrb[0].mxu0
        %v8954 = vadd.f32 0.0, %v8953
        %v8955 = vpop.f32.mrb[0].mxu0
        %v8956 = vpop.f32.mrb[0].mxu0
        %v8957 = vadd.f32 0.0, %v8956
        %v8958 = vpop.f32.mrb[0].mxu0
        %8959 = vmatprep.mubr.bf16.mxu0 0
        %8960 = vmatmul.mubr.bf16.gmra.mrb[0].mxu0 %v4461
        %v8961 = vpop.f32.mrb[0].mxu0
        %v8962 = vadd.f32 0.0, %v8961
        %v8963 = vpop.f32.mrb[0].mxu0
        %v8964 = vpop.f32.mrb[0].mxu0
        %v8965 = vadd.f32 0.0, %v8964
        %v8966 = vpop.f32.mrb[0].mxu0
        %8967 = vmatprep.mubr.bf16.mxu0 0
        %8968 = vmatmul.mubr.bf16.gmra.mrb[0].mxu0 %v4464
        %v8969 = vpop.f32.mrb[0].mxu0
        %v8970 = vadd.f32 0.0, %v8969
        %v8971 = vpop.f32.mrb[0].mxu0
        %v8972 = vpop.f32.mrb[0].mxu0
        %v8973 = vadd.f32 0.0, %v8972
        %v8974 = vpop.f32.mrb[0].mxu0
        %8975 = vmatprep.mubr.bf16.mxu0 0
        %8976 = vmatmul.mubr.bf16.gmra.mrb[0].mxu0 %v4467
        %v8977 = vpop.f32.mrb[0].mxu0
        %v8978 = vadd.f32 0.0, %v8977
        %v8979 = vpop.f32.mrb[0].mxu0
        %v8980 = vpop.f32.mrb[0].mxu0
        %v8981 = vadd.f32 0.0, %v8980
        %v8982 = vpop.f32.mrb[0].mxu0
        %8983 = vmatprep.mubr.bf16.mxu0 0
        %8984 = vmatmul.mubr.bf16.gmra.mrb[0].mxu0 %v4470
        %v8985 = vpop.f32.mrb[0].mxu0
        %v8986 = vadd.f32 0.0, %v8985
        %v8987 = vpop.f32.mrb[0].mxu0
        %v8988 = vpop.f32.mrb[0].mxu0
        %v8989 = vadd.f32 0.0, %v8988
        %v8990 = vpop.f32.mrb[0].mxu0
        %8991 = vmatprep.mubr.bf16.mxu0 0
        %8992 = vmatmul.mubr.bf16.gmra.mrb[0].mxu0 %v4473
        %v8993 = vpop.f32.mrb[0].mxu0
        %v8994 = vadd.f32 0.0, %v8993
        %v8995 = vpop.f32.mrb[0].mxu0
        %v8996 = vpop.f32.mrb[0].mxu0
        %v8997 = vadd.f32 0.0, %v8996
        %v8998 = vpop.f32.mrb[0].mxu0
        %8999 = vmatprep.mubr.bf16.mxu0 0
        %9000 = vmatmul.mubr.bf16.gmra.mrb[0].mxu0 %v4476
        %v9001 = vpop.f32.mrb[0].mxu0
        %v9002 = vadd.f32 0.0, %v9001
        %v9003 = vpop.f32.mrb[0].mxu0
        %v9004 = vpop.f32.mrb[0].mxu0
        %v9005 = vadd.f32 0.0, %v9004
        %v9006 = vpop.f32.mrb[0].mxu0
        %9007 = vmatprep.mubr.bf16.mxu0 0
        %9008 = vmatmul.mubr.bf16.gmra.mrb[0].mxu0 %v4479
        %v9009 = vpop.f32.mrb[0].mxu0
        %v9010 = vadd.f32 0.0, %v9009
        %v9011 = vpop.f32.mrb[0].mxu0
        %v9012 = vpop.f32.mrb[0].mxu0
        %v9013 = vadd.f32 0.0, %v9012
        %v9014 = vpop.f32.mrb[0].mxu0
        %9015 = vmatprep.mubr.bf16.mxu0 0
        %9016 = vmatmul.mubr.bf16.gmra.mrb[0].mxu0 %v4482
        %v9017 = vpop.f32.mrb[0].mxu0
        %v9018 = vadd.f32 0.0, %v9017
        %v9019 = vpop.f32.mrb[0].mxu0
        %v9020 = vpop.f32.mrb[0].mxu0
        %v9021 = vadd.f32 0.0, %v9020
        %v9022 = vpop.f32.mrb[0].mxu0
        %9023 = vmatprep.mubr.bf16.mxu0 0
        %9024 = vmatmul.mubr.bf16.gmra.mrb[0].mxu0 %v4485
        %v9025 = vpop.f32.mrb[0].mxu0
        %v9026 = vadd.f32 0.0, %v9025
        %v9027 = vpop.f32.mrb[0].mxu0
        %v9028 = vpop.f32.mrb[0].mxu0
        %v9029 = vadd.f32 0.0, %v9028
        %v9030 = vpop.f32.mrb[0].mxu0
        %9031 = vmatprep.mubr.bf16.mxu0 0
        %9032 = vmatmul.mubr.bf16.gmra.mrb[0].mxu0 %v4488
        %v9033 = vpop.f32.mrb[0].mxu0
        %v9034 = vadd.f32 0.0, %v9033
        %v9035 = vpop.f32.mrb[0].mxu0
        %v9036 = vpop.f32.mrb[0].mxu0
        %v9037 = vadd.f32 0.0, %v9036
        %v9038 = vpop.f32.mrb[0].mxu0
        %9039 = vmatprep.mubr.bf16.mxu0 0
        %9040 = vmatmul.mubr.bf16.gmra.mrb[0].mxu0 %v4491
        %v9041 = vpop.f32.mrb[0].mxu0
        %v9042 = vadd.f32 0.0, %v9041
        %v9043 = vpop.f32.mrb[0].mxu0
        %v9044 = vpop.f32.mrb[0].mxu0
        %v9045 = vadd.f32 0.0, %v9044
        %v9046 = vpop.f32.mrb[0].mxu0
        %9047 = vmatprep.mubr.bf16.mxu0 0
        %9048 = vmatmul.mubr.bf16.gmra.mrb[0].mxu0 %v4494
        %v9049 = vpop.f32.mrb[0].mxu0
        %v9050 = vadd.f32 0.0, %v9049
        %v9051 = vpop.f32.mrb[0].mxu0
        %v9052 = vpop.f32.mrb[0].mxu0
        %v9053 = vadd.f32 0.0, %v9052
        %v9054 = vpop.f32.mrb[0].mxu0
        %9055 = vmatprep.mubr.bf16.mxu0 0
        %9056 = vmatmul.mubr.bf16.gmra.mrb[0].mxu0 %v4497
        %v9057 = vpop.f32.mrb[0].mxu0
        %v9058 = vadd.f32 0.0, %v9057
        %v9059 = vpop.f32.mrb[0].mxu0
        %v9060 = vpop.f32.mrb[0].mxu0
        %v9061 = vadd.f32 0.0, %v9060
        %v9062 = vpop.f32.mrb[0].mxu0
        %9063 = vmatprep.mubr.bf16.mxu0 0
        %9064 = vmatmul.mubr.bf16.gmra.mrb[0].mxu0 %v4500
        %v9065 = vpop.f32.mrb[0].mxu0
        %v9066 = vadd.f32 0.0, %v9065
        %v9067 = vpop.f32.mrb[0].mxu0
        %v9068 = vpop.f32.mrb[0].mxu0
        %v9069 = vadd.f32 0.0, %v9068
        %v9070 = vpop.f32.mrb[0].mxu0
        %9071 = vmatprep.mubr.bf16.mxu0 0
        %9072 = vmatmul.mubr.bf16.gmra.mrb[0].mxu0 %v4503
        %v9073 = vpop.f32.mrb[0].mxu0
        %v9074 = vadd.f32 0.0, %v9073
        %v9075 = vpop.f32.mrb[0].mxu0
        %v9076 = vpop.f32.mrb[0].mxu0
        %v9077 = vadd.f32 0.0, %v9076
        %v9078 = vpop.f32.mrb[0].mxu0
        %9079 = vmatprep.mubr.bf16.mxu0 0
        %9080 = vmatmul.mubr.bf16.gmra.mrb[0].mxu0 %v4506
        %v9081 = vpop.f32.mrb[0].mxu0
        %v9082 = vadd.f32 0.0, %v9081
        %v9083 = vpop.f32.mrb[0].mxu0
        %v9084 = vpop.f32.mrb[0].mxu0
        %v9085 = vadd.f32 0.0, %v9084
        %v9086 = vpop.f32.mrb[0].mxu0
        %9087 = vmatprep.mubr.bf16.mxu0 0
        %9088 = vmatmul.mubr.bf16.gmra.mrb[0].mxu0 %v4509
        %v9089 = vpop.f32.mrb[0].mxu0
        %v9090 = vadd.f32 0.0, %v9089
        %v9091 = vpop.f32.mrb[0].mxu0
        %v9092 = vpop.f32.mrb[0].mxu0
        %v9093 = vadd.f32 0.0, %v9092
        %v9094 = vpop.f32.mrb[0].mxu0
        %9095 = vmatprep.mubr.bf16.mxu0 0
        %9096 = vmatmul.mubr.bf16.gmra.mrb[0].mxu0 %v4512
        %v9097 = vpop.f32.mrb[0].mxu0
        %v9098 = vadd.f32 0.0, %v9097
        %v9099 = vpop.f32.mrb[0].mxu0
        %v9100 = vpop.f32.mrb[0].mxu0
        %v9101 = vadd.f32 0.0, %v9100
        %v9102 = vpop.f32.mrb[0].mxu0
        %9103 = vmatprep.mubr.bf16.mxu0 0
        %9104 = vmatmul.mubr.bf16.gmra.mrb[0].mxu0 %v4515
        %v9105 = vpop.f32.mrb[0].mxu0
        %v9106 = vadd.f32 0.0, %v9105
        %v9107 = vpop.f32.mrb[0].mxu0
        %v9108 = vpop.f32.mrb[0].mxu0
        %v9109 = vadd.f32 0.0, %v9108
        %v9110 = vpop.f32.mrb[0].mxu0
        %9111 = vmatprep.mubr.bf16.mxu0 0
        %9112 = vmatmul.mubr.bf16.gmra.mrb[0].mxu0 %v4518
        %v9113 = vpop.f32.mrb[0].mxu0
        %v9114 = vadd.f32 0.0, %v9113
        %v9115 = vpop.f32.mrb[0].mxu0
        %v9116 = vpop.f32.mrb[0].mxu0
        %v9117 = vadd.f32 0.0, %v9116
        %v9118 = vpop.f32.mrb[0].mxu0
        %9119 = vmatprep.mubr.bf16.mxu0 0
        %9120 = vmatmul.mubr.bf16.gmra.mrb[0].mxu0 %v4521
        %v9121 = vpop.f32.mrb[0].mxu0
        %v9122 = vadd.f32 0.0, %v9121
        %v9123 = vpop.f32.mrb[0].mxu0
        %v9124 = vpop.f32.mrb[0].mxu0
        %v9125 = vadd.f32 0.0, %v9124
        %v9126 = vpop.f32.mrb[0].mxu0
        %9127 = vmatprep.mubr.bf16.mxu0 0
        %9128 = vmatmul.mubr.bf16.gmra.mrb[0].mxu0 %v4524
        %v9129 = vpop.f32.mrb[0].mxu0
        %v9130 = vadd.f32 0.0, %v9129
        %v9131 = vpop.f32.mrb[0].mxu0
        %v9132 = vpop.f32.mrb[0].mxu0
        %v9133 = vadd.f32 0.0, %v9132
        %v9134 = vpop.f32.mrb[0].mxu0
        %9135 = vmatprep.mubr.bf16.mxu0 0
        %9136 = vmatmul.mubr.bf16.gmra.mrb[0].mxu0 %v4527
        %v9137 = vpop.f32.mrb[0].mxu0
        %v9138 = vadd.f32 0.0, %v9137
        %v9139 = vpop.f32.mrb[0].mxu0
        %v9140 = vpop.f32.mrb[0].mxu0
        %v9141 = vadd.f32 0.0, %v9140
        %v9142 = vpop.f32.mrb[0].mxu0
        %9143 = vmatprep.mubr.bf16.mxu0 0
        %9144 = vmatmul.mubr.bf16.gmra.mrb[0].mxu0 %v4530
        %v9145 = vpop.f32.mrb[0].mxu0
        %v9146 = vadd.f32 0.0, %v9145
        %v9147 = vpop.f32.mrb[0].mxu0
        %v9148 = vpop.f32.mrb[0].mxu0
        %v9149 = vadd.f32 0.0, %v9148
        %v9150 = vpop.f32.mrb[0].mxu0
        %9151 = vmatprep.mubr.bf16.mxu0 0
        %9152 = vmatmul.mubr.bf16.gmra.mrb[0].mxu0 %v4533
        %v9153 = vpop.f32.mrb[0].mxu0
        %v9154 = vadd.f32 0.0, %v9153
        %v9155 = vpop.f32.mrb[0].mxu0
        %v9156 = vpop.f32.mrb[0].mxu0
        %v9157 = vadd.f32 0.0, %v9156
        %v9158 = vpop.f32.mrb[0].mxu0
        %9159 = vmatprep.mubr.bf16.mxu0 0
        %9160 = vmatmul.mubr.bf16.gmra.mrb[0].mxu0 %v4536
        %v9161 = vpop.f32.mrb[0].mxu0
        %v9162 = vadd.f32 0.0, %v9161
        %v9163 = vpop.f32.mrb[0].mxu0
        %v9164 = vpop.f32.mrb[0].mxu0
        %v9165 = vadd.f32 0.0, %v9164
        %v9166 = vpop.f32.mrb[0].mxu0
        %9167 = vmatprep.mubr.bf16.mxu0 0
        %9168 = vmatmul.mubr.bf16.gmra.mrb[0].mxu0 %v4539
        %v9169 = vpop.f32.mrb[0].mxu0
        %v9170 = vadd.f32 0.0, %v9169
        %v9171 = vpop.f32.mrb[0].mxu0
        %v9172 = vpop.f32.mrb[0].mxu0
        %v9173 = vadd.f32 0.0, %v9172
        %v9174 = vpop.f32.mrb[0].mxu0
        %9175 = vmatprep.mubr.bf16.mxu0 0
        %9176 = vmatmul.mubr.bf16.gmra.mrb[0].mxu0 %v4542
        %v9177 = vpop.f32.mrb[0].mxu0
        %v9178 = vadd.f32 0.0, %v9177
        %v9179 = vpop.f32.mrb[0].mxu0
        %v9180 = vpop.f32.mrb[0].mxu0
        %v9181 = vadd.f32 0.0, %v9180
        %v9182 = vpop.f32.mrb[0].mxu0
        %9183 = vmatprep.mubr.bf16.mxu0 0
        %9184 = vmatmul.mubr.bf16.gmra.mrb[0].mxu0 %v4545
        %v9185 = vpop.f32.mrb[0].mxu0
        %v9186 = vadd.f32 0.0, %v9185
        %v9187 = vpop.f32.mrb[0].mxu0
        %v9188 = vpop.f32.mrb[0].mxu0
        %v9189 = vadd.f32 0.0, %v9188
        %v9190 = vpop.f32.mrb[0].mxu0
        %9191 = vmatprep.mubr.bf16.mxu0 0
        %9192 = vmatmul.mubr.bf16.gmra.mrb[0].mxu0 %v4548
        %v9193 = vpop.f32.mrb[0].mxu0
        %v9194 = vadd.f32 0.0, %v9193
        %v9195 = vpop.f32.mrb[0].mxu0
        %v9196 = vpop.f32.mrb[0].mxu0
        %v9197 = vadd.f32 0.0, %v9196
        %v9198 = vpop.f32.mrb[0].mxu0
        %9199 = vmatprep.mubr.bf16.mxu0 0
        %9200 = vmatmul.mubr.bf16.gmra.mrb[0].mxu0 %v4551
        %v9201 = vpop.f32.mrb[0].mxu0
        %v9202 = vadd.f32 0.0, %v9201
        %v9203 = vpop.f32.mrb[0].mxu0
        %v9204 = vpop.f32.mrb[0].mxu0
        %v9205 = vadd.f32 0.0, %v9204
        %v9206 = vpop.f32.mrb[0].mxu0
        %9207 = vmatprep.mubr.bf16.mxu0 0
        %9208 = vmatmul.mubr.bf16.gmra.mrb[0].mxu0 %v4554
        %v9209 = vpop.f32.mrb[0].mxu0
        %v9210 = vadd.f32 0.0, %v9209
        %v9211 = vpop.f32.mrb[0].mxu0
        %v9212 = vpop.f32.mrb[0].mxu0
        %v9213 = vadd.f32 0.0, %v9212
        %v9214 = vpop.f32.mrb[0].mxu0
        %9215 = vmatprep.mubr.bf16.mxu0 0
        %9216 = vmatmul.mubr.bf16.gmra.mrb[0].mxu0 %v4557
        %v9217 = vpop.f32.mrb[0].mxu0
        %v9218 = vadd.f32 0.0, %v9217
        %v9219 = vpop.f32.mrb[0].mxu0
        %v9220 = vpop.f32.mrb[0].mxu0
        %v9221 = vadd.f32 0.0, %v9220
        %v9222 = vpop.f32.mrb[0].mxu0
        %9223 = vmatprep.mubr.bf16.mxu0 0
        %9224 = vmatmul.mubr.bf16.gmra.mrb[0].mxu0 %v4560
        %v9225 = vpop.f32.mrb[0].mxu0
        %v9226 = vadd.f32 0.0, %v9225
        %v9227 = vpop.f32.mrb[0].mxu0
        %v9228 = vpop.f32.mrb[0].mxu0
        %v9229 = vadd.f32 0.0, %v9228
        %v9230 = vpop.f32.mrb[0].mxu0
        %9231 = vmatprep.mubr.bf16.mxu0 0
        %9232 = vmatmul.mubr.bf16.gmra.mrb[0].mxu0 %v4563
        %v9233 = vpop.f32.mrb[0].mxu0
        %v9234 = vadd.f32 0.0, %v9233
        %v9235 = vpop.f32.mrb[0].mxu0
        %v9236 = vpop.f32.mrb[0].mxu0
        %v9237 = vadd.f32 0.0, %v9236
        %v9238 = vpop.f32.mrb[0].mxu0
        %9239 = vmatprep.mubr.bf16.mxu0 0
        %9240 = vmatmul.mubr.bf16.gmra.mrb[0].mxu0 %v4566
        %v9241 = vpop.f32.mrb[0].mxu0
        %v9242 = vadd.f32 0.0, %v9241
        %v9243 = vpop.f32.mrb[0].mxu0
        %v9244 = vpop.f32.mrb[0].mxu0
        %v9245 = vadd.f32 0.0, %v9244
        %v9246 = vpop.f32.mrb[0].mxu0
        %9247 = vmatprep.mubr.bf16.mxu0 0
        %9248 = vmatmul.mubr.bf16.gmra.mrb[0].mxu0 %v4569
        %v9249 = vpop.f32.mrb[0].mxu0
        %v9250 = vadd.f32 0.0, %v9249
        %v9251 = vpop.f32.mrb[0].mxu0
        %v9252 = vpop.f32.mrb[0].mxu0
        %v9253 = vadd.f32 0.0, %v9252
        %v9254 = vpop.f32.mrb[0].mxu0
        %9255 = vmatprep.mubr.bf16.mxu0 0
        %9256 = vmatmul.mubr.bf16.gmra.mrb[0].mxu0 %v4572
        %v9257 = vpop.f32.mrb[0].mxu0
        %v9258 = vadd.f32 0.0, %v9257
        %v9259 = vpop.f32.mrb[0].mxu0
        %v9260 = vpop.f32.mrb[0].mxu0
        %v9261 = vadd.f32 0.0, %v9260
        %v9262 = vpop.f32.mrb[0].mxu0
        %9263 = vmatprep.mubr.bf16.mxu0 0
        %9264 = vmatmul.mubr.bf16.gmra.mrb[0].mxu0 %v4575
        %v9265 = vpop.f32.mrb[0].mxu0
        %v9266 = vadd.f32 0.0, %v9265
        %v9267 = vpop.f32.mrb[0].mxu0
        %v9268 = vpop.f32.mrb[0].mxu0
        %v9269 = vadd.f32 0.0, %v9268
        %v9270 = vpop.f32.mrb[0].mxu0
        %9271 = vmatprep.mubr.bf16.mxu0 0
        %9272 = vmatmul.mubr.bf16.gmra.mrb[0].mxu0 %v4578
        %v9273 = vpop.f32.mrb[0].mxu0
        %v9274 = vadd.f32 0.0, %v9273
        %v9275 = vpop.f32.mrb[0].mxu0
        %v9276 = vpop.f32.mrb[0].mxu0
        %v9277 = vadd.f32 0.0, %v9276
        %v9278 = vpop.f32.mrb[0].mxu0
        %9279 = vmatprep.mubr.bf16.mxu0 0
        %9280 = vmatmul.mubr.bf16.gmra.mrb[0].mxu0 %v4581
        %v9281 = vpop.f32.mrb[0].mxu0
        %v9282 = vadd.f32 0.0, %v9281
        %v9283 = vpop.f32.mrb[0].mxu0
        %v9284 = vpop.f32.mrb[0].mxu0
        %v9285 = vadd.f32 0.0, %v9284
        %v9286 = vpop.f32.mrb[0].mxu0
        %9287 = vmatprep.mubr.bf16.mxu0 0
        %9288 = vmatmul.mubr.bf16.gmra.mrb[0].mxu0 %v4584
        %v9289 = vpop.f32.mrb[0].mxu0
        %v9290 = vadd.f32 0.0, %v9289
        %v9291 = vpop.f32.mrb[0].mxu0
        %v9292 = vpop.f32.mrb[0].mxu0
        %v9293 = vadd.f32 0.0, %v9292
        %v9294 = vpop.f32.mrb[0].mxu0
        %9295 = vmatprep.mubr.bf16.mxu0 0
        %9296 = vmatmul.mubr.bf16.gmra.mrb[0].mxu0 %v4587
        %v9297 = vpop.f32.mrb[0].mxu0
        %v9298 = vadd.f32 0.0, %v9297
        %v9299 = vpop.f32.mrb[0].mxu0
        %v9300 = vpop.f32.mrb[0].mxu0
        %v9301 = vadd.f32 0.0, %v9300
        %v9302 = vpop.f32.mrb[0].mxu0
        %9303 = vmatprep.mubr.bf16.mxu0 0
        %9304 = vmatmul.mubr.bf16.gmra.mrb[0].mxu0 %v4590
        %v9305 = vpop.f32.mrb[0].mxu0
        %v9306 = vadd.f32 0.0, %v9305
        %v9307 = vpop.f32.mrb[0].mxu0
        %v9308 = vpop.f32.mrb[0].mxu0
        %v9309 = vadd.f32 0.0, %v9308
        %v9310 = vpop.f32.mrb[0].mxu0
        %9311 = vmatprep.mubr.bf16.mxu0 0
        %9312 = vmatmul.mubr.bf16.gmra.mrb[0].mxu0 %v4593
        %v9313 = vpop.f32.mrb[0].mxu0
        %v9314 = vadd.f32 0.0, %v9313
        %v9315 = vpop.f32.mrb[0].mxu0
        %v9316 = vpop.f32.mrb[0].mxu0
        %v9317 = vadd.f32 0.0, %v9316
        %v9318 = vpop.f32.mrb[0].mxu0
        %9319 = vmatprep.mubr.bf16.mxu0 0
        %9320 = vmatmul.mubr.bf16.gmra.mrb[0].mxu0 %v4596
        %v9321 = vpop.f32.mrb[0].mxu0
        %v9322 = vadd.f32 0.0, %v9321
        %v9323 = vpop.f32.mrb[0].mxu0
        %v9324 = vpop.f32.mrb[0].mxu0
        %v9325 = vadd.f32 0.0, %v9324
        %v9326 = vpop.f32.mrb[0].mxu0
        %9327 = vmatprep.mubr.bf16.mxu0 0
        %9328 = vmatmul.mubr.bf16.gmra.mrb[0].mxu0 %v4599
        %v9329 = vpop.f32.mrb[0].mxu0
        %v9330 = vadd.f32 0.0, %v9329
        %v9331 = vpop.f32.mrb[0].mxu0
        %v9332 = vpop.f32.mrb[0].mxu0
        %v9333 = vadd.f32 0.0, %v9332
        %v9334 = vpop.f32.mrb[0].mxu0
        %9335 = vmatprep.mubr.bf16.mxu0 0
        %9336 = vmatmul.mubr.bf16.gmra.mrb[0].mxu0 %v4602
        %v9337 = vpop.f32.mrb[0].mxu0
        %v9338 = vadd.f32 0.0, %v9337
        %v9339 = vpop.f32.mrb[0].mxu0
        %v9340 = vpop.f32.mrb[0].mxu0
        %v9341 = vadd.f32 0.0, %v9340
        %v9342 = vpop.f32.mrb[0].mxu0
        %9343 = vmatprep.mubr.bf16.mxu0 0
        %9344 = vmatmul.mubr.bf16.gmra.mrb[0].mxu0 %v4605
        %v9345 = vpop.f32.mrb[0].mxu0
        %v9346 = vadd.f32 0.0, %v9345
        %v9347 = vpop.f32.mrb[0].mxu0
        %v9348 = vpop.f32.mrb[0].mxu0
        %v9349 = vadd.f32 0.0, %v9348
        %v9350 = vpop.f32.mrb[0].mxu0
        %9351 = vmatprep.mubr.bf16.mxu0 0
        %9352 = vmatmul.mubr.bf16.gmra.mrb[0].mxu0 %v4608
        %v9353 = vpop.f32.mrb[0].mxu0
        %v9354 = vadd.f32 0.0, %v9353
        %v9355 = vpop.f32.mrb[0].mxu0
        %v9356 = vpop.f32.mrb[0].mxu0
        %v9357 = vadd.f32 0.0, %v9356
        %v9358 = vpop.f32.mrb[0].mxu0
        %9359 = vmatprep.mubr.bf16.mxu0 0
        %9360 = vmatmul.mubr.bf16.gmra.mrb[0].mxu0 %v4611
        %v9361 = vpop.f32.mrb[0].mxu0
        %v9362 = vadd.f32 0.0, %v9361
        %v9363 = vpop.f32.mrb[0].mxu0
        %v9364 = vpop.f32.mrb[0].mxu0
        %v9365 = vadd.f32 0.0, %v9364
        %v9366 = vpop.f32.mrb[0].mxu0
        %9367 = vmatprep.mubr.bf16.mxu0 0
        %9368 = vmatmul.mubr.bf16.gmra.mrb[0].mxu0 %v4614
        %v9369 = vpop.f32.mrb[0].mxu0
        %v9370 = vadd.f32 0.0, %v9369
        %v9371 = vpop.f32.mrb[0].mxu0
        %v9372 = vpop.f32.mrb[0].mxu0
        %v9373 = vadd.f32 0.0, %v9372
        %v9374 = vpop.f32.mrb[0].mxu0
        %9375 = vmatprep.mubr.bf16.mxu0 0
        %9376 = vmatmul.mubr.bf16.gmra.mrb[0].mxu0 %v4617
        %v9377 = vpop.f32.mrb[0].mxu0
        %v9378 = vadd.f32 0.0, %v9377
        %v9379 = vpop.f32.mrb[0].mxu0
        %v9380 = vpop.f32.mrb[0].mxu0
        %v9381 = vadd.f32 0.0, %v9380
        %v9382 = vpop.f32.mrb[0].mxu0
        %9383 = vmatprep.mubr.bf16.mxu0 0
        %9384 = vmatmul.mubr.bf16.gmra.mrb[0].mxu0 %v4620
        %v9385 = vpop.f32.mrb[0].mxu0
        %v9386 = vadd.f32 0.0, %v9385
        %v9387 = vpop.f32.mrb[0].mxu0
        %v9388 = vpop.f32.mrb[0].mxu0
        %v9389 = vadd.f32 0.0, %v9388
        %v9390 = vpop.f32.mrb[0].mxu0
        %9391 = vmatprep.mubr.bf16.mxu0 0
        %9392 = vmatmul.mubr.bf16.gmra.mrb[0].mxu0 %v4623
        %v9393 = vpop.f32.mrb[0].mxu0
        %v9394 = vadd.f32 0.0, %v9393
        %v9395 = vpop.f32.mrb[0].mxu0
        %v9396 = vpop.f32.mrb[0].mxu0
        %v9397 = vadd.f32 0.0, %v9396
        %v9398 = vpop.f32.mrb[0].mxu0
        %9399 = vmatprep.mubr.bf16.mxu0 0
        %9400 = vmatmul.mubr.bf16.gmra.mrb[0].mxu0 %v4626
        %v9401 = vpop.f32.mrb[0].mxu0
        %v9402 = vadd.f32 0.0, %v9401
        %v9403 = vpop.f32.mrb[0].mxu0
        %v9404 = vpop.f32.mrb[0].mxu0
        %v9405 = vadd.f32 0.0, %v9404
        %v9406 = vpop.f32.mrb[0].mxu0
        %9407 = vmatprep.mubr.bf16.mxu0 0
        %9408 = vmatmul.mubr.bf16.gmra.mrb[0].mxu0 %v6755
        %v9409 = vpop.f32.mrb[0].mxu0
        %v9410 = vadd.f32 0.0, %v9409
        %v9411 = vpop.f32.mrb[0].mxu0
        %v9412 = vpop.f32.mrb[0].mxu0
        %v9413 = vadd.f32 0.0, %v9412
        %v9414 = vpop.f32.mrb[0].mxu0
        %9415 = vmatprep.mubr.bf16.mxu0 0
        %9416 = vmatmul.mubr.bf16.gmra.mrb[0].mxu0 %v6758
        %v9417 = vpop.f32.mrb[0].mxu0
        %v9418 = vadd.f32 0.0, %v9417
        %v9419 = vpop.f32.mrb[0].mxu0
        %v9420 = vpop.f32.mrb[0].mxu0
        %v9421 = vadd.f32 0.0, %v9420
        %v9422 = vpop.f32.mrb[0].mxu0
        %9423 = vmatprep.mubr.bf16.mxu0 0
        %9424 = vmatmul.mubr.bf16.gmra.mrb[0].mxu0 %v8887
        %v9425 = vpop.f32.mrb[0].mxu0
        %v9426 = vadd.f32 0.0, %v9425
        %v9427 = vpop.f32.mrb[0].mxu0
        %v9428 = vpop.f32.mrb[0].mxu0
        %v9429 = vadd.f32 0.0, %v9428
        %v9430 = vpop.f32.mrb[0].mxu0
        %9431 = vmatprep.mubr.bf16.mxu0 0
        %9432 = vmatmul.mubr.bf16.gmra.mrb[0].mxu0 %v8890
        %v9433 = vpop.f32.mrb[0].mxu0
        %v9434 = vadd.f32 0.0, %v9433
        %v9435 = vpop.f32.mrb[0].mxu0
        %v9436 = vpop.f32.mrb[0].mxu0
        %v9437 = vadd.f32 0.0, %v9436
        %v9438 = vpop.f32.mrb[0].mxu0
        %9439 = vdwg.mxu0
        %v9440 = vadd.f32 %v8736, %v8930
        %v9441 = vadd.f32 %v8737, %v8933
        %v9442 = vadd.f32 %v8738, %v8938
        %v9443 = vadd.f32 %v8739, %v8941
        %v9444 = vadd.f32 %v8740, %v8946
        %v9445 = vadd.f32 %v8741, %v8949
        %v9446 = vadd.f32 %v8742, %v8954
        %v9447 = vadd.f32 %v8743, %v8957
        %v9448 = vadd.f32 %v8744, %v8962
        %v9449 = vadd.f32 %v8745, %v8965
        %v9450 = vadd.f32 %v8746, %v8970
        %v9451 = vadd.f32 %v8747, %v8973
        %v9452 = vadd.f32 %v8748, %v8978
        %v9453 = vadd.f32 %v8749, %v8981
        %v9454 = vadd.f32 %v8750, %v8986
        %v9455 = vadd.f32 %v8751, %v8989
        %v9456 = vadd.f32 %v8752, %v8994
        %v9457 = vadd.f32 %v8753, %v8997
        %v9458 = vadd.f32 %v8754, %v9002
        %v9459 = vadd.f32 %v8755, %v9005
        %v9460 = vadd.f32 %v8756, %v9010
        %v9461 = vadd.f32 %v8757, %v9013
        %v9462 = vadd.f32 %v8758, %v9018
        %v9463 = vadd.f32 %v8759, %v9021
        %v9464 = vadd.f32 %v8760, %v9026
        %v9465 = vadd.f32 %v8761, %v9029
        %v9466 = vadd.f32 %v8762, %v9034
        %v9467 = vadd.f32 %v8763, %v9037
        %v9468 = vadd.f32 %v8764, %v9042
        %v9469 = vadd.f32 %v8765, %v9045
        %v9470 = vadd.f32 %v8766, %v9050
        %v9471 = vadd.f32 %v8767, %v9053
        %v9472 = vadd.f32 %v8768, %v9058
        %v9473 = vadd.f32 %v8769, %v9061
        %v9474 = vadd.f32 %v8770, %v9066
        %v9475 = vadd.f32 %v8771, %v9069
        %v9476 = vadd.f32 %v8772, %v9074
        %v9477 = vadd.f32 %v8773, %v9077
        %v9478 = vadd.f32 %v8774, %v9082
        %v9479 = vadd.f32 %v8775, %v9085
        %v9480 = vadd.f32 %v8776, %v9090
        %v9481 = vadd.f32 %v8777, %v9093
        %v9482 = vadd.f32 %v8778, %v9098
        %v9483 = vadd.f32 %v8779, %v9101
        %v9484 = vadd.f32 %v8780, %v9106
        %v9485 = vadd.f32 %v8781, %v9109
        %v9486 = vadd.f32 %v8782, %v9114
        %v9487 = vadd.f32 %v8783, %v9117
        %v9488 = vadd.f32 %v8784, %v9122
        %v9489 = vadd.f32 %v8785, %v9125
        %v9490 = vadd.f32 %v8786, %v9130
        %v9491 = vadd.f32 %v8787, %v9133
        %v9492 = vadd.f32 %v8788, %v9138
        %v9493 = vadd.f32 %v8789, %v9141
        %v9494 = vadd.f32 %v8790, %v9146
        %v9495 = vadd.f32 %v8791, %v9149
        %v9496 = vadd.f32 %v8792, %v9154
        %v9497 = vadd.f32 %v8793, %v9157
        %v9498 = vadd.f32 %v8794, %v9162
        %v9499 = vadd.f32 %v8795, %v9165
        %v9500 = vadd.f32 %v8796, %v9170
        %v9501 = vadd.f32 %v8797, %v9173
        %v9502 = vadd.f32 %v8798, %v9178
        %v9503 = vadd.f32 %v8799, %v9181
        %v9504 = vadd.f32 %v8800, %v9186
        %v9505 = vadd.f32 %v8801, %v9189
        %v9506 = vadd.f32 %v8802, %v9194
        %v9507 = vadd.f32 %v8803, %v9197
        %v9508 = vadd.f32 %v8804, %v9202
        %v9509 = vadd.f32 %v8805, %v9205
        %v9510 = vadd.f32 %v8806, %v9210
        %v9511 = vadd.f32 %v8807, %v9213
        %v9512 = vadd.f32 %v8808, %v9218
        %v9513 = vadd.f32 %v8809, %v9221
        %v9514 = vadd.f32 %v8810, %v9226
        %v9515 = vadd.f32 %v8811, %v9229
        %v9516 = vadd.f32 %v8812, %v9234
        %v9517 = vadd.f32 %v8813, %v9237
        %v9518 = vadd.f32 %v8814, %v9242
        %v9519 = vadd.f32 %v8815, %v9245
        %v9520 = vadd.f32 %v8816, %v9250
        %v9521 = vadd.f32 %v8817, %v9253
        %v9522 = vadd.f32 %v8818, %v9258
        %v9523 = vadd.f32 %v8819, %v9261
        %v9524 = vadd.f32 %v8820, %v9266
        %v9525 = vadd.f32 %v8821, %v9269
        %v9526 = vadd.f32 %v8822, %v9274
        %v9527 = vadd.f32 %v8823, %v9277
        %v9528 = vadd.f32 %v8824, %v9282
        %v9529 = vadd.f32 %v8825, %v9285
        %v9530 = vadd.f32 %v8826, %v9290
        %v9531 = vadd.f32 %v8827, %v9293
        %v9532 = vadd.f32 %v8828, %v9298
        %v9533 = vadd.f32 %v8829, %v9301
        %v9534 = vadd.f32 %v8830, %v9306
        %v9535 = vadd.f32 %v8831, %v9309
        %v9536 = vadd.f32 %v8832, %v9314
        %v9537 = vadd.f32 %v8833, %v9317
        %v9538 = vadd.f32 %v8834, %v9322
        %v9539 = vadd.f32 %v8835, %v9325
        %v9540 = vadd.f32 %v8836, %v9330
        %v9541 = vadd.f32 %v8837, %v9333
        %v9542 = vadd.f32 %v8838, %v9338
        %v9543 = vadd.f32 %v8839, %v9341
        %v9544 = vadd.f32 %v8840, %v9346
        %v9545 = vadd.f32 %v8841, %v9349
        %v9546 = vadd.f32 %v8842, %v9354
        %v9547 = vadd.f32 %v8843, %v9357
        %v9548 = vadd.f32 %v8844, %v9362
        %v9549 = vadd.f32 %v8845, %v9365
        %v9550 = vadd.f32 %v8846, %v9370
        %v9551 = vadd.f32 %v8847, %v9373
        %v9552 = vadd.f32 %v8848, %v9378
        %v9553 = vadd.f32 %v8849, %v9381
        %v9554 = vadd.f32 %v8850, %v9386
        %v9555 = vadd.f32 %v8851, %v9389
        %v9556 = vadd.f32 %v8852, %v9394
        %v9557 = vadd.f32 %v8853, %v9397
        %v9558 = vadd.f32 %v8854, %v9402
        %v9559 = vadd.f32 %v8855, %v9405
        %v9560 = vadd.f32 %v8856, %v9410
        %v9561 = vadd.f32 %v8857, %v9413
        %v9562 = vadd.f32 %v8858, %v9418
        %v9563 = vadd.f32 %v8859, %v9421
        %v9564 = vadd.f32 %v8860, %v9426
        %v9565 = vadd.f32 %v8861, %v9429
        %v9566 = vadd.f32 %v8862, %v9434
        %v9567 = vadd.f32 %v8863, %v9437
        %v9568 = vld [vmem:[%s2] sm:$0x1]
        %v9570 = vlaneseq
        %v9571 = vshrl.u32 %v9570, 7
        %v9572 = vsub.s32 0, %v9571
        %v9573 = vrot.slane %v9568, %v9572
        %v9575 = vadd.f32 %v9440, %v9573
        %v9576 = vadd.f32 %v9441, %v9573
        %v9577 = vadd.f32 %v9442, %v9573
        %v9578 = vadd.f32 %v9443, %v9573
        %v9579 = vadd.f32 %v9444, %v9573
        %v9580 = vadd.f32 %v9445, %v9573
        %v9581 = vadd.f32 %v9446, %v9573
        %v9582 = vadd.f32 %v9447, %v9573
        %v9583 = vadd.f32 %v9448, %v9573
        %v9584 = vadd.f32 %v9449, %v9573
        %v9585 = vadd.f32 %v9450, %v9573
        %v9586 = vadd.f32 %v9451, %v9573
        %v9587 = vadd.f32 %v9452, %v9573
        %v9588 = vadd.f32 %v9453, %v9573
        %v9589 = vadd.f32 %v9454, %v9573
        %v9590 = vadd.f32 %v9455, %v9573
        %v9591 = vadd.f32 %v9456, %v9573
        %v9592 = vadd.f32 %v9457, %v9573
        %v9593 = vadd.f32 %v9458, %v9573
        %v9594 = vadd.f32 %v9459, %v9573
        %v9595 = vadd.f32 %v9460, %v9573
        %v9596 = vadd.f32 %v9461, %v9573
        %v9597 = vadd.f32 %v9462, %v9573
        %v9598 = vadd.f32 %v9463, %v9573
        %v9599 = vadd.f32 %v9464, %v9573
        %v9600 = vadd.f32 %v9465, %v9573
        %v9601 = vadd.f32 %v9466, %v9573
        %v9602 = vadd.f32 %v9467, %v9573
        %v9603 = vadd.f32 %v9468, %v9573
        %v9604 = vadd.f32 %v9469, %v9573
        %v9605 = vadd.f32 %v9470, %v9573
        %v9606 = vadd.f32 %v9471, %v9573
        %v9607 = vadd.f32 %v9472, %v9573
        %v9608 = vadd.f32 %v9473, %v9573
        %v9609 = vadd.f32 %v9474, %v9573
        %v9610 = vadd.f32 %v9475, %v9573
        %v9611 = vadd.f32 %v9476, %v9573
        %v9612 = vadd.f32 %v9477, %v9573
        %v9613 = vadd.f32 %v9478, %v9573
        %v9614 = vadd.f32 %v9479, %v9573
        %v9615 = vadd.f32 %v9480, %v9573
        %v9616 = vadd.f32 %v9481, %v9573
        %v9617 = vadd.f32 %v9482, %v9573
        %v9618 = vadd.f32 %v9483, %v9573
        %v9619 = vadd.f32 %v9484, %v9573
        %v9620 = vadd.f32 %v9485, %v9573
        %v9621 = vadd.f32 %v9486, %v9573
        %v9622 = vadd.f32 %v9487, %v9573
        %v9623 = vadd.f32 %v9488, %v9573
        %v9624 = vadd.f32 %v9489, %v9573
        %v9625 = vadd.f32 %v9490, %v9573
        %v9626 = vadd.f32 %v9491, %v9573
        %v9627 = vadd.f32 %v9492, %v9573
        %v9628 = vadd.f32 %v9493, %v9573
        %v9629 = vadd.f32 %v9494, %v9573
        %v9630 = vadd.f32 %v9495, %v9573
        %v9631 = vadd.f32 %v9496, %v9573
        %v9632 = vadd.f32 %v9497, %v9573
        %v9633 = vadd.f32 %v9498, %v9573
        %v9634 = vadd.f32 %v9499, %v9573
        %v9635 = vadd.f32 %v9500, %v9573
        %v9636 = vadd.f32 %v9501, %v9573
        %v9637 = vadd.f32 %v9502, %v9573
        %v9638 = vadd.f32 %v9503, %v9573
        %v9639 = vadd.f32 %v9504, %v9573
        %v9640 = vadd.f32 %v9505, %v9573
        %v9641 = vadd.f32 %v9506, %v9573
        %v9642 = vadd.f32 %v9507, %v9573
        %v9643 = vadd.f32 %v9508, %v9573
        %v9644 = vadd.f32 %v9509, %v9573
        %v9645 = vadd.f32 %v9510, %v9573
        %v9646 = vadd.f32 %v9511, %v9573
        %v9647 = vadd.f32 %v9512, %v9573
        %v9648 = vadd.f32 %v9513, %v9573
        %v9649 = vadd.f32 %v9514, %v9573
        %v9650 = vadd.f32 %v9515, %v9573
        %v9651 = vadd.f32 %v9516, %v9573
        %v9652 = vadd.f32 %v9517, %v9573
        %v9653 = vadd.f32 %v9518, %v9573
        %v9654 = vadd.f32 %v9519, %v9573
        %v9655 = vadd.f32 %v9520, %v9573
        %v9656 = vadd.f32 %v9521, %v9573
        %v9657 = vadd.f32 %v9522, %v9573
        %v9658 = vadd.f32 %v9523, %v9573
        %v9659 = vadd.f32 %v9524, %v9573
        %v9660 = vadd.f32 %v9525, %v9573
        %v9661 = vadd.f32 %v9526, %v9573
        %v9662 = vadd.f32 %v9527, %v9573
        %v9663 = vadd.f32 %v9528, %v9573
        %v9664 = vadd.f32 %v9529, %v9573
        %v9665 = vadd.f32 %v9530, %v9573
        %v9666 = vadd.f32 %v9531, %v9573
        %v9667 = vadd.f32 %v9532, %v9573
        %v9668 = vadd.f32 %v9533, %v9573
        %v9669 = vadd.f32 %v9534, %v9573
        %v9670 = vadd.f32 %v9535, %v9573
        %v9671 = vadd.f32 %v9536, %v9573
        %v9672 = vadd.f32 %v9537, %v9573
        %v9673 = vadd.f32 %v9538, %v9573
        %v9674 = vadd.f32 %v9539, %v9573
        %v9675 = vadd.f32 %v9540, %v9573
        %v9676 = vadd.f32 %v9541, %v9573
        %v9677 = vadd.f32 %v9542, %v9573
        %v9678 = vadd.f32 %v9543, %v9573
        %v9679 = vadd.f32 %v9544, %v9573
        %v9680 = vadd.f32 %v9545, %v9573
        %v9681 = vadd.f32 %v9546, %v9573
        %v9682 = vadd.f32 %v9547, %v9573
        %v9683 = vadd.f32 %v9548, %v9573
        %v9684 = vadd.f32 %v9549, %v9573
        %v9685 = vadd.f32 %v9550, %v9573
        %v9686 = vadd.f32 %v9551, %v9573
        %v9687 = vadd.f32 %v9552, %v9573
        %v9688 = vadd.f32 %v9553, %v9573
        %v9689 = vadd.f32 %v9554, %v9573
        %v9690 = vadd.f32 %v9555, %v9573
        %v9691 = vadd.f32 %v9556, %v9573
        %v9692 = vadd.f32 %v9557, %v9573
        %v9693 = vadd.f32 %v9558, %v9573
        %v9694 = vadd.f32 %v9559, %v9573
        %v9695 = vadd.f32 %v9560, %v9573
        %v9696 = vadd.f32 %v9561, %v9573
        %v9697 = vadd.f32 %v9562, %v9573
        %v9698 = vadd.f32 %v9563, %v9573
        %v9699 = vadd.f32 %v9564, %v9573
        %v9700 = vadd.f32 %v9565, %v9573
        %v9701 = vadd.f32 %v9566, %v9573
        %v9702 = vadd.f32 %v9567, %v9573
        %v9703 = vmax.f32 %v9575, 0.0
        %v9704 = vmax.f32 %v9576, 0.0
        %v9705 = vmax.f32 %v9577, 0.0
        %v9706 = vmax.f32 %v9578, 0.0
        %v9707 = vmax.f32 %v9579, 0.0
        %v9708 = vmax.f32 %v9580, 0.0
        %v9709 = vmax.f32 %v9581, 0.0
        %v9710 = vmax.f32 %v9582, 0.0
        %v9711 = vmax.f32 %v9583, 0.0
        %v9712 = vmax.f32 %v9584, 0.0
        %v9713 = vmax.f32 %v9585, 0.0
        %v9714 = vmax.f32 %v9586, 0.0
        %v9715 = vmax.f32 %v9587, 0.0
        %v9716 = vmax.f32 %v9588, 0.0
        %v9717 = vmax.f32 %v9589, 0.0
        %v9718 = vmax.f32 %v9590, 0.0
        %v9719 = vmax.f32 %v9591, 0.0
        %v9720 = vmax.f32 %v9592, 0.0
        %v9721 = vmax.f32 %v9593, 0.0
        %v9722 = vmax.f32 %v9594, 0.0
        %v9723 = vmax.f32 %v9595, 0.0
        %v9724 = vmax.f32 %v9596, 0.0
        %v9725 = vmax.f32 %v9597, 0.0
        %v9726 = vmax.f32 %v9598, 0.0
        %v9727 = vmax.f32 %v9599, 0.0
        %v9728 = vmax.f32 %v9600, 0.0
        %v9729 = vmax.f32 %v9601, 0.0
        %v9730 = vmax.f32 %v9602, 0.0
        %v9731 = vmax.f32 %v9603, 0.0
        %v9732 = vmax.f32 %v9604, 0.0
        %v9733 = vmax.f32 %v9605, 0.0
        %v9734 = vmax.f32 %v9606, 0.0
        %v9735 = vmax.f32 %v9607, 0.0
        %v9736 = vmax.f32 %v9608, 0.0
        %v9737 = vmax.f32 %v9609, 0.0
        %v9738 = vmax.f32 %v9610, 0.0
        %v9739 = vmax.f32 %v9611, 0.0
        %v9740 = vmax.f32 %v9612, 0.0
        %v9741 = vmax.f32 %v9613, 0.0
        %v9742 = vmax.f32 %v9614, 0.0
        %v9743 = vmax.f32 %v9615, 0.0
        %v9744 = vmax.f32 %v9616, 0.0
        %v9745 = vmax.f32 %v9617, 0.0
        %v9746 = vmax.f32 %v9618, 0.0
        %v9747 = vmax.f32 %v9619, 0.0
        %v9748 = vmax.f32 %v9620, 0.0
        %v9749 = vmax.f32 %v9621, 0.0
        %v9750 = vmax.f32 %v9622, 0.0
        %v9751 = vmax.f32 %v9623, 0.0
        %v9752 = vmax.f32 %v9624, 0.0
        %v9753 = vmax.f32 %v9625, 0.0
        %v9754 = vmax.f32 %v9626, 0.0
        %v9755 = vmax.f32 %v9627, 0.0
        %v9756 = vmax.f32 %v9628, 0.0
        %v9757 = vmax.f32 %v9629, 0.0
        %v9758 = vmax.f32 %v9630, 0.0
        %v9759 = vmax.f32 %v9631, 0.0
        %v9760 = vmax.f32 %v9632, 0.0
        %v9761 = vmax.f32 %v9633, 0.0
        %v9762 = vmax.f32 %v9634, 0.0
        %v9763 = vmax.f32 %v9635, 0.0
        %v9764 = vmax.f32 %v9636, 0.0
        %v9765 = vmax.f32 %v9637, 0.0
        %v9766 = vmax.f32 %v9638, 0.0
        %v9767 = vmax.f32 %v9639, 0.0
        %v9768 = vmax.f32 %v9640, 0.0
        %v9769 = vmax.f32 %v9641, 0.0
        %v9770 = vmax.f32 %v9642, 0.0
        %v9771 = vmax.f32 %v9643, 0.0
        %v9772 = vmax.f32 %v9644, 0.0
        %v9773 = vmax.f32 %v9645, 0.0
        %v9774 = vmax.f32 %v9646, 0.0
        %v9775 = vmax.f32 %v9647, 0.0
        %v9776 = vmax.f32 %v9648, 0.0
        %v9777 = vmax.f32 %v9649, 0.0
        %v9778 = vmax.f32 %v9650, 0.0
        %v9779 = vmax.f32 %v9651, 0.0
        %v9780 = vmax.f32 %v9652, 0.0
        %v9781 = vmax.f32 %v9653, 0.0
        %v9782 = vmax.f32 %v9654, 0.0
        %v9783 = vmax.f32 %v9655, 0.0
        %v9784 = vmax.f32 %v9656, 0.0
        %v9785 = vmax.f32 %v9657, 0.0
        %v9786 = vmax.f32 %v9658, 0.0
        %v9787 = vmax.f32 %v9659, 0.0
        %v9788 = vmax.f32 %v9660, 0.0
        %v9789 = vmax.f32 %v9661, 0.0
        %v9790 = vmax.f32 %v9662, 0.0
        %v9791 = vmax.f32 %v9663, 0.0
        %v9792 = vmax.f32 %v9664, 0.0
        %v9793 = vmax.f32 %v9665, 0.0
        %v9794 = vmax.f32 %v9666, 0.0
        %v9795 = vmax.f32 %v9667, 0.0
        %v9796 = vmax.f32 %v9668, 0.0
        %v9797 = vmax.f32 %v9669, 0.0
        %v9798 = vmax.f32 %v9670, 0.0
        %v9799 = vmax.f32 %v9671, 0.0
        %v9800 = vmax.f32 %v9672, 0.0
        %v9801 = vmax.f32 %v9673, 0.0
        %v9802 = vmax.f32 %v9674, 0.0
        %v9803 = vmax.f32 %v9675, 0.0
        %v9804 = vmax.f32 %v9676, 0.0
        %v9805 = vmax.f32 %v9677, 0.0
        %v9806 = vmax.f32 %v9678, 0.0
        %v9807 = vmax.f32 %v9679, 0.0
        %v9808 = vmax.f32 %v9680, 0.0
        %v9809 = vmax.f32 %v9681, 0.0
        %v9810 = vmax.f32 %v9682, 0.0
        %v9811 = vmax.f32 %v9683, 0.0
        %v9812 = vmax.f32 %v9684, 0.0
        %v9813 = vmax.f32 %v9685, 0.0
        %v9814 = vmax.f32 %v9686, 0.0
        %v9815 = vmax.f32 %v9687, 0.0
        %v9816 = vmax.f32 %v9688, 0.0
        %v9817 = vmax.f32 %v9689, 0.0
        %v9818 = vmax.f32 %v9690, 0.0
        %v9819 = vmax.f32 %v9691, 0.0
        %v9820 = vmax.f32 %v9692, 0.0
        %v9821 = vmax.f32 %v9693, 0.0
        %v9822 = vmax.f32 %v9694, 0.0
        %v9823 = vmax.f32 %v9695, 0.0
        %v9824 = vmax.f32 %v9696, 0.0
        %v9825 = vmax.f32 %v9697, 0.0
        %v9826 = vmax.f32 %v9698, 0.0
        %v9827 = vmax.f32 %v9699, 0.0
        %v9828 = vmax.f32 %v9700, 0.0
        %v9829 = vmax.f32 %v9701, 0.0
        %v9830 = vmax.f32 %v9702, 0.0
        %v9831 = vpack.c.bf16 %v9704, %v9703
        %v9832 = vpack.c.bf16 %v9706, %v9705
        %v9833 = vpack.c.bf16 %v9708, %v9707
        %v9834 = vpack.c.bf16 %v9710, %v9709
        %v9835 = vpack.c.bf16 %v9712, %v9711
        %v9836 = vpack.c.bf16 %v9714, %v9713
        %v9837 = vpack.c.bf16 %v9716, %v9715
        %v9838 = vpack.c.bf16 %v9718, %v9717
        %v9839 = vpack.c.bf16 %v9720, %v9719
        %v9840 = vpack.c.bf16 %v9722, %v9721
        %v9841 = vpack.c.bf16 %v9724, %v9723
        %v9842 = vpack.c.bf16 %v9726, %v9725
        %v9843 = vpack.c.bf16 %v9728, %v9727
        %v9844 = vpack.c.bf16 %v9730, %v9729
        %v9845 = vpack.c.bf16 %v9732, %v9731
        %v9846 = vpack.c.bf16 %v9734, %v9733
        %v9847 = vpack.c.bf16 %v9736, %v9735
        %v9848 = vpack.c.bf16 %v9738, %v9737
        %v9849 = vpack.c.bf16 %v9740, %v9739
        %v9850 = vpack.c.bf16 %v9742, %v9741
        %v9851 = vpack.c.bf16 %v9744, %v9743
        %v9852 = vpack.c.bf16 %v9746, %v9745
        %v9853 = vpack.c.bf16 %v9748, %v9747
        %v9854 = vpack.c.bf16 %v9750, %v9749
        %v9855 = vpack.c.bf16 %v9752, %v9751
        %v9856 = vpack.c.bf16 %v9754, %v9753
        %v9857 = vpack.c.bf16 %v9756, %v9755
        %v9858 = vpack.c.bf16 %v9758, %v9757
        %v9859 = vpack.c.bf16 %v9760, %v9759
        %v9860 = vpack.c.bf16 %v9762, %v9761
        %v9861 = vpack.c.bf16 %v9764, %v9763
        %v9862 = vpack.c.bf16 %v9766, %v9765
        %v9863 = vpack.c.bf16 %v9768, %v9767
        %v9864 = vpack.c.bf16 %v9770, %v9769
        %v9865 = vpack.c.bf16 %v9772, %v9771
        %v9866 = vpack.c.bf16 %v9774, %v9773
        %v9867 = vpack.c.bf16 %v9776, %v9775
        %v9868 = vpack.c.bf16 %v9778, %v9777
        %v9869 = vpack.c.bf16 %v9780, %v9779
        %v9870 = vpack.c.bf16 %v9782, %v9781
        %v9871 = vpack.c.bf16 %v9784, %v9783
        %v9872 = vpack.c.bf16 %v9786, %v9785
        %v9873 = vpack.c.bf16 %v9788, %v9787
        %v9874 = vpack.c.bf16 %v9790, %v9789
        %v9875 = vpack.c.bf16 %v9792, %v9791
        %v9876 = vpack.c.bf16 %v9794, %v9793
        %v9877 = vpack.c.bf16 %v9796, %v9795
        %v9878 = vpack.c.bf16 %v9798, %v9797
        %v9879 = vpack.c.bf16 %v9800, %v9799
        %v9880 = vpack.c.bf16 %v9802, %v9801
        %v9881 = vpack.c.bf16 %v9804, %v9803
        %v9882 = vpack.c.bf16 %v9806, %v9805
        %v9883 = vpack.c.bf16 %v9808, %v9807
        %v9884 = vpack.c.bf16 %v9810, %v9809
        %v9885 = vpack.c.bf16 %v9812, %v9811
        %v9886 = vpack.c.bf16 %v9814, %v9813
        %v9887 = vpack.c.bf16 %v9816, %v9815
        %v9888 = vpack.c.bf16 %v9818, %v9817
        %v9889 = vpack.c.bf16 %v9820, %v9819
        %v9890 = vpack.c.bf16 %v9822, %v9821
        %v9891 = vpack.c.bf16 %v9824, %v9823
        %v9892 = vpack.c.bf16 %v9826, %v9825
        %v9893 = vpack.c.bf16 %v9828, %v9827
        %v9894 = vpack.c.bf16 %v9830, %v9829
        %v9959 = vunpack.c.l.b16 %v9831
        %v9960 = vunpack.c.h.b16 %v9831
        %v9961 = vunpack.c.l.b16 %v9832
        %v9962 = vunpack.c.h.b16 %v9832
        %v9963 = vunpack.c.l.b16 %v9833
        %v9964 = vunpack.c.h.b16 %v9833
        %v9965 = vunpack.c.l.b16 %v9834
        %v9966 = vunpack.c.h.b16 %v9834
        %v9967 = vunpack.c.l.b16 %v9835
        %v9968 = vunpack.c.h.b16 %v9835
        %v9969 = vunpack.c.l.b16 %v9836
        %v9970 = vunpack.c.h.b16 %v9836
        %v9971 = vunpack.c.l.b16 %v9837
        %v9972 = vunpack.c.h.b16 %v9837
        %v9973 = vunpack.c.l.b16 %v9838
        %v9974 = vunpack.c.h.b16 %v9838
        %v9975 = vunpack.c.l.b16 %v9839
        %v9976 = vunpack.c.h.b16 %v9839
        %v9977 = vunpack.c.l.b16 %v9840
        %v9978 = vunpack.c.h.b16 %v9840
        %v9979 = vunpack.c.l.b16 %v9841
        %v9980 = vunpack.c.h.b16 %v9841
        %v9981 = vunpack.c.l.b16 %v9842
        %v9982 = vunpack.c.h.b16 %v9842
        %v9983 = vunpack.c.l.b16 %v9843
        %v9984 = vunpack.c.h.b16 %v9843
        %v9985 = vunpack.c.l.b16 %v9844
        %v9986 = vunpack.c.h.b16 %v9844
        %v9987 = vunpack.c.l.b16 %v9845
        %v9988 = vunpack.c.h.b16 %v9845
        %v9989 = vunpack.c.l.b16 %v9846
        %v9990 = vunpack.c.h.b16 %v9846
        %v9991 = vunpack.c.l.b16 %v9847
        %v9992 = vunpack.c.h.b16 %v9847
        %v9993 = vunpack.c.l.b16 %v9848
        %v9994 = vunpack.c.h.b16 %v9848
        %v9995 = vunpack.c.l.b16 %v9849
        %v9996 = vunpack.c.h.b16 %v9849
        %v9997 = vunpack.c.l.b16 %v9850
        %v9998 = vunpack.c.h.b16 %v9850
        %v9999 = vunpack.c.l.b16 %v9851
        %v10000 = vunpack.c.h.b16 %v9851
        %v10001 = vunpack.c.l.b16 %v9852
        %v10002 = vunpack.c.h.b16 %v9852
        %v10003 = vunpack.c.l.b16 %v9853
        %v10004 = vunpack.c.h.b16 %v9853
        %v10005 = vunpack.c.l.b16 %v9854
        %v10006 = vunpack.c.h.b16 %v9854
        %v10007 = vunpack.c.l.b16 %v9855
        %v10008 = vunpack.c.h.b16 %v9855
        %v10009 = vunpack.c.l.b16 %v9856
        %v10010 = vunpack.c.h.b16 %v9856
        %v10011 = vunpack.c.l.b16 %v9857
        %v10012 = vunpack.c.h.b16 %v9857
        %v10013 = vunpack.c.l.b16 %v9858
        %v10014 = vunpack.c.h.b16 %v9858
        %v10015 = vunpack.c.l.b16 %v9859
        %v10016 = vunpack.c.h.b16 %v9859
        %v10017 = vunpack.c.l.b16 %v9860
        %v10018 = vunpack.c.h.b16 %v9860
        %v10019 = vunpack.c.l.b16 %v9861
        %v10020 = vunpack.c.h.b16 %v9861
        %v10021 = vunpack.c.l.b16 %v9862
        %v10022 = vunpack.c.h.b16 %v9862
        %v10023 = vunpack.c.l.b16 %v9863
        %v10024 = vunpack.c.h.b16 %v9863
        %v10025 = vunpack.c.l.b16 %v9864
        %v10026 = vunpack.c.h.b16 %v9864
        %v10027 = vunpack.c.l.b16 %v9865
        %v10028 = vunpack.c.h.b16 %v9865
        %v10029 = vunpack.c.l.b16 %v9866
        %v10030 = vunpack.c.h.b16 %v9866
        %v10031 = vunpack.c.l.b16 %v9867
        %v10032 = vunpack.c.h.b16 %v9867
        %v10033 = vunpack.c.l.b16 %v9868
        %v10034 = vunpack.c.h.b16 %v9868
        %v10035 = vunpack.c.l.b16 %v9869
        %v10036 = vunpack.c.h.b16 %v9869
        %v10037 = vunpack.c.l.b16 %v9870
        %v10038 = vunpack.c.h.b16 %v9870
        %v10039 = vunpack.c.l.b16 %v9871
        %v10040 = vunpack.c.h.b16 %v9871
        %v10041 = vunpack.c.l.b16 %v9872
        %v10042 = vunpack.c.h.b16 %v9872
        %v10043 = vunpack.c.l.b16 %v9873
        %v10044 = vunpack.c.h.b16 %v9873
        %v10045 = vunpack.c.l.b16 %v9874
        %v10046 = vunpack.c.h.b16 %v9874
        %v10047 = vunpack.c.l.b16 %v9875
        %v10048 = vunpack.c.h.b16 %v9875
        %v10049 = vunpack.c.l.b16 %v9876
        %v10050 = vunpack.c.h.b16 %v9876
        %v10051 = vunpack.c.l.b16 %v9877
        %v10052 = vunpack.c.h.b16 %v9877
        %v10053 = vunpack.c.l.b16 %v9878
        %v10054 = vunpack.c.h.b16 %v9878
        %v10055 = vunpack.c.l.b16 %v9879
        %v10056 = vunpack.c.h.b16 %v9879
        %v10057 = vunpack.c.l.b16 %v9880
        %v10058 = vunpack.c.h.b16 %v9880
        %v10059 = vunpack.c.l.b16 %v9881
        %v10060 = vunpack.c.h.b16 %v9881
        %v10061 = vunpack.c.l.b16 %v9882
        %v10062 = vunpack.c.h.b16 %v9882
        %v10063 = vunpack.c.l.b16 %v9883
        %v10064 = vunpack.c.h.b16 %v9883
        %v10065 = vunpack.c.l.b16 %v9884
        %v10066 = vunpack.c.h.b16 %v9884
        %v10067 = vunpack.c.l.b16 %v9885
        %v10068 = vunpack.c.h.b16 %v9885
        %v10069 = vunpack.c.l.b16 %v9886
        %v10070 = vunpack.c.h.b16 %v9886
        %v10071 = vunpack.c.l.b16 %v9887
        %v10072 = vunpack.c.h.b16 %v9887
        %v10073 = vunpack.c.l.b16 %v9888
        %v10074 = vunpack.c.h.b16 %v9888
        %v10075 = vunpack.c.l.b16 %v9889
        %v10076 = vunpack.c.h.b16 %v9889
        %v10077 = vunpack.c.l.b16 %v9890
        %v10078 = vunpack.c.h.b16 %v9890
        %v10079 = vunpack.c.l.b16 %v9891
        %v10080 = vunpack.c.h.b16 %v9891
        %v10081 = vunpack.c.l.b16 %v9892
        %v10082 = vunpack.c.h.b16 %v9892
        %v10083 = vunpack.c.l.b16 %v9893
        %v10084 = vunpack.c.h.b16 %v9893
        %v10085 = vunpack.c.l.b16 %v9894
        %v10086 = vunpack.c.h.b16 %v9894
        %v10087 = vpack.c.b16 %v9959, %v9959
        %v10088 = vpack.c.b16 %v9960, %v9960
        %v10089 = vpack.c.b16 %v9961, %v9961
        %v10090 = vpack.c.b16 %v9962, %v9962
        %v10091 = vpack.c.b16 %v9963, %v9963
        %v10092 = vpack.c.b16 %v9964, %v9964
        %v10093 = vpack.c.b16 %v9965, %v9965
        %v10094 = vpack.c.b16 %v9966, %v9966
        %v10095 = vpack.c.b16 %v9967, %v9967
        %v10096 = vpack.c.b16 %v9968, %v9968
        %v10097 = vpack.c.b16 %v9969, %v9969
        %v10098 = vpack.c.b16 %v9970, %v9970
        %v10099 = vpack.c.b16 %v9971, %v9971
        %v10100 = vpack.c.b16 %v9972, %v9972
        %v10101 = vpack.c.b16 %v9973, %v9973
        %v10102 = vpack.c.b16 %v9974, %v9974
        %v10103 = vpack.c.b16 %v9975, %v9975
        %v10104 = vpack.c.b16 %v9976, %v9976
        %v10105 = vpack.c.b16 %v9977, %v9977
        %v10106 = vpack.c.b16 %v9978, %v9978
        %v10107 = vpack.c.b16 %v9979, %v9979
        %v10108 = vpack.c.b16 %v9980, %v9980
        %v10109 = vpack.c.b16 %v9981, %v9981
        %v10110 = vpack.c.b16 %v9982, %v9982
        %v10111 = vpack.c.b16 %v9983, %v9983
        %v10112 = vpack.c.b16 %v9984, %v9984
        %v10113 = vpack.c.b16 %v9985, %v9985
        %v10114 = vpack.c.b16 %v9986, %v9986
        %v10115 = vpack.c.b16 %v9987, %v9987
        %v10116 = vpack.c.b16 %v9988, %v9988
        %v10117 = vpack.c.b16 %v9989, %v9989
        %v10118 = vpack.c.b16 %v9990, %v9990
        %v10119 = vpack.c.b16 %v9991, %v9991
        %v10120 = vpack.c.b16 %v9992, %v9992
        %v10121 = vpack.c.b16 %v9993, %v9993
        %v10122 = vpack.c.b16 %v9994, %v9994
        %v10123 = vpack.c.b16 %v9995, %v9995
        %v10124 = vpack.c.b16 %v9996, %v9996
        %v10125 = vpack.c.b16 %v9997, %v9997
        %v10126 = vpack.c.b16 %v9998, %v9998
        %v10127 = vpack.c.b16 %v9999, %v9999
        %v10128 = vpack.c.b16 %v10000, %v10000
        %v10129 = vpack.c.b16 %v10001, %v10001
        %v10130 = vpack.c.b16 %v10002, %v10002
        %v10131 = vpack.c.b16 %v10003, %v10003
        %v10132 = vpack.c.b16 %v10004, %v10004
        %v10133 = vpack.c.b16 %v10005, %v10005
        %v10134 = vpack.c.b16 %v10006, %v10006
        %v10135 = vpack.c.b16 %v10007, %v10007
        %v10136 = vpack.c.b16 %v10008, %v10008
        %v10137 = vpack.c.b16 %v10009, %v10009
        %v10138 = vpack.c.b16 %v10010, %v10010
        %v10139 = vpack.c.b16 %v10011, %v10011
        %v10140 = vpack.c.b16 %v10012, %v10012
        %v10141 = vpack.c.b16 %v10013, %v10013
        %v10142 = vpack.c.b16 %v10014, %v10014
        %v10143 = vpack.c.b16 %v10015, %v10015
        %v10144 = vpack.c.b16 %v10016, %v10016
        %v10145 = vpack.c.b16 %v10017, %v10017
        %v10146 = vpack.c.b16 %v10018, %v10018
        %v10147 = vpack.c.b16 %v10019, %v10019
        %v10148 = vpack.c.b16 %v10020, %v10020
        %v10149 = vpack.c.b16 %v10021, %v10021
        %v10150 = vpack.c.b16 %v10022, %v10022
        %v10151 = vpack.c.b16 %v10023, %v10023
        %v10152 = vpack.c.b16 %v10024, %v10024
        %v10153 = vpack.c.b16 %v10025, %v10025
        %v10154 = vpack.c.b16 %v10026, %v10026
        %v10155 = vpack.c.b16 %v10027, %v10027
        %v10156 = vpack.c.b16 %v10028, %v10028
        %v10157 = vpack.c.b16 %v10029, %v10029
        %v10158 = vpack.c.b16 %v10030, %v10030
        %v10159 = vpack.c.b16 %v10031, %v10031
        %v10160 = vpack.c.b16 %v10032, %v10032
        %v10161 = vpack.c.b16 %v10033, %v10033
        %v10162 = vpack.c.b16 %v10034, %v10034
        %v10163 = vpack.c.b16 %v10035, %v10035
        %v10164 = vpack.c.b16 %v10036, %v10036
        %v10165 = vpack.c.b16 %v10037, %v10037
        %v10166 = vpack.c.b16 %v10038, %v10038
        %v10167 = vpack.c.b16 %v10039, %v10039
        %v10168 = vpack.c.b16 %v10040, %v10040
        %v10169 = vpack.c.b16 %v10041, %v10041
        %v10170 = vpack.c.b16 %v10042, %v10042
        %v10171 = vpack.c.b16 %v10043, %v10043
        %v10172 = vpack.c.b16 %v10044, %v10044
        %v10173 = vpack.c.b16 %v10045, %v10045
        %v10174 = vpack.c.b16 %v10046, %v10046
        %v10175 = vpack.c.b16 %v10047, %v10047
        %v10176 = vpack.c.b16 %v10048, %v10048
        %v10177 = vpack.c.b16 %v10049, %v10049
        %v10178 = vpack.c.b16 %v10050, %v10050
        %v10179 = vpack.c.b16 %v10051, %v10051
        %v10180 = vpack.c.b16 %v10052, %v10052
        %v10181 = vpack.c.b16 %v10053, %v10053
        %v10182 = vpack.c.b16 %v10054, %v10054
        %v10183 = vpack.c.b16 %v10055, %v10055
        %v10184 = vpack.c.b16 %v10056, %v10056
        %v10185 = vpack.c.b16 %v10057, %v10057
        %v10186 = vpack.c.b16 %v10058, %v10058
        %v10187 = vpack.c.b16 %v10059, %v10059
        %v10188 = vpack.c.b16 %v10060, %v10060
        %v10189 = vpack.c.b16 %v10061, %v10061
        %v10190 = vpack.c.b16 %v10062, %v10062
        %v10191 = vpack.c.b16 %v10063, %v10063
        %v10192 = vpack.c.b16 %v10064, %v10064
        %v10193 = vpack.c.b16 %v10065, %v10065
        %v10194 = vpack.c.b16 %v10066, %v10066
        %v10195 = vpack.c.b16 %v10067, %v10067
        %v10196 = vpack.c.b16 %v10068, %v10068
        %v10197 = vpack.c.b16 %v10069, %v10069
        %v10198 = vpack.c.b16 %v10070, %v10070
        %v10199 = vpack.c.b16 %v10071, %v10071
        %v10200 = vpack.c.b16 %v10072, %v10072
        %v10201 = vpack.c.b16 %v10073, %v10073
        %v10202 = vpack.c.b16 %v10074, %v10074
        %v10203 = vpack.c.b16 %v10075, %v10075
        %v10204 = vpack.c.b16 %v10076, %v10076
        %v10205 = vpack.c.b16 %v10077, %v10077
        %v10206 = vpack.c.b16 %v10078, %v10078
        %v10207 = vpack.c.b16 %v10079, %v10079
        %v10208 = vpack.c.b16 %v10080, %v10080
        %v10209 = vpack.c.b16 %v10081, %v10081
        %v10210 = vpack.c.b16 %v10082, %v10082
        %v10211 = vpack.c.b16 %v10083, %v10083
        %v10212 = vpack.c.b16 %v10084, %v10084
        %v10213 = vpack.c.b16 %v10085, %v10085
        %v10214 = vpack.c.b16 %v10086, %v10086
        %vm10343 = vcmask 519168
        %10344 = vst.msk [vmem:[%s196] sm:$0xf] %vm10343, %v10087
        %10345 = vst.msk [vmem:[%s196 + $0x4] sm:$0xf] %vm10343, %v10088
        %10346 = vst.msk [vmem:[%s196 + $0x8] sm:$0xf] %vm10343, %v10089
        %10347 = vst.msk [vmem:[%s196 + $0xc] sm:$0xf] %vm10343, %v10090
        %10348 = vst.msk [vmem:[%s196 + $0x10] sm:$0xf] %vm10343, %v10091
        %10349 = vst.msk [vmem:[%s196 + $0x14] sm:$0xf] %vm10343, %v10092
        %10350 = vst.msk [vmem:[%s196 + $0x18] sm:$0xf] %vm10343, %v10093
        %10351 = vst.msk [vmem:[%s196 + $0x1c] sm:$0xf] %vm10343, %v10094
        %10352 = vst.msk [vmem:[%s196 + $0x20] sm:$0xf] %vm10343, %v10095
        %10353 = vst.msk [vmem:[%s196 + $0x24] sm:$0xf] %vm10343, %v10096
        %10354 = vst.msk [vmem:[%s196 + $0x28] sm:$0xf] %vm10343, %v10097
        %10355 = vst.msk [vmem:[%s196 + $0x2c] sm:$0xf] %vm10343, %v10098
        %10356 = vst.msk [vmem:[%s196 + $0x30] sm:$0xf] %vm10343, %v10099
        %10357 = vst.msk [vmem:[%s196 + $0x34] sm:$0xf] %vm10343, %v10100
        %10358 = vst.msk [vmem:[%s196 + $0x38] sm:$0xf] %vm10343, %v10101
        %10359 = vst.msk [vmem:[%s196 + $0x3c] sm:$0xf] %vm10343, %v10102
        %10360 = vst.msk [vmem:[%s196 + $0x40] sm:$0xf] %vm10343, %v10103
        %10361 = vst.msk [vmem:[%s196 + $0x44] sm:$0xf] %vm10343, %v10104
        %10362 = vst.msk [vmem:[%s196 + $0x48] sm:$0xf] %vm10343, %v10105
        %10363 = vst.msk [vmem:[%s196 + $0x4c] sm:$0xf] %vm10343, %v10106
        %10364 = vst.msk [vmem:[%s196 + $0x50] sm:$0xf] %vm10343, %v10107
        %10365 = vst.msk [vmem:[%s196 + $0x54] sm:$0xf] %vm10343, %v10108
        %10366 = vst.msk [vmem:[%s196 + $0x58] sm:$0xf] %vm10343, %v10109
        %10367 = vst.msk [vmem:[%s196 + $0x5c] sm:$0xf] %vm10343, %v10110
        %10368 = vst.msk [vmem:[%s196 + $0x60] sm:$0xf] %vm10343, %v10111
        %10369 = vst.msk [vmem:[%s196 + $0x64] sm:$0xf] %vm10343, %v10112
        %10370 = vst.msk [vmem:[%s196 + $0x68] sm:$0xf] %vm10343, %v10113
        %10371 = vst.msk [vmem:[%s196 + $0x6c] sm:$0xf] %vm10343, %v10114
        %10372 = vst.msk [vmem:[%s196 + $0x70] sm:$0xf] %vm10343, %v10115
        %10373 = vst.msk [vmem:[%s196 + $0x74] sm:$0xf] %vm10343, %v10116
        %10374 = vst.msk [vmem:[%s196 + $0x78] sm:$0xf] %vm10343, %v10117
        %10375 = vst.msk [vmem:[%s196 + $0x7c] sm:$0xf] %vm10343, %v10118
        %10376 = vst.msk [vmem:[%s196 + $0x80] sm:$0xf] %vm10343, %v10119
        %10377 = vst.msk [vmem:[%s196 + $0x84] sm:$0xf] %vm10343, %v10120
        %10378 = vst.msk [vmem:[%s196 + $0x88] sm:$0xf] %vm10343, %v10121
        %10379 = vst.msk [vmem:[%s196 + $0x8c] sm:$0xf] %vm10343, %v10122
        %10380 = vst.msk [vmem:[%s196 + $0x90] sm:$0xf] %vm10343, %v10123
        %10381 = vst.msk [vmem:[%s196 + $0x94] sm:$0xf] %vm10343, %v10124
        %10382 = vst.msk [vmem:[%s196 + $0x98] sm:$0xf] %vm10343, %v10125
        %10383 = vst.msk [vmem:[%s196 + $0x9c] sm:$0xf] %vm10343, %v10126
        %10384 = vst.msk [vmem:[%s196 + $0xa0] sm:$0xf] %vm10343, %v10127
        %10385 = vst.msk [vmem:[%s196 + $0xa4] sm:$0xf] %vm10343, %v10128
        %10386 = vst.msk [vmem:[%s196 + $0xa8] sm:$0xf] %vm10343, %v10129
        %10387 = vst.msk [vmem:[%s196 + $0xac] sm:$0xf] %vm10343, %v10130
        %10388 = vst.msk [vmem:[%s196 + $0xb0] sm:$0xf] %vm10343, %v10131
        %10389 = vst.msk [vmem:[%s196 + $0xb4] sm:$0xf] %vm10343, %v10132
        %10390 = vst.msk [vmem:[%s196 + $0xb8] sm:$0xf] %vm10343, %v10133
        %10391 = vst.msk [vmem:[%s196 + $0xbc] sm:$0xf] %vm10343, %v10134
        %10392 = vst.msk [vmem:[%s196 + $0xc0] sm:$0xf] %vm10343, %v10135
        %10393 = vst.msk [vmem:[%s196 + $0xc4] sm:$0xf] %vm10343, %v10136
        %10394 = vst.msk [vmem:[%s196 + $0xc8] sm:$0xf] %vm10343, %v10137
        %10395 = vst.msk [vmem:[%s196 + $0xcc] sm:$0xf] %vm10343, %v10138
        %10396 = vst.msk [vmem:[%s196 + $0xd0] sm:$0xf] %vm10343, %v10139
        %10397 = vst.msk [vmem:[%s196 + $0xd4] sm:$0xf] %vm10343, %v10140
        %10398 = vst.msk [vmem:[%s196 + $0xd8] sm:$0xf] %vm10343, %v10141
        %10399 = vst.msk [vmem:[%s196 + $0xdc] sm:$0xf] %vm10343, %v10142
        %10400 = vst.msk [vmem:[%s196 + $0xe0] sm:$0xf] %vm10343, %v10143
        %10401 = vst.msk [vmem:[%s196 + $0xe4] sm:$0xf] %vm10343, %v10144
        %10402 = vst.msk [vmem:[%s196 + $0xe8] sm:$0xf] %vm10343, %v10145
        %10403 = vst.msk [vmem:[%s196 + $0xec] sm:$0xf] %vm10343, %v10146
        %10404 = vst.msk [vmem:[%s196 + $0xf0] sm:$0xf] %vm10343, %v10147
        %10405 = vst.msk [vmem:[%s196 + $0xf4] sm:$0xf] %vm10343, %v10148
        %10406 = vst.msk [vmem:[%s196 + $0xf8] sm:$0xf] %vm10343, %v10149
        %10407 = vst.msk [vmem:[%s196 + $0xfc] sm:$0xf] %vm10343, %v10150
        %10408 = vst.msk [vmem:[%s196 + $0x100] sm:$0xf] %vm10343, %v10151
        %10409 = vst.msk [vmem:[%s196 + $0x104] sm:$0xf] %vm10343, %v10152
        %10410 = vst.msk [vmem:[%s196 + $0x108] sm:$0xf] %vm10343, %v10153
        %10411 = vst.msk [vmem:[%s196 + $0x10c] sm:$0xf] %vm10343, %v10154
        %10412 = vst.msk [vmem:[%s196 + $0x110] sm:$0xf] %vm10343, %v10155
        %10413 = vst.msk [vmem:[%s196 + $0x114] sm:$0xf] %vm10343, %v10156
        %10414 = vst.msk [vmem:[%s196 + $0x118] sm:$0xf] %vm10343, %v10157
        %10415 = vst.msk [vmem:[%s196 + $0x11c] sm:$0xf] %vm10343, %v10158
        %10416 = vst.msk [vmem:[%s196 + $0x120] sm:$0xf] %vm10343, %v10159
        %10417 = vst.msk [vmem:[%s196 + $0x124] sm:$0xf] %vm10343, %v10160
        %10418 = vst.msk [vmem:[%s196 + $0x128] sm:$0xf] %vm10343, %v10161
        %10419 = vst.msk [vmem:[%s196 + $0x12c] sm:$0xf] %vm10343, %v10162
        %10420 = vst.msk [vmem:[%s196 + $0x130] sm:$0xf] %vm10343, %v10163
        %10421 = vst.msk [vmem:[%s196 + $0x134] sm:$0xf] %vm10343, %v10164
        %10422 = vst.msk [vmem:[%s196 + $0x138] sm:$0xf] %vm10343, %v10165
        %10423 = vst.msk [vmem:[%s196 + $0x13c] sm:$0xf] %vm10343, %v10166
        %10424 = vst.msk [vmem:[%s196 + $0x140] sm:$0xf] %vm10343, %v10167
        %10425 = vst.msk [vmem:[%s196 + $0x144] sm:$0xf] %vm10343, %v10168
        %10426 = vst.msk [vmem:[%s196 + $0x148] sm:$0xf] %vm10343, %v10169
        %10427 = vst.msk [vmem:[%s196 + $0x14c] sm:$0xf] %vm10343, %v10170
        %10428 = vst.msk [vmem:[%s196 + $0x150] sm:$0xf] %vm10343, %v10171
        %10429 = vst.msk [vmem:[%s196 + $0x154] sm:$0xf] %vm10343, %v10172
        %10430 = vst.msk [vmem:[%s196 + $0x158] sm:$0xf] %vm10343, %v10173
        %10431 = vst.msk [vmem:[%s196 + $0x15c] sm:$0xf] %vm10343, %v10174
        %10432 = vst.msk [vmem:[%s196 + $0x160] sm:$0xf] %vm10343, %v10175
        %10433 = vst.msk [vmem:[%s196 + $0x164] sm:$0xf] %vm10343, %v10176
        %10434 = vst.msk [vmem:[%s196 + $0x168] sm:$0xf] %vm10343, %v10177
        %10435 = vst.msk [vmem:[%s196 + $0x16c] sm:$0xf] %vm10343, %v10178
        %10436 = vst.msk [vmem:[%s196 + $0x170] sm:$0xf] %vm10343, %v10179
        %10437 = vst.msk [vmem:[%s196 + $0x174] sm:$0xf] %vm10343, %v10180
        %10438 = vst.msk [vmem:[%s196 + $0x178] sm:$0xf] %vm10343, %v10181
        %10439 = vst.msk [vmem:[%s196 + $0x17c] sm:$0xf] %vm10343, %v10182
        %10440 = vst.msk [vmem:[%s196 + $0x180] sm:$0xf] %vm10343, %v10183
        %10441 = vst.msk [vmem:[%s196 + $0x184] sm:$0xf] %vm10343, %v10184
        %10442 = vst.msk [vmem:[%s196 + $0x188] sm:$0xf] %vm10343, %v10185
        %10443 = vst.msk [vmem:[%s196 + $0x18c] sm:$0xf] %vm10343, %v10186
        %10444 = vst.msk [vmem:[%s196 + $0x190] sm:$0xf] %vm10343, %v10187
        %10445 = vst.msk [vmem:[%s196 + $0x194] sm:$0xf] %vm10343, %v10188
        %10446 = vst.msk [vmem:[%s196 + $0x198] sm:$0xf] %vm10343, %v10189
        %10447 = vst.msk [vmem:[%s196 + $0x19c] sm:$0xf] %vm10343, %v10190
        %10448 = vst.msk [vmem:[%s196 + $0x1a0] sm:$0xf] %vm10343, %v10191
        %10449 = vst.msk [vmem:[%s196 + $0x1a4] sm:$0xf] %vm10343, %v10192
        %10450 = vst.msk [vmem:[%s196 + $0x1a8] sm:$0xf] %vm10343, %v10193
        %10451 = vst.msk [vmem:[%s196 + $0x1ac] sm:$0xf] %vm10343, %v10194
        %10452 = vst.msk [vmem:[%s196 + $0x1b0] sm:$0xf] %vm10343, %v10195
        %10453 = vst.msk [vmem:[%s196 + $0x1b4] sm:$0xf] %vm10343, %v10196
        %10454 = vst.msk [vmem:[%s196 + $0x1b8] sm:$0xf] %vm10343, %v10197
        %10455 = vst.msk [vmem:[%s196 + $0x1bc] sm:$0xf] %vm10343, %v10198
        %10456 = vst.msk [vmem:[%s196 + $0x1c0] sm:$0xf] %vm10343, %v10199
        %10457 = vst.msk [vmem:[%s196 + $0x1c4] sm:$0xf] %vm10343, %v10200
        %10458 = vst.msk [vmem:[%s196 + $0x1c8] sm:$0xf] %vm10343, %v10201
        %10459 = vst.msk [vmem:[%s196 + $0x1cc] sm:$0xf] %vm10343, %v10202
        %10460 = vst.msk [vmem:[%s196 + $0x1d0] sm:$0xf] %vm10343, %v10203
        %10461 = vst.msk [vmem:[%s196 + $0x1d4] sm:$0xf] %vm10343, %v10204
        %10462 = vst.msk [vmem:[%s196 + $0x1d8] sm:$0xf] %vm10343, %v10205
        %10463 = vst.msk [vmem:[%s196 + $0x1dc] sm:$0xf] %vm10343, %v10206
        %10464 = vst.msk [vmem:[%s196 + $0x1e0] sm:$0xf] %vm10343, %v10207
        %10465 = vst.msk [vmem:[%s196 + $0x1e4] sm:$0xf] %vm10343, %v10208
        %10466 = vst.msk [vmem:[%s196 + $0x1e8] sm:$0xf] %vm10343, %v10209
        %10467 = vst.msk [vmem:[%s196 + $0x1ec] sm:$0xf] %vm10343, %v10210
        %10468 = vst.msk [vmem:[%s196 + $0x1f0] sm:$0xf] %vm10343, %v10211
        %10469 = vst.msk [vmem:[%s196 + $0x1f4] sm:$0xf] %vm10343, %v10212
        %10470 = vst.msk [vmem:[%s196 + $0x1f8] sm:$0xf] %vm10343, %v10213
        %10471 = vst.msk [vmem:[%s196 + $0x1fc] sm:$0xf] %vm10343, %v10214
        %s10472 = sand.u32 %s112, 1
        %s10473 = scalar_lea.sflag [#allocation4], %s10472
        %s10474 = sand.u32 %s112, 1
        %s10475 = smul.addr %s10474, 512
        %s10476 = scalar_lea.vmem [#allocation3], %s10475
        // Predicated region
        $region33: #{conv3x3_pallas.1} parent=31 // pred_check
          %p10477 = pneg %p122
        $region34: #{conv3x3_pallas.1} parent=31 // pred_check_branch
          %10479 = sbr.rel (%p10477) target = $region36
        $region35: #{conv3x3_pallas.1} parent=31 // pred_region
          %s10481 = ssub.s32 8192, 8192
          %10482 = vsyncadd %s10473, %s10481
          %s10483 = smul.addr %s21, 128
          %s10484 = smul.addr %s10483, 64
          %s10485 = scalar_lea.hbm %s3, %s10484
          %s10486 = sshll.u32 %s10476, 4
          %s10487 = int_to_ptr.vmem [resolvable:$true] %s10486
          %10492 = dma.vmem_to_hbm [thread:$0]  %s10487, 8192, %s10485, %s10473, 64, 64, 4
        $region36: #{conv3x3_pallas.1} parent=31 // pred_fallthru
          _
      $region32: #{conv3x3_pallas.1} parent=5 // pred_fallthru
        _
      %p10493 = scmp.le.s32.totalorder 2, %s12
      // Predicated region
      $region37: #{conv3x3_pallas.1} parent=5 // pred_check
        %p10494 = pneg %p10493
      $region38: #{conv3x3_pallas.1} parent=5 // pred_check_branch
        %10496 = sbr.rel (%p10494) target = $region40
      $region39: #{conv3x3_pallas.1} parent=5 // pred_region
        %s10497 = ssub.s32 %s12, 2
        // Predicated region
        $region41: #{conv3x3_pallas.1} parent=39 // pred_check
          %p10498 = pneg %p128
        $region42: #{conv3x3_pallas.1} parent=39 // pred_check_branch
          %10500 = sbr.rel (%p10498) target = $region44
        $region43: #{conv3x3_pallas.1} parent=39 // pred_region
          %s10501 = sand.u32 %s113, 1
          %s10502 = scalar_lea.sflag [#allocation4], %s10501
          %s10503 = sand.u32 %s113, 1
          %s10504 = smul.addr %s10503, 512
          %s10505 = scalar_lea.vmem [#allocation3], %s10504
          %10506 = dma.done %s10502, 8192
        $region44: #{conv3x3_pallas.1} parent=39 // pred_fallthru
          _
      $region40: #{conv3x3_pallas.1} parent=5 // pred_fallthru
        _
    $region6: #{conv3x3_pallas.1} parent=1 // loop_footer
      %s16 = sadd.s32 1, %s12
    $region7: #{conv3x3_pallas.1} parent=1 // loop_footer_branch
      %11 = sbr.rel target = $region3
    $region8: #{conv3x3_pallas.1} parent=1 // loop_exit
      _
    %10507 = vsyncpa [#allocation4], 1
    %s10508 = scalar_lea.sflag [#allocation4], 1
    %10509 = vsyncpa %s10508, 1

</llo_original>
